<compile_context>
chip_gen: v5e
topology: v5e:2x2
jax: 0.10.0
libtpu: 0.0.40
codegen_flags: <defaults>
</compile_context>

<pallas_src>
import functools
import math

import numpy as np
import jax
import jax.numpy as jnp
from jax import lax
from jax.experimental import pallas as pl
from jax.experimental.pallas import tpu as pltpu

# ---------------- hyperparameters (small demo sizes) ----------------
IN_CHANNELS = 4
UNITS = 2
GROWTH_RATE = 8
KERNEL_SIZE = 3
D_STATE = 16
D_CONV = 4
EXPAND = 2
BN_EPS = 1e-5
LN_EPS = 1e-5
SCAN_BLK = 8          # timesteps per chunk of the selective scan (one sublane tile)


# ---------------- fused per-unit kernel: ConvBlock + MambaLayer ----------------
def _unit_kernel(x_ref, scale_ref, shift_ref, mask_l_ref, mask_r_ref,
                 convw_ref, ln_g_ref, ln_b_ref, inw_ref,
                 c1w_ref, c1b_ref,
                 xpb_ref, xpc_ref, wdt_ref, bdt_ref,
                 etile_ref, aflat_ref, dprm_ref, outw_ref,
                 o_ref,
                 dA_ref, dBu_ref, hist_ref,
                 *, width):
    f32 = jnp.float32
    Cin, L = x_ref.shape
    d_inner, d_conv = c1w_ref.shape
    SD = aflat_ref.shape[1]
    W = width
    P = W + 1
    T = SCAN_BLK
    NB = L // T

    # ===== ConvBlock: BatchNorm(train stats) -> ReLU -> pad(1) -> 3x3 harmonic conv =====
    act = jnp.maximum(x_ref[...] * scale_ref[...] + shift_ref[...], 0.0)       # (Cin, L)

    # zero-pad along the lane (flattened H*W) axis: handles the vertical out-of-bounds taps
    apad = jnp.concatenate(
        [jnp.zeros((Cin, P), f32), act, jnp.zeros((Cin, P), f32)], axis=1)      # (Cin, L+2P)
    mask_l = mask_l_ref[...]            # (1, L): 0 where x == 0     (left tap crosses border)
    mask_r = mask_r_ref[...]            # (1, L): 0 where x == W-1   (right tap crosses border)

    taps = []
    for ky in range(KERNEL_SIZE):
        for kx in range(KERNEL_SIZE):
            s = (ky - 1) * W + (kx - 1)
            t = apad[:, P + s:P + s + L]                                        # (Cin, L)
            if kx == 0:
                t = t * mask_l
            elif kx == 2:
                t = t * mask_r
            taps.append(t)
    col = jnp.concatenate(taps, axis=0)                                         # (9*Cin, L)
    conv = jnp.dot(convw_ref[...], col, preferred_element_type=f32)             # (G, L)

    # ===== MambaLayer: LayerNorm over channels (lane-dense (C, L) layout) =====
    mu = jnp.mean(conv, axis=0, keepdims=True)
    xm = conv - mu
    var = jnp.mean(xm * xm, axis=0, keepdims=True)
    xn = xm * lax.rsqrt(var + LN_EPS) * ln_g_ref[...] + ln_b_ref[...]           # (G, L)

    # in_proj: one merged (2*d_inner, d_model) @ (d_model, L) matmul, 8-aligned row split
    xz = jnp.dot(inw_ref[...], xn, preferred_element_type=f32)                  # (2*d_inner, L)
    x_in = xz[:d_inner, :]
    z = xz[d_inner:, :]

    # causal depthwise conv1d (d_conv taps) + bias + SiLU, all lane-dense
    xpad = jnp.concatenate([jnp.zeros((d_inner, d_conv - 1), f32), x_in], axis=1)
    xc = jnp.zeros((d_inner, L), f32)
    for k in range(d_conv):
        xc = xc + c1w_ref[:, k:k + 1] * xpad[:, k:k + L]
    xc = xc + c1b_ref[...]
    xc = xc * jax.nn.sigmoid(xc)                                                # u, (d_inner, L)

    # ===== selective-scan operands built on the MXU via SD-wide pre-expanded weights =====
    # (flat state column j = s*d_inner + d; the only layout flip in the kernel is xc.T)
    xc_t = jnp.transpose(xc)                                                    # (L, d_inner)
    b_rep = jnp.dot(xc_t, xpb_ref[...], preferred_element_type=f32)             # (L, SD): B[l,s]
    u_tl = jnp.dot(xc_t, etile_ref[...], preferred_element_type=f32)            # (L, SD): u[l,d]
    bu = b_rep * u_tl
    dt_tl = jnp.dot(xc_t, wdt_ref[...], preferred_element_type=f32) + bdt_ref[...]
    dt_tl = jnp.maximum(dt_tl, 0.0) + jnp.log1p(jnp.exp(-jnp.abs(dt_tl)))       # softplus(dt)[l,d]
    dA_ref[...] = jnp.exp(dt_tl * aflat_ref[...])                               # exp(dt*A)
    dBu_ref[...] = bu * dt_tl                                                   # B*dt*u

    # ===== chunked selective scan: blocks of T=8 steps, 3 Hillis-Steele doubling steps =====
    def blk(i, h):
        t0 = pl.multiple_of(i * T, T)
        a_blk = dA_ref[pl.ds(t0, T), :]                                         # (T, SD)
        b_blk = dBu_ref[pl.ds(t0, T), :]
        for d in (1, 2, 4):                    # inclusive scan of affine maps within block
            a_sh = jnp.concatenate([jnp.ones((d, SD), f32), a_blk[:T - d, :]], axis=0)
            b_sh = jnp.concatenate([jnp.zeros((d, SD), f32), b_blk[:T - d, :]], axis=0)
            b_blk = a_blk * b_sh + b_blk
            a_blk = a_blk * a_sh
        hist_blk = a_blk * h + b_blk                                            # h_t for the block
        hist_ref[pl.ds(t0, T), :] = hist_blk
        return hist_blk[T - 1:T, :]

    lax.fori_loop(0, NB, blk, jnp.zeros((1, SD), f32))

    # ===== epilogue: y = C.h (one MXU reduction) + D*u, gate with SiLU(z), out_proj =====
    c_rep = jnp.dot(xc_t, xpc_ref[...], preferred_element_type=f32)             # (L, SD): C[l,s]
    y_cm = lax.dot_general(etile_ref[...], hist_ref[...] * c_rep,
                           (((1,), (1,)), ((), ())),
                           preferred_element_type=f32)                          # (d_inner, L)
    y_cm = y_cm + dprm_ref[...] * xc
    y_cm = y_cm * (z * jax.nn.sigmoid(z))
    o_ref[...] = jnp.dot(outw_ref[...], y_cm, preferred_element_type=f32)       # (G, L), lane-dense


def _replicated(arr):
    n = arr.ndim
    return pl.BlockSpec(arr.shape, lambda b, _n=n: (0,) * _n)


def unit_forward(inp_bcl, p, H, W):
    """One DenseFeatureStack unit (ConvBlock + MambaLayer). (B, Cin, H*W) -> (B, G, H*W)."""
    B, Cin, L = inp_bcl.shape
    G = p["out_w"].shape[0]
    SD = p["a_flat"].shape[1]
    assert L == H * W and L % SCAN_BLK == 0

    # BatchNorm2d batch statistics (train mode): tiny hoisted XLA reduction (identical stats)
    mean = jnp.mean(inp_bcl, axis=(0, 2))
    var = jnp.mean(jnp.square(inp_bcl - mean[None, :, None]), axis=(0, 2))
    scale = (p["bn_g"] * lax.rsqrt(var + BN_EPS)).reshape(Cin, 1)
    shift = (p["bn_b"] - mean * scale[:, 0]).reshape(Cin, 1)

    # lane masks: zero taps whose 3x3 window crosses the left / right image border
    xi = jnp.arange(L, dtype=jnp.int32) % W
    mask_l = (xi != 0).astype(jnp.float32).reshape(1, L)
    mask_r = (xi != W - 1).astype(jnp.float32).reshape(1, L)

    weights = (scale, shift, mask_l, mask_r,
               p["conv_w"], p["ln_g"], p["ln_b"], p["in_w"],
               p["conv1d_w"], p["conv1d_b"],
               p["xp_b_exp"], p["xp_c_exp"], p["w_dt_exp"], p["b_dt_exp"],
               p["e_tile"], p["a_flat"], p["d_col"], p["out_w"])

    return pl.pallas_call(
        functools.partial(_unit_kernel, width=W),
        out_shape=jax.ShapeDtypeStruct((B, G, L), jnp.float32),
        grid=(B,),
        in_specs=[pl.BlockSpec((None, Cin, L), lambda b: (b, 0, 0))]
                 + [_replicated(w) for w in weights],
        out_specs=pl.BlockSpec((None, G, L), lambda b: (b, 0, 0)),
        scratch_shapes=[
            pltpu.VMEM((L, SD), jnp.float32),    # dA  = exp(dt*A)
            pltpu.VMEM((L, SD), jnp.float32),    # dBu = B*dt*u
            pltpu.VMEM((L, SD), jnp.float32),    # h history
        ],
        compiler_params=pltpu.CompilerParams(dimension_semantics=("parallel",)),
    )(inp_bcl, *weights)


# ---------------- DenseFeatureStack forward (stays NCHW end-to-end) ----------------
def dense_feature_stack(x_nchw, params):
    B, C0, H, W = x_nchw.shape
    L = H * W
    x = x_nchw.reshape(B, C0, L).astype(jnp.float32)
    feats = [x]
    for p in params:
        inp = feats[0] if len(feats) == 1 else jnp.concatenate(feats, axis=1)
        y = unit_forward(inp, p, H, W)                      # (B, G, L)
        feats.append(y)
    out = jnp.concatenate(feats, axis=1)                    # (B, C_total, L)
    return out.reshape(B, -1, H, W)                         # NCHW, no transpose needed


# ---------------- deterministic parameter init ----------------
def dct_filters(k=3):
    filt = np.zeros((k * k, k, k), dtype=np.float32)
    ai = np.where(np.arange(k) == 0, math.sqrt(1.0 / k), math.sqrt(2.0 / k))
    for i in range(k):
        for j in range(k):
            for x in range(k):
                for y in range(k):
                    filt[i * k + j, x, y] = (math.cos(math.pi * (x + 0.5) * i / k)
                                             * math.cos(math.pi * (y + 0.5) * j / k)
                                             * ai[i] * ai[j])
    return jnp.asarray(filt)


def init_params(key, in_channels, units, growth_rate):
    # TODO(synk): harm3x3 / MambaLayer sources not provided; the harmonic conv is realised as
    # a bias-free 3x3 conv whose filters are DCT-basis combinations of deterministic coeffs.
    basis = dct_filters(KERNEL_SIZE)                         # (9, 3, 3)
    d_model = growth_rate
    d_inner = EXPAND * d_model
    d_state = D_STATE
    dt_rank = max(1, math.ceil(d_model / 16))
    SD = d_state * d_inner

    params = []
    cin = in_channels
    for i in range(units):
        k = jax.random.fold_in(key, i)
        ks = jax.random.split(k, 6)
        coeff = 0.1 * jax.random.normal(ks[0], (growth_rate, cin, KERNEL_SIZE * KERNEL_SIZE),
                                        jnp.float32)
        w_full = jnp.einsum("jyx,oij->yxio", basis, coeff)   # (3, 3, cin, G)
        in_w = 0.1 * jax.random.normal(ks[1], (2 * d_inner, d_model), jnp.float32)
        conv1d_w = 0.2 * jax.random.normal(ks[2], (d_inner, D_CONV), jnp.float32)
        xp_w = 0.1 * jax.random.normal(ks[3], (dt_rank + 2 * d_state, d_inner), jnp.float32)
        dt_w = 0.5 * jax.random.normal(ks[4], (d_inner, dt_rank), jnp.float32)
        out_w = 0.1 * jax.random.normal(ks[5], (d_model, d_inner), jnp.float32)

        dt_b = jnp.log(jnp.expm1(0.01 * jnp.ones((d_inner,), jnp.float32)))
        A_log = jnp.log(jnp.broadcast_to(
            jnp.arange(1, d_state + 1, dtype=jnp.float32), (d_inner, d_state)))

        w_b = xp_w[dt_rank:dt_rank + d_state]                # (d_state, d_inner)
        w_c = xp_w[dt_rank + d_state:]                       # (d_state, d_inner)
        w_comb = xp_w[:dt_rank].T @ dt_w.T                   # (d_inner, d_inner): x_proj_dt . dt_proj

        def _expand_rep(w):                                  # (d_state, d_inner) -> (d_inner, SD)
            return jnp.broadcast_to(w.T[:, :, None],
                                    (d_inner, d_state, d_inner)).reshape(d_inner, SD)

        params.append({
            "bn_g": jnp.ones((cin,), jnp.float32),
            "bn_b": jnp.zeros((cin,), jnp.float32),
            # (G, 9*cin): column k*cin + c with k = ky*3 + kx (matches kernel tap order)
            "conv_w": w_full.reshape(KERNEL_SIZE * KERNEL_SIZE * cin, growth_rate).T,
            "ln_g": jnp.ones((d_model, 1), jnp.float32),
            "ln_b": jnp.zeros((d_model, 1), jnp.float32),
            "in_w": in_w,                                    # (2*d_inner, d_model), PyTorch layout
            "conv1d_w": conv1d_w,                            # (d_inner, d_conv)
            "conv1d_b": jnp.zeros((d_inner, 1), jnp.float32),
            # SD-wide pre-expanded projections (flat state column j = s*d_inner + d):
            "xp_b_exp": _expand_rep(w_b),                    # -> B[l,s] replicated over d
            "xp_c_exp": _expand_rep(w_c),                    # -> C[l,s] replicated over d
            "w_dt_exp": jnp.tile(w_comb, (1, d_state)),      # -> dt_raw[l,d] tiled over s
            "b_dt_exp": jnp.tile(dt_b.reshape(1, d_inner), (1, d_state)),
            "e_tile": jnp.tile(jnp.eye(d_inner, dtype=jnp.float32), (1, d_state)),
            "a_flat": (-jnp.exp(A_log)).T.reshape(1, SD),    # A[d,s] at column s*d_inner+d
            "d_col": jnp.ones((d_inner, 1), jnp.float32),
            "out_w": out_w,                                  # (d_model, d_inner), PyTorch layout
        })
        cin += growth_rate
    return params


if __name__ == "__main__":
    key = jax.random.PRNGKey(0)
    kx, kp = jax.random.split(key)
    x = jax.random.normal(kx, (2, IN_CHANNELS, 16, 16), jnp.float32)   # NCHW input
    params = init_params(kp, IN_CHANNELS, UNITS, GROWTH_RATE)

    fwd = jax.jit(lambda inp: dense_feature_stack(inp, params))
    out = fwd(x)
    jax.block_until_ready(out)

    assert out.shape == (2, IN_CHANNELS + UNITS * GROWTH_RATE, 16, 16), out.shape
    assert bool(jnp.all(jnp.isfinite(out)))
    print("KERNEL_OK")
</pallas_src>

<mosaic_0001>
module attributes {stable_mosaic.version = 11 : i64} {
  func.func @_unit_kernel(%arg0: i32, %arg1: memref<1x4x256xf32, #tpu.memory_space<vmem>>, %arg2: memref<4x1xf32, #tpu.memory_space<vmem>>, %arg3: memref<4x1xf32, #tpu.memory_space<vmem>>, %arg4: memref<1x256xf32, #tpu.memory_space<vmem>>, %arg5: memref<1x256xf32, #tpu.memory_space<vmem>>, %arg6: memref<8x36xf32, #tpu.memory_space<vmem>>, %arg7: memref<8x1xf32, #tpu.memory_space<vmem>>, %arg8: memref<8x1xf32, #tpu.memory_space<vmem>>, %arg9: memref<32x8xf32, #tpu.memory_space<vmem>>, %arg10: memref<16x4xf32, #tpu.memory_space<vmem>>, %arg11: memref<16x1xf32, #tpu.memory_space<vmem>>, %arg12: memref<16x256xf32, #tpu.memory_space<vmem>>, %arg13: memref<16x256xf32, #tpu.memory_space<vmem>>, %arg14: memref<16x256xf32, #tpu.memory_space<vmem>>, %arg15: memref<1x256xf32, #tpu.memory_space<vmem>>, %arg16: memref<16x256xf32, #tpu.memory_space<vmem>>, %arg17: memref<1x256xf32, #tpu.memory_space<vmem>>, %arg18: memref<16x1xf32, #tpu.memory_space<vmem>>, %arg19: memref<8x16xf32, #tpu.memory_space<vmem>>, %arg20: memref<1x8x256xf32, #tpu.memory_space<vmem>>, %arg21: memref<256x256xf32, #tpu.memory_space<vmem>>, %arg22: memref<256x256xf32, #tpu.memory_space<vmem>>, %arg23: memref<256x256xf32, #tpu.memory_space<vmem>>) attributes {dimension_semantics = [#tpu.dimension_semantics<parallel>], iteration_bounds = array<i64: 2>, scalar_prefetch = 0 : i64, scratch_operands = 3 : i64, tpu.core_type = #tpu.core_type<tc>, window_params = [{transform_indices = @transform_0, window_bounds = array<i64: 1, 4, 256>}, {pipeline_mode = #tpu.pipeline_mode<synchronous>, transform_indices = @transform_1, window_bounds = array<i64: 4, 1>}, {pipeline_mode = #tpu.pipeline_mode<synchronous>, transform_indices = @transform_2, window_bounds = array<i64: 4, 1>}, {pipeline_mode = #tpu.pipeline_mode<synchronous>, transform_indices = @transform_3, window_bounds = array<i64: 1, 256>}, {pipeline_mode = #tpu.pipeline_mode<synchronous>, transform_indices = @transform_4, window_bounds = array<i64: 1, 256>}, {pipeline_mode = #tpu.pipeline_mode<synchronous>, transform_indices = @transform_5, window_bounds = array<i64: 8, 36>}, {pipeline_mode = #tpu.pipeline_mode<synchronous>, transform_indices = @transform_6, window_bounds = array<i64: 8, 1>}, {pipeline_mode = #tpu.pipeline_mode<synchronous>, transform_indices = @transform_7, window_bounds = array<i64: 8, 1>}, {pipeline_mode = #tpu.pipeline_mode<synchronous>, transform_indices = @transform_8, window_bounds = array<i64: 32, 8>}, {pipeline_mode = #tpu.pipeline_mode<synchronous>, transform_indices = @transform_9, window_bounds = array<i64: 16, 4>}, {pipeline_mode = #tpu.pipeline_mode<synchronous>, transform_indices = @transform_10, window_bounds = array<i64: 16, 1>}, {pipeline_mode = #tpu.pipeline_mode<synchronous>, transform_indices = @transform_11, window_bounds = array<i64: 16, 256>}, {pipeline_mode = #tpu.pipeline_mode<synchronous>, transform_indices = @transform_12, window_bounds = array<i64: 16, 256>}, {pipeline_mode = #tpu.pipeline_mode<synchronous>, transform_indices = @transform_13, window_bounds = array<i64: 16, 256>}, {pipeline_mode = #tpu.pipeline_mode<synchronous>, transform_indices = @transform_14, window_bounds = array<i64: 1, 256>}, {pipeline_mode = #tpu.pipeline_mode<synchronous>, transform_indices = @transform_15, window_bounds = array<i64: 16, 256>}, {pipeline_mode = #tpu.pipeline_mode<synchronous>, transform_indices = @transform_16, window_bounds = array<i64: 1, 256>}, {pipeline_mode = #tpu.pipeline_mode<synchronous>, transform_indices = @transform_17, window_bounds = array<i64: 16, 1>}, {pipeline_mode = #tpu.pipeline_mode<synchronous>, transform_indices = @transform_18, window_bounds = array<i64: 8, 16>}, {transform_indices = @transform_19, window_bounds = array<i64: 1, 8, 256>}]} {
    %c0 = arith.constant 0 : index
    %c0_0 = arith.constant 0 : index
    %c0_1 = arith.constant 0 : index
    %0 = vector.load %arg1[%c0, %c0_0, %c0_1] : memref<1x4x256xf32, #tpu.memory_space<vmem>>, vector<1x4x256xf32>
    %1 = vector.shape_cast %0 : vector<1x4x256xf32> to vector<4x256xf32>
    %c0_2 = arith.constant 0 : index
    %c0_3 = arith.constant 0 : index
    %2 = vector.load %arg2[%c0_2, %c0_3] : memref<4x1xf32, #tpu.memory_space<vmem>>, vector<4x1xf32>
    %3 = vector.broadcast %2 : vector<4x1xf32> to vector<4x256xf32>
    %4 = arith.mulf %1, %3 : vector<4x256xf32>
    %c0_4 = arith.constant 0 : index
    %c0_5 = arith.constant 0 : index
    %5 = vector.load %arg3[%c0_4, %c0_5] : memref<4x1xf32, #tpu.memory_space<vmem>>, vector<4x1xf32>
    %6 = vector.broadcast %5 : vector<4x1xf32> to vector<4x256xf32>
    %7 = arith.addf %4, %6 : vector<4x256xf32>
    %cst = arith.constant 0.000000e+00 : f32
    %8 = vector.broadcast %cst : f32 to vector<4x256xf32>
    %9 = arith.maximumf %7, %8 : vector<4x256xf32>
    %cst_6 = arith.constant 0.000000e+00 : f32
    %10 = vector.broadcast %cst_6 : f32 to vector<4x17xf32>
    %cst_7 = arith.constant 0.000000e+00 : f32
    %11 = vector.broadcast %cst_7 : f32 to vector<4x17xf32>
    %12 = tpu.concatenate %10, %9, %11 in 1 : vector<4x17xf32>, vector<4x256xf32>, vector<4x17xf32> -> vector<4x290xf32>
    %c0_8 = arith.constant 0 : index
    %c0_9 = arith.constant 0 : index
    %13 = vector.load %arg4[%c0_8, %c0_9] : memref<1x256xf32, #tpu.memory_space<vmem>>, vector<1x256xf32>
    %c0_10 = arith.constant 0 : index
    %c0_11 = arith.constant 0 : index
    %14 = vector.load %arg5[%c0_10, %c0_11] : memref<1x256xf32, #tpu.memory_space<vmem>>, vector<1x256xf32>
    %15 = vector.extract_strided_slice %12 {offsets = [0, 0], sizes = [4, 256], strides = [1, 1]} : vector<4x290xf32> to vector<4x256xf32>
    %16 = vector.broadcast %13 : vector<1x256xf32> to vector<4x256xf32>
    %17 = arith.mulf %15, %16 : vector<4x256xf32>
    %18 = vector.extract_strided_slice %12 {offsets = [0, 1], sizes = [4, 256], strides = [1, 1]} : vector<4x290xf32> to vector<4x256xf32>
    %19 = vector.extract_strided_slice %12 {offsets = [0, 2], sizes = [4, 256], strides = [1, 1]} : vector<4x290xf32> to vector<4x256xf32>
    %20 = vector.broadcast %14 : vector<1x256xf32> to vector<4x256xf32>
    %21 = arith.mulf %19, %20 : vector<4x256xf32>
    %22 = vector.extract_strided_slice %12 {offsets = [0, 16], sizes = [4, 256], strides = [1, 1]} : vector<4x290xf32> to vector<4x256xf32>
    %23 = vector.broadcast %13 : vector<1x256xf32> to vector<4x256xf32>
    %24 = arith.mulf %22, %23 : vector<4x256xf32>
    %25 = vector.extract_strided_slice %12 {offsets = [0, 17], sizes = [4, 256], strides = [1, 1]} : vector<4x290xf32> to vector<4x256xf32>
    %26 = vector.extract_strided_slice %12 {offsets = [0, 18], sizes = [4, 256], strides = [1, 1]} : vector<4x290xf32> to vector<4x256xf32>
    %27 = vector.broadcast %14 : vector<1x256xf32> to vector<4x256xf32>
    %28 = arith.mulf %26, %27 : vector<4x256xf32>
    %29 = vector.extract_strided_slice %12 {offsets = [0, 32], sizes = [4, 256], strides = [1, 1]} : vector<4x290xf32> to vector<4x256xf32>
    %30 = vector.broadcast %13 : vector<1x256xf32> to vector<4x256xf32>
    %31 = arith.mulf %29, %30 : vector<4x256xf32>
    %32 = vector.extract_strided_slice %12 {offsets = [0, 33], sizes = [4, 256], strides = [1, 1]} : vector<4x290xf32> to vector<4x256xf32>
    %33 = vector.extract_strided_slice %12 {offsets = [0, 34], sizes = [4, 256], strides = [1, 1]} : vector<4x290xf32> to vector<4x256xf32>
    %34 = vector.broadcast %14 : vector<1x256xf32> to vector<4x256xf32>
    %35 = arith.mulf %33, %34 : vector<4x256xf32>
    %36 = tpu.concatenate %17, %18, %21, %24, %25, %28, %31, %32, %35 in 0 : vector<4x256xf32>, vector<4x256xf32>, vector<4x256xf32>, vector<4x256xf32>, vector<4x256xf32>, vector<4x256xf32>, vector<4x256xf32>, vector<4x256xf32>, vector<4x256xf32> -> vector<36x256xf32>
    %c0_12 = arith.constant 0 : index
    %c0_13 = arith.constant 0 : index
    %37 = vector.load %arg6[%c0_12, %c0_13] : memref<8x36xf32, #tpu.memory_space<vmem>>, vector<8x36xf32>
    %cst_14 = arith.constant dense<0.000000e+00> : vector<8x256xf32>
    %38 = tpu.matmul %37, %36, %cst_14 {dimension_numbers = #tpu.dot_dimension_numbers<[1], [0], [0], [1], [0, 0, 1, 1], [], []>} : vector<8x36xf32>, vector<36x256xf32>, vector<8x256xf32> -> vector<8x256xf32>
    %cst_15 = arith.constant dense<0.000000e+00> : vector<256xf32>
    %39 = vector.multi_reduction <add>, %38, %cst_15 [0] : vector<8x256xf32> to vector<256xf32>
    %40 = vector.shape_cast %39 : vector<256xf32> to vector<1x256xf32>
    %cst_16 = arith.constant 8.000000e+00 : f32
    %41 = vector.broadcast %cst_16 : f32 to vector<1x256xf32>
    %42 = arith.divf %40, %41 : vector<1x256xf32>
    %43 = vector.broadcast %42 : vector<1x256xf32> to vector<8x256xf32>
    %44 = arith.subf %38, %43 : vector<8x256xf32>
    %45 = arith.mulf %44, %44 : vector<8x256xf32>
    %cst_17 = arith.constant dense<0.000000e+00> : vector<256xf32>
    %46 = vector.multi_reduction <add>, %45, %cst_17 [0] : vector<8x256xf32> to vector<256xf32>
    %47 = vector.shape_cast %46 : vector<256xf32> to vector<1x256xf32>
    %cst_18 = arith.constant 8.000000e+00 : f32
    %48 = vector.broadcast %cst_18 : f32 to vector<1x256xf32>
    %49 = arith.divf %47, %48 : vector<1x256xf32>
    %cst_19 = arith.constant 9.99999974E-6 : f32
    %50 = vector.broadcast %cst_19 : f32 to vector<1x256xf32>
    %51 = arith.addf %49, %50 : vector<1x256xf32>
    %52 = math.rsqrt %51 : vector<1x256xf32>
    %53 = vector.broadcast %52 : vector<1x256xf32> to vector<8x256xf32>
    %54 = arith.mulf %44, %53 : vector<8x256xf32>
    %c0_20 = arith.constant 0 : index
    %c0_21 = arith.constant 0 : index
    %55 = vector.load %arg7[%c0_20, %c0_21] : memref<8x1xf32, #tpu.memory_space<vmem>>, vector<8x1xf32>
    %56 = vector.broadcast %55 : vector<8x1xf32> to vector<8x256xf32>
    %57 = arith.mulf %54, %56 : vector<8x256xf32>
    %c0_22 = arith.constant 0 : index
    %c0_23 = arith.constant 0 : index
    %58 = vector.load %arg8[%c0_22, %c0_23] : memref<8x1xf32, #tpu.memory_space<vmem>>, vector<8x1xf32>
    %59 = vector.broadcast %58 : vector<8x1xf32> to vector<8x256xf32>
    %60 = arith.addf %57, %59 : vector<8x256xf32>
    %c0_24 = arith.constant 0 : index
    %c0_25 = arith.constant 0 : index
    %61 = vector.load %arg9[%c0_24, %c0_25] : memref<32x8xf32, #tpu.memory_space<vmem>>, vector<32x8xf32>
    %cst_26 = arith.constant dense<0.000000e+00> : vector<32x256xf32>
    %62 = tpu.matmul %61, %60, %cst_26 {dimension_numbers = #tpu.dot_dimension_numbers<[1], [0], [0], [1], [0, 0, 1, 1], [], []>} : vector<32x8xf32>, vector<8x256xf32>, vector<32x256xf32> -> vector<32x256xf32>
    %63 = vector.extract_strided_slice %62 {offsets = [0, 0], sizes = [16, 256], strides = [1, 1]} : vector<32x256xf32> to vector<16x256xf32>
    %64 = vector.extract_strided_slice %62 {offsets = [16, 0], sizes = [16, 256], strides = [1, 1]} : vector<32x256xf32> to vector<16x256xf32>
    %cst_27 = arith.constant 0.000000e+00 : f32
    %65 = vector.broadcast %cst_27 : f32 to vector<16x3xf32>
    %66 = tpu.concatenate %65, %63 in 1 : vector<16x3xf32>, vector<16x256xf32> -> vector<16x259xf32>
    %cst_28 = arith.constant 0.000000e+00 : f32
    %67 = vector.broadcast %cst_28 : f32 to vector<16x256xf32>
    %c0_29 = arith.constant 0 : index
    %c0_30 = arith.constant 0 : index
    %68 = vector.load %arg10[%c0_29, %c0_30] : memref<16x4xf32, #tpu.memory_space<vmem>>, vector<16x1xf32>
    %69 = vector.extract_strided_slice %66 {offsets = [0, 0], sizes = [16, 256], strides = [1, 1]} : vector<16x259xf32> to vector<16x256xf32>
    %70 = vector.broadcast %68 : vector<16x1xf32> to vector<16x256xf32>
    %71 = arith.mulf %70, %69 : vector<16x256xf32>
    %72 = arith.addf %67, %71 : vector<16x256xf32>
    %c0_31 = arith.constant 0 : index
    %c1 = arith.constant 1 : index
    %73 = vector.load %arg10[%c0_31, %c1] : memref<16x4xf32, #tpu.memory_space<vmem>>, vector<16x1xf32>
    %74 = vector.extract_strided_slice %66 {offsets = [0, 1], sizes = [16, 256], strides = [1, 1]} : vector<16x259xf32> to vector<16x256xf32>
    %75 = vector.broadcast %73 : vector<16x1xf32> to vector<16x256xf32>
    %76 = arith.mulf %75, %74 : vector<16x256xf32>
    %77 = arith.addf %72, %76 : vector<16x256xf32>
    %c0_32 = arith.constant 0 : index
    %c2 = arith.constant 2 : index
    %78 = vector.load %arg10[%c0_32, %c2] : memref<16x4xf32, #tpu.memory_space<vmem>>, vector<16x1xf32>
    %79 = vector.extract_strided_slice %66 {offsets = [0, 2], sizes = [16, 256], strides = [1, 1]} : vector<16x259xf32> to vector<16x256xf32>
    %80 = vector.broadcast %78 : vector<16x1xf32> to vector<16x256xf32>
    %81 = arith.mulf %80, %79 : vector<16x256xf32>
    %82 = arith.addf %77, %81 : vector<16x256xf32>
    %c0_33 = arith.constant 0 : index
    %c3 = arith.constant 3 : index
    %83 = vector.load %arg10[%c0_33, %c3] : memref<16x4xf32, #tpu.memory_space<vmem>>, vector<16x1xf32>
    %84 = vector.extract_strided_slice %66 {offsets = [0, 3], sizes = [16, 256], strides = [1, 1]} : vector<16x259xf32> to vector<16x256xf32>
    %85 = vector.broadcast %83 : vector<16x1xf32> to vector<16x256xf32>
    %86 = arith.mulf %85, %84 : vector<16x256xf32>
    %87 = arith.addf %82, %86 : vector<16x256xf32>
    %c0_34 = arith.constant 0 : index
    %c0_35 = arith.constant 0 : index
    %88 = vector.load %arg11[%c0_34, %c0_35] : memref<16x1xf32, #tpu.memory_space<vmem>>, vector<16x1xf32>
    %89 = vector.broadcast %88 : vector<16x1xf32> to vector<16x256xf32>
    %90 = arith.addf %87, %89 : vector<16x256xf32>
    %91 = arith.negf %90 : vector<16x256xf32>
    %92 = math.exp %91 : vector<16x256xf32>
    %cst_36 = arith.constant 1.000000e+00 : f32
    %93 = vector.broadcast %cst_36 : f32 to vector<16x256xf32>
    %94 = arith.addf %93, %92 : vector<16x256xf32>
    %95 = arith.divf %93, %94 : vector<16x256xf32>
    %96 = arith.mulf %90, %95 : vector<16x256xf32>
    %97 = tpu.transpose %96, [1, 0] : vector<16x256xf32> -> vector<256x16xf32>
    %c0_37 = arith.constant 0 : index
    %c0_38 = arith.constant 0 : index
    %98 = vector.load %arg12[%c0_37, %c0_38] : memref<16x256xf32, #tpu.memory_space<vmem>>, vector<16x256xf32>
    %cst_39 = arith.constant dense<0.000000e+00> : vector<256x256xf32>
    %99 = tpu.matmul %97, %98, %cst_39 {dimension_numbers = #tpu.dot_dimension_numbers<[1], [0], [0], [1], [0, 0, 1, 1], [], []>} : vector<256x16xf32>, vector<16x256xf32>, vector<256x256xf32> -> vector<256x256xf32>
    %c0_40 = arith.constant 0 : index
    %c0_41 = arith.constant 0 : index
    %100 = vector.load %arg16[%c0_40, %c0_41] : memref<16x256xf32, #tpu.memory_space<vmem>>, vector<16x256xf32>
    %cst_42 = arith.constant dense<0.000000e+00> : vector<256x256xf32>
    %101 = tpu.matmul %97, %100, %cst_42 {dimension_numbers = #tpu.dot_dimension_numbers<[1], [0], [0], [1], [0, 0, 1, 1], [], []>} : vector<256x16xf32>, vector<16x256xf32>, vector<256x256xf32> -> vector<256x256xf32>
    %102 = arith.mulf %99, %101 : vector<256x256xf32>
    %c0_43 = arith.constant 0 : index
    %c0_44 = arith.constant 0 : index
    %103 = vector.load %arg14[%c0_43, %c0_44] : memref<16x256xf32, #tpu.memory_space<vmem>>, vector<16x256xf32>
    %cst_45 = arith.constant dense<0.000000e+00> : vector<256x256xf32>
    %104 = tpu.matmul %97, %103, %cst_45 {dimension_numbers = #tpu.dot_dimension_numbers<[1], [0], [0], [1], [0, 0, 1, 1], [], []>} : vector<256x16xf32>, vector<16x256xf32>, vector<256x256xf32> -> vector<256x256xf32>
    %c0_46 = arith.constant 0 : index
    %c0_47 = arith.constant 0 : index
    %105 = vector.load %arg15[%c0_46, %c0_47] : memref<1x256xf32, #tpu.memory_space<vmem>>, vector<1x256xf32>
    %106 = vector.broadcast %105 : vector<1x256xf32> to vector<256x256xf32>
    %107 = arith.addf %104, %106 : vector<256x256xf32>
    %cst_48 = arith.constant 0.000000e+00 : f32
    %108 = vector.broadcast %cst_48 : f32 to vector<256x256xf32>
    %109 = arith.maximumf %107, %108 : vector<256x256xf32>
    %110 = math.absf %107 : vector<256x256xf32>
    %cst_49 = arith.constant 0.000000e+00 : f32
    %111 = vector.broadcast %cst_49 : f32 to vector<256x256xf32>
    %112 = arith.subf %111, %110 : vector<256x256xf32>
    %113 = math.exp %112 : vector<256x256xf32>
    %114 = math.log1p %113 : vector<256x256xf32>
    %115 = arith.addf %109, %114 : vector<256x256xf32>
    %c0_50 = arith.constant 0 : index
    %c0_51 = arith.constant 0 : index
    %116 = vector.load %arg17[%c0_50, %c0_51] : memref<1x256xf32, #tpu.memory_space<vmem>>, vector<1x256xf32>
    %117 = vector.broadcast %116 : vector<1x256xf32> to vector<256x256xf32>
    %118 = arith.mulf %115, %117 : vector<256x256xf32>
    %119 = math.exp %118 : vector<256x256xf32>
    %c0_52 = arith.constant 0 : index
    %c0_53 = arith.constant 0 : index
    %120 = vector.load %arg21[%c0_52, %c0_53] : memref<256x256xf32, #tpu.memory_space<vmem>>, vector<256x256xf32>
    tpu.vector_store %arg21[%c0_52, %c0_53], %119 {strides = array<i32>} : memref<256x256xf32, #tpu.memory_space<vmem>>, vector<256x256xf32>,
    %121 = arith.mulf %102, %115 : vector<256x256xf32>
    %c0_54 = arith.constant 0 : index
    %c0_55 = arith.constant 0 : index
    %122 = vector.load %arg22[%c0_54, %c0_55] : memref<256x256xf32, #tpu.memory_space<vmem>>, vector<256x256xf32>
    tpu.vector_store %arg22[%c0_54, %c0_55], %121 {strides = array<i32>} : memref<256x256xf32, #tpu.memory_space<vmem>>, vector<256x256xf32>,
    %cst_56 = arith.constant 0.000000e+00 : f32
    %123 = vector.broadcast %cst_56 : f32 to vector<1x256xf32>
    %c0_i32 = arith.constant 0 : i32
    %c32_i32 = arith.constant 32 : i32
    %124 = arith.addi %c0_i32, %c32_i32 : i32
    %c1_i32 = arith.constant 1 : i32
    %125 = scf.for %arg24 = %c0_i32 to %124 step %c1_i32 iter_args(%arg25 = %123) -> (vector<1x256xf32>)  : i32 {
      %c8_i32 = arith.constant 8 : i32
      %148 = arith.muli %arg24, %c8_i32 : i32
      %149 = tpu.assume_multiple %148, 8 : i32
      %150 = arith.index_cast %149 : i32 to index
      %c0_75 = arith.constant 0 : index
      %151 = vector.load %arg21[%150, %c0_75] : memref<256x256xf32, #tpu.memory_space<vmem>>, vector<8x256xf32>
      %152 = arith.index_cast %149 : i32 to index
      %c0_76 = arith.constant 0 : index
      %153 = vector.load %arg22[%152, %c0_76] : memref<256x256xf32, #tpu.memory_space<vmem>>, vector<8x256xf32>
      %cst_77 = arith.constant 1.000000e+00 : f32
      %154 = vector.broadcast %cst_77 : f32 to vector<1x256xf32>
      %155 = vector.extract_strided_slice %151 {offsets = [0, 0], sizes = [7, 256], strides = [1, 1]} : vector<8x256xf32> to vector<7x256xf32>
      %156 = tpu.concatenate %154, %155 in 0 : vector<1x256xf32>, vector<7x256xf32> -> vector<8x256xf32>
      %cst_78 = arith.constant 0.000000e+00 : f32
      %157 = vector.broadcast %cst_78 : f32 to vector<1x256xf32>
      %158 = vector.extract_strided_slice %153 {offsets = [0, 0], sizes = [7, 256], strides = [1, 1]} : vector<8x256xf32> to vector<7x256xf32>
      %159 = tpu.concatenate %157, %158 in 0 : vector<1x256xf32>, vector<7x256xf32> -> vector<8x256xf32>
      %160 = arith.mulf %151, %159 : vector<8x256xf32>
      %161 = arith.addf %160, %153 : vector<8x256xf32>
      %162 = arith.mulf %151, %156 : vector<8x256xf32>
      %cst_79 = arith.constant 1.000000e+00 : f32
      %163 = vector.broadcast %cst_79 : f32 to vector<2x256xf32>
      %164 = vector.extract_strided_slice %162 {offsets = [0, 0], sizes = [6, 256], strides = [1, 1]} : vector<8x256xf32> to vector<6x256xf32>
      %165 = tpu.concatenate %163, %164 in 0 : vector<2x256xf32>, vector<6x256xf32> -> vector<8x256xf32>
      %cst_80 = arith.constant 0.000000e+00 : f32
      %166 = vector.broadcast %cst_80 : f32 to vector<2x256xf32>
      %167 = vector.extract_strided_slice %161 {offsets = [0, 0], sizes = [6, 256], strides = [1, 1]} : vector<8x256xf32> to vector<6x256xf32>
      %168 = tpu.concatenate %166, %167 in 0 : vector<2x256xf32>, vector<6x256xf32> -> vector<8x256xf32>
      %169 = arith.mulf %162, %168 : vector<8x256xf32>
      %170 = arith.addf %169, %161 : vector<8x256xf32>
      %171 = arith.mulf %162, %165 : vector<8x256xf32>
      %cst_81 = arith.constant 1.000000e+00 : f32
      %172 = vector.broadcast %cst_81 : f32 to vector<4x256xf32>
      %173 = vector.extract_strided_slice %171 {offsets = [0, 0], sizes = [4, 256], strides = [1, 1]} : vector<8x256xf32> to vector<4x256xf32>
      %174 = tpu.concatenate %172, %173 in 0 : vector<4x256xf32>, vector<4x256xf32> -> vector<8x256xf32>
      %cst_82 = arith.constant 0.000000e+00 : f32
      %175 = vector.broadcast %cst_82 : f32 to vector<4x256xf32>
      %176 = vector.extract_strided_slice %170 {offsets = [0, 0], sizes = [4, 256], strides = [1, 1]} : vector<8x256xf32> to vector<4x256xf32>
      %177 = tpu.concatenate %175, %176 in 0 : vector<4x256xf32>, vector<4x256xf32> -> vector<8x256xf32>
      %178 = arith.mulf %171, %177 : vector<8x256xf32>
      %179 = arith.addf %178, %170 : vector<8x256xf32>
      %180 = arith.mulf %171, %174 : vector<8x256xf32>
      %181 = vector.broadcast %arg25 : vector<1x256xf32> to vector<8x256xf32>
      %182 = arith.mulf %180, %181 : vector<8x256xf32>
      %183 = arith.addf %182, %179 : vector<8x256xf32>
      %184 = arith.index_cast %149 : i32 to index
      %c0_83 = arith.constant 0 : index
      %185 = vector.load %arg23[%184, %c0_83] : memref<256x256xf32, #tpu.memory_space<vmem>>, vector<8x256xf32>
      tpu.vector_store %arg23[%184, %c0_83], %183 {strides = array<i32>} : memref<256x256xf32, #tpu.memory_space<vmem>>, vector<8x256xf32>,
      %186 = vector.extract_strided_slice %183 {offsets = [7, 0], sizes = [1, 256], strides = [1, 1]} : vector<8x256xf32> to vector<1x256xf32>
      scf.yield %186 : vector<1x256xf32>
    }
    %c32_i32_57 = arith.constant 32 : i32
    %c0_58 = arith.constant 0 : index
    %c0_59 = arith.constant 0 : index
    %126 = vector.load %arg13[%c0_58, %c0_59] : memref<16x256xf32, #tpu.memory_space<vmem>>, vector<16x256xf32>
    %cst_60 = arith.constant dense<0.000000e+00> : vector<256x256xf32>
    %127 = tpu.matmul %97, %126, %cst_60 {dimension_numbers = #tpu.dot_dimension_numbers<[1], [0], [0], [1], [0, 0, 1, 1], [], []>} : vector<256x16xf32>, vector<16x256xf32>, vector<256x256xf32> -> vector<256x256xf32>
    %c0_61 = arith.constant 0 : index
    %c0_62 = arith.constant 0 : index
    %128 = vector.load %arg16[%c0_61, %c0_62] : memref<16x256xf32, #tpu.memory_space<vmem>>, vector<16x256xf32>
    %c0_63 = arith.constant 0 : index
    %c0_64 = arith.constant 0 : index
    %129 = vector.load %arg23[%c0_63, %c0_64] : memref<256x256xf32, #tpu.memory_space<vmem>>, vector<256x256xf32>
    %130 = arith.mulf %129, %127 : vector<256x256xf32>
    %cst_65 = arith.constant dense<0.000000e+00> : vector<16x256xf32>
    %131 = tpu.matmul %128, %130, %cst_65 {dimension_numbers = #tpu.dot_dimension_numbers<[1], [1], [0], [0], [0, 0, 1, 0], [], []>} : vector<16x256xf32>, vector<256x256xf32>, vector<16x256xf32> -> vector<16x256xf32>
    %c0_66 = arith.constant 0 : index
    %c0_67 = arith.constant 0 : index
    %132 = vector.load %arg18[%c0_66, %c0_67] : memref<16x1xf32, #tpu.memory_space<vmem>>, vector<16x1xf32>
    %133 = vector.broadcast %132 : vector<16x1xf32> to vector<16x256xf32>
    %134 = arith.mulf %133, %96 : vector<16x256xf32>
    %135 = arith.addf %131, %134 : vector<16x256xf32>
    %136 = arith.negf %64 : vector<16x256xf32>
    %137 = math.exp %136 : vector<16x256xf32>
    %cst_68 = arith.constant 1.000000e+00 : f32
    %138 = vector.broadcast %cst_68 : f32 to vector<16x256xf32>
    %139 = arith.addf %138, %137 : vector<16x256xf32>
    %140 = arith.divf %138, %139 : vector<16x256xf32>
    %141 = arith.mulf %64, %140 : vector<16x256xf32>
    %142 = arith.mulf %135, %141 : vector<16x256xf32>
    %c0_69 = arith.constant 0 : index
    %c0_70 = arith.constant 0 : index
    %143 = vector.load %arg19[%c0_69, %c0_70] : memref<8x16xf32, #tpu.memory_space<vmem>>, vector<8x16xf32>
    %cst_71 = arith.constant dense<0.000000e+00> : vector<8x256xf32>
    %144 = tpu.matmul %143, %142, %cst_71 {dimension_numbers = #tpu.dot_dimension_numbers<[1], [0], [0], [1], [0, 0, 1, 1], [], []>} : vector<8x16xf32>, vector<16x256xf32>, vector<8x256xf32> -> vector<8x256xf32>
    %c0_72 = arith.constant 0 : index
    %c0_73 = arith.constant 0 : index
    %c0_74 = arith.constant 0 : index
    %145 = vector.load %arg20[%c0_72, %c0_73, %c0_74] : memref<1x8x256xf32, #tpu.memory_space<vmem>>, vector<1x8x256xf32>
    %146 = vector.shape_cast %145 : vector<1x8x256xf32> to vector<8x256xf32>
    %147 = vector.shape_cast %144 : vector<8x256xf32> to vector<1x8x256xf32>
    tpu.vector_store %arg20[%c0_72, %c0_73, %c0_74], %147 {strides = array<i32>} : memref<1x8x256xf32, #tpu.memory_space<vmem>>, vector<1x8x256xf32>,
    return
  }
  func.func @transform_0(%arg0: i32) -> (i32, i32, i32) {
    %c0_i32 = arith.constant 0 : i32
    %c0_i32_0 = arith.constant 0 : i32
    %c0_i32_1 = arith.constant 0 : i32
    return %arg0, %c0_i32, %c0_i32_0 : i32, i32, i32
  }
  func.func @transform_1(%arg0: i32) -> (i32, i32) {
    %c0_i32 = arith.constant 0 : i32
    %c0_i32_0 = arith.constant 0 : i32
    %c0_i32_1 = arith.constant 0 : i32
    return %c0_i32, %c0_i32_0 : i32, i32
  }
  func.func @transform_2(%arg0: i32) -> (i32, i32) {
    %c0_i32 = arith.constant 0 : i32
    %c0_i32_0 = arith.constant 0 : i32
    %c0_i32_1 = arith.constant 0 : i32
    return %c0_i32, %c0_i32_0 : i32, i32
  }
  func.func @transform_3(%arg0: i32) -> (i32, i32) {
    %c0_i32 = arith.constant 0 : i32
    %c0_i32_0 = arith.constant 0 : i32
    %c0_i32_1 = arith.constant 0 : i32
    return %c0_i32, %c0_i32_0 : i32, i32
  }
  func.func @transform_4(%arg0: i32) -> (i32, i32) {
    %c0_i32 = arith.constant 0 : i32
    %c0_i32_0 = arith.constant 0 : i32
    %c0_i32_1 = arith.constant 0 : i32
    return %c0_i32, %c0_i32_0 : i32, i32
  }
  func.func @transform_5(%arg0: i32) -> (i32, i32) {
    %c0_i32 = arith.constant 0 : i32
    %c0_i32_0 = arith.constant 0 : i32
    %c0_i32_1 = arith.constant 0 : i32
    return %c0_i32, %c0_i32_0 : i32, i32
  }
  func.func @transform_6(%arg0: i32) -> (i32, i32) {
    %c0_i32 = arith.constant 0 : i32
    %c0_i32_0 = arith.constant 0 : i32
    %c0_i32_1 = arith.constant 0 : i32
    return %c0_i32, %c0_i32_0 : i32, i32
  }
  func.func @transform_7(%arg0: i32) -> (i32, i32) {
    %c0_i32 = arith.constant 0 : i32
    %c0_i32_0 = arith.constant 0 : i32
    %c0_i32_1 = arith.constant 0 : i32
    return %c0_i32, %c0_i32_0 : i32, i32
  }
  func.func @transform_8(%arg0: i32) -> (i32, i32) {
    %c0_i32 = arith.constant 0 : i32
    %c0_i32_0 = arith.constant 0 : i32
    %c0_i32_1 = arith.constant 0 : i32
    return %c0_i32, %c0_i32_0 : i32, i32
  }
  func.func @transform_9(%arg0: i32) -> (i32, i32) {
    %c0_i32 = arith.constant 0 : i32
    %c0_i32_0 = arith.constant 0 : i32
    %c0_i32_1 = arith.constant 0 : i32
    return %c0_i32, %c0_i32_0 : i32, i32
  }
  func.func @transform_10(%arg0: i32) -> (i32, i32) {
    %c0_i32 = arith.constant 0 : i32
    %c0_i32_0 = arith.constant 0 : i32
    %c0_i32_1 = arith.constant 0 : i32
    return %c0_i32, %c0_i32_0 : i32, i32
  }
  func.func @transform_11(%arg0: i32) -> (i32, i32) {
    %c0_i32 = arith.constant 0 : i32
    %c0_i32_0 = arith.constant 0 : i32
    %c0_i32_1 = arith.constant 0 : i32
    return %c0_i32, %c0_i32_0 : i32, i32
  }
  func.func @transform_12(%arg0: i32) -> (i32, i32) {
    %c0_i32 = arith.constant 0 : i32
    %c0_i32_0 = arith.constant 0 : i32
    %c0_i32_1 = arith.constant 0 : i32
    return %c0_i32, %c0_i32_0 : i32, i32
  }
  func.func @transform_13(%arg0: i32) -> (i32, i32) {
    %c0_i32 = arith.constant 0 : i32
    %c0_i32_0 = arith.constant 0 : i32
    %c0_i32_1 = arith.constant 0 : i32
    return %c0_i32, %c0_i32_0 : i32, i32
  }
  func.func @transform_14(%arg0: i32) -> (i32, i32) {
    %c0_i32 = arith.constant 0 : i32
    %c0_i32_0 = arith.constant 0 : i32
    %c0_i32_1 = arith.constant 0 : i32
    return %c0_i32, %c0_i32_0 : i32, i32
  }
  func.func @transform_15(%arg0: i32) -> (i32, i32) {
    %c0_i32 = arith.constant 0 : i32
    %c0_i32_0 = arith.constant 0 : i32
    %c0_i32_1 = arith.constant 0 : i32
    return %c0_i32, %c0_i32_0 : i32, i32
  }
  func.func @transform_16(%arg0: i32) -> (i32, i32) {
    %c0_i32 = arith.constant 0 : i32
    %c0_i32_0 = arith.constant 0 : i32
    %c0_i32_1 = arith.constant 0 : i32
    return %c0_i32, %c0_i32_0 : i32, i32
  }
  func.func @transform_17(%arg0: i32) -> (i32, i32) {
    %c0_i32 = arith.constant 0 : i32
    %c0_i32_0 = arith.constant 0 : i32
    %c0_i32_1 = arith.constant 0 : i32
    return %c0_i32, %c0_i32_0 : i32, i32
  }
  func.func @transform_18(%arg0: i32) -> (i32, i32) {
    %c0_i32 = arith.constant 0 : i32
    %c0_i32_0 = arith.constant 0 : i32
    %c0_i32_1 = arith.constant 0 : i32
    return %c0_i32, %c0_i32_0 : i32, i32
  }
  func.func @transform_19(%arg0: i32) -> (i32, i32, i32) {
    %c0_i32 = arith.constant 0 : i32
    %c0_i32_0 = arith.constant 0 : i32
    %c0_i32_1 = arith.constant 0 : i32
    return %arg0, %c0_i32, %c0_i32_0 : i32, i32, i32
  }
}

module attributes {stable_mosaic.version = 11 : i64} {
  func.func @_unit_kernel(%arg0: i32, %arg1: memref<1x12x256xf32, #tpu.memory_space<vmem>>, %arg2: memref<12x1xf32, #tpu.memory_space<vmem>>, %arg3: memref<12x1xf32, #tpu.memory_space<vmem>>, %arg4: memref<1x256xf32, #tpu.memory_space<vmem>>, %arg5: memref<1x256xf32, #tpu.memory_space<vmem>>, %arg6: memref<8x108xf32, #tpu.memory_space<vmem>>, %arg7: memref<8x1xf32, #tpu.memory_space<vmem>>, %arg8: memref<8x1xf32, #tpu.memory_space<vmem>>, %arg9: memref<32x8xf32, #tpu.memory_space<vmem>>, %arg10: memref<16x4xf32, #tpu.memory_space<vmem>>, %arg11: memref<16x1xf32, #tpu.memory_space<vmem>>, %arg12: memref<16x256xf32, #tpu.memory_space<vmem>>, %arg13: memref<16x256xf32, #tpu.memory_space<vmem>>, %arg14: memref<16x256xf32, #tpu.memory_space<vmem>>, %arg15: memref<1x256xf32, #tpu.memory_space<vmem>>, %arg16: memref<16x256xf32, #tpu.memory_space<vmem>>, %arg17: memref<1x256xf32, #tpu.memory_space<vmem>>, %arg18: memref<16x1xf32, #tpu.memory_space<vmem>>, %arg19: memref<8x16xf32, #tpu.memory_space<vmem>>, %arg20: memref<1x8x256xf32, #tpu.memory_space<vmem>>, %arg21: memref<256x256xf32, #tpu.memory_space<vmem>>, %arg22: memref<256x256xf32, #tpu.memory_space<vmem>>, %arg23: memref<256x256xf32, #tpu.memory_space<vmem>>) attributes {dimension_semantics = [#tpu.dimension_semantics<parallel>], iteration_bounds = array<i64: 2>, scalar_prefetch = 0 : i64, scratch_operands = 3 : i64, tpu.core_type = #tpu.core_type<tc>, window_params = [{transform_indices = @transform_0, window_bounds = array<i64: 1, 12, 256>}, {pipeline_mode = #tpu.pipeline_mode<synchronous>, transform_indices = @transform_1, window_bounds = array<i64: 12, 1>}, {pipeline_mode = #tpu.pipeline_mode<synchronous>, transform_indices = @transform_2, window_bounds = array<i64: 12, 1>}, {pipeline_mode = #tpu.pipeline_mode<synchronous>, transform_indices = @transform_3, window_bounds = array<i64: 1, 256>}, {pipeline_mode = #tpu.pipeline_mode<synchronous>, transform_indices = @transform_4, window_bounds = array<i64: 1, 256>}, {pipeline_mode = #tpu.pipeline_mode<synchronous>, transform_indices = @transform_5, window_bounds = array<i64: 8, 108>}, {pipeline_mode = #tpu.pipeline_mode<synchronous>, transform_indices = @transform_6, window_bounds = array<i64: 8, 1>}, {pipeline_mode = #tpu.pipeline_mode<synchronous>, transform_indices = @transform_7, window_bounds = array<i64: 8, 1>}, {pipeline_mode = #tpu.pipeline_mode<synchronous>, transform_indices = @transform_8, window_bounds = array<i64: 32, 8>}, {pipeline_mode = #tpu.pipeline_mode<synchronous>, transform_indices = @transform_9, window_bounds = array<i64: 16, 4>}, {pipeline_mode = #tpu.pipeline_mode<synchronous>, transform_indices = @transform_10, window_bounds = array<i64: 16, 1>}, {pipeline_mode = #tpu.pipeline_mode<synchronous>, transform_indices = @transform_11, window_bounds = array<i64: 16, 256>}, {pipeline_mode = #tpu.pipeline_mode<synchronous>, transform_indices = @transform_12, window_bounds = array<i64: 16, 256>}, {pipeline_mode = #tpu.pipeline_mode<synchronous>, transform_indices = @transform_13, window_bounds = array<i64: 16, 256>}, {pipeline_mode = #tpu.pipeline_mode<synchronous>, transform_indices = @transform_14, window_bounds = array<i64: 1, 256>}, {pipeline_mode = #tpu.pipeline_mode<synchronous>, transform_indices = @transform_15, window_bounds = array<i64: 16, 256>}, {pipeline_mode = #tpu.pipeline_mode<synchronous>, transform_indices = @transform_16, window_bounds = array<i64: 1, 256>}, {pipeline_mode = #tpu.pipeline_mode<synchronous>, transform_indices = @transform_17, window_bounds = array<i64: 16, 1>}, {pipeline_mode = #tpu.pipeline_mode<synchronous>, transform_indices = @transform_18, window_bounds = array<i64: 8, 16>}, {transform_indices = @transform_19, window_bounds = array<i64: 1, 8, 256>}]} {
    %c0 = arith.constant 0 : index
    %c0_0 = arith.constant 0 : index
    %c0_1 = arith.constant 0 : index
    %0 = vector.load %arg1[%c0, %c0_0, %c0_1] : memref<1x12x256xf32, #tpu.memory_space<vmem>>, vector<1x12x256xf32>
    %1 = vector.shape_cast %0 : vector<1x12x256xf32> to vector<12x256xf32>
    %c0_2 = arith.constant 0 : index
    %c0_3 = arith.constant 0 : index
    %2 = vector.load %arg2[%c0_2, %c0_3] : memref<12x1xf32, #tpu.memory_space<vmem>>, vector<12x1xf32>
    %3 = vector.broadcast %2 : vector<12x1xf32> to vector<12x256xf32>
    %4 = arith.mulf %1, %3 : vector<12x256xf32>
    %c0_4 = arith.constant 0 : index
    %c0_5 = arith.constant 0 : index
    %5 = vector.load %arg3[%c0_4, %c0_5] : memref<12x1xf32, #tpu.memory_space<vmem>>, vector<12x1xf32>
    %6 = vector.broadcast %5 : vector<12x1xf32> to vector<12x256xf32>
    %7 = arith.addf %4, %6 : vector<12x256xf32>
    %cst = arith.constant 0.000000e+00 : f32
    %8 = vector.broadcast %cst : f32 to vector<12x256xf32>
    %9 = arith.maximumf %7, %8 : vector<12x256xf32>
    %cst_6 = arith.constant 0.000000e+00 : f32
    %10 = vector.broadcast %cst_6 : f32 to vector<12x17xf32>
    %cst_7 = arith.constant 0.000000e+00 : f32
    %11 = vector.broadcast %cst_7 : f32 to vector<12x17xf32>
    %12 = tpu.concatenate %10, %9, %11 in 1 : vector<12x17xf32>, vector<12x256xf32>, vector<12x17xf32> -> vector<12x290xf32>
    %c0_8 = arith.constant 0 : index
    %c0_9 = arith.constant 0 : index
    %13 = vector.load %arg4[%c0_8, %c0_9] : memref<1x256xf32, #tpu.memory_space<vmem>>, vector<1x256xf32>
    %c0_10 = arith.constant 0 : index
    %c0_11 = arith.constant 0 : index
    %14 = vector.load %arg5[%c0_10, %c0_11] : memref<1x256xf32, #tpu.memory_space<vmem>>, vector<1x256xf32>
    %15 = vector.extract_strided_slice %12 {offsets = [0, 0], sizes = [12, 256], strides = [1, 1]} : vector<12x290xf32> to vector<12x256xf32>
    %16 = vector.broadcast %13 : vector<1x256xf32> to vector<12x256xf32>
    %17 = arith.mulf %15, %16 : vector<12x256xf32>
    %18 = vector.extract_strided_slice %12 {offsets = [0, 1], sizes = [12, 256], strides = [1, 1]} : vector<12x290xf32> to vector<12x256xf32>
    %19 = vector.extract_strided_slice %12 {offsets = [0, 2], sizes = [12, 256], strides = [1, 1]} : vector<12x290xf32> to vector<12x256xf32>
    %20 = vector.broadcast %14 : vector<1x256xf32> to vector<12x256xf32>
    %21 = arith.mulf %19, %20 : vector<12x256xf32>
    %22 = vector.extract_strided_slice %12 {offsets = [0, 16], sizes = [12, 256], strides = [1, 1]} : vector<12x290xf32> to vector<12x256xf32>
    %23 = vector.broadcast %13 : vector<1x256xf32> to vector<12x256xf32>
    %24 = arith.mulf %22, %23 : vector<12x256xf32>
    %25 = vector.extract_strided_slice %12 {offsets = [0, 17], sizes = [12, 256], strides = [1, 1]} : vector<12x290xf32> to vector<12x256xf32>
    %26 = vector.extract_strided_slice %12 {offsets = [0, 18], sizes = [12, 256], strides = [1, 1]} : vector<12x290xf32> to vector<12x256xf32>
    %27 = vector.broadcast %14 : vector<1x256xf32> to vector<12x256xf32>
    %28 = arith.mulf %26, %27 : vector<12x256xf32>
    %29 = vector.extract_strided_slice %12 {offsets = [0, 32], sizes = [12, 256], strides = [1, 1]} : vector<12x290xf32> to vector<12x256xf32>
    %30 = vector.broadcast %13 : vector<1x256xf32> to vector<12x256xf32>
    %31 = arith.mulf %29, %30 : vector<12x256xf32>
    %32 = vector.extract_strided_slice %12 {offsets = [0, 33], sizes = [12, 256], strides = [1, 1]} : vector<12x290xf32> to vector<12x256xf32>
    %33 = vector.extract_strided_slice %12 {offsets = [0, 34], sizes = [12, 256], strides = [1, 1]} : vector<12x290xf32> to vector<12x256xf32>
    %34 = vector.broadcast %14 : vector<1x256xf32> to vector<12x256xf32>
    %35 = arith.mulf %33, %34 : vector<12x256xf32>
    %36 = tpu.concatenate %17, %18, %21, %24, %25, %28, %31, %32, %35 in 0 : vector<12x256xf32>, vector<12x256xf32>, vector<12x256xf32>, vector<12x256xf32>, vector<12x256xf32>, vector<12x256xf32>, vector<12x256xf32>, vector<12x256xf32>, vector<12x256xf32> -> vector<108x256xf32>
    %c0_12 = arith.constant 0 : index
    %c0_13 = arith.constant 0 : index
    %37 = vector.load %arg6[%c0_12, %c0_13] : memref<8x108xf32, #tpu.memory_space<vmem>>, vector<8x108xf32>
    %cst_14 = arith.constant dense<0.000000e+00> : vector<8x256xf32>
    %38 = tpu.matmul %37, %36, %cst_14 {dimension_numbers = #tpu.dot_dimension_numbers<[1], [0], [0], [1], [0, 0, 1, 1], [], []>} : vector<8x108xf32>, vector<108x256xf32>, vector<8x256xf32> -> vector<8x256xf32>
    %cst_15 = arith.constant dense<0.000000e+00> : vector<256xf32>
    %39 = vector.multi_reduction <add>, %38, %cst_15 [0] : vector<8x256xf32> to vector<256xf32>
    %40 = vector.shape_cast %39 : vector<256xf32> to vector<1x256xf32>
    %cst_16 = arith.constant 8.000000e+00 : f32
    %41 = vector.broadcast %cst_16 : f32 to vector<1x256xf32>
    %42 = arith.divf %40, %41 : vector<1x256xf32>
    %43 = vector.broadcast %42 : vector<1x256xf32> to vector<8x256xf32>
    %44 = arith.subf %38, %43 : vector<8x256xf32>
    %45 = arith.mulf %44, %44 : vector<8x256xf32>
    %cst_17 = arith.constant dense<0.000000e+00> : vector<256xf32>
    %46 = vector.multi_reduction <add>, %45, %cst_17 [0] : vector<8x256xf32> to vector<256xf32>
    %47 = vector.shape_cast %46 : vector<256xf32> to vector<1x256xf32>
    %cst_18 = arith.constant 8.000000e+00 : f32
    %48 = vector.broadcast %cst_18 : f32 to vector<1x256xf32>
    %49 = arith.divf %47, %48 : vector<1x256xf32>
    %cst_19 = arith.constant 9.99999974E-6 : f32
    %50 = vector.broadcast %cst_19 : f32 to vector<1x256xf32>
    %51 = arith.addf %49, %50 : vector<1x256xf32>
    %52 = math.rsqrt %51 : vector<1x256xf32>
    %53 = vector.broadcast %52 : vector<1x256xf32> to vector<8x256xf32>
    %54 = arith.mulf %44, %53 : vector<8x256xf32>
    %c0_20 = arith.constant 0 : index
    %c0_21 = arith.constant 0 : index
    %55 = vector.load %arg7[%c0_20, %c0_21] : memref<8x1xf32, #tpu.memory_space<vmem>>, vector<8x1xf32>
    %56 = vector.broadcast %55 : vector<8x1xf32> to vector<8x256xf32>
    %57 = arith.mulf %54, %56 : vector<8x256xf32>
    %c0_22 = arith.constant 0 : index
    %c0_23 = arith.constant 0 : index
    %58 = vector.load %arg8[%c0_22, %c0_23] : memref<8x1xf32, #tpu.memory_space<vmem>>, vector<8x1xf32>
    %59 = vector.broadcast %58 : vector<8x1xf32> to vector<8x256xf32>
    %60 = arith.addf %57, %59 : vector<8x256xf32>
    %c0_24 = arith.constant 0 : index
    %c0_25 = arith.constant 0 : index
    %61 = vector.load %arg9[%c0_24, %c0_25] : memref<32x8xf32, #tpu.memory_space<vmem>>, vector<32x8xf32>
    %cst_26 = arith.constant dense<0.000000e+00> : vector<32x256xf32>
    %62 = tpu.matmul %61, %60, %cst_26 {dimension_numbers = #tpu.dot_dimension_numbers<[1], [0], [0], [1], [0, 0, 1, 1], [], []>} : vector<32x8xf32>, vector<8x256xf32>, vector<32x256xf32> -> vector<32x256xf32>
    %63 = vector.extract_strided_slice %62 {offsets = [0, 0], sizes = [16, 256], strides = [1, 1]} : vector<32x256xf32> to vector<16x256xf32>
    %64 = vector.extract_strided_slice %62 {offsets = [16, 0], sizes = [16, 256], strides = [1, 1]} : vector<32x256xf32> to vector<16x256xf32>
    %cst_27 = arith.constant 0.000000e+00 : f32
    %65 = vector.broadcast %cst_27 : f32 to vector<16x3xf32>
    %66 = tpu.concatenate %65, %63 in 1 : vector<16x3xf32>, vector<16x256xf32> -> vector<16x259xf32>
    %cst_28 = arith.constant 0.000000e+00 : f32
    %67 = vector.broadcast %cst_28 : f32 to vector<16x256xf32>
    %c0_29 = arith.constant 0 : index
    %c0_30 = arith.constant 0 : index
    %68 = vector.load %arg10[%c0_29, %c0_30] : memref<16x4xf32, #tpu.memory_space<vmem>>, vector<16x1xf32>
    %69 = vector.extract_strided_slice %66 {offsets = [0, 0], sizes = [16, 256], strides = [1, 1]} : vector<16x259xf32> to vector<16x256xf32>
    %70 = vector.broadcast %68 : vector<16x1xf32> to vector<16x256xf32>
    %71 = arith.mulf %70, %69 : vector<16x256xf32>
    %72 = arith.addf %67, %71 : vector<16x256xf32>
    %c0_31 = arith.constant 0 : index
    %c1 = arith.constant 1 : index
    %73 = vector.load %arg10[%c0_31, %c1] : memref<16x4xf32, #tpu.memory_space<vmem>>, vector<16x1xf32>
    %74 = vector.extract_strided_slice %66 {offsets = [0, 1], sizes = [16, 256], strides = [1, 1]} : vector<16x259xf32> to vector<16x256xf32>
    %75 = vector.broadcast %73 : vector<16x1xf32> to vector<16x256xf32>
    %76 = arith.mulf %75, %74 : vector<16x256xf32>
    %77 = arith.addf %72, %76 : vector<16x256xf32>
    %c0_32 = arith.constant 0 : index
    %c2 = arith.constant 2 : index
    %78 = vector.load %arg10[%c0_32, %c2] : memref<16x4xf32, #tpu.memory_space<vmem>>, vector<16x1xf32>
    %79 = vector.extract_strided_slice %66 {offsets = [0, 2], sizes = [16, 256], strides = [1, 1]} : vector<16x259xf32> to vector<16x256xf32>
    %80 = vector.broadcast %78 : vector<16x1xf32> to vector<16x256xf32>
    %81 = arith.mulf %80, %79 : vector<16x256xf32>
    %82 = arith.addf %77, %81 : vector<16x256xf32>
    %c0_33 = arith.constant 0 : index
    %c3 = arith.constant 3 : index
    %83 = vector.load %arg10[%c0_33, %c3] : memref<16x4xf32, #tpu.memory_space<vmem>>, vector<16x1xf32>
    %84 = vector.extract_strided_slice %66 {offsets = [0, 3], sizes = [16, 256], strides = [1, 1]} : vector<16x259xf32> to vector<16x256xf32>
    %85 = vector.broadcast %83 : vector<16x1xf32> to vector<16x256xf32>
    %86 = arith.mulf %85, %84 : vector<16x256xf32>
    %87 = arith.addf %82, %86 : vector<16x256xf32>
    %c0_34 = arith.constant 0 : index
    %c0_35 = arith.constant 0 : index
    %88 = vector.load %arg11[%c0_34, %c0_35] : memref<16x1xf32, #tpu.memory_space<vmem>>, vector<16x1xf32>
    %89 = vector.broadcast %88 : vector<16x1xf32> to vector<16x256xf32>
    %90 = arith.addf %87, %89 : vector<16x256xf32>
    %91 = arith.negf %90 : vector<16x256xf32>
    %92 = math.exp %91 : vector<16x256xf32>
    %cst_36 = arith.constant 1.000000e+00 : f32
    %93 = vector.broadcast %cst_36 : f32 to vector<16x256xf32>
    %94 = arith.addf %93, %92 : vector<16x256xf32>
    %95 = arith.divf %93, %94 : vector<16x256xf32>
    %96 = arith.mulf %90, %95 : vector<16x256xf32>
    %97 = tpu.transpose %96, [1, 0] : vector<16x256xf32> -> vector<256x16xf32>
    %c0_37 = arith.constant 0 : index
    %c0_38 = arith.constant 0 : index
    %98 = vector.load %arg12[%c0_37, %c0_38] : memref<16x256xf32, #tpu.memory_space<vmem>>, vector<16x256xf32>
    %cst_39 = arith.constant dense<0.000000e+00> : vector<256x256xf32>
    %99 = tpu.matmul %97, %98, %cst_39 {dimension_numbers = #tpu.dot_dimension_numbers<[1], [0], [0], [1], [0, 0, 1, 1], [], []>} : vector<256x16xf32>, vector<16x256xf32>, vector<256x256xf32> -> vector<256x256xf32>
    %c0_40 = arith.constant 0 : index
    %c0_41 = arith.constant 0 : index
    %100 = vector.load %arg16[%c0_40, %c0_41] : memref<16x256xf32, #tpu.memory_space<vmem>>, vector<16x256xf32>
    %cst_42 = arith.constant dense<0.000000e+00> : vector<256x256xf32>
    %101 = tpu.matmul %97, %100, %cst_42 {dimension_numbers = #tpu.dot_dimension_numbers<[1], [0], [0], [1], [0, 0, 1, 1], [], []>} : vector<256x16xf32>, vector<16x256xf32>, vector<256x256xf32> -> vector<256x256xf32>
    %102 = arith.mulf %99, %101 : vector<256x256xf32>
    %c0_43 = arith.constant 0 : index
    %c0_44 = arith.constant 0 : index
    %103 = vector.load %arg14[%c0_43, %c0_44] : memref<16x256xf32, #tpu.memory_space<vmem>>, vector<16x256xf32>
    %cst_45 = arith.constant dense<0.000000e+00> : vector<256x256xf32>
    %104 = tpu.matmul %97, %103, %cst_45 {dimension_numbers = #tpu.dot_dimension_numbers<[1], [0], [0], [1], [0, 0, 1, 1], [], []>} : vector<256x16xf32>, vector<16x256xf32>, vector<256x256xf32> -> vector<256x256xf32>
    %c0_46 = arith.constant 0 : index
    %c0_47 = arith.constant 0 : index
    %105 = vector.load %arg15[%c0_46, %c0_47] : memref<1x256xf32, #tpu.memory_space<vmem>>, vector<1x256xf32>
    %106 = vector.broadcast %105 : vector<1x256xf32> to vector<256x256xf32>
    %107 = arith.addf %104, %106 : vector<256x256xf32>
    %cst_48 = arith.constant 0.000000e+00 : f32
    %108 = vector.broadcast %cst_48 : f32 to vector<256x256xf32>
    %109 = arith.maximumf %107, %108 : vector<256x256xf32>
    %110 = math.absf %107 : vector<256x256xf32>
    %cst_49 = arith.constant 0.000000e+00 : f32
    %111 = vector.broadcast %cst_49 : f32 to vector<256x256xf32>
    %112 = arith.subf %111, %110 : vector<256x256xf32>
    %113 = math.exp %112 : vector<256x256xf32>
    %114 = math.log1p %113 : vector<256x256xf32>
    %115 = arith.addf %109, %114 : vector<256x256xf32>
    %c0_50 = arith.constant 0 : index
    %c0_51 = arith.constant 0 : index
    %116 = vector.load %arg17[%c0_50, %c0_51] : memref<1x256xf32, #tpu.memory_space<vmem>>, vector<1x256xf32>
    %117 = vector.broadcast %116 : vector<1x256xf32> to vector<256x256xf32>
    %118 = arith.mulf %115, %117 : vector<256x256xf32>
    %119 = math.exp %118 : vector<256x256xf32>
    %c0_52 = arith.constant 0 : index
    %c0_53 = arith.constant 0 : index
    %120 = vector.load %arg21[%c0_52, %c0_53] : memref<256x256xf32, #tpu.memory_space<vmem>>, vector<256x256xf32>
    tpu.vector_store %arg21[%c0_52, %c0_53], %119 {strides = array<i32>} : memref<256x256xf32, #tpu.memory_space<vmem>>, vector<256x256xf32>,
    %121 = arith.mulf %102, %115 : vector<256x256xf32>
    %c0_54 = arith.constant 0 : index
    %c0_55 = arith.constant 0 : index
    %122 = vector.load %arg22[%c0_54, %c0_55] : memref<256x256xf32, #tpu.memory_space<vmem>>, vector<256x256xf32>
    tpu.vector_store %arg22[%c0_54, %c0_55], %121 {strides = array<i32>} : memref<256x256xf32, #tpu.memory_space<vmem>>, vector<256x256xf32>,
    %cst_56 = arith.constant 0.000000e+00 : f32
    %123 = vector.broadcast %cst_56 : f32 to vector<1x256xf32>
    %c0_i32 = arith.constant 0 : i32
    %c32_i32 = arith.constant 32 : i32
    %124 = arith.addi %c0_i32, %c32_i32 : i32
    %c1_i32 = arith.constant 1 : i32
    %125 = scf.for %arg24 = %c0_i32 to %124 step %c1_i32 iter_args(%arg25 = %123) -> (vector<1x256xf32>)  : i32 {
      %c8_i32 = arith.constant 8 : i32
      %148 = arith.muli %arg24, %c8_i32 : i32
      %149 = tpu.assume_multiple %148, 8 : i32
      %150 = arith.index_cast %149 : i32 to index
      %c0_75 = arith.constant 0 : index
      %151 = vector.load %arg21[%150, %c0_75] : memref<256x256xf32, #tpu.memory_space<vmem>>, vector<8x256xf32>
      %152 = arith.index_cast %149 : i32 to index
      %c0_76 = arith.constant 0 : index
      %153 = vector.load %arg22[%152, %c0_76] : memref<256x256xf32, #tpu.memory_space<vmem>>, vector<8x256xf32>
      %cst_77 = arith.constant 1.000000e+00 : f32
      %154 = vector.broadcast %cst_77 : f32 to vector<1x256xf32>
      %155 = vector.extract_strided_slice %151 {offsets = [0, 0], sizes = [7, 256], strides = [1, 1]} : vector<8x256xf32> to vector<7x256xf32>
      %156 = tpu.concatenate %154, %155 in 0 : vector<1x256xf32>, vector<7x256xf32> -> vector<8x256xf32>
      %cst_78 = arith.constant 0.000000e+00 : f32
      %157 = vector.broadcast %cst_78 : f32 to vector<1x256xf32>
      %158 = vector.extract_strided_slice %153 {offsets = [0, 0], sizes = [7, 256], strides = [1, 1]} : vector<8x256xf32> to vector<7x256xf32>
      %159 = tpu.concatenate %157, %158 in 0 : vector<1x256xf32>, vector<7x256xf32> -> vector<8x256xf32>
      %160 = arith.mulf %151, %159 : vector<8x256xf32>
      %161 = arith.addf %160, %153 : vector<8x256xf32>
      %162 = arith.mulf %151, %156 : vector<8x256xf32>
      %cst_79 = arith.constant 1.000000e+00 : f32
      %163 = vector.broadcast %cst_79 : f32 to vector<2x256xf32>
      %164 = vector.extract_strided_slice %162 {offsets = [0, 0], sizes = [6, 256], strides = [1, 1]} : vector<8x256xf32> to vector<6x256xf32>
      %165 = tpu.concatenate %163, %164 in 0 : vector<2x256xf32>, vector<6x256xf32> -> vector<8x256xf32>
      %cst_80 = arith.constant 0.000000e+00 : f32
      %166 = vector.broadcast %cst_80 : f32 to vector<2x256xf32>
      %167 = vector.extract_strided_slice %161 {offsets = [0, 0], sizes = [6, 256], strides = [1, 1]} : vector<8x256xf32> to vector<6x256xf32>
      %168 = tpu.concatenate %166, %167 in 0 : vector<2x256xf32>, vector<6x256xf32> -> vector<8x256xf32>
      %169 = arith.mulf %162, %168 : vector<8x256xf32>
      %170 = arith.addf %169, %161 : vector<8x256xf32>
      %171 = arith.mulf %162, %165 : vector<8x256xf32>
      %cst_81 = arith.constant 1.000000e+00 : f32
      %172 = vector.broadcast %cst_81 : f32 to vector<4x256xf32>
      %173 = vector.extract_strided_slice %171 {offsets = [0, 0], sizes = [4, 256], strides = [1, 1]} : vector<8x256xf32> to vector<4x256xf32>
      %174 = tpu.concatenate %172, %173 in 0 : vector<4x256xf32>, vector<4x256xf32> -> vector<8x256xf32>
      %cst_82 = arith.constant 0.000000e+00 : f32
      %175 = vector.broadcast %cst_82 : f32 to vector<4x256xf32>
      %176 = vector.extract_strided_slice %170 {offsets = [0, 0], sizes = [4, 256], strides = [1, 1]} : vector<8x256xf32> to vector<4x256xf32>
      %177 = tpu.concatenate %175, %176 in 0 : vector<4x256xf32>, vector<4x256xf32> -> vector<8x256xf32>
      %178 = arith.mulf %171, %177 : vector<8x256xf32>
      %179 = arith.addf %178, %170 : vector<8x256xf32>
      %180 = arith.mulf %171, %174 : vector<8x256xf32>
      %181 = vector.broadcast %arg25 : vector<1x256xf32> to vector<8x256xf32>
      %182 = arith.mulf %180, %181 : vector<8x256xf32>
      %183 = arith.addf %182, %179 : vector<8x256xf32>
      %184 = arith.index_cast %149 : i32 to index
      %c0_83 = arith.constant 0 : index
      %185 = vector.load %arg23[%184, %c0_83] : memref<256x256xf32, #tpu.memory_space<vmem>>, vector<8x256xf32>
      tpu.vector_store %arg23[%184, %c0_83], %183 {strides = array<i32>} : memref<256x256xf32, #tpu.memory_space<vmem>>, vector<8x256xf32>,
      %186 = vector.extract_strided_slice %183 {offsets = [7, 0], sizes = [1, 256], strides = [1, 1]} : vector<8x256xf32> to vector<1x256xf32>
      scf.yield %186 : vector<1x256xf32>
    }
    %c32_i32_57 = arith.constant 32 : i32
    %c0_58 = arith.constant 0 : index
    %c0_59 = arith.constant 0 : index
    %126 = vector.load %arg13[%c0_58, %c0_59] : memref<16x256xf32, #tpu.memory_space<vmem>>, vector<16x256xf32>
    %cst_60 = arith.constant dense<0.000000e+00> : vector<256x256xf32>
    %127 = tpu.matmul %97, %126, %cst_60 {dimension_numbers = #tpu.dot_dimension_numbers<[1], [0], [0], [1], [0, 0, 1, 1], [], []>} : vector<256x16xf32>, vector<16x256xf32>, vector<256x256xf32> -> vector<256x256xf32>
    %c0_61 = arith.constant 0 : index
    %c0_62 = arith.constant 0 : index
    %128 = vector.load %arg16[%c0_61, %c0_62] : memref<16x256xf32, #tpu.memory_space<vmem>>, vector<16x256xf32>
    %c0_63 = arith.constant 0 : index
    %c0_64 = arith.constant 0 : index
    %129 = vector.load %arg23[%c0_63, %c0_64] : memref<256x256xf32, #tpu.memory_space<vmem>>, vector<256x256xf32>
    %130 = arith.mulf %129, %127 : vector<256x256xf32>
    %cst_65 = arith.constant dense<0.000000e+00> : vector<16x256xf32>
    %131 = tpu.matmul %128, %130, %cst_65 {dimension_numbers = #tpu.dot_dimension_numbers<[1], [1], [0], [0], [0, 0, 1, 0], [], []>} : vector<16x256xf32>, vector<256x256xf32>, vector<16x256xf32> -> vector<16x256xf32>
    %c0_66 = arith.constant 0 : index
    %c0_67 = arith.constant 0 : index
    %132 = vector.load %arg18[%c0_66, %c0_67] : memref<16x1xf32, #tpu.memory_space<vmem>>, vector<16x1xf32>
    %133 = vector.broadcast %132 : vector<16x1xf32> to vector<16x256xf32>
    %134 = arith.mulf %133, %96 : vector<16x256xf32>
    %135 = arith.addf %131, %134 : vector<16x256xf32>
    %136 = arith.negf %64 : vector<16x256xf32>
    %137 = math.exp %136 : vector<16x256xf32>
    %cst_68 = arith.constant 1.000000e+00 : f32
    %138 = vector.broadcast %cst_68 : f32 to vector<16x256xf32>
    %139 = arith.addf %138, %137 : vector<16x256xf32>
    %140 = arith.divf %138, %139 : vector<16x256xf32>
    %141 = arith.mulf %64, %140 : vector<16x256xf32>
    %142 = arith.mulf %135, %141 : vector<16x256xf32>
    %c0_69 = arith.constant 0 : index
    %c0_70 = arith.constant 0 : index
    %143 = vector.load %arg19[%c0_69, %c0_70] : memref<8x16xf32, #tpu.memory_space<vmem>>, vector<8x16xf32>
    %cst_71 = arith.constant dense<0.000000e+00> : vector<8x256xf32>
    %144 = tpu.matmul %143, %142, %cst_71 {dimension_numbers = #tpu.dot_dimension_numbers<[1], [0], [0], [1], [0, 0, 1, 1], [], []>} : vector<8x16xf32>, vector<16x256xf32>, vector<8x256xf32> -> vector<8x256xf32>
    %c0_72 = arith.constant 0 : index
    %c0_73 = arith.constant 0 : index
    %c0_74 = arith.constant 0 : index
    %145 = vector.load %arg20[%c0_72, %c0_73, %c0_74] : memref<1x8x256xf32, #tpu.memory_space<vmem>>, vector<1x8x256xf32>
    %146 = vector.shape_cast %145 : vector<1x8x256xf32> to vector<8x256xf32>
    %147 = vector.shape_cast %144 : vector<8x256xf32> to vector<1x8x256xf32>
    tpu.vector_store %arg20[%c0_72, %c0_73, %c0_74], %147 {strides = array<i32>} : memref<1x8x256xf32, #tpu.memory_space<vmem>>, vector<1x8x256xf32>,
    return
  }
  func.func @transform_0(%arg0: i32) -> (i32, i32, i32) {
    %c0_i32 = arith.constant 0 : i32
    %c0_i32_0 = arith.constant 0 : i32
    %c0_i32_1 = arith.constant 0 : i32
    return %arg0, %c0_i32, %c0_i32_0 : i32, i32, i32
  }
  func.func @transform_1(%arg0: i32) -> (i32, i32) {
    %c0_i32 = arith.constant 0 : i32
    %c0_i32_0 = arith.constant 0 : i32
    %c0_i32_1 = arith.constant 0 : i32
    return %c0_i32, %c0_i32_0 : i32, i32
  }
  func.func @transform_2(%arg0: i32) -> (i32, i32) {
    %c0_i32 = arith.constant 0 : i32
    %c0_i32_0 = arith.constant 0 : i32
    %c0_i32_1 = arith.constant 0 : i32
    return %c0_i32, %c0_i32_0 : i32, i32
  }
  func.func @transform_3(%arg0: i32) -> (i32, i32) {
    %c0_i32 = arith.constant 0 : i32
    %c0_i32_0 = arith.constant 0 : i32
    %c0_i32_1 = arith.constant 0 : i32
    return %c0_i32, %c0_i32_0 : i32, i32
  }
  func.func @transform_4(%arg0: i32) -> (i32, i32) {
    %c0_i32 = arith.constant 0 : i32
    %c0_i32_0 = arith.constant 0 : i32
    %c0_i32_1 = arith.constant 0 : i32
    return %c0_i32, %c0_i32_0 : i32, i32
  }
  func.func @transform_5(%arg0: i32) -> (i32, i32) {
    %c0_i32 = arith.constant 0 : i32
    %c0_i32_0 = arith.constant 0 : i32
    %c0_i32_1 = arith.constant 0 : i32
    return %c0_i32, %c0_i32_0 : i32, i32
  }
  func.func @transform_6(%arg0: i32) -> (i32, i32) {
    %c0_i32 = arith.constant 0 : i32
    %c0_i32_0 = arith.constant 0 : i32
    %c0_i32_1 = arith.constant 0 : i32
    return %c0_i32, %c0_i32_0 : i32, i32
  }
  func.func @transform_7(%arg0: i32) -> (i32, i32) {
    %c0_i32 = arith.constant 0 : i32
    %c0_i32_0 = arith.constant 0 : i32
    %c0_i32_1 = arith.constant 0 : i32
    return %c0_i32, %c0_i32_0 : i32, i32
  }
  func.func @transform_8(%arg0: i32) -> (i32, i32) {
    %c0_i32 = arith.constant 0 : i32
    %c0_i32_0 = arith.constant 0 : i32
    %c0_i32_1 = arith.constant 0 : i32
    return %c0_i32, %c0_i32_0 : i32, i32
  }
  func.func @transform_9(%arg0: i32) -> (i32, i32) {
    %c0_i32 = arith.constant 0 : i32
    %c0_i32_0 = arith.constant 0 : i32
    %c0_i32_1 = arith.constant 0 : i32
    return %c0_i32, %c0_i32_0 : i32, i32
  }
  func.func @transform_10(%arg0: i32) -> (i32, i32) {
    %c0_i32 = arith.constant 0 : i32
    %c0_i32_0 = arith.constant 0 : i32
    %c0_i32_1 = arith.constant 0 : i32
    return %c0_i32, %c0_i32_0 : i32, i32
  }
  func.func @transform_11(%arg0: i32) -> (i32, i32) {
    %c0_i32 = arith.constant 0 : i32
    %c0_i32_0 = arith.constant 0 : i32
    %c0_i32_1 = arith.constant 0 : i32
    return %c0_i32, %c0_i32_0 : i32, i32
  }
  func.func @transform_12(%arg0: i32) -> (i32, i32) {
    %c0_i32 = arith.constant 0 : i32
    %c0_i32_0 = arith.constant 0 : i32
    %c0_i32_1 = arith.constant 0 : i32
    return %c0_i32, %c0_i32_0 : i32, i32
  }
  func.func @transform_13(%arg0: i32) -> (i32, i32) {
    %c0_i32 = arith.constant 0 : i32
    %c0_i32_0 = arith.constant 0 : i32
    %c0_i32_1 = arith.constant 0 : i32
    return %c0_i32, %c0_i32_0 : i32, i32
  }
  func.func @transform_14(%arg0: i32) -> (i32, i32) {
    %c0_i32 = arith.constant 0 : i32
    %c0_i32_0 = arith.constant 0 : i32
    %c0_i32_1 = arith.constant 0 : i32
    return %c0_i32, %c0_i32_0 : i32, i32
  }
  func.func @transform_15(%arg0: i32) -> (i32, i32) {
    %c0_i32 = arith.constant 0 : i32
    %c0_i32_0 = arith.constant 0 : i32
    %c0_i32_1 = arith.constant 0 : i32
    return %c0_i32, %c0_i32_0 : i32, i32
  }
  func.func @transform_16(%arg0: i32) -> (i32, i32) {
    %c0_i32 = arith.constant 0 : i32
    %c0_i32_0 = arith.constant 0 : i32
    %c0_i32_1 = arith.constant 0 : i32
    return %c0_i32, %c0_i32_0 : i32, i32
  }
  func.func @transform_17(%arg0: i32) -> (i32, i32) {
    %c0_i32 = arith.constant 0 : i32
    %c0_i32_0 = arith.constant 0 : i32
    %c0_i32_1 = arith.constant 0 : i32
    return %c0_i32, %c0_i32_0 : i32, i32
  }
  func.func @transform_18(%arg0: i32) -> (i32, i32) {
    %c0_i32 = arith.constant 0 : i32
    %c0_i32_0 = arith.constant 0 : i32
    %c0_i32_1 = arith.constant 0 : i32
    return %c0_i32, %c0_i32_0 : i32, i32
  }
  func.func @transform_19(%arg0: i32) -> (i32, i32, i32) {
    %c0_i32 = arith.constant 0 : i32
    %c0_i32_0 = arith.constant 0 : i32
    %c0_i32_1 = arith.constant 0 : i32
    return %arg0, %c0_i32, %c0_i32_0 : i32, i32, i32
  }
}

</mosaic_0001>

<llo_original>
// kernel: _lambda_.2
$region0: #{_lambda_.2}
  #allocation0 [shape = 'u32[]', space=smem, size = 0x4, offset = 0x4, fixed_abs, tag = 'smem constant byte address 0x4 - core index']
  #allocation1 [shape = 'u32[72,128]{1,0:T(1,128)}', space=vmem, size = 0x9000, scoped, tag = 'internal scratch']
  #allocation2 [shape = 'f32[256,256]{1,0:T(8,128)}', space=vmem, size = 0x40000, scoped, tag = 'scratch operand']
  #allocation3 [shape = 'f32[256,256]{1,0:T(8,128)}', space=vmem, size = 0x40000, scoped, tag = 'scratch operand']
  #allocation4 [shape = 'f32[256,256]{1,0:T(8,128)}', space=vmem, size = 0x40000, scoped, tag = 'scratch operand']
  %s0 = inlined_call_operand.vmem [shape: f32[2,4,256], index: 0, kind: input, shape index: {}]
  %s1 = inlined_call_operand.vmem [shape: f32[4,1], index: 1, kind: input, shape index: {}]
  %s2 = inlined_call_operand.vmem [shape: f32[4,1], index: 2, kind: input, shape index: {}]
  %s3 = inlined_call_operand.vmem [shape: f32[1,256], index: 3, kind: input, shape index: {}]
  %s4 = inlined_call_operand.vmem [shape: f32[1,256], index: 4, kind: input, shape index: {}]
  %s5 = inlined_call_operand.vmem [shape: f32[8,36], index: 5, kind: input, shape index: {}]
  %s6 = inlined_call_operand.vmem [shape: f32[8,1], index: 6, kind: input, shape index: {}]
  %s7 = inlined_call_operand.vmem [shape: f32[8,1], index: 7, kind: input, shape index: {}]
  %s8 = inlined_call_operand.vmem [shape: f32[32,8], index: 8, kind: input, shape index: {}]
  %s9 = inlined_call_operand.vmem [shape: f32[16,4], index: 9, kind: input, shape index: {}]
  %s10 = inlined_call_operand.vmem [shape: f32[16,1], index: 10, kind: input, shape index: {}]
  %s11 = inlined_call_operand.vmem [shape: f32[16,256], index: 11, kind: input, shape index: {}]
  %s12 = inlined_call_operand.vmem [shape: f32[16,256], index: 12, kind: input, shape index: {}]
  %s13 = inlined_call_operand.vmem [shape: f32[16,256], index: 13, kind: input, shape index: {}]
  %s14 = inlined_call_operand.vmem [shape: f32[1,256], index: 14, kind: input, shape index: {}]
  %s15 = inlined_call_operand.vmem [shape: f32[16,256], index: 15, kind: input, shape index: {}]
  %s16 = inlined_call_operand.vmem [shape: f32[1,256], index: 16, kind: input, shape index: {}]
  %s17 = inlined_call_operand.vmem [shape: f32[16,1], index: 17, kind: input, shape index: {}]
  %s18 = inlined_call_operand.vmem [shape: f32[8,16], index: 18, kind: input, shape index: {}]
  %s19 = inlined_call_operand.vmem [shape: f32[2,8,256], index: 19, kind: output, shape index: {}]
  %s20 = sld [smem:[#allocation0]]
  $region116: #{_lambda_.2} parent=0
    _
  %s22 = ssub.s32 1, %s20
  %s23 = scalar_select 0, %s22, %s20
  loop: start=0, step=1, limit=4
  $region2: #{_lambda_.2} parent=0 // loop_pre_header
    _
  $region3: #{_lambda_.2} parent=0 // loop_header
    %s25 = sphi 0, %s29
    %p26 = scmp.ge.s32.totalorder %s25, 4
    %s35 = sphi 0, %s37
    %s38 = sphi 0, %s35
    %s39 = sphi 0, %s38
    %s55 = sphi 0, %s39
    %s59 = sphi 0, %s59
    %s61 = sphi 0, %s59
    %s62 = sphi 0, %s61
    %s76 = sphi 0, %s62
    %s80 = sphi 0, %s80
    %s82 = sphi 0, %s80
    %s83 = sphi 0, %s82
    %s97 = sphi 0, %s83
    %s101 = sphi 0, %s101
    %s103 = sphi 0, %s101
    %s104 = sphi 0, %s103
    %s118 = sphi 0, %s104
    %s122 = sphi 0, %s122
    %s124 = sphi 0, %s122
    %s125 = sphi 0, %s124
    %s139 = sphi 0, %s125
    %s143 = sphi 0, %s143
    %s145 = sphi 0, %s143
    %s146 = sphi 0, %s145
    %s160 = sphi 0, %s146
    %s164 = sphi 0, %s164
    %s166 = sphi 0, %s164
    %s167 = sphi 0, %s166
    %s181 = sphi 0, %s167
    %s185 = sphi 0, %s185
    %s187 = sphi 0, %s185
    %s188 = sphi 0, %s187
    %s202 = sphi 0, %s188
    %s206 = sphi 0, %s206
    %s208 = sphi 0, %s206
    %s209 = sphi 0, %s208
    %s223 = sphi 0, %s209
    %s227 = sphi 0, %s227
    %s229 = sphi 0, %s227
    %s230 = sphi 0, %s229
    %s244 = sphi 0, %s230
    %s248 = sphi 0, %s248
    %s250 = sphi 0, %s248
    %s251 = sphi 0, %s250
    %s265 = sphi 0, %s251
    %s269 = sphi 0, %s269
    %s271 = sphi 0, %s269
    %s272 = sphi 0, %s271
    %s286 = sphi 0, %s272
    %s290 = sphi 0, %s290
    %s292 = sphi 0, %s290
    %s293 = sphi 0, %s292
    %s307 = sphi 0, %s293
    %s311 = sphi 0, %s311
    %s313 = sphi 0, %s311
    %s314 = sphi 0, %s313
    %s328 = sphi 0, %s314
    %s332 = sphi 0, %s332
    %s334 = sphi 0, %s332
    %s335 = sphi 0, %s334
    %s349 = sphi 0, %s335
    %s353 = sphi 0, %s353
    %s355 = sphi 0, %s353
    %s356 = sphi 0, %s355
    %s370 = sphi 0, %s356
    %s374 = sphi 0, %s374
    %s376 = sphi 0, %s374
    %s377 = sphi 0, %s376
    %s391 = sphi 0, %s377
    %s395 = sphi 0, %s395
    %s397 = sphi 0, %s395
    %s398 = sphi 0, %s397
    %s412 = sphi 0, %s398
    %s416 = sphi 0, %s416
    %s418 = sphi 0, %s416
    %s419 = sphi 0, %s418
    %s433 = sphi 0, %s419
    %s439 = sphi 0, %s441
    %s442 = sphi 0, %s439
    %s443 = sphi 0, %s442
    %s459 = sphi 0, %s443
  $region4: #{_lambda_.2} parent=0 // loop_header_branch
    %28 = sbr.rel (%p26) target = $region8
  $region5: #{_lambda_.2} parent=0 // loop_body
    %s30 = ssub.s32 %s25, 1
    %s31 = ssub.s32 %s25, 2
    %s32 = sadd.s32 %s25, 1
    %s33 = ssub.s32 %s25, %s32
    %p34 = scmp.eq.s32.totalorder %s33, 0
    %s36 = sadd.s32 %s35, 1
    %s37 = scalar_select %p34, %s35, %s36
    %p40 = pneg %p34
    %p41 = scmp.eq.s32.totalorder %s25, 1
    %p42 = por %p40, %p41
    %p43 = scmp.ne.s32.totalorder %s35, %s38
    %p44 = scmp.eq.s32.totalorder %s25, 0
    %p45 = por %p43, %p44
    %p46 = scmp.ne.s32.totalorder %s35, %s38
    %p47 = scmp.eq.s32.totalorder %s30, 1
    %p48 = por %p46, %p47
    %p49 = scmp.ne.s32.totalorder %s38, %s39
    %p50 = scmp.eq.s32.totalorder %s30, 0
    %p51 = por %p49, %p50
    %p52 = scmp.ne.s32.totalorder %s38, %s39
    %p53 = scmp.eq.s32.totalorder %s31, 1
    %p54 = por %p52, %p53
    %p56 = scmp.ne.s32.totalorder %s39, %s55
    %p57 = scmp.eq.s32.totalorder %s31, 0
    %p58 = por %p56, %p57
    %s60 = sadd.s32 %s59, 1
    %p63 = scmp.eq.s32.totalorder %s25, 1
    %p64 = scmp.ne.s32.totalorder %s59, %s61
    %p65 = scmp.eq.s32.totalorder %s25, 0
    %p66 = por %p64, %p65
    %p67 = scmp.ne.s32.totalorder %s59, %s61
    %p68 = scmp.eq.s32.totalorder %s30, 1
    %p69 = por %p67, %p68
    %p70 = scmp.ne.s32.totalorder %s61, %s62
    %p71 = scmp.eq.s32.totalorder %s30, 0
    %p72 = por %p70, %p71
    %p73 = scmp.ne.s32.totalorder %s61, %s62
    %p74 = scmp.eq.s32.totalorder %s31, 1
    %p75 = por %p73, %p74
    %p77 = scmp.ne.s32.totalorder %s62, %s76
    %p78 = scmp.eq.s32.totalorder %s31, 0
    %p79 = por %p77, %p78
    %s81 = sadd.s32 %s80, 1
    %p84 = scmp.eq.s32.totalorder %s25, 1
    %p85 = scmp.ne.s32.totalorder %s80, %s82
    %p86 = scmp.eq.s32.totalorder %s25, 0
    %p87 = por %p85, %p86
    %p88 = scmp.ne.s32.totalorder %s80, %s82
    %p89 = scmp.eq.s32.totalorder %s30, 1
    %p90 = por %p88, %p89
    %p91 = scmp.ne.s32.totalorder %s82, %s83
    %p92 = scmp.eq.s32.totalorder %s30, 0
    %p93 = por %p91, %p92
    %p94 = scmp.ne.s32.totalorder %s82, %s83
    %p95 = scmp.eq.s32.totalorder %s31, 1
    %p96 = por %p94, %p95
    %p98 = scmp.ne.s32.totalorder %s83, %s97
    %p99 = scmp.eq.s32.totalorder %s31, 0
    %p100 = por %p98, %p99
    %s102 = sadd.s32 %s101, 1
    %p105 = scmp.eq.s32.totalorder %s25, 1
    %p106 = scmp.ne.s32.totalorder %s101, %s103
    %p107 = scmp.eq.s32.totalorder %s25, 0
    %p108 = por %p106, %p107
    %p109 = scmp.ne.s32.totalorder %s101, %s103
    %p110 = scmp.eq.s32.totalorder %s30, 1
    %p111 = por %p109, %p110
    %p112 = scmp.ne.s32.totalorder %s103, %s104
    %p113 = scmp.eq.s32.totalorder %s30, 0
    %p114 = por %p112, %p113
    %p115 = scmp.ne.s32.totalorder %s103, %s104
    %p116 = scmp.eq.s32.totalorder %s31, 1
    %p117 = por %p115, %p116
    %p119 = scmp.ne.s32.totalorder %s104, %s118
    %p120 = scmp.eq.s32.totalorder %s31, 0
    %p121 = por %p119, %p120
    %s123 = sadd.s32 %s122, 1
    %p126 = scmp.eq.s32.totalorder %s25, 1
    %p127 = scmp.ne.s32.totalorder %s122, %s124
    %p128 = scmp.eq.s32.totalorder %s25, 0
    %p129 = por %p127, %p128
    %p130 = scmp.ne.s32.totalorder %s122, %s124
    %p131 = scmp.eq.s32.totalorder %s30, 1
    %p132 = por %p130, %p131
    %p133 = scmp.ne.s32.totalorder %s124, %s125
    %p134 = scmp.eq.s32.totalorder %s30, 0
    %p135 = por %p133, %p134
    %p136 = scmp.ne.s32.totalorder %s124, %s125
    %p137 = scmp.eq.s32.totalorder %s31, 1
    %p138 = por %p136, %p137
    %p140 = scmp.ne.s32.totalorder %s125, %s139
    %p141 = scmp.eq.s32.totalorder %s31, 0
    %p142 = por %p140, %p141
    %s144 = sadd.s32 %s143, 1
    %p147 = scmp.eq.s32.totalorder %s25, 1
    %p148 = scmp.ne.s32.totalorder %s143, %s145
    %p149 = scmp.eq.s32.totalorder %s25, 0
    %p150 = por %p148, %p149
    %p151 = scmp.ne.s32.totalorder %s143, %s145
    %p152 = scmp.eq.s32.totalorder %s30, 1
    %p153 = por %p151, %p152
    %p154 = scmp.ne.s32.totalorder %s145, %s146
    %p155 = scmp.eq.s32.totalorder %s30, 0
    %p156 = por %p154, %p155
    %p157 = scmp.ne.s32.totalorder %s145, %s146
    %p158 = scmp.eq.s32.totalorder %s31, 1
    %p159 = por %p157, %p158
    %p161 = scmp.ne.s32.totalorder %s146, %s160
    %p162 = scmp.eq.s32.totalorder %s31, 0
    %p163 = por %p161, %p162
    %s165 = sadd.s32 %s164, 1
    %p168 = scmp.eq.s32.totalorder %s25, 1
    %p169 = scmp.ne.s32.totalorder %s164, %s166
    %p170 = scmp.eq.s32.totalorder %s25, 0
    %p171 = por %p169, %p170
    %p172 = scmp.ne.s32.totalorder %s164, %s166
    %p173 = scmp.eq.s32.totalorder %s30, 1
    %p174 = por %p172, %p173
    %p175 = scmp.ne.s32.totalorder %s166, %s167
    %p176 = scmp.eq.s32.totalorder %s30, 0
    %p177 = por %p175, %p176
    %p178 = scmp.ne.s32.totalorder %s166, %s167
    %p179 = scmp.eq.s32.totalorder %s31, 1
    %p180 = por %p178, %p179
    %p182 = scmp.ne.s32.totalorder %s167, %s181
    %p183 = scmp.eq.s32.totalorder %s31, 0
    %p184 = por %p182, %p183
    %s186 = sadd.s32 %s185, 1
    %p189 = scmp.eq.s32.totalorder %s25, 1
    %p190 = scmp.ne.s32.totalorder %s185, %s187
    %p191 = scmp.eq.s32.totalorder %s25, 0
    %p192 = por %p190, %p191
    %p193 = scmp.ne.s32.totalorder %s185, %s187
    %p194 = scmp.eq.s32.totalorder %s30, 1
    %p195 = por %p193, %p194
    %p196 = scmp.ne.s32.totalorder %s187, %s188
    %p197 = scmp.eq.s32.totalorder %s30, 0
    %p198 = por %p196, %p197
    %p199 = scmp.ne.s32.totalorder %s187, %s188
    %p200 = scmp.eq.s32.totalorder %s31, 1
    %p201 = por %p199, %p200
    %p203 = scmp.ne.s32.totalorder %s188, %s202
    %p204 = scmp.eq.s32.totalorder %s31, 0
    %p205 = por %p203, %p204
    %s207 = sadd.s32 %s206, 1
    %p210 = scmp.eq.s32.totalorder %s25, 1
    %p211 = scmp.ne.s32.totalorder %s206, %s208
    %p212 = scmp.eq.s32.totalorder %s25, 0
    %p213 = por %p211, %p212
    %p214 = scmp.ne.s32.totalorder %s206, %s208
    %p215 = scmp.eq.s32.totalorder %s30, 1
    %p216 = por %p214, %p215
    %p217 = scmp.ne.s32.totalorder %s208, %s209
    %p218 = scmp.eq.s32.totalorder %s30, 0
    %p219 = por %p217, %p218
    %p220 = scmp.ne.s32.totalorder %s208, %s209
    %p221 = scmp.eq.s32.totalorder %s31, 1
    %p222 = por %p220, %p221
    %p224 = scmp.ne.s32.totalorder %s209, %s223
    %p225 = scmp.eq.s32.totalorder %s31, 0
    %p226 = por %p224, %p225
    %s228 = sadd.s32 %s227, 1
    %p231 = scmp.eq.s32.totalorder %s25, 1
    %p232 = scmp.ne.s32.totalorder %s227, %s229
    %p233 = scmp.eq.s32.totalorder %s25, 0
    %p234 = por %p232, %p233
    %p235 = scmp.ne.s32.totalorder %s227, %s229
    %p236 = scmp.eq.s32.totalorder %s30, 1
    %p237 = por %p235, %p236
    %p238 = scmp.ne.s32.totalorder %s229, %s230
    %p239 = scmp.eq.s32.totalorder %s30, 0
    %p240 = por %p238, %p239
    %p241 = scmp.ne.s32.totalorder %s229, %s230
    %p242 = scmp.eq.s32.totalorder %s31, 1
    %p243 = por %p241, %p242
    %p245 = scmp.ne.s32.totalorder %s230, %s244
    %p246 = scmp.eq.s32.totalorder %s31, 0
    %p247 = por %p245, %p246
    %s249 = sadd.s32 %s248, 1
    %p252 = scmp.eq.s32.totalorder %s25, 1
    %p253 = scmp.ne.s32.totalorder %s248, %s250
    %p254 = scmp.eq.s32.totalorder %s25, 0
    %p255 = por %p253, %p254
    %p256 = scmp.ne.s32.totalorder %s248, %s250
    %p257 = scmp.eq.s32.totalorder %s30, 1
    %p258 = por %p256, %p257
    %p259 = scmp.ne.s32.totalorder %s250, %s251
    %p260 = scmp.eq.s32.totalorder %s30, 0
    %p261 = por %p259, %p260
    %p262 = scmp.ne.s32.totalorder %s250, %s251
    %p263 = scmp.eq.s32.totalorder %s31, 1
    %p264 = por %p262, %p263
    %p266 = scmp.ne.s32.totalorder %s251, %s265
    %p267 = scmp.eq.s32.totalorder %s31, 0
    %p268 = por %p266, %p267
    %s270 = sadd.s32 %s269, 1
    %p273 = scmp.eq.s32.totalorder %s25, 1
    %p274 = scmp.ne.s32.totalorder %s269, %s271
    %p275 = scmp.eq.s32.totalorder %s25, 0
    %p276 = por %p274, %p275
    %p277 = scmp.ne.s32.totalorder %s269, %s271
    %p278 = scmp.eq.s32.totalorder %s30, 1
    %p279 = por %p277, %p278
    %p280 = scmp.ne.s32.totalorder %s271, %s272
    %p281 = scmp.eq.s32.totalorder %s30, 0
    %p282 = por %p280, %p281
    %p283 = scmp.ne.s32.totalorder %s271, %s272
    %p284 = scmp.eq.s32.totalorder %s31, 1
    %p285 = por %p283, %p284
    %p287 = scmp.ne.s32.totalorder %s272, %s286
    %p288 = scmp.eq.s32.totalorder %s31, 0
    %p289 = por %p287, %p288
    %s291 = sadd.s32 %s290, 1
    %p294 = scmp.eq.s32.totalorder %s25, 1
    %p295 = scmp.ne.s32.totalorder %s290, %s292
    %p296 = scmp.eq.s32.totalorder %s25, 0
    %p297 = por %p295, %p296
    %p298 = scmp.ne.s32.totalorder %s290, %s292
    %p299 = scmp.eq.s32.totalorder %s30, 1
    %p300 = por %p298, %p299
    %p301 = scmp.ne.s32.totalorder %s292, %s293
    %p302 = scmp.eq.s32.totalorder %s30, 0
    %p303 = por %p301, %p302
    %p304 = scmp.ne.s32.totalorder %s292, %s293
    %p305 = scmp.eq.s32.totalorder %s31, 1
    %p306 = por %p304, %p305
    %p308 = scmp.ne.s32.totalorder %s293, %s307
    %p309 = scmp.eq.s32.totalorder %s31, 0
    %p310 = por %p308, %p309
    %s312 = sadd.s32 %s311, 1
    %p315 = scmp.eq.s32.totalorder %s25, 1
    %p316 = scmp.ne.s32.totalorder %s311, %s313
    %p317 = scmp.eq.s32.totalorder %s25, 0
    %p318 = por %p316, %p317
    %p319 = scmp.ne.s32.totalorder %s311, %s313
    %p320 = scmp.eq.s32.totalorder %s30, 1
    %p321 = por %p319, %p320
    %p322 = scmp.ne.s32.totalorder %s313, %s314
    %p323 = scmp.eq.s32.totalorder %s30, 0
    %p324 = por %p322, %p323
    %p325 = scmp.ne.s32.totalorder %s313, %s314
    %p326 = scmp.eq.s32.totalorder %s31, 1
    %p327 = por %p325, %p326
    %p329 = scmp.ne.s32.totalorder %s314, %s328
    %p330 = scmp.eq.s32.totalorder %s31, 0
    %p331 = por %p329, %p330
    %s333 = sadd.s32 %s332, 1
    %p336 = scmp.eq.s32.totalorder %s25, 1
    %p337 = scmp.ne.s32.totalorder %s332, %s334
    %p338 = scmp.eq.s32.totalorder %s25, 0
    %p339 = por %p337, %p338
    %p340 = scmp.ne.s32.totalorder %s332, %s334
    %p341 = scmp.eq.s32.totalorder %s30, 1
    %p342 = por %p340, %p341
    %p343 = scmp.ne.s32.totalorder %s334, %s335
    %p344 = scmp.eq.s32.totalorder %s30, 0
    %p345 = por %p343, %p344
    %p346 = scmp.ne.s32.totalorder %s334, %s335
    %p347 = scmp.eq.s32.totalorder %s31, 1
    %p348 = por %p346, %p347
    %p350 = scmp.ne.s32.totalorder %s335, %s349
    %p351 = scmp.eq.s32.totalorder %s31, 0
    %p352 = por %p350, %p351
    %s354 = sadd.s32 %s353, 1
    %p357 = scmp.eq.s32.totalorder %s25, 1
    %p358 = scmp.ne.s32.totalorder %s353, %s355
    %p359 = scmp.eq.s32.totalorder %s25, 0
    %p360 = por %p358, %p359
    %p361 = scmp.ne.s32.totalorder %s353, %s355
    %p362 = scmp.eq.s32.totalorder %s30, 1
    %p363 = por %p361, %p362
    %p364 = scmp.ne.s32.totalorder %s355, %s356
    %p365 = scmp.eq.s32.totalorder %s30, 0
    %p366 = por %p364, %p365
    %p367 = scmp.ne.s32.totalorder %s355, %s356
    %p368 = scmp.eq.s32.totalorder %s31, 1
    %p369 = por %p367, %p368
    %p371 = scmp.ne.s32.totalorder %s356, %s370
    %p372 = scmp.eq.s32.totalorder %s31, 0
    %p373 = por %p371, %p372
    %s375 = sadd.s32 %s374, 1
    %p378 = scmp.eq.s32.totalorder %s25, 1
    %p379 = scmp.ne.s32.totalorder %s374, %s376
    %p380 = scmp.eq.s32.totalorder %s25, 0
    %p381 = por %p379, %p380
    %p382 = scmp.ne.s32.totalorder %s374, %s376
    %p383 = scmp.eq.s32.totalorder %s30, 1
    %p384 = por %p382, %p383
    %p385 = scmp.ne.s32.totalorder %s376, %s377
    %p386 = scmp.eq.s32.totalorder %s30, 0
    %p387 = por %p385, %p386
    %p388 = scmp.ne.s32.totalorder %s376, %s377
    %p389 = scmp.eq.s32.totalorder %s31, 1
    %p390 = por %p388, %p389
    %p392 = scmp.ne.s32.totalorder %s377, %s391
    %p393 = scmp.eq.s32.totalorder %s31, 0
    %p394 = por %p392, %p393
    %s396 = sadd.s32 %s395, 1
    %p399 = scmp.eq.s32.totalorder %s25, 1
    %p400 = scmp.ne.s32.totalorder %s395, %s397
    %p401 = scmp.eq.s32.totalorder %s25, 0
    %p402 = por %p400, %p401
    %p403 = scmp.ne.s32.totalorder %s395, %s397
    %p404 = scmp.eq.s32.totalorder %s30, 1
    %p405 = por %p403, %p404
    %p406 = scmp.ne.s32.totalorder %s397, %s398
    %p407 = scmp.eq.s32.totalorder %s30, 0
    %p408 = por %p406, %p407
    %p409 = scmp.ne.s32.totalorder %s397, %s398
    %p410 = scmp.eq.s32.totalorder %s31, 1
    %p411 = por %p409, %p410
    %p413 = scmp.ne.s32.totalorder %s398, %s412
    %p414 = scmp.eq.s32.totalorder %s31, 0
    %p415 = por %p413, %p414
    %s417 = sadd.s32 %s416, 1
    %p420 = scmp.eq.s32.totalorder %s25, 1
    %p421 = scmp.ne.s32.totalorder %s416, %s418
    %p422 = scmp.eq.s32.totalorder %s25, 0
    %p423 = por %p421, %p422
    %p424 = scmp.ne.s32.totalorder %s416, %s418
    %p425 = scmp.eq.s32.totalorder %s30, 1
    %p426 = por %p424, %p425
    %p427 = scmp.ne.s32.totalorder %s418, %s419
    %p428 = scmp.eq.s32.totalorder %s30, 0
    %p429 = por %p427, %p428
    %p430 = scmp.ne.s32.totalorder %s418, %s419
    %p431 = scmp.eq.s32.totalorder %s31, 1
    %p432 = por %p430, %p431
    %p434 = scmp.ne.s32.totalorder %s419, %s433
    %p435 = scmp.eq.s32.totalorder %s31, 0
    %p436 = por %p434, %p435
    %s437 = ssub.s32 %s25, %s32
    %p438 = scmp.eq.s32.totalorder %s437, 0
    %s440 = sadd.s32 %s439, 1
    %s441 = scalar_select %p438, %s439, %s440
    %p444 = pneg %p438
    %p445 = scmp.eq.s32.totalorder %s25, 1
    %p446 = por %p444, %p445
    %p447 = scmp.ne.s32.totalorder %s439, %s442
    %p448 = scmp.eq.s32.totalorder %s25, 0
    %p449 = por %p447, %p448
    %p450 = scmp.ne.s32.totalorder %s439, %s442
    %p451 = scmp.eq.s32.totalorder %s30, 1
    %p452 = por %p450, %p451
    %p453 = scmp.ne.s32.totalorder %s442, %s443
    %p454 = scmp.eq.s32.totalorder %s30, 0
    %p455 = por %p453, %p454
    %p456 = scmp.ne.s32.totalorder %s442, %s443
    %p457 = scmp.eq.s32.totalorder %s31, 1
    %p458 = por %p456, %p457
    %p460 = scmp.ne.s32.totalorder %s443, %s459
    %p461 = scmp.eq.s32.totalorder %s31, 0
    %p462 = por %p460, %p461
    %p463 = scmp.le.s32.totalorder 1, %s25
    %p464 = scmp.lt.s32.totalorder %s25, 3
    %p465 = pnand %p463, %p464
    %p466 = pneg %p465
    // Predicated region
    $region9: #{_lambda_.2} parent=5 // pred_check
      _
    $region10: #{_lambda_.2} parent=5 // pred_check_branch
      %468 = sbr.rel (%p465) target = $region12
    $region11: #{_lambda_.2} parent=5 // pred_region
      %s469 = ssub.s32 %s25, 1
      // Predicated region
      $region13: #{_lambda_.2} parent=11 // pred_check
        %p470 = pneg %p72
      $region14: #{_lambda_.2} parent=11 // pred_check_branch
        %472 = sbr.rel (%p470) target = $region16
      $region15: #{_lambda_.2} parent=11 // pred_region
        _
      $region16: #{_lambda_.2} parent=11 // pred_fallthru
        _
      // Predicated region
      $region17: #{_lambda_.2} parent=11 // pred_check
        %p473 = pneg %p93
      $region18: #{_lambda_.2} parent=11 // pred_check_branch
        %475 = sbr.rel (%p473) target = $region20
      $region19: #{_lambda_.2} parent=11 // pred_region
        _
      $region20: #{_lambda_.2} parent=11 // pred_fallthru
        _
      // Predicated region
      $region21: #{_lambda_.2} parent=11 // pred_check
        %p476 = pneg %p114
      $region22: #{_lambda_.2} parent=11 // pred_check_branch
        %478 = sbr.rel (%p476) target = $region24
      $region23: #{_lambda_.2} parent=11 // pred_region
        _
      $region24: #{_lambda_.2} parent=11 // pred_fallthru
        _
      // Predicated region
      $region25: #{_lambda_.2} parent=11 // pred_check
        %p479 = pneg %p135
      $region26: #{_lambda_.2} parent=11 // pred_check_branch
        %481 = sbr.rel (%p479) target = $region28
      $region27: #{_lambda_.2} parent=11 // pred_region
        _
      $region28: #{_lambda_.2} parent=11 // pred_fallthru
        _
      // Predicated region
      $region29: #{_lambda_.2} parent=11 // pred_check
        %p482 = pneg %p156
      $region30: #{_lambda_.2} parent=11 // pred_check_branch
        %484 = sbr.rel (%p482) target = $region32
      $region31: #{_lambda_.2} parent=11 // pred_region
        _
      $region32: #{_lambda_.2} parent=11 // pred_fallthru
        _
      // Predicated region
      $region33: #{_lambda_.2} parent=11 // pred_check
        %p485 = pneg %p177
      $region34: #{_lambda_.2} parent=11 // pred_check_branch
        %487 = sbr.rel (%p485) target = $region36
      $region35: #{_lambda_.2} parent=11 // pred_region
        _
      $region36: #{_lambda_.2} parent=11 // pred_fallthru
        _
      // Predicated region
      $region37: #{_lambda_.2} parent=11 // pred_check
        %p488 = pneg %p198
      $region38: #{_lambda_.2} parent=11 // pred_check_branch
        %490 = sbr.rel (%p488) target = $region40
      $region39: #{_lambda_.2} parent=11 // pred_region
        _
      $region40: #{_lambda_.2} parent=11 // pred_fallthru
        _
      // Predicated region
      $region41: #{_lambda_.2} parent=11 // pred_check
        %p491 = pneg %p219
      $region42: #{_lambda_.2} parent=11 // pred_check_branch
        %493 = sbr.rel (%p491) target = $region44
      $region43: #{_lambda_.2} parent=11 // pred_region
        _
      $region44: #{_lambda_.2} parent=11 // pred_fallthru
        _
      // Predicated region
      $region45: #{_lambda_.2} parent=11 // pred_check
        %p494 = pneg %p240
      $region46: #{_lambda_.2} parent=11 // pred_check_branch
        %496 = sbr.rel (%p494) target = $region48
      $region47: #{_lambda_.2} parent=11 // pred_region
        _
      $region48: #{_lambda_.2} parent=11 // pred_fallthru
        _
      // Predicated region
      $region49: #{_lambda_.2} parent=11 // pred_check
        %p497 = pneg %p261
      $region50: #{_lambda_.2} parent=11 // pred_check_branch
        %499 = sbr.rel (%p497) target = $region52
      $region51: #{_lambda_.2} parent=11 // pred_region
        _
      $region52: #{_lambda_.2} parent=11 // pred_fallthru
        _
      // Predicated region
      $region53: #{_lambda_.2} parent=11 // pred_check
        %p500 = pneg %p282
      $region54: #{_lambda_.2} parent=11 // pred_check_branch
        %502 = sbr.rel (%p500) target = $region56
      $region55: #{_lambda_.2} parent=11 // pred_region
        _
      $region56: #{_lambda_.2} parent=11 // pred_fallthru
        _
      // Predicated region
      $region57: #{_lambda_.2} parent=11 // pred_check
        %p503 = pneg %p303
      $region58: #{_lambda_.2} parent=11 // pred_check_branch
        %505 = sbr.rel (%p503) target = $region60
      $region59: #{_lambda_.2} parent=11 // pred_region
        _
      $region60: #{_lambda_.2} parent=11 // pred_fallthru
        _
      // Predicated region
      $region61: #{_lambda_.2} parent=11 // pred_check
        %p506 = pneg %p324
      $region62: #{_lambda_.2} parent=11 // pred_check_branch
        %508 = sbr.rel (%p506) target = $region64
      $region63: #{_lambda_.2} parent=11 // pred_region
        _
      $region64: #{_lambda_.2} parent=11 // pred_fallthru
        _
      // Predicated region
      $region65: #{_lambda_.2} parent=11 // pred_check
        %p509 = pneg %p345
      $region66: #{_lambda_.2} parent=11 // pred_check_branch
        %511 = sbr.rel (%p509) target = $region68
      $region67: #{_lambda_.2} parent=11 // pred_region
        _
      $region68: #{_lambda_.2} parent=11 // pred_fallthru
        _
      // Predicated region
      $region69: #{_lambda_.2} parent=11 // pred_check
        %p512 = pneg %p366
      $region70: #{_lambda_.2} parent=11 // pred_check_branch
        %514 = sbr.rel (%p512) target = $region72
      $region71: #{_lambda_.2} parent=11 // pred_region
        _
      $region72: #{_lambda_.2} parent=11 // pred_fallthru
        _
      // Predicated region
      $region73: #{_lambda_.2} parent=11 // pred_check
        %p515 = pneg %p387
      $region74: #{_lambda_.2} parent=11 // pred_check_branch
        %517 = sbr.rel (%p515) target = $region76
      $region75: #{_lambda_.2} parent=11 // pred_region
        _
      $region76: #{_lambda_.2} parent=11 // pred_fallthru
        _
      // Predicated region
      $region77: #{_lambda_.2} parent=11 // pred_check
        %p518 = pneg %p408
      $region78: #{_lambda_.2} parent=11 // pred_check_branch
        %520 = sbr.rel (%p518) target = $region80
      $region79: #{_lambda_.2} parent=11 // pred_region
        _
      $region80: #{_lambda_.2} parent=11 // pred_fallthru
        _
      // Predicated region
      $region81: #{_lambda_.2} parent=11 // pred_check
        %p521 = pneg %p429
      $region82: #{_lambda_.2} parent=11 // pred_check_branch
        %523 = sbr.rel (%p521) target = $region84
      $region83: #{_lambda_.2} parent=11 // pred_region
        _
      $region84: #{_lambda_.2} parent=11 // pred_fallthru
        _
    $region12: #{_lambda_.2} parent=5 // pred_fallthru
      _
    %p524 = scmp.lt.s32.totalorder %s25, 2
    // Predicated region
    $region85: #{_lambda_.2} parent=5 // pred_check
      %p525 = pneg %p524
    $region86: #{_lambda_.2} parent=5 // pred_check_branch
      %527 = sbr.rel (%p525) target = $region88
    $region87: #{_lambda_.2} parent=5 // pred_region
      // Predicated region
      $region89: #{_lambda_.2} parent=87 // pred_check
        %p528 = pneg %p45
      $region90: #{_lambda_.2} parent=87 // pred_check_branch
        %530 = sbr.rel (%p528) target = $region92
      $region91: #{_lambda_.2} parent=87 // pred_region
        %p531 = scmp.lt.s32.totalorder %s25, 1
        %s532 = scalar_select %p531, %s25, 1
        %s533 = smul.addr %s532, 2
        %s534 = smul.addr %s533, 4
        %s535 = scalar_lea.vmem %s0, %s534
      $region92: #{_lambda_.2} parent=87 // pred_fallthru
        _
    $region88: #{_lambda_.2} parent=5 // pred_fallthru
      _
    %p536 = scmp.le.s32.totalorder 1, %s25
    %p537 = scmp.lt.s32.totalorder %s25, 3
    %p538 = pnand %p536, %p537
    %p539 = pneg %p538
    // Predicated region
    $region93: #{_lambda_.2} parent=5 // pred_check
      _
    $region94: #{_lambda_.2} parent=5 // pred_check_branch
      %541 = sbr.rel (%p538) target = $region96
    $region95: #{_lambda_.2} parent=5 // pred_region
      %s542 = ssub.s32 %s25, 1
      %p543 = scmp.lt.s32.totalorder %s30, 1
      %s544 = scalar_select %p543, %s30, 1
      %s545 = smul.addr %s544, 2
      %s546 = smul.addr %s545, 4
      %s547 = scalar_lea.vmem %s0, %s546
      %p548 = pneg %p51
      %p549 = pneg %p48
      %p550 = pneg %p72
      %p551 = pneg %p69
      %p552 = pneg %p93
      %p553 = pneg %p90
      %p554 = pneg %p114
      %p555 = pneg %p111
      %p556 = pneg %p135
      %p557 = pneg %p132
      %p558 = pneg %p156
      %p559 = pneg %p153
      %p560 = pneg %p177
      %p561 = pneg %p174
      %p562 = pneg %p198
      %p563 = pneg %p195
      %p564 = pneg %p219
      %p565 = pneg %p216
      %p566 = pneg %p240
      %p567 = pneg %p237
      %p568 = pneg %p261
      %p569 = pneg %p258
      %p570 = pneg %p282
      %p571 = pneg %p279
      %p572 = pneg %p303
      %p573 = pneg %p300
      %p574 = pneg %p324
      %p575 = pneg %p321
      %p576 = pneg %p345
      %p577 = pneg %p342
      %p578 = pneg %p366
      %p579 = pneg %p363
      %p580 = pneg %p387
      %p581 = pneg %p384
      %p582 = pneg %p408
      %p583 = pneg %p405
      %p584 = pneg %p429
      %p585 = pneg %p426
      %p586 = pneg %p455
      %p587 = pneg %p452
      %p588 = scmp.lt.s32.totalorder %s30, 1
      %s589 = scalar_select %p588, %s30, 1
      %s590 = smul.addr %s589, 2
      %s591 = smul.addr %s590, 8
      %s592 = scalar_lea.vmem %s19, %s591
      %p593 = scmp.lt.s32.totalorder %s30, 1
      %s594 = scalar_select %p593, %s30, 1
      %s595 = smul.addr %s594, 2
      %s596 = smul.addr %s595, 4
      %s597 = scalar_lea.vmem %s0, %s596
      %p598 = scmp.lt.s32.totalorder %s30, 1
      %s599 = scalar_select %p598, %s30, 1
      %s600 = smul.addr %s599, 2
      %s601 = smul.addr %s600, 8
      %s602 = scalar_lea.vmem %s19, %s601
      %v603 = vld [vmem:[%s597] sm:$0xff]
      %v604 = vld [vmem:[%s1] sm:$0xf]
      %606 = vset.pattern.permute.xlu0 0
      %607 = vperm.xlu0 %606, %v604
      %v608 = vpop.permute.xlu0 %607
      %v610 = vunpack.c.l.s4 839922192
      %v611 = vunpack.c.0.s8 %v610
      %v612 = vperm.slane %v608, %v611
      %v614 = vmul.f32 %v603, %v612
      %v615 = vld [vmem:[%s2] sm:$0xf]
      %617 = vset.pattern.permute.xlu0 0
      %618 = vperm.xlu0 %617, %v615
      %v619 = vpop.permute.xlu0 %618
      %v621 = vunpack.c.l.s4 839922192
      %v622 = vunpack.c.0.s8 %v621
      %v623 = vperm.slane %v619, %v622
      %v625 = vadd.f32 %v614, %v623
      %v626 = vmax.f32 %v625, 0.0
      %628 = vst [vmem:[#allocation1] ss:$2 sm:$0xff] %v626
      %v629 = vld.sshfl [vmem:[#allocation1] sm:$0xff pattern:$0x75316420]
      %v630 = vld.sshfl [vmem:[#allocation1 + $0x8] sm:$0xff pattern:$0x75316420]
      %631 = vrot.lane.b32.xlu0 %v629, 17
      %v632 = vpop.permute.xlu0 %631
      %633 = vrot.lane.b32.xlu0 %v630, 17
      %v634 = vpop.permute.xlu0 %633
      %vm635 = vcmask 138240
      %v636 = vsel %vm635, %v632, %v634
      %v640 = vsel %vm635, 0.0, %v632
      %v641 = vsel %vm635, %v634, 0.0
      %v642 = vld [vmem:[%s3] sm:$0x3]
      %v643 = vld [vmem:[%s4] sm:$0x3]
      %v645 = vperm.slane %v642, 0
      %v646 = vperm.slane %v642, 1
      %v649 = vmul.f32 %v640, %v645
      %v650 = vmul.f32 %v636, %v646
      %v652 = vperm.slane %v643, 0
      %v653 = vperm.slane %v643, 1
      %654 = vrot.lane.b32.xlu0 %v652, 2
      %v655 = vpop.permute.xlu0 %654
      %656 = vrot.lane.b32.xlu0 %v653, 2
      %v657 = vpop.permute.xlu0 %656
      %vm658 = vcmask 15360
      %v659 = vsel %vm658, %v655, %v657
      %v663 = vmul.f32 %v640, %v655
      %v664 = vmul.f32 %v636, %v659
      %v665 = vmul.f32 %v641, %v657
      %666 = vrot.lane.b32.xlu0 %v645, 16
      %v667 = vpop.permute.xlu0 %666
      %668 = vrot.lane.b32.xlu0 %v646, 16
      %v669 = vpop.permute.xlu0 %668
      %vm670 = vcmask 130048
      %v671 = vsel %vm670, %v667, %v669
      %v675 = vmul.f32 %v640, %v667
      %v676 = vmul.f32 %v636, %v671
      %v677 = vmul.f32 %v641, %v669
      %678 = vrot.lane.b32.xlu0 %v652, 18
      %v679 = vpop.permute.xlu0 %678
      %680 = vrot.lane.b32.xlu0 %v653, 18
      %v681 = vpop.permute.xlu0 %680
      %vm682 = vcmask 146432
      %v683 = vsel %vm682, %v679, %v681
      %v687 = vmul.f32 %v640, %v679
      %v688 = vmul.f32 %v636, %v683
      %v689 = vmul.f32 %v641, %v681
      %690 = vrot.lane.b32.xlu0 %v645, 32
      %v691 = vpop.permute.xlu0 %690
      %692 = vrot.lane.b32.xlu0 %v646, 32
      %v693 = vpop.permute.xlu0 %692
      %vm694 = vcmask 261120
      %v695 = vsel %vm694, %v691, %v693
      %v699 = vmul.f32 %v640, %v691
      %v700 = vmul.f32 %v636, %v695
      %v701 = vmul.f32 %v641, %v693
      %702 = vrot.lane.b32.xlu0 %v652, 34
      %v703 = vpop.permute.xlu0 %702
      %704 = vrot.lane.b32.xlu0 %v653, 34
      %v705 = vpop.permute.xlu0 %704
      %vm706 = vcmask 277504
      %v707 = vsel %vm706, %v703, %v705
      %v711 = vmul.f32 %v640, %v703
      %v712 = vmul.f32 %v636, %v707
      %v713 = vmul.f32 %v641, %v705
      %v716 = vrot.slane %v640, 4
      %v717 = vrot.slane %v636, 4
      %v718 = vrot.slane %v641, 4
      %719 = vrot.lane.b32.xlu0 %v716, 127
      %v720 = vpop.permute.xlu0 %719
      %721 = vrot.lane.b32.xlu0 %v717, 127
      %v722 = vpop.permute.xlu0 %721
      %723 = vrot.lane.b32.xlu0 %v718, 127
      %v724 = vpop.permute.xlu0 %723
      %vm725 = vcmask 1039360
      %v726 = vsel %vm725, %v720, %v722
      %v727 = vsel %vm725, %v722, %v724
      %733 = vrot.lane.b32.xlu0 %v663, 126
      %v734 = vpop.permute.xlu0 %733
      %735 = vrot.lane.b32.xlu0 %v664, 126
      %v736 = vpop.permute.xlu0 %735
      %737 = vrot.lane.b32.xlu0 %v665, 126
      %v738 = vpop.permute.xlu0 %737
      %vm739 = vcmask 1031168
      %v740 = vsel %vm739, %v734, %v736
      %v741 = vsel %vm739, %v736, %v738
      %v747 = vrot.slane %v675, 4
      %v748 = vrot.slane %v676, 4
      %v749 = vrot.slane %v677, 4
      %750 = vrot.lane.b32.xlu0 %v747, 112
      %v751 = vpop.permute.xlu0 %750
      %752 = vrot.lane.b32.xlu0 %v748, 112
      %v753 = vpop.permute.xlu0 %752
      %754 = vrot.lane.b32.xlu0 %v749, 112
      %v755 = vpop.permute.xlu0 %754
      %vm756 = vcmask 916480
      %v757 = vsel %vm756, %v751, %v753
      %v758 = vsel %vm756, %v753, %v755
      %761 = vrot.lane.b32.xlu0 %v640, 111
      %v762 = vpop.permute.xlu0 %761
      %763 = vrot.lane.b32.xlu0 %v636, 111
      %v764 = vpop.permute.xlu0 %763
      %765 = vrot.lane.b32.xlu0 %v641, 111
      %v766 = vpop.permute.xlu0 %765
      %vm767 = vcmask 908288
      %v768 = vsel %vm767, %v762, %v764
      %v769 = vsel %vm767, %v764, %v766
      %v775 = vrot.slane %v687, 4
      %v776 = vrot.slane %v688, 4
      %v777 = vrot.slane %v689, 4
      %778 = vrot.lane.b32.xlu0 %v775, 110
      %v779 = vpop.permute.xlu0 %778
      %780 = vrot.lane.b32.xlu0 %v776, 110
      %v781 = vpop.permute.xlu0 %780
      %782 = vrot.lane.b32.xlu0 %v777, 110
      %v783 = vpop.permute.xlu0 %782
      %vm784 = vcmask 900096
      %v785 = vsel %vm784, %v779, %v781
      %v786 = vsel %vm784, %v781, %v783
      %792 = vrot.lane.b32.xlu0 %v699, 96
      %v793 = vpop.permute.xlu0 %792
      %794 = vrot.lane.b32.xlu0 %v700, 96
      %v795 = vpop.permute.xlu0 %794
      %796 = vrot.lane.b32.xlu0 %v701, 96
      %v797 = vpop.permute.xlu0 %796
      %vm798 = vcmask 785408
      %v799 = vsel %vm798, %v793, %v795
      %v800 = vsel %vm798, %v795, %v797
      %803 = vrot.lane.b32.xlu0 %v716, 95
      %v804 = vpop.permute.xlu0 %803
      %805 = vrot.lane.b32.xlu0 %v717, 95
      %v806 = vpop.permute.xlu0 %805
      %807 = vrot.lane.b32.xlu0 %v718, 95
      %v808 = vpop.permute.xlu0 %807
      %vm809 = vcmask 777216
      %v810 = vsel %vm809, %v804, %v806
      %v811 = vsel %vm809, %v806, %v808
      %817 = vrot.lane.b32.xlu0 %v711, 94
      %v818 = vpop.permute.xlu0 %817
      %819 = vrot.lane.b32.xlu0 %v712, 94
      %v820 = vpop.permute.xlu0 %819
      %821 = vrot.lane.b32.xlu0 %v713, 94
      %v822 = vpop.permute.xlu0 %821
      %vm823 = vcmask 769024
      %v824 = vsel %vm823, %v818, %v820
      %v825 = vsel %vm823, %v820, %v822
      %vm826 = vcmask 1043456
      %v827 = vsel %vm826, %v649, %v726
      %v828 = vsel %vm826, %v650, %v727
      %v829 = vsel %vm826, %v740, %v757
      %v830 = vsel %vm826, %v741, %v758
      %v831 = vsel %vm826, %v768, %v785
      %v832 = vsel %vm826, %v769, %v786
      %v833 = vsel %vm826, %v799, %v810
      %v834 = vsel %vm826, %v800, %v811
      %v835 = vld [vmem:[%s5] sm:$0xff]
      %vm836 = vcmask 293888
      %v838 = vsel %vm836, %v835, 0
      %v840 = vsel %vm826, %v824, 0
      %v842 = vsel %vm826, %v825, 0
      %844 = vmatpush.msra.mxu0 0.0
      %845 = vmatpush.msra.mxu0 0.0
      %846 = vmatpush.msra.mxu0 0.0
      %847 = vmatpush.msra.mxu0 0.0
      %848 = vmatpush.msra.mxu0 0.0
      %849 = vmatpush.msra.mxu0 0.0
      %850 = vmatpush.msra.mxu0 0.0
      %851 = vmatpush.msra.mxu0 0.0
      %852 = vmatpush.msra.mxu0 0.0
      %853 = vmatpush.msra.mxu0 0.0
      %854 = vmatpush.msra.mxu0 0.0
      %855 = vmatpush.msra.mxu0 %v840
      %856 = vmatpush.msra.mxu0 %v833
      %857 = vmatpush.msra.mxu0 %v831
      %858 = vmatpush.msra.mxu0 %v829
      %859 = vmatpush.msra.mxu0 %v827
      %860 = vmatmul.f32.gmra.mxu0 %v838
      %v861 = vpop.f32.mrf.mxu0
      %v862 = vadd.f32 0.0, %v861
      %863 = vdwg.mxu0
      %864 = vmatpush.msra.mxu0 0.0
      %865 = vmatpush.msra.mxu0 0.0
      %866 = vmatpush.msra.mxu0 0.0
      %867 = vmatpush.msra.mxu0 0.0
      %868 = vmatpush.msra.mxu0 0.0
      %869 = vmatpush.msra.mxu0 0.0
      %870 = vmatpush.msra.mxu0 0.0
      %871 = vmatpush.msra.mxu0 0.0
      %872 = vmatpush.msra.mxu0 0.0
      %873 = vmatpush.msra.mxu0 0.0
      %874 = vmatpush.msra.mxu0 0.0
      %875 = vmatpush.msra.mxu0 %v842
      %876 = vmatpush.msra.mxu0 %v834
      %877 = vmatpush.msra.mxu0 %v832
      %878 = vmatpush.msra.mxu0 %v830
      %879 = vmatpush.msra.mxu0 %v828
      %880 = vmatmul.f32.gmra.mxu0 %v838
      %v881 = vpop.f32.mrf.mxu0
      %v882 = vadd.f32 0.0, %v881
      %883 = vdwg.mxu0
      %v884 = vrot.slane %v862, 4
      %v885 = vadd.f32 %v862, %v884
      %v886 = vrot.slane %v885, 2
      %v887 = vadd.f32 %v885, %v886
      %v888 = vrot.slane %v887, 1
      %v889 = vadd.f32 %v887, %v888
      %v890 = vrot.slane %v882, 4
      %v891 = vadd.f32 %v882, %v890
      %v892 = vrot.slane %v891, 2
      %v893 = vadd.f32 %v891, %v892
      %v894 = vrot.slane %v893, 1
      %v895 = vadd.f32 %v893, %v894
      %v896 = vrcp.pop 8.0
      %v897 = vmul.f32 8.0, %v896
      %v898 = vsub.f32 1.0, %v897
      %v899 = vmul.f32 %v896, %v898
      %v900 = vadd.f32 %v896, %v899
      %vm901 = vweird.f32 %v896
      %v902 = vsel %vm901, %v896, %v900
      %v903 = vmul.f32 %v889, %v902
      %v904 = vmul.f32 %v895, %v902
      %v905 = vsub.f32 %v862, %v903
      %v906 = vsub.f32 %v882, %v904
      %v907 = vmul.f32 %v905, %v905
      %v908 = vmul.f32 %v906, %v906
      %v909 = vrot.slane %v907, 4
      %v910 = vadd.f32 %v907, %v909
      %v911 = vrot.slane %v910, 2
      %v912 = vadd.f32 %v910, %v911
      %v913 = vrot.slane %v912, 1
      %v914 = vadd.f32 %v912, %v913
      %v915 = vrot.slane %v908, 4
      %v916 = vadd.f32 %v908, %v915
      %v917 = vrot.slane %v916, 2
      %v918 = vadd.f32 %v916, %v917
      %v919 = vrot.slane %v918, 1
      %v920 = vadd.f32 %v918, %v919
      %v921 = vmul.f32 %v914, %v902
      %v922 = vmul.f32 %v920, %v902
      %v923 = vadd.f32 %v921, 1e-05
      %v924 = vadd.f32 %v922, 1e-05
      %v925 = vrsqrt.pop %v923
      %v926 = vmul.f32 %v925, %v923
      %v927 = vmul.f32 %v926, %v925
      %v928 = vmul.f32 0.5, %v927
      %v929 = vsub.f32 1.5, %v928
      %v930 = vmul.f32 %v925, %v929
      %vm931 = vweird.f32 %v923
      %vm932 = vweird.f32 %v925
      %vm933 = vmor %vm931, %vm932
      %v934 = vsel %vm933, %v925, %v930
      %v935 = vrsqrt.pop %v924
      %v936 = vmul.f32 %v935, %v924
      %v937 = vmul.f32 %v936, %v935
      %v938 = vmul.f32 0.5, %v937
      %v939 = vsub.f32 1.5, %v938
      %v940 = vmul.f32 %v935, %v939
      %vm941 = vweird.f32 %v924
      %vm942 = vweird.f32 %v935
      %vm943 = vmor %vm941, %vm942
      %v944 = vsel %vm943, %v935, %v940
      %v945 = vmul.f32 %v905, %v934
      %v946 = vmul.f32 %v906, %v944
      %v947 = vld [vmem:[%s6] sm:$0xff]
      %949 = vset.pattern.permute.xlu0 0
      %950 = vperm.xlu0 %949, %v947
      %v951 = vpop.permute.xlu0 %950
      %v953 = vmul.f32 %v945, %v951
      %v954 = vmul.f32 %v946, %v951
      %v955 = vld [vmem:[%s7] sm:$0xff]
      %957 = vset.pattern.permute.xlu0 0
      %958 = vperm.xlu0 %957, %v955
      %v959 = vpop.permute.xlu0 %958
      %v961 = vadd.f32 %v953, %v959
      %v962 = vadd.f32 %v954, %v959
      %v963 = vld [vmem:[%s8] sm:$0xff]
      %v964 = vld [vmem:[%s8 + $0x8] sm:$0xff]
      %v965 = vld [vmem:[%s8 + $0x10] sm:$0xff]
      %v966 = vld [vmem:[%s8 + $0x18] sm:$0xff]
      %vm967 = vcmask 64512
      %v969 = vsel %vm967, %v963, 0
      %v972 = vsel %vm967, %v964, 0
      %v975 = vsel %vm967, %v965, 0
      %v978 = vsel %vm967, %v966, 0
      %980 = vmatpush.msra.mxu0 0.0
      %981 = vmatpush.msra.mxu0 0.0
      %982 = vmatpush.msra.mxu0 0.0
      %983 = vmatpush.msra.mxu0 0.0
      %984 = vmatpush.msra.mxu0 0.0
      %985 = vmatpush.msra.mxu0 0.0
      %986 = vmatpush.msra.mxu0 0.0
      %987 = vmatpush.msra.mxu0 0.0
      %988 = vmatpush.msra.mxu0 0.0
      %989 = vmatpush.msra.mxu0 0.0
      %990 = vmatpush.msra.mxu0 0.0
      %991 = vmatpush.msra.mxu0 0.0
      %992 = vmatpush.msra.mxu0 0.0
      %993 = vmatpush.msra.mxu0 0.0
      %994 = vmatpush.msra.mxu0 0.0
      %995 = vmatpush.msra.mxu0 %v961
      %996 = vmatmul.f32.gmra.mxu0 %v969
      %v997 = vpop.f32.mrf.mxu0
      %v998 = vadd.f32 0.0, %v997
      %999 = vmatmul.f32.gmra.mxu0 %v972
      %v1000 = vpop.f32.mrf.mxu0
      %v1001 = vadd.f32 0.0, %v1000
      %1002 = vmatmul.f32.gmra.mxu0 %v975
      %v1003 = vpop.f32.mrf.mxu0
      %v1004 = vadd.f32 0.0, %v1003
      %1005 = vmatmul.f32.gmra.mxu0 %v978
      %v1006 = vpop.f32.mrf.mxu0
      %v1007 = vadd.f32 0.0, %v1006
      %1008 = vdwg.mxu0
      %1009 = vmatpush.msra.mxu0 0.0
      %1010 = vmatpush.msra.mxu0 0.0
      %1011 = vmatpush.msra.mxu0 0.0
      %1012 = vmatpush.msra.mxu0 0.0
      %1013 = vmatpush.msra.mxu0 0.0
      %1014 = vmatpush.msra.mxu0 0.0
      %1015 = vmatpush.msra.mxu0 0.0
      %1016 = vmatpush.msra.mxu0 0.0
      %1017 = vmatpush.msra.mxu0 0.0
      %1018 = vmatpush.msra.mxu0 0.0
      %1019 = vmatpush.msra.mxu0 0.0
      %1020 = vmatpush.msra.mxu0 0.0
      %1021 = vmatpush.msra.mxu0 0.0
      %1022 = vmatpush.msra.mxu0 0.0
      %1023 = vmatpush.msra.mxu0 0.0
      %1024 = vmatpush.msra.mxu0 %v962
      %1025 = vmatmul.f32.gmra.mxu0 %v969
      %v1026 = vpop.f32.mrf.mxu0
      %v1027 = vadd.f32 0.0, %v1026
      %1028 = vmatmul.f32.gmra.mxu0 %v972
      %v1029 = vpop.f32.mrf.mxu0
      %v1030 = vadd.f32 0.0, %v1029
      %1031 = vmatmul.f32.gmra.mxu0 %v975
      %v1032 = vpop.f32.mrf.mxu0
      %v1033 = vadd.f32 0.0, %v1032
      %1034 = vmatmul.f32.gmra.mxu0 %v978
      %v1035 = vpop.f32.mrf.mxu0
      %v1036 = vadd.f32 0.0, %v1035
      %1037 = vdwg.mxu0
      %1042 = vrot.lane.b32.xlu0 %v998, 3
      %v1043 = vpop.permute.xlu0 %1042
      %1044 = vrot.lane.b32.xlu0 %v1027, 3
      %v1045 = vpop.permute.xlu0 %1044
      %1046 = vrot.lane.b32.xlu0 %v1001, 3
      %v1047 = vpop.permute.xlu0 %1046
      %1048 = vrot.lane.b32.xlu0 %v1030, 3
      %v1049 = vpop.permute.xlu0 %1048
      %vm1050 = vcmask 23552
      %v1051 = vsel %vm1050, %v1043, %v1045
      %v1052 = vsel %vm1050, %v1047, %v1049
      %v1059 = vsel %vm1050, 0.0, %v1043
      %v1060 = vsel %vm1050, 0.0, %v1047
      %v1061 = vld [vmem:[%s9] sm:$0xff]
      %v1062 = vld [vmem:[%s9 + $0x8] sm:$0xff]
      %1064 = vset.pattern.permute.xlu0 0
      %1065 = vperm.xlu0 %1064, %v1061
      %v1066 = vpop.permute.xlu0 %1065
      %1069 = vset.pattern.permute.xlu0 0
      %1070 = vperm.xlu0 %1069, %v1062
      %v1071 = vpop.permute.xlu0 %1070
      %v1073 = vmul.f32 %v1066, %v1059
      %v1074 = vmul.f32 %v1066, %v1051
      %v1075 = vmul.f32 %v1071, %v1060
      %v1076 = vmul.f32 %v1071, %v1052
      %v1077 = vadd.f32 %v1073, 0.0
      %v1078 = vadd.f32 %v1074, 0.0
      %v1079 = vadd.f32 %v1075, 0.0
      %v1080 = vadd.f32 %v1076, 0.0
      %1081 = vset.pattern.permute.xlu0 1
      %1082 = vperm.xlu0 %1081, %v1061
      %v1083 = vpop.permute.xlu0 %1082
      %1085 = vset.pattern.permute.xlu0 1
      %1086 = vperm.xlu0 %1085, %v1062
      %v1087 = vpop.permute.xlu0 %1086
      %v1089 = vmul.f32 %v1083, %v1059
      %v1090 = vmul.f32 %v1083, %v1051
      %v1091 = vmul.f32 %v1083, %v1045
      %v1092 = vmul.f32 %v1087, %v1060
      %v1093 = vmul.f32 %v1087, %v1052
      %v1094 = vmul.f32 %v1087, %v1049
      %1101 = vrot.lane.b32.xlu0 %v1089, 127
      %v1102 = vpop.permute.xlu0 %1101
      %1103 = vrot.lane.b32.xlu0 %v1090, 127
      %v1104 = vpop.permute.xlu0 %1103
      %1105 = vrot.lane.b32.xlu0 %v1091, 127
      %v1106 = vpop.permute.xlu0 %1105
      %1107 = vrot.lane.b32.xlu0 %v1092, 127
      %v1108 = vpop.permute.xlu0 %1107
      %1109 = vrot.lane.b32.xlu0 %v1093, 127
      %v1110 = vpop.permute.xlu0 %1109
      %1111 = vrot.lane.b32.xlu0 %v1094, 127
      %v1112 = vpop.permute.xlu0 %1111
      %v1113 = vsel %vm725, %v1102, %v1104
      %v1114 = vsel %vm725, %v1104, %v1106
      %v1115 = vsel %vm725, %v1108, %v1110
      %v1116 = vsel %vm725, %v1110, %v1112
      %v1121 = vadd.f32 %v1077, %v1113
      %v1122 = vadd.f32 %v1078, %v1114
      %v1123 = vadd.f32 %v1079, %v1115
      %v1124 = vadd.f32 %v1080, %v1116
      %1125 = vset.pattern.permute.xlu0 2
      %1126 = vperm.xlu0 %1125, %v1061
      %v1127 = vpop.permute.xlu0 %1126
      %1129 = vset.pattern.permute.xlu0 2
      %1130 = vperm.xlu0 %1129, %v1062
      %v1131 = vpop.permute.xlu0 %1130
      %v1133 = vmul.f32 %v1127, %v1059
      %v1134 = vmul.f32 %v1127, %v1051
      %v1135 = vmul.f32 %v1127, %v1045
      %v1136 = vmul.f32 %v1131, %v1060
      %v1137 = vmul.f32 %v1131, %v1052
      %v1138 = vmul.f32 %v1131, %v1049
      %1145 = vrot.lane.b32.xlu0 %v1133, 126
      %v1146 = vpop.permute.xlu0 %1145
      %1147 = vrot.lane.b32.xlu0 %v1134, 126
      %v1148 = vpop.permute.xlu0 %1147
      %1149 = vrot.lane.b32.xlu0 %v1135, 126
      %v1150 = vpop.permute.xlu0 %1149
      %1151 = vrot.lane.b32.xlu0 %v1136, 126
      %v1152 = vpop.permute.xlu0 %1151
      %1153 = vrot.lane.b32.xlu0 %v1137, 126
      %v1154 = vpop.permute.xlu0 %1153
      %1155 = vrot.lane.b32.xlu0 %v1138, 126
      %v1156 = vpop.permute.xlu0 %1155
      %v1157 = vsel %vm739, %v1146, %v1148
      %v1158 = vsel %vm739, %v1148, %v1150
      %v1159 = vsel %vm739, %v1152, %v1154
      %v1160 = vsel %vm739, %v1154, %v1156
      %v1165 = vadd.f32 %v1121, %v1157
      %v1166 = vadd.f32 %v1122, %v1158
      %v1167 = vadd.f32 %v1123, %v1159
      %v1168 = vadd.f32 %v1124, %v1160
      %1169 = vset.pattern.permute.xlu0 3
      %1170 = vperm.xlu0 %1169, %v1061
      %v1171 = vpop.permute.xlu0 %1170
      %1173 = vset.pattern.permute.xlu0 3
      %1174 = vperm.xlu0 %1173, %v1062
      %v1175 = vpop.permute.xlu0 %1174
      %v1177 = vmul.f32 %v1171, %v1059
      %v1178 = vmul.f32 %v1171, %v1051
      %v1179 = vmul.f32 %v1171, %v1045
      %v1180 = vmul.f32 %v1175, %v1060
      %v1181 = vmul.f32 %v1175, %v1052
      %v1182 = vmul.f32 %v1175, %v1049
      %1189 = vrot.lane.b32.xlu0 %v1177, 125
      %v1190 = vpop.permute.xlu0 %1189
      %1191 = vrot.lane.b32.xlu0 %v1178, 125
      %v1192 = vpop.permute.xlu0 %1191
      %1193 = vrot.lane.b32.xlu0 %v1179, 125
      %v1194 = vpop.permute.xlu0 %1193
      %1195 = vrot.lane.b32.xlu0 %v1180, 125
      %v1196 = vpop.permute.xlu0 %1195
      %1197 = vrot.lane.b32.xlu0 %v1181, 125
      %v1198 = vpop.permute.xlu0 %1197
      %1199 = vrot.lane.b32.xlu0 %v1182, 125
      %v1200 = vpop.permute.xlu0 %1199
      %vm1201 = vcmask 1022976
      %v1202 = vsel %vm1201, %v1190, %v1192
      %v1203 = vsel %vm1201, %v1192, %v1194
      %v1204 = vsel %vm1201, %v1196, %v1198
      %v1205 = vsel %vm1201, %v1198, %v1200
      %v1210 = vadd.f32 %v1165, %v1202
      %v1211 = vadd.f32 %v1166, %v1203
      %v1212 = vadd.f32 %v1167, %v1204
      %v1213 = vadd.f32 %v1168, %v1205
      %v1214 = vld [vmem:[%s10] sm:$0xff]
      %v1215 = vld [vmem:[%s10 + $0x8] sm:$0xff]
      %1217 = vset.pattern.permute.xlu0 0
      %1218 = vperm.xlu0 %1217, %v1214
      %v1219 = vpop.permute.xlu0 %1218
      %1222 = vset.pattern.permute.xlu0 0
      %1223 = vperm.xlu0 %1222, %v1215
      %v1224 = vpop.permute.xlu0 %1223
      %v1226 = vadd.f32 %v1210, %v1219
      %v1227 = vadd.f32 %v1211, %v1219
      %v1228 = vadd.f32 %v1212, %v1224
      %v1229 = vadd.f32 %v1213, %v1224
      %v1230 = vxor.u32 %v1226, 2147483648
      %v1231 = vxor.u32 %v1227, 2147483648
      %v1232 = vxor.u32 %v1228, 2147483648
      %v1233 = vxor.u32 %v1229, 2147483648
      %v1234 = vmul.f32 %v1230, 1.442695
      %v1235 = vpow.pop %v1234
      %v1236 = vmul.f32 %v1231, 1.442695
      %v1237 = vpow.pop %v1236
      %v1238 = vmul.f32 %v1232, 1.442695
      %v1239 = vpow.pop %v1238
      %v1240 = vmul.f32 %v1233, 1.442695
      %v1241 = vpow.pop %v1240
      %v1242 = vadd.f32 %v1235, 1.0
      %v1243 = vadd.f32 %v1237, 1.0
      %v1244 = vadd.f32 %v1239, 1.0
      %v1245 = vadd.f32 %v1241, 1.0
      %v1246 = vrcp.pop %v1242
      %v1247 = vmul.f32 %v1242, %v1246
      %v1248 = vsub.f32 1.0, %v1247
      %v1249 = vmul.f32 %v1246, %v1248
      %v1250 = vadd.f32 %v1246, %v1249
      %vm1251 = vweird.f32 %v1242
      %vm1252 = vweird.f32 %v1246
      %vm1253 = vmor %vm1251, %vm1252
      %v1254 = vsel %vm1253, %v1246, %v1250
      %v1255 = vand.u32 2147483647, %v1242
      %vm1256 = vcmp.eq.f32.partialorder %v1255, 8.507059e+37
      %v1257 = vand.u32 %v1242, 2147483648
      %v1258 = vor.u32 1.1754944e-38, %v1257
      %v1259 = vsel %vm1256, %v1258, %v1254
      %v1260 = vmul.f32 1.0, %v1259
      %v1261 = vrcp.pop %v1243
      %v1262 = vmul.f32 %v1243, %v1261
      %v1263 = vsub.f32 1.0, %v1262
      %v1264 = vmul.f32 %v1261, %v1263
      %v1265 = vadd.f32 %v1261, %v1264
      %vm1266 = vweird.f32 %v1243
      %vm1267 = vweird.f32 %v1261
      %vm1268 = vmor %vm1266, %vm1267
      %v1269 = vsel %vm1268, %v1261, %v1265
      %v1270 = vand.u32 2147483647, %v1243
      %vm1271 = vcmp.eq.f32.partialorder %v1270, 8.507059e+37
      %v1272 = vand.u32 %v1243, 2147483648
      %v1273 = vor.u32 1.1754944e-38, %v1272
      %v1274 = vsel %vm1271, %v1273, %v1269
      %v1275 = vmul.f32 1.0, %v1274
      %v1276 = vrcp.pop %v1244
      %v1277 = vmul.f32 %v1244, %v1276
      %v1278 = vsub.f32 1.0, %v1277
      %v1279 = vmul.f32 %v1276, %v1278
      %v1280 = vadd.f32 %v1276, %v1279
      %vm1281 = vweird.f32 %v1244
      %vm1282 = vweird.f32 %v1276
      %vm1283 = vmor %vm1281, %vm1282
      %v1284 = vsel %vm1283, %v1276, %v1280
      %v1285 = vand.u32 2147483647, %v1244
      %vm1286 = vcmp.eq.f32.partialorder %v1285, 8.507059e+37
      %v1287 = vand.u32 %v1244, 2147483648
      %v1288 = vor.u32 1.1754944e-38, %v1287
      %v1289 = vsel %vm1286, %v1288, %v1284
      %v1290 = vmul.f32 1.0, %v1289
      %v1291 = vrcp.pop %v1245
      %v1292 = vmul.f32 %v1245, %v1291
      %v1293 = vsub.f32 1.0, %v1292
      %v1294 = vmul.f32 %v1291, %v1293
      %v1295 = vadd.f32 %v1291, %v1294
      %vm1296 = vweird.f32 %v1245
      %vm1297 = vweird.f32 %v1291
      %vm1298 = vmor %vm1296, %vm1297
      %v1299 = vsel %vm1298, %v1291, %v1295
      %v1300 = vand.u32 2147483647, %v1245
      %vm1301 = vcmp.eq.f32.partialorder %v1300, 8.507059e+37
      %v1302 = vand.u32 %v1245, 2147483648
      %v1303 = vor.u32 1.1754944e-38, %v1302
      %v1304 = vsel %vm1301, %v1303, %v1299
      %v1305 = vmul.f32 1.0, %v1304
      %v1306 = vmul.f32 %v1226, %v1260
      %v1307 = vmul.f32 %v1227, %v1275
      %v1308 = vmul.f32 %v1228, %v1290
      %v1309 = vmul.f32 %v1229, %v1305
      %1310 = vxpose.xlu0.b32.start [1/16] %v1306, 128
      %1311 = vxpose.xlu0.b32.cont [2/16] %v1308, 128
      %1312 = vxpose.xlu0.b32.cont [3/16] 0.0, 128
      %1313 = vxpose.xlu0.b32.cont [4/16] 0.0, 128
      %1314 = vxpose.xlu0.b32.cont [5/16] 0.0, 128
      %1315 = vxpose.xlu0.b32.cont [6/16] 0.0, 128
      %1316 = vxpose.xlu0.b32.cont [7/16] 0.0, 128
      %1317 = vxpose.xlu0.b32.cont [8/16] 0.0, 128
      %1318 = vxpose.xlu0.b32.cont [9/16] 0.0, 128
      %1319 = vxpose.xlu0.b32.cont [10/16] 0.0, 128
      %1320 = vxpose.xlu0.b32.cont [11/16] 0.0, 128
      %1321 = vxpose.xlu0.b32.cont [12/16] 0.0, 128
      %1322 = vxpose.xlu0.b32.cont [13/16] 0.0, 128
      %1323 = vxpose.xlu0.b32.cont [14/16] 0.0, 128
      %1324 = vxpose.xlu0.b32.cont [15/16] 0.0, 128
      %1325 = vxpose.xlu0.b32.end [16/16] 0.0, 128
      %v1326 = vpop.trf.xlu0
      %v1327 = vpop.trf.xlu0
      %v1328 = vpop.trf.xlu0
      %v1329 = vpop.trf.xlu0
      %v1330 = vpop.trf.xlu0
      %v1331 = vpop.trf.xlu0
      %v1332 = vpop.trf.xlu0
      %v1333 = vpop.trf.xlu0
      %v1334 = vpop.trf.xlu0
      %v1335 = vpop.trf.xlu0
      %v1336 = vpop.trf.xlu0
      %v1337 = vpop.trf.xlu0
      %v1338 = vpop.trf.xlu0
      %v1339 = vpop.trf.xlu0
      %v1340 = vpop.trf.xlu0
      %v1341 = vpop.trf.xlu0
      %1342 = vxpose.xlu0.b32.start [1/16] %v1307, 128
      %1343 = vxpose.xlu0.b32.cont [2/16] %v1309, 128
      %1344 = vxpose.xlu0.b32.cont [3/16] 0.0, 128
      %1345 = vxpose.xlu0.b32.cont [4/16] 0.0, 128
      %1346 = vxpose.xlu0.b32.cont [5/16] 0.0, 128
      %1347 = vxpose.xlu0.b32.cont [6/16] 0.0, 128
      %1348 = vxpose.xlu0.b32.cont [7/16] 0.0, 128
      %1349 = vxpose.xlu0.b32.cont [8/16] 0.0, 128
      %1350 = vxpose.xlu0.b32.cont [9/16] 0.0, 128
      %1351 = vxpose.xlu0.b32.cont [10/16] 0.0, 128
      %1352 = vxpose.xlu0.b32.cont [11/16] 0.0, 128
      %1353 = vxpose.xlu0.b32.cont [12/16] 0.0, 128
      %1354 = vxpose.xlu0.b32.cont [13/16] 0.0, 128
      %1355 = vxpose.xlu0.b32.cont [14/16] 0.0, 128
      %1356 = vxpose.xlu0.b32.cont [15/16] 0.0, 128
      %1357 = vxpose.xlu0.b32.end [16/16] 0.0, 128
      %v1358 = vpop.trf.xlu0
      %v1359 = vpop.trf.xlu0
      %v1360 = vpop.trf.xlu0
      %v1361 = vpop.trf.xlu0
      %v1362 = vpop.trf.xlu0
      %v1363 = vpop.trf.xlu0
      %v1364 = vpop.trf.xlu0
      %v1365 = vpop.trf.xlu0
      %v1366 = vpop.trf.xlu0
      %v1367 = vpop.trf.xlu0
      %v1368 = vpop.trf.xlu0
      %v1369 = vpop.trf.xlu0
      %v1370 = vpop.trf.xlu0
      %v1371 = vpop.trf.xlu0
      %v1372 = vpop.trf.xlu0
      %v1373 = vpop.trf.xlu0
      %v1374 = vld [vmem:[%s11] sm:$0xff]
      %v1375 = vld [vmem:[%s11 + $0x8] sm:$0xff]
      %v1376 = vld [vmem:[%s11 + $0x10] sm:$0xff]
      %v1377 = vld [vmem:[%s11 + $0x18] sm:$0xff]
      %v1379 = vsel %vm670, %v1326, 0
      %v1382 = vsel %vm670, %v1327, 0
      %v1385 = vsel %vm670, %v1328, 0
      %v1388 = vsel %vm670, %v1329, 0
      %v1391 = vsel %vm670, %v1330, 0
      %v1394 = vsel %vm670, %v1331, 0
      %v1397 = vsel %vm670, %v1332, 0
      %v1400 = vsel %vm670, %v1333, 0
      %v1403 = vsel %vm670, %v1334, 0
      %v1406 = vsel %vm670, %v1335, 0
      %v1409 = vsel %vm670, %v1336, 0
      %v1412 = vsel %vm670, %v1337, 0
      %v1415 = vsel %vm670, %v1338, 0
      %v1418 = vsel %vm670, %v1339, 0
      %v1421 = vsel %vm670, %v1340, 0
      %v1424 = vsel %vm670, %v1341, 0
      %v1427 = vsel %vm670, %v1358, 0
      %v1430 = vsel %vm670, %v1359, 0
      %v1433 = vsel %vm670, %v1360, 0
      %v1436 = vsel %vm670, %v1361, 0
      %v1439 = vsel %vm670, %v1362, 0
      %v1442 = vsel %vm670, %v1363, 0
      %v1445 = vsel %vm670, %v1364, 0
      %v1448 = vsel %vm670, %v1365, 0
      %v1451 = vsel %vm670, %v1366, 0
      %v1454 = vsel %vm670, %v1367, 0
      %v1457 = vsel %vm670, %v1368, 0
      %v1460 = vsel %vm670, %v1369, 0
      %v1463 = vsel %vm670, %v1370, 0
      %v1466 = vsel %vm670, %v1371, 0
      %v1469 = vsel %vm670, %v1372, 0
      %v1472 = vsel %vm670, %v1373, 0
      %1474 = vmatpush.msra.mxu0 0.0
      %1475 = vmatpush.msra.mxu0 0.0
      %1476 = vmatpush.msra.mxu0 0.0
      %1477 = vmatpush.msra.mxu0 0.0
      %1478 = vmatpush.msra.mxu0 0.0
      %1479 = vmatpush.msra.mxu0 0.0
      %1480 = vmatpush.msra.mxu0 0.0
      %1481 = vmatpush.msra.mxu0 0.0
      %1482 = vmatpush.msra.mxu0 0.0
      %1483 = vmatpush.msra.mxu0 0.0
      %1484 = vmatpush.msra.mxu0 0.0
      %1485 = vmatpush.msra.mxu0 0.0
      %1486 = vmatpush.msra.mxu0 0.0
      %1487 = vmatpush.msra.mxu0 0.0
      %1488 = vmatpush.msra.mxu0 %v1376
      %1489 = vmatpush.msra.mxu0 %v1374
      %1490 = vmatmul.f32.gmra.mxu0 %v1379
      %v1491 = vpop.f32.mrf.mxu0
      %v1492 = vadd.f32 0.0, %v1491
      %1493 = vmatmul.f32.gmra.mxu0 %v1382
      %v1494 = vpop.f32.mrf.mxu0
      %v1495 = vadd.f32 0.0, %v1494
      %1496 = vmatmul.f32.gmra.mxu0 %v1385
      %v1497 = vpop.f32.mrf.mxu0
      %v1498 = vadd.f32 0.0, %v1497
      %1499 = vmatmul.f32.gmra.mxu0 %v1388
      %v1500 = vpop.f32.mrf.mxu0
      %v1501 = vadd.f32 0.0, %v1500
      %1502 = vmatmul.f32.gmra.mxu0 %v1391
      %v1503 = vpop.f32.mrf.mxu0
      %v1504 = vadd.f32 0.0, %v1503
      %1505 = vmatmul.f32.gmra.mxu0 %v1394
      %v1506 = vpop.f32.mrf.mxu0
      %v1507 = vadd.f32 0.0, %v1506
      %1508 = vmatmul.f32.gmra.mxu0 %v1397
      %v1509 = vpop.f32.mrf.mxu0
      %v1510 = vadd.f32 0.0, %v1509
      %1511 = vmatmul.f32.gmra.mxu0 %v1400
      %v1512 = vpop.f32.mrf.mxu0
      %v1513 = vadd.f32 0.0, %v1512
      %1514 = vmatmul.f32.gmra.mxu0 %v1403
      %v1515 = vpop.f32.mrf.mxu0
      %v1516 = vadd.f32 0.0, %v1515
      %1517 = vmatmul.f32.gmra.mxu0 %v1406
      %v1518 = vpop.f32.mrf.mxu0
      %v1519 = vadd.f32 0.0, %v1518
      %1520 = vmatmul.f32.gmra.mxu0 %v1409
      %v1521 = vpop.f32.mrf.mxu0
      %v1522 = vadd.f32 0.0, %v1521
      %1523 = vmatmul.f32.gmra.mxu0 %v1412
      %v1524 = vpop.f32.mrf.mxu0
      %v1525 = vadd.f32 0.0, %v1524
      %1526 = vmatmul.f32.gmra.mxu0 %v1415
      %v1527 = vpop.f32.mrf.mxu0
      %v1528 = vadd.f32 0.0, %v1527
      %1529 = vmatmul.f32.gmra.mxu0 %v1418
      %v1530 = vpop.f32.mrf.mxu0
      %v1531 = vadd.f32 0.0, %v1530
      %1532 = vmatmul.f32.gmra.mxu0 %v1421
      %v1533 = vpop.f32.mrf.mxu0
      %v1534 = vadd.f32 0.0, %v1533
      %1535 = vmatmul.f32.gmra.mxu0 %v1424
      %v1536 = vpop.f32.mrf.mxu0
      %v1537 = vadd.f32 0.0, %v1536
      %1538 = vmatmul.f32.gmra.mxu0 %v1427
      %v1539 = vpop.f32.mrf.mxu0
      %v1540 = vadd.f32 0.0, %v1539
      %1541 = vmatmul.f32.gmra.mxu0 %v1430
      %v1542 = vpop.f32.mrf.mxu0
      %v1543 = vadd.f32 0.0, %v1542
      %1544 = vmatmul.f32.gmra.mxu0 %v1433
      %v1545 = vpop.f32.mrf.mxu0
      %v1546 = vadd.f32 0.0, %v1545
      %1547 = vmatmul.f32.gmra.mxu0 %v1436
      %v1548 = vpop.f32.mrf.mxu0
      %v1549 = vadd.f32 0.0, %v1548
      %1550 = vmatmul.f32.gmra.mxu0 %v1439
      %v1551 = vpop.f32.mrf.mxu0
      %v1552 = vadd.f32 0.0, %v1551
      %1553 = vmatmul.f32.gmra.mxu0 %v1442
      %v1554 = vpop.f32.mrf.mxu0
      %v1555 = vadd.f32 0.0, %v1554
      %1556 = vmatmul.f32.gmra.mxu0 %v1445
      %v1557 = vpop.f32.mrf.mxu0
      %v1558 = vadd.f32 0.0, %v1557
      %1559 = vmatmul.f32.gmra.mxu0 %v1448
      %v1560 = vpop.f32.mrf.mxu0
      %v1561 = vadd.f32 0.0, %v1560
      %1562 = vmatmul.f32.gmra.mxu0 %v1451
      %v1563 = vpop.f32.mrf.mxu0
      %v1564 = vadd.f32 0.0, %v1563
      %1565 = vmatmul.f32.gmra.mxu0 %v1454
      %v1566 = vpop.f32.mrf.mxu0
      %v1567 = vadd.f32 0.0, %v1566
      %1568 = vmatmul.f32.gmra.mxu0 %v1457
      %v1569 = vpop.f32.mrf.mxu0
      %v1570 = vadd.f32 0.0, %v1569
      %1571 = vmatmul.f32.gmra.mxu0 %v1460
      %v1572 = vpop.f32.mrf.mxu0
      %v1573 = vadd.f32 0.0, %v1572
      %1574 = vmatmul.f32.gmra.mxu0 %v1463
      %v1575 = vpop.f32.mrf.mxu0
      %v1576 = vadd.f32 0.0, %v1575
      %1577 = vmatmul.f32.gmra.mxu0 %v1466
      %v1578 = vpop.f32.mrf.mxu0
      %v1579 = vadd.f32 0.0, %v1578
      %1580 = vmatmul.f32.gmra.mxu0 %v1469
      %v1581 = vpop.f32.mrf.mxu0
      %v1582 = vadd.f32 0.0, %v1581
      %1583 = vmatmul.f32.gmra.mxu0 %v1472
      %v1584 = vpop.f32.mrf.mxu0
      %v1585 = vadd.f32 0.0, %v1584
      %1586 = vdwg.mxu0
      %1587 = vmatpush.msra.mxu0 0.0
      %1588 = vmatpush.msra.mxu0 0.0
      %1589 = vmatpush.msra.mxu0 0.0
      %1590 = vmatpush.msra.mxu0 0.0
      %1591 = vmatpush.msra.mxu0 0.0
      %1592 = vmatpush.msra.mxu0 0.0
      %1593 = vmatpush.msra.mxu0 0.0
      %1594 = vmatpush.msra.mxu0 0.0
      %1595 = vmatpush.msra.mxu0 0.0
      %1596 = vmatpush.msra.mxu0 0.0
      %1597 = vmatpush.msra.mxu0 0.0
      %1598 = vmatpush.msra.mxu0 0.0
      %1599 = vmatpush.msra.mxu0 0.0
      %1600 = vmatpush.msra.mxu0 0.0
      %1601 = vmatpush.msra.mxu0 %v1377
      %1602 = vmatpush.msra.mxu0 %v1375
      %1603 = vmatmul.f32.gmra.mxu0 %v1379
      %v1604 = vpop.f32.mrf.mxu0
      %v1605 = vadd.f32 0.0, %v1604
      %1606 = vmatmul.f32.gmra.mxu0 %v1382
      %v1607 = vpop.f32.mrf.mxu0
      %v1608 = vadd.f32 0.0, %v1607
      %1609 = vmatmul.f32.gmra.mxu0 %v1385
      %v1610 = vpop.f32.mrf.mxu0
      %v1611 = vadd.f32 0.0, %v1610
      %1612 = vmatmul.f32.gmra.mxu0 %v1388
      %v1613 = vpop.f32.mrf.mxu0
      %v1614 = vadd.f32 0.0, %v1613
      %1615 = vmatmul.f32.gmra.mxu0 %v1391
      %v1616 = vpop.f32.mrf.mxu0
      %v1617 = vadd.f32 0.0, %v1616
      %1618 = vmatmul.f32.gmra.mxu0 %v1394
      %v1619 = vpop.f32.mrf.mxu0
      %v1620 = vadd.f32 0.0, %v1619
      %1621 = vmatmul.f32.gmra.mxu0 %v1397
      %v1622 = vpop.f32.mrf.mxu0
      %v1623 = vadd.f32 0.0, %v1622
      %1624 = vmatmul.f32.gmra.mxu0 %v1400
      %v1625 = vpop.f32.mrf.mxu0
      %v1626 = vadd.f32 0.0, %v1625
      %1627 = vmatmul.f32.gmra.mxu0 %v1403
      %v1628 = vpop.f32.mrf.mxu0
      %v1629 = vadd.f32 0.0, %v1628
      %1630 = vmatmul.f32.gmra.mxu0 %v1406
      %v1631 = vpop.f32.mrf.mxu0
      %v1632 = vadd.f32 0.0, %v1631
      %1633 = vmatmul.f32.gmra.mxu0 %v1409
      %v1634 = vpop.f32.mrf.mxu0
      %v1635 = vadd.f32 0.0, %v1634
      %1636 = vmatmul.f32.gmra.mxu0 %v1412
      %v1637 = vpop.f32.mrf.mxu0
      %v1638 = vadd.f32 0.0, %v1637
      %1639 = vmatmul.f32.gmra.mxu0 %v1415
      %v1640 = vpop.f32.mrf.mxu0
      %v1641 = vadd.f32 0.0, %v1640
      %1642 = vmatmul.f32.gmra.mxu0 %v1418
      %v1643 = vpop.f32.mrf.mxu0
      %v1644 = vadd.f32 0.0, %v1643
      %1645 = vmatmul.f32.gmra.mxu0 %v1421
      %v1646 = vpop.f32.mrf.mxu0
      %v1647 = vadd.f32 0.0, %v1646
      %1648 = vmatmul.f32.gmra.mxu0 %v1424
      %v1649 = vpop.f32.mrf.mxu0
      %v1650 = vadd.f32 0.0, %v1649
      %1651 = vmatmul.f32.gmra.mxu0 %v1427
      %v1652 = vpop.f32.mrf.mxu0
      %v1653 = vadd.f32 0.0, %v1652
      %1654 = vmatmul.f32.gmra.mxu0 %v1430
      %v1655 = vpop.f32.mrf.mxu0
      %v1656 = vadd.f32 0.0, %v1655
      %1657 = vmatmul.f32.gmra.mxu0 %v1433
      %v1658 = vpop.f32.mrf.mxu0
      %v1659 = vadd.f32 0.0, %v1658
      %1660 = vmatmul.f32.gmra.mxu0 %v1436
      %v1661 = vpop.f32.mrf.mxu0
      %v1662 = vadd.f32 0.0, %v1661
      %1663 = vmatmul.f32.gmra.mxu0 %v1439
      %v1664 = vpop.f32.mrf.mxu0
      %v1665 = vadd.f32 0.0, %v1664
      %1666 = vmatmul.f32.gmra.mxu0 %v1442
      %v1667 = vpop.f32.mrf.mxu0
      %v1668 = vadd.f32 0.0, %v1667
      %1669 = vmatmul.f32.gmra.mxu0 %v1445
      %v1670 = vpop.f32.mrf.mxu0
      %v1671 = vadd.f32 0.0, %v1670
      %1672 = vmatmul.f32.gmra.mxu0 %v1448
      %v1673 = vpop.f32.mrf.mxu0
      %v1674 = vadd.f32 0.0, %v1673
      %1675 = vmatmul.f32.gmra.mxu0 %v1451
      %v1676 = vpop.f32.mrf.mxu0
      %v1677 = vadd.f32 0.0, %v1676
      %1678 = vmatmul.f32.gmra.mxu0 %v1454
      %v1679 = vpop.f32.mrf.mxu0
      %v1680 = vadd.f32 0.0, %v1679
      %1681 = vmatmul.f32.gmra.mxu0 %v1457
      %v1682 = vpop.f32.mrf.mxu0
      %v1683 = vadd.f32 0.0, %v1682
      %1684 = vmatmul.f32.gmra.mxu0 %v1460
      %v1685 = vpop.f32.mrf.mxu0
      %v1686 = vadd.f32 0.0, %v1685
      %1687 = vmatmul.f32.gmra.mxu0 %v1463
      %v1688 = vpop.f32.mrf.mxu0
      %v1689 = vadd.f32 0.0, %v1688
      %1690 = vmatmul.f32.gmra.mxu0 %v1466
      %v1691 = vpop.f32.mrf.mxu0
      %v1692 = vadd.f32 0.0, %v1691
      %1693 = vmatmul.f32.gmra.mxu0 %v1469
      %v1694 = vpop.f32.mrf.mxu0
      %v1695 = vadd.f32 0.0, %v1694
      %1696 = vmatmul.f32.gmra.mxu0 %v1472
      %v1697 = vpop.f32.mrf.mxu0
      %v1698 = vadd.f32 0.0, %v1697
      %1699 = vdwg.mxu0
      %v1700 = vld [vmem:[%s15] sm:$0xff]
      %v1701 = vld [vmem:[%s15 + $0x8] sm:$0xff]
      %v1702 = vld [vmem:[%s15 + $0x10] sm:$0xff]
      %v1703 = vld [vmem:[%s15 + $0x18] sm:$0xff]
      %1704 = vmatpush.msra.mxu0 0.0
      %1705 = vmatpush.msra.mxu0 0.0
      %1706 = vmatpush.msra.mxu0 0.0
      %1707 = vmatpush.msra.mxu0 0.0
      %1708 = vmatpush.msra.mxu0 0.0
      %1709 = vmatpush.msra.mxu0 0.0
      %1710 = vmatpush.msra.mxu0 0.0
      %1711 = vmatpush.msra.mxu0 0.0
      %1712 = vmatpush.msra.mxu0 0.0
      %1713 = vmatpush.msra.mxu0 0.0
      %1714 = vmatpush.msra.mxu0 0.0
      %1715 = vmatpush.msra.mxu0 0.0
      %1716 = vmatpush.msra.mxu0 0.0
      %1717 = vmatpush.msra.mxu0 0.0
      %1718 = vmatpush.msra.mxu0 %v1702
      %1719 = vmatpush.msra.mxu0 %v1700
      %1720 = vmatmul.f32.gmra.mxu0 %v1379
      %v1721 = vpop.f32.mrf.mxu0
      %v1722 = vadd.f32 0.0, %v1721
      %1723 = vmatmul.f32.gmra.mxu0 %v1382
      %v1724 = vpop.f32.mrf.mxu0
      %v1725 = vadd.f32 0.0, %v1724
      %1726 = vmatmul.f32.gmra.mxu0 %v1385
      %v1727 = vpop.f32.mrf.mxu0
      %v1728 = vadd.f32 0.0, %v1727
      %1729 = vmatmul.f32.gmra.mxu0 %v1388
      %v1730 = vpop.f32.mrf.mxu0
      %v1731 = vadd.f32 0.0, %v1730
      %1732 = vmatmul.f32.gmra.mxu0 %v1391
      %v1733 = vpop.f32.mrf.mxu0
      %v1734 = vadd.f32 0.0, %v1733
      %1735 = vmatmul.f32.gmra.mxu0 %v1394
      %v1736 = vpop.f32.mrf.mxu0
      %v1737 = vadd.f32 0.0, %v1736
      %1738 = vmatmul.f32.gmra.mxu0 %v1397
      %v1739 = vpop.f32.mrf.mxu0
      %v1740 = vadd.f32 0.0, %v1739
      %1741 = vmatmul.f32.gmra.mxu0 %v1400
      %v1742 = vpop.f32.mrf.mxu0
      %v1743 = vadd.f32 0.0, %v1742
      %1744 = vmatmul.f32.gmra.mxu0 %v1403
      %v1745 = vpop.f32.mrf.mxu0
      %v1746 = vadd.f32 0.0, %v1745
      %1747 = vmatmul.f32.gmra.mxu0 %v1406
      %v1748 = vpop.f32.mrf.mxu0
      %v1749 = vadd.f32 0.0, %v1748
      %1750 = vmatmul.f32.gmra.mxu0 %v1409
      %v1751 = vpop.f32.mrf.mxu0
      %v1752 = vadd.f32 0.0, %v1751
      %1753 = vmatmul.f32.gmra.mxu0 %v1412
      %v1754 = vpop.f32.mrf.mxu0
      %v1755 = vadd.f32 0.0, %v1754
      %1756 = vmatmul.f32.gmra.mxu0 %v1415
      %v1757 = vpop.f32.mrf.mxu0
      %v1758 = vadd.f32 0.0, %v1757
      %1759 = vmatmul.f32.gmra.mxu0 %v1418
      %v1760 = vpop.f32.mrf.mxu0
      %v1761 = vadd.f32 0.0, %v1760
      %1762 = vmatmul.f32.gmra.mxu0 %v1421
      %v1763 = vpop.f32.mrf.mxu0
      %v1764 = vadd.f32 0.0, %v1763
      %1765 = vmatmul.f32.gmra.mxu0 %v1424
      %v1766 = vpop.f32.mrf.mxu0
      %v1767 = vadd.f32 0.0, %v1766
      %1768 = vmatmul.f32.gmra.mxu0 %v1427
      %v1769 = vpop.f32.mrf.mxu0
      %v1770 = vadd.f32 0.0, %v1769
      %1771 = vmatmul.f32.gmra.mxu0 %v1430
      %v1772 = vpop.f32.mrf.mxu0
      %v1773 = vadd.f32 0.0, %v1772
      %1774 = vmatmul.f32.gmra.mxu0 %v1433
      %v1775 = vpop.f32.mrf.mxu0
      %v1776 = vadd.f32 0.0, %v1775
      %1777 = vmatmul.f32.gmra.mxu0 %v1436
      %v1778 = vpop.f32.mrf.mxu0
      %v1779 = vadd.f32 0.0, %v1778
      %1780 = vmatmul.f32.gmra.mxu0 %v1439
      %v1781 = vpop.f32.mrf.mxu0
      %v1782 = vadd.f32 0.0, %v1781
      %1783 = vmatmul.f32.gmra.mxu0 %v1442
      %v1784 = vpop.f32.mrf.mxu0
      %v1785 = vadd.f32 0.0, %v1784
      %1786 = vmatmul.f32.gmra.mxu0 %v1445
      %v1787 = vpop.f32.mrf.mxu0
      %v1788 = vadd.f32 0.0, %v1787
      %1789 = vmatmul.f32.gmra.mxu0 %v1448
      %v1790 = vpop.f32.mrf.mxu0
      %v1791 = vadd.f32 0.0, %v1790
      %1792 = vmatmul.f32.gmra.mxu0 %v1451
      %v1793 = vpop.f32.mrf.mxu0
      %v1794 = vadd.f32 0.0, %v1793
      %1795 = vmatmul.f32.gmra.mxu0 %v1454
      %v1796 = vpop.f32.mrf.mxu0
      %v1797 = vadd.f32 0.0, %v1796
      %1798 = vmatmul.f32.gmra.mxu0 %v1457
      %v1799 = vpop.f32.mrf.mxu0
      %v1800 = vadd.f32 0.0, %v1799
      %1801 = vmatmul.f32.gmra.mxu0 %v1460
      %v1802 = vpop.f32.mrf.mxu0
      %v1803 = vadd.f32 0.0, %v1802
      %1804 = vmatmul.f32.gmra.mxu0 %v1463
      %v1805 = vpop.f32.mrf.mxu0
      %v1806 = vadd.f32 0.0, %v1805
      %1807 = vmatmul.f32.gmra.mxu0 %v1466
      %v1808 = vpop.f32.mrf.mxu0
      %v1809 = vadd.f32 0.0, %v1808
      %1810 = vmatmul.f32.gmra.mxu0 %v1469
      %v1811 = vpop.f32.mrf.mxu0
      %v1812 = vadd.f32 0.0, %v1811
      %1813 = vmatmul.f32.gmra.mxu0 %v1472
      %v1814 = vpop.f32.mrf.mxu0
      %v1815 = vadd.f32 0.0, %v1814
      %1816 = vdwg.mxu0
      %1817 = vmatpush.msra.mxu0 0.0
      %1818 = vmatpush.msra.mxu0 0.0
      %1819 = vmatpush.msra.mxu0 0.0
      %1820 = vmatpush.msra.mxu0 0.0
      %1821 = vmatpush.msra.mxu0 0.0
      %1822 = vmatpush.msra.mxu0 0.0
      %1823 = vmatpush.msra.mxu0 0.0
      %1824 = vmatpush.msra.mxu0 0.0
      %1825 = vmatpush.msra.mxu0 0.0
      %1826 = vmatpush.msra.mxu0 0.0
      %1827 = vmatpush.msra.mxu0 0.0
      %1828 = vmatpush.msra.mxu0 0.0
      %1829 = vmatpush.msra.mxu0 0.0
      %1830 = vmatpush.msra.mxu0 0.0
      %1831 = vmatpush.msra.mxu0 %v1703
      %1832 = vmatpush.msra.mxu0 %v1701
      %1833 = vmatmul.f32.gmra.mxu0 %v1379
      %v1834 = vpop.f32.mrf.mxu0
      %v1835 = vadd.f32 0.0, %v1834
      %1836 = vmatmul.f32.gmra.mxu0 %v1382
      %v1837 = vpop.f32.mrf.mxu0
      %v1838 = vadd.f32 0.0, %v1837
      %1839 = vmatmul.f32.gmra.mxu0 %v1385
      %v1840 = vpop.f32.mrf.mxu0
      %v1841 = vadd.f32 0.0, %v1840
      %1842 = vmatmul.f32.gmra.mxu0 %v1388
      %v1843 = vpop.f32.mrf.mxu0
      %v1844 = vadd.f32 0.0, %v1843
      %1845 = vmatmul.f32.gmra.mxu0 %v1391
      %v1846 = vpop.f32.mrf.mxu0
      %v1847 = vadd.f32 0.0, %v1846
      %1848 = vmatmul.f32.gmra.mxu0 %v1394
      %v1849 = vpop.f32.mrf.mxu0
      %v1850 = vadd.f32 0.0, %v1849
      %1851 = vmatmul.f32.gmra.mxu0 %v1397
      %v1852 = vpop.f32.mrf.mxu0
      %v1853 = vadd.f32 0.0, %v1852
      %1854 = vmatmul.f32.gmra.mxu0 %v1400
      %v1855 = vpop.f32.mrf.mxu0
      %v1856 = vadd.f32 0.0, %v1855
      %1857 = vmatmul.f32.gmra.mxu0 %v1403
      %v1858 = vpop.f32.mrf.mxu0
      %v1859 = vadd.f32 0.0, %v1858
      %1860 = vmatmul.f32.gmra.mxu0 %v1406
      %v1861 = vpop.f32.mrf.mxu0
      %v1862 = vadd.f32 0.0, %v1861
      %1863 = vmatmul.f32.gmra.mxu0 %v1409
      %v1864 = vpop.f32.mrf.mxu0
      %v1865 = vadd.f32 0.0, %v1864
      %1866 = vmatmul.f32.gmra.mxu0 %v1412
      %v1867 = vpop.f32.mrf.mxu0
      %v1868 = vadd.f32 0.0, %v1867
      %1869 = vmatmul.f32.gmra.mxu0 %v1415
      %v1870 = vpop.f32.mrf.mxu0
      %v1871 = vadd.f32 0.0, %v1870
      %1872 = vmatmul.f32.gmra.mxu0 %v1418
      %v1873 = vpop.f32.mrf.mxu0
      %v1874 = vadd.f32 0.0, %v1873
      %1875 = vmatmul.f32.gmra.mxu0 %v1421
      %v1876 = vpop.f32.mrf.mxu0
      %v1877 = vadd.f32 0.0, %v1876
      %1878 = vmatmul.f32.gmra.mxu0 %v1424
      %v1879 = vpop.f32.mrf.mxu0
      %v1880 = vadd.f32 0.0, %v1879
      %1881 = vmatmul.f32.gmra.mxu0 %v1427
      %v1882 = vpop.f32.mrf.mxu0
      %v1883 = vadd.f32 0.0, %v1882
      %1884 = vmatmul.f32.gmra.mxu0 %v1430
      %v1885 = vpop.f32.mrf.mxu0
      %v1886 = vadd.f32 0.0, %v1885
      %1887 = vmatmul.f32.gmra.mxu0 %v1433
      %v1888 = vpop.f32.mrf.mxu0
      %v1889 = vadd.f32 0.0, %v1888
      %1890 = vmatmul.f32.gmra.mxu0 %v1436
      %v1891 = vpop.f32.mrf.mxu0
      %v1892 = vadd.f32 0.0, %v1891
      %1893 = vmatmul.f32.gmra.mxu0 %v1439
      %v1894 = vpop.f32.mrf.mxu0
      %v1895 = vadd.f32 0.0, %v1894
      %1896 = vmatmul.f32.gmra.mxu0 %v1442
      %v1897 = vpop.f32.mrf.mxu0
      %v1898 = vadd.f32 0.0, %v1897
      %1899 = vmatmul.f32.gmra.mxu0 %v1445
      %v1900 = vpop.f32.mrf.mxu0
      %v1901 = vadd.f32 0.0, %v1900
      %1902 = vmatmul.f32.gmra.mxu0 %v1448
      %v1903 = vpop.f32.mrf.mxu0
      %v1904 = vadd.f32 0.0, %v1903
      %1905 = vmatmul.f32.gmra.mxu0 %v1451
      %v1906 = vpop.f32.mrf.mxu0
      %v1907 = vadd.f32 0.0, %v1906
      %1908 = vmatmul.f32.gmra.mxu0 %v1454
      %v1909 = vpop.f32.mrf.mxu0
      %v1910 = vadd.f32 0.0, %v1909
      %1911 = vmatmul.f32.gmra.mxu0 %v1457
      %v1912 = vpop.f32.mrf.mxu0
      %v1913 = vadd.f32 0.0, %v1912
      %1914 = vmatmul.f32.gmra.mxu0 %v1460
      %v1915 = vpop.f32.mrf.mxu0
      %v1916 = vadd.f32 0.0, %v1915
      %1917 = vmatmul.f32.gmra.mxu0 %v1463
      %v1918 = vpop.f32.mrf.mxu0
      %v1919 = vadd.f32 0.0, %v1918
      %1920 = vmatmul.f32.gmra.mxu0 %v1466
      %v1921 = vpop.f32.mrf.mxu0
      %v1922 = vadd.f32 0.0, %v1921
      %1923 = vmatmul.f32.gmra.mxu0 %v1469
      %v1924 = vpop.f32.mrf.mxu0
      %v1925 = vadd.f32 0.0, %v1924
      %1926 = vmatmul.f32.gmra.mxu0 %v1472
      %v1927 = vpop.f32.mrf.mxu0
      %v1928 = vadd.f32 0.0, %v1927
      %1929 = vdwg.mxu0
      %v1930 = vmul.f32 %v1492, %v1722
      %v1931 = vmul.f32 %v1605, %v1835
      %v1932 = vmul.f32 %v1495, %v1725
      %v1933 = vmul.f32 %v1608, %v1838
      %v1934 = vmul.f32 %v1498, %v1728
      %v1935 = vmul.f32 %v1611, %v1841
      %v1936 = vmul.f32 %v1501, %v1731
      %v1937 = vmul.f32 %v1614, %v1844
      %v1938 = vmul.f32 %v1504, %v1734
      %v1939 = vmul.f32 %v1617, %v1847
      %v1940 = vmul.f32 %v1507, %v1737
      %v1941 = vmul.f32 %v1620, %v1850
      %v1942 = vmul.f32 %v1510, %v1740
      %v1943 = vmul.f32 %v1623, %v1853
      %v1944 = vmul.f32 %v1513, %v1743
      %v1945 = vmul.f32 %v1626, %v1856
      %v1946 = vmul.f32 %v1516, %v1746
      %v1947 = vmul.f32 %v1629, %v1859
      %v1948 = vmul.f32 %v1519, %v1749
      %v1949 = vmul.f32 %v1632, %v1862
      %v1950 = vmul.f32 %v1522, %v1752
      %v1951 = vmul.f32 %v1635, %v1865
      %v1952 = vmul.f32 %v1525, %v1755
      %v1953 = vmul.f32 %v1638, %v1868
      %v1954 = vmul.f32 %v1528, %v1758
      %v1955 = vmul.f32 %v1641, %v1871
      %v1956 = vmul.f32 %v1531, %v1761
      %v1957 = vmul.f32 %v1644, %v1874
      %v1958 = vmul.f32 %v1534, %v1764
      %v1959 = vmul.f32 %v1647, %v1877
      %v1960 = vmul.f32 %v1537, %v1767
      %v1961 = vmul.f32 %v1650, %v1880
      %v1962 = vmul.f32 %v1540, %v1770
      %v1963 = vmul.f32 %v1653, %v1883
      %v1964 = vmul.f32 %v1543, %v1773
      %v1965 = vmul.f32 %v1656, %v1886
      %v1966 = vmul.f32 %v1546, %v1776
      %v1967 = vmul.f32 %v1659, %v1889
      %v1968 = vmul.f32 %v1549, %v1779
      %v1969 = vmul.f32 %v1662, %v1892
      %v1970 = vmul.f32 %v1552, %v1782
      %v1971 = vmul.f32 %v1665, %v1895
      %v1972 = vmul.f32 %v1555, %v1785
      %v1973 = vmul.f32 %v1668, %v1898
      %v1974 = vmul.f32 %v1558, %v1788
      %v1975 = vmul.f32 %v1671, %v1901
      %v1976 = vmul.f32 %v1561, %v1791
      %v1977 = vmul.f32 %v1674, %v1904
      %v1978 = vmul.f32 %v1564, %v1794
      %v1979 = vmul.f32 %v1677, %v1907
      %v1980 = vmul.f32 %v1567, %v1797
      %v1981 = vmul.f32 %v1680, %v1910
      %v1982 = vmul.f32 %v1570, %v1800
      %v1983 = vmul.f32 %v1683, %v1913
      %v1984 = vmul.f32 %v1573, %v1803
      %v1985 = vmul.f32 %v1686, %v1916
      %v1986 = vmul.f32 %v1576, %v1806
      %v1987 = vmul.f32 %v1689, %v1919
      %v1988 = vmul.f32 %v1579, %v1809
      %v1989 = vmul.f32 %v1692, %v1922
      %v1990 = vmul.f32 %v1582, %v1812
      %v1991 = vmul.f32 %v1695, %v1925
      %v1992 = vmul.f32 %v1585, %v1815
      %v1993 = vmul.f32 %v1698, %v1928
      %v1994 = vld [vmem:[%s13] sm:$0xff]
      %v1995 = vld [vmem:[%s13 + $0x8] sm:$0xff]
      %v1996 = vld [vmem:[%s13 + $0x10] sm:$0xff]
      %v1997 = vld [vmem:[%s13 + $0x18] sm:$0xff]
      %v1998 = vld [vmem:[%s14] sm:$0x3]
      %v2000 = vperm.slane %v1998, 0
      %v2001 = vperm.slane %v1998, 1
      %2004 = vmatpush.msra.mxu0 0.0
      %2005 = vmatpush.msra.mxu0 0.0
      %2006 = vmatpush.msra.mxu0 0.0
      %2007 = vmatpush.msra.mxu0 0.0
      %2008 = vmatpush.msra.mxu0 0.0
      %2009 = vmatpush.msra.mxu0 0.0
      %2010 = vmatpush.msra.mxu0 0.0
      %2011 = vmatpush.msra.mxu0 0.0
      %2012 = vmatpush.msra.mxu0 0.0
      %2013 = vmatpush.msra.mxu0 0.0
      %2014 = vmatpush.msra.mxu0 0.0
      %2015 = vmatpush.msra.mxu0 0.0
      %2016 = vmatpush.msra.mxu0 0.0
      %2017 = vmatpush.msra.mxu0 0.0
      %2018 = vmatpush.msra.mxu0 %v1996
      %2019 = vmatpush.msra.mxu0 %v1994
      %2020 = vmatmul.f32.gmra.mxu0 %v1379
      %v2021 = vpop.f32.mrf.mxu0
      %v2022 = vadd.f32 %v2000, %v2021
      %2023 = vmatmul.f32.gmra.mxu0 %v1382
      %v2024 = vpop.f32.mrf.mxu0
      %v2025 = vadd.f32 %v2000, %v2024
      %2026 = vmatmul.f32.gmra.mxu0 %v1385
      %v2027 = vpop.f32.mrf.mxu0
      %v2028 = vadd.f32 %v2000, %v2027
      %2029 = vmatmul.f32.gmra.mxu0 %v1388
      %v2030 = vpop.f32.mrf.mxu0
      %v2031 = vadd.f32 %v2000, %v2030
      %2032 = vmatmul.f32.gmra.mxu0 %v1391
      %v2033 = vpop.f32.mrf.mxu0
      %v2034 = vadd.f32 %v2000, %v2033
      %2035 = vmatmul.f32.gmra.mxu0 %v1394
      %v2036 = vpop.f32.mrf.mxu0
      %v2037 = vadd.f32 %v2000, %v2036
      %2038 = vmatmul.f32.gmra.mxu0 %v1397
      %v2039 = vpop.f32.mrf.mxu0
      %v2040 = vadd.f32 %v2000, %v2039
      %2041 = vmatmul.f32.gmra.mxu0 %v1400
      %v2042 = vpop.f32.mrf.mxu0
      %v2043 = vadd.f32 %v2000, %v2042
      %2044 = vmatmul.f32.gmra.mxu0 %v1403
      %v2045 = vpop.f32.mrf.mxu0
      %v2046 = vadd.f32 %v2000, %v2045
      %2047 = vmatmul.f32.gmra.mxu0 %v1406
      %v2048 = vpop.f32.mrf.mxu0
      %v2049 = vadd.f32 %v2000, %v2048
      %2050 = vmatmul.f32.gmra.mxu0 %v1409
      %v2051 = vpop.f32.mrf.mxu0
      %v2052 = vadd.f32 %v2000, %v2051
      %2053 = vmatmul.f32.gmra.mxu0 %v1412
      %v2054 = vpop.f32.mrf.mxu0
      %v2055 = vadd.f32 %v2000, %v2054
      %2056 = vmatmul.f32.gmra.mxu0 %v1415
      %v2057 = vpop.f32.mrf.mxu0
      %v2058 = vadd.f32 %v2000, %v2057
      %2059 = vmatmul.f32.gmra.mxu0 %v1418
      %v2060 = vpop.f32.mrf.mxu0
      %v2061 = vadd.f32 %v2000, %v2060
      %2062 = vmatmul.f32.gmra.mxu0 %v1421
      %v2063 = vpop.f32.mrf.mxu0
      %v2064 = vadd.f32 %v2000, %v2063
      %2065 = vmatmul.f32.gmra.mxu0 %v1424
      %v2066 = vpop.f32.mrf.mxu0
      %v2067 = vadd.f32 %v2000, %v2066
      %2068 = vmatmul.f32.gmra.mxu0 %v1427
      %v2069 = vpop.f32.mrf.mxu0
      %v2070 = vadd.f32 %v2000, %v2069
      %2071 = vmatmul.f32.gmra.mxu0 %v1430
      %v2072 = vpop.f32.mrf.mxu0
      %v2073 = vadd.f32 %v2000, %v2072
      %2074 = vmatmul.f32.gmra.mxu0 %v1433
      %v2075 = vpop.f32.mrf.mxu0
      %v2076 = vadd.f32 %v2000, %v2075
      %2077 = vmatmul.f32.gmra.mxu0 %v1436
      %v2078 = vpop.f32.mrf.mxu0
      %v2079 = vadd.f32 %v2000, %v2078
      %2080 = vmatmul.f32.gmra.mxu0 %v1439
      %v2081 = vpop.f32.mrf.mxu0
      %v2082 = vadd.f32 %v2000, %v2081
      %2083 = vmatmul.f32.gmra.mxu0 %v1442
      %v2084 = vpop.f32.mrf.mxu0
      %v2085 = vadd.f32 %v2000, %v2084
      %2086 = vmatmul.f32.gmra.mxu0 %v1445
      %v2087 = vpop.f32.mrf.mxu0
      %v2088 = vadd.f32 %v2000, %v2087
      %2089 = vmatmul.f32.gmra.mxu0 %v1448
      %v2090 = vpop.f32.mrf.mxu0
      %v2091 = vadd.f32 %v2000, %v2090
      %2092 = vmatmul.f32.gmra.mxu0 %v1451
      %v2093 = vpop.f32.mrf.mxu0
      %v2094 = vadd.f32 %v2000, %v2093
      %2095 = vmatmul.f32.gmra.mxu0 %v1454
      %v2096 = vpop.f32.mrf.mxu0
      %v2097 = vadd.f32 %v2000, %v2096
      %2098 = vmatmul.f32.gmra.mxu0 %v1457
      %v2099 = vpop.f32.mrf.mxu0
      %v2100 = vadd.f32 %v2000, %v2099
      %2101 = vmatmul.f32.gmra.mxu0 %v1460
      %v2102 = vpop.f32.mrf.mxu0
      %v2103 = vadd.f32 %v2000, %v2102
      %2104 = vmatmul.f32.gmra.mxu0 %v1463
      %v2105 = vpop.f32.mrf.mxu0
      %v2106 = vadd.f32 %v2000, %v2105
      %2107 = vmatmul.f32.gmra.mxu0 %v1466
      %v2108 = vpop.f32.mrf.mxu0
      %v2109 = vadd.f32 %v2000, %v2108
      %2110 = vmatmul.f32.gmra.mxu0 %v1469
      %v2111 = vpop.f32.mrf.mxu0
      %v2112 = vadd.f32 %v2000, %v2111
      %2113 = vmatmul.f32.gmra.mxu0 %v1472
      %v2114 = vpop.f32.mrf.mxu0
      %v2115 = vadd.f32 %v2000, %v2114
      %2116 = vdwg.mxu0
      %2117 = vmatpush.msra.mxu0 0.0
      %2118 = vmatpush.msra.mxu0 0.0
      %2119 = vmatpush.msra.mxu0 0.0
      %2120 = vmatpush.msra.mxu0 0.0
      %2121 = vmatpush.msra.mxu0 0.0
      %2122 = vmatpush.msra.mxu0 0.0
      %2123 = vmatpush.msra.mxu0 0.0
      %2124 = vmatpush.msra.mxu0 0.0
      %2125 = vmatpush.msra.mxu0 0.0
      %2126 = vmatpush.msra.mxu0 0.0
      %2127 = vmatpush.msra.mxu0 0.0
      %2128 = vmatpush.msra.mxu0 0.0
      %2129 = vmatpush.msra.mxu0 0.0
      %2130 = vmatpush.msra.mxu0 0.0
      %2131 = vmatpush.msra.mxu0 %v1997
      %2132 = vmatpush.msra.mxu0 %v1995
      %2133 = vmatmul.f32.gmra.mxu0 %v1379
      %v2134 = vpop.f32.mrf.mxu0
      %v2135 = vadd.f32 %v2001, %v2134
      %2136 = vmatmul.f32.gmra.mxu0 %v1382
      %v2137 = vpop.f32.mrf.mxu0
      %v2138 = vadd.f32 %v2001, %v2137
      %2139 = vmatmul.f32.gmra.mxu0 %v1385
      %v2140 = vpop.f32.mrf.mxu0
      %v2141 = vadd.f32 %v2001, %v2140
      %2142 = vmatmul.f32.gmra.mxu0 %v1388
      %v2143 = vpop.f32.mrf.mxu0
      %v2144 = vadd.f32 %v2001, %v2143
      %2145 = vmatmul.f32.gmra.mxu0 %v1391
      %v2146 = vpop.f32.mrf.mxu0
      %v2147 = vadd.f32 %v2001, %v2146
      %2148 = vmatmul.f32.gmra.mxu0 %v1394
      %v2149 = vpop.f32.mrf.mxu0
      %v2150 = vadd.f32 %v2001, %v2149
      %2151 = vmatmul.f32.gmra.mxu0 %v1397
      %v2152 = vpop.f32.mrf.mxu0
      %v2153 = vadd.f32 %v2001, %v2152
      %2154 = vmatmul.f32.gmra.mxu0 %v1400
      %v2155 = vpop.f32.mrf.mxu0
      %v2156 = vadd.f32 %v2001, %v2155
      %2157 = vmatmul.f32.gmra.mxu0 %v1403
      %v2158 = vpop.f32.mrf.mxu0
      %v2159 = vadd.f32 %v2001, %v2158
      %2160 = vmatmul.f32.gmra.mxu0 %v1406
      %v2161 = vpop.f32.mrf.mxu0
      %v2162 = vadd.f32 %v2001, %v2161
      %2163 = vmatmul.f32.gmra.mxu0 %v1409
      %v2164 = vpop.f32.mrf.mxu0
      %v2165 = vadd.f32 %v2001, %v2164
      %2166 = vmatmul.f32.gmra.mxu0 %v1412
      %v2167 = vpop.f32.mrf.mxu0
      %v2168 = vadd.f32 %v2001, %v2167
      %2169 = vmatmul.f32.gmra.mxu0 %v1415
      %v2170 = vpop.f32.mrf.mxu0
      %v2171 = vadd.f32 %v2001, %v2170
      %2172 = vmatmul.f32.gmra.mxu0 %v1418
      %v2173 = vpop.f32.mrf.mxu0
      %v2174 = vadd.f32 %v2001, %v2173
      %2175 = vmatmul.f32.gmra.mxu0 %v1421
      %v2176 = vpop.f32.mrf.mxu0
      %v2177 = vadd.f32 %v2001, %v2176
      %2178 = vmatmul.f32.gmra.mxu0 %v1424
      %v2179 = vpop.f32.mrf.mxu0
      %v2180 = vadd.f32 %v2001, %v2179
      %2181 = vmatmul.f32.gmra.mxu0 %v1427
      %v2182 = vpop.f32.mrf.mxu0
      %v2183 = vadd.f32 %v2001, %v2182
      %2184 = vmatmul.f32.gmra.mxu0 %v1430
      %v2185 = vpop.f32.mrf.mxu0
      %v2186 = vadd.f32 %v2001, %v2185
      %2187 = vmatmul.f32.gmra.mxu0 %v1433
      %v2188 = vpop.f32.mrf.mxu0
      %v2189 = vadd.f32 %v2001, %v2188
      %2190 = vmatmul.f32.gmra.mxu0 %v1436
      %v2191 = vpop.f32.mrf.mxu0
      %v2192 = vadd.f32 %v2001, %v2191
      %2193 = vmatmul.f32.gmra.mxu0 %v1439
      %v2194 = vpop.f32.mrf.mxu0
      %v2195 = vadd.f32 %v2001, %v2194
      %2196 = vmatmul.f32.gmra.mxu0 %v1442
      %v2197 = vpop.f32.mrf.mxu0
      %v2198 = vadd.f32 %v2001, %v2197
      %2199 = vmatmul.f32.gmra.mxu0 %v1445
      %v2200 = vpop.f32.mrf.mxu0
      %v2201 = vadd.f32 %v2001, %v2200
      %2202 = vmatmul.f32.gmra.mxu0 %v1448
      %v2203 = vpop.f32.mrf.mxu0
      %v2204 = vadd.f32 %v2001, %v2203
      %2205 = vmatmul.f32.gmra.mxu0 %v1451
      %v2206 = vpop.f32.mrf.mxu0
      %v2207 = vadd.f32 %v2001, %v2206
      %2208 = vmatmul.f32.gmra.mxu0 %v1454
      %v2209 = vpop.f32.mrf.mxu0
      %v2210 = vadd.f32 %v2001, %v2209
      %2211 = vmatmul.f32.gmra.mxu0 %v1457
      %v2212 = vpop.f32.mrf.mxu0
      %v2213 = vadd.f32 %v2001, %v2212
      %2214 = vmatmul.f32.gmra.mxu0 %v1460
      %v2215 = vpop.f32.mrf.mxu0
      %v2216 = vadd.f32 %v2001, %v2215
      %2217 = vmatmul.f32.gmra.mxu0 %v1463
      %v2218 = vpop.f32.mrf.mxu0
      %v2219 = vadd.f32 %v2001, %v2218
      %2220 = vmatmul.f32.gmra.mxu0 %v1466
      %v2221 = vpop.f32.mrf.mxu0
      %v2222 = vadd.f32 %v2001, %v2221
      %2223 = vmatmul.f32.gmra.mxu0 %v1469
      %v2224 = vpop.f32.mrf.mxu0
      %v2225 = vadd.f32 %v2001, %v2224
      %2226 = vmatmul.f32.gmra.mxu0 %v1472
      %v2227 = vpop.f32.mrf.mxu0
      %v2228 = vadd.f32 %v2001, %v2227
      %2229 = vdwg.mxu0
      %v2230 = vmax.f32 %v2022, 0.0
      %v2231 = vmax.f32 %v2135, 0.0
      %v2232 = vmax.f32 %v2025, 0.0
      %v2233 = vmax.f32 %v2138, 0.0
      %v2234 = vmax.f32 %v2028, 0.0
      %v2235 = vmax.f32 %v2141, 0.0
      %v2236 = vmax.f32 %v2031, 0.0
      %v2237 = vmax.f32 %v2144, 0.0
      %v2238 = vmax.f32 %v2034, 0.0
      %v2239 = vmax.f32 %v2147, 0.0
      %v2240 = vmax.f32 %v2037, 0.0
      %v2241 = vmax.f32 %v2150, 0.0
      %v2242 = vmax.f32 %v2040, 0.0
      %v2243 = vmax.f32 %v2153, 0.0
      %v2244 = vmax.f32 %v2043, 0.0
      %v2245 = vmax.f32 %v2156, 0.0
      %v2246 = vmax.f32 %v2046, 0.0
      %v2247 = vmax.f32 %v2159, 0.0
      %v2248 = vmax.f32 %v2049, 0.0
      %v2249 = vmax.f32 %v2162, 0.0
      %v2250 = vmax.f32 %v2052, 0.0
      %v2251 = vmax.f32 %v2165, 0.0
      %v2252 = vmax.f32 %v2055, 0.0
      %v2253 = vmax.f32 %v2168, 0.0
      %v2254 = vmax.f32 %v2058, 0.0
      %v2255 = vmax.f32 %v2171, 0.0
      %v2256 = vmax.f32 %v2061, 0.0
      %v2257 = vmax.f32 %v2174, 0.0
      %v2258 = vmax.f32 %v2064, 0.0
      %v2259 = vmax.f32 %v2177, 0.0
      %v2260 = vmax.f32 %v2067, 0.0
      %v2261 = vmax.f32 %v2180, 0.0
      %v2262 = vmax.f32 %v2070, 0.0
      %v2263 = vmax.f32 %v2183, 0.0
      %v2264 = vmax.f32 %v2073, 0.0
      %v2265 = vmax.f32 %v2186, 0.0
      %v2266 = vmax.f32 %v2076, 0.0
      %v2267 = vmax.f32 %v2189, 0.0
      %v2268 = vmax.f32 %v2079, 0.0
      %v2269 = vmax.f32 %v2192, 0.0
      %v2270 = vmax.f32 %v2082, 0.0
      %v2271 = vmax.f32 %v2195, 0.0
      %v2272 = vmax.f32 %v2085, 0.0
      %v2273 = vmax.f32 %v2198, 0.0
      %v2274 = vmax.f32 %v2088, 0.0
      %v2275 = vmax.f32 %v2201, 0.0
      %v2276 = vmax.f32 %v2091, 0.0
      %v2277 = vmax.f32 %v2204, 0.0
      %v2278 = vmax.f32 %v2094, 0.0
      %v2279 = vmax.f32 %v2207, 0.0
      %v2280 = vmax.f32 %v2097, 0.0
      %v2281 = vmax.f32 %v2210, 0.0
      %v2282 = vmax.f32 %v2100, 0.0
      %v2283 = vmax.f32 %v2213, 0.0
      %v2284 = vmax.f32 %v2103, 0.0
      %v2285 = vmax.f32 %v2216, 0.0
      %v2286 = vmax.f32 %v2106, 0.0
      %v2287 = vmax.f32 %v2219, 0.0
      %v2288 = vmax.f32 %v2109, 0.0
      %v2289 = vmax.f32 %v2222, 0.0
      %v2290 = vmax.f32 %v2112, 0.0
      %v2291 = vmax.f32 %v2225, 0.0
      %v2292 = vmax.f32 %v2115, 0.0
      %v2293 = vmax.f32 %v2228, 0.0
      %v2294 = vand.u32 2147483647, %v2022
      %v2295 = vand.u32 2147483647, %v2135
      %v2296 = vand.u32 2147483647, %v2025
      %v2297 = vand.u32 2147483647, %v2138
      %v2298 = vand.u32 2147483647, %v2028
      %v2299 = vand.u32 2147483647, %v2141
      %v2300 = vand.u32 2147483647, %v2031
      %v2301 = vand.u32 2147483647, %v2144
      %v2302 = vand.u32 2147483647, %v2034
      %v2303 = vand.u32 2147483647, %v2147
      %v2304 = vand.u32 2147483647, %v2037
      %v2305 = vand.u32 2147483647, %v2150
      %v2306 = vand.u32 2147483647, %v2040
      %v2307 = vand.u32 2147483647, %v2153
      %v2308 = vand.u32 2147483647, %v2043
      %v2309 = vand.u32 2147483647, %v2156
      %v2310 = vand.u32 2147483647, %v2046
      %v2311 = vand.u32 2147483647, %v2159
      %v2312 = vand.u32 2147483647, %v2049
      %v2313 = vand.u32 2147483647, %v2162
      %v2314 = vand.u32 2147483647, %v2052
      %v2315 = vand.u32 2147483647, %v2165
      %v2316 = vand.u32 2147483647, %v2055
      %v2317 = vand.u32 2147483647, %v2168
      %v2318 = vand.u32 2147483647, %v2058
      %v2319 = vand.u32 2147483647, %v2171
      %v2320 = vand.u32 2147483647, %v2061
      %v2321 = vand.u32 2147483647, %v2174
      %v2322 = vand.u32 2147483647, %v2064
      %v2323 = vand.u32 2147483647, %v2177
      %v2324 = vand.u32 2147483647, %v2067
      %v2325 = vand.u32 2147483647, %v2180
      %v2326 = vand.u32 2147483647, %v2070
      %v2327 = vand.u32 2147483647, %v2183
      %v2328 = vand.u32 2147483647, %v2073
      %v2329 = vand.u32 2147483647, %v2186
      %v2330 = vand.u32 2147483647, %v2076
      %v2331 = vand.u32 2147483647, %v2189
      %v2332 = vand.u32 2147483647, %v2079
      %v2333 = vand.u32 2147483647, %v2192
      %v2334 = vand.u32 2147483647, %v2082
      %v2335 = vand.u32 2147483647, %v2195
      %v2336 = vand.u32 2147483647, %v2085
      %v2337 = vand.u32 2147483647, %v2198
      %v2338 = vand.u32 2147483647, %v2088
      %v2339 = vand.u32 2147483647, %v2201
      %v2340 = vand.u32 2147483647, %v2091
      %v2341 = vand.u32 2147483647, %v2204
      %v2342 = vand.u32 2147483647, %v2094
      %v2343 = vand.u32 2147483647, %v2207
      %v2344 = vand.u32 2147483647, %v2097
      %v2345 = vand.u32 2147483647, %v2210
      %v2346 = vand.u32 2147483647, %v2100
      %v2347 = vand.u32 2147483647, %v2213
      %v2348 = vand.u32 2147483647, %v2103
      %v2349 = vand.u32 2147483647, %v2216
      %v2350 = vand.u32 2147483647, %v2106
      %v2351 = vand.u32 2147483647, %v2219
      %v2352 = vand.u32 2147483647, %v2109
      %v2353 = vand.u32 2147483647, %v2222
      %v2354 = vand.u32 2147483647, %v2112
      %v2355 = vand.u32 2147483647, %v2225
      %v2356 = vand.u32 2147483647, %v2115
      %v2357 = vand.u32 2147483647, %v2228
      %v2358 = vsub.f32 0.0, %v2294
      %v2359 = vsub.f32 0.0, %v2295
      %v2360 = vsub.f32 0.0, %v2296
      %v2361 = vsub.f32 0.0, %v2297
      %v2362 = vsub.f32 0.0, %v2298
      %v2363 = vsub.f32 0.0, %v2299
      %v2364 = vsub.f32 0.0, %v2300
      %v2365 = vsub.f32 0.0, %v2301
      %v2366 = vsub.f32 0.0, %v2302
      %v2367 = vsub.f32 0.0, %v2303
      %v2368 = vsub.f32 0.0, %v2304
      %v2369 = vsub.f32 0.0, %v2305
      %v2370 = vsub.f32 0.0, %v2306
      %v2371 = vsub.f32 0.0, %v2307
      %v2372 = vsub.f32 0.0, %v2308
      %v2373 = vsub.f32 0.0, %v2309
      %v2374 = vsub.f32 0.0, %v2310
      %v2375 = vsub.f32 0.0, %v2311
      %v2376 = vsub.f32 0.0, %v2312
      %v2377 = vsub.f32 0.0, %v2313
      %v2378 = vsub.f32 0.0, %v2314
      %v2379 = vsub.f32 0.0, %v2315
      %v2380 = vsub.f32 0.0, %v2316
      %v2381 = vsub.f32 0.0, %v2317
      %v2382 = vsub.f32 0.0, %v2318
      %v2383 = vsub.f32 0.0, %v2319
      %v2384 = vsub.f32 0.0, %v2320
      %v2385 = vsub.f32 0.0, %v2321
      %v2386 = vsub.f32 0.0, %v2322
      %v2387 = vsub.f32 0.0, %v2323
      %v2388 = vsub.f32 0.0, %v2324
      %v2389 = vsub.f32 0.0, %v2325
      %v2390 = vsub.f32 0.0, %v2326
      %v2391 = vsub.f32 0.0, %v2327
      %v2392 = vsub.f32 0.0, %v2328
      %v2393 = vsub.f32 0.0, %v2329
      %v2394 = vsub.f32 0.0, %v2330
      %v2395 = vsub.f32 0.0, %v2331
      %v2396 = vsub.f32 0.0, %v2332
      %v2397 = vsub.f32 0.0, %v2333
      %v2398 = vsub.f32 0.0, %v2334
      %v2399 = vsub.f32 0.0, %v2335
      %v2400 = vsub.f32 0.0, %v2336
      %v2401 = vsub.f32 0.0, %v2337
      %v2402 = vsub.f32 0.0, %v2338
      %v2403 = vsub.f32 0.0, %v2339
      %v2404 = vsub.f32 0.0, %v2340
      %v2405 = vsub.f32 0.0, %v2341
      %v2406 = vsub.f32 0.0, %v2342
      %v2407 = vsub.f32 0.0, %v2343
      %v2408 = vsub.f32 0.0, %v2344
      %v2409 = vsub.f32 0.0, %v2345
      %v2410 = vsub.f32 0.0, %v2346
      %v2411 = vsub.f32 0.0, %v2347
      %v2412 = vsub.f32 0.0, %v2348
      %v2413 = vsub.f32 0.0, %v2349
      %v2414 = vsub.f32 0.0, %v2350
      %v2415 = vsub.f32 0.0, %v2351
      %v2416 = vsub.f32 0.0, %v2352
      %v2417 = vsub.f32 0.0, %v2353
      %v2418 = vsub.f32 0.0, %v2354
      %v2419 = vsub.f32 0.0, %v2355
      %v2420 = vsub.f32 0.0, %v2356
      %v2421 = vsub.f32 0.0, %v2357
      %v2422 = vmul.f32 %v2358, 1.442695
      %v2423 = vpow.pop %v2422
      %v2424 = vmul.f32 %v2359, 1.442695
      %v2425 = vpow.pop %v2424
      %v2426 = vmul.f32 %v2360, 1.442695
      %v2427 = vpow.pop %v2426
      %v2428 = vmul.f32 %v2361, 1.442695
      %v2429 = vpow.pop %v2428
      %v2430 = vmul.f32 %v2362, 1.442695
      %v2431 = vpow.pop %v2430
      %v2432 = vmul.f32 %v2363, 1.442695
      %v2433 = vpow.pop %v2432
      %v2434 = vmul.f32 %v2364, 1.442695
      %v2435 = vpow.pop %v2434
      %v2436 = vmul.f32 %v2365, 1.442695
      %v2437 = vpow.pop %v2436
      %v2438 = vmul.f32 %v2366, 1.442695
      %v2439 = vpow.pop %v2438
      %v2440 = vmul.f32 %v2367, 1.442695
      %v2441 = vpow.pop %v2440
      %v2442 = vmul.f32 %v2368, 1.442695
      %v2443 = vpow.pop %v2442
      %v2444 = vmul.f32 %v2369, 1.442695
      %v2445 = vpow.pop %v2444
      %v2446 = vmul.f32 %v2370, 1.442695
      %v2447 = vpow.pop %v2446
      %v2448 = vmul.f32 %v2371, 1.442695
      %v2449 = vpow.pop %v2448
      %v2450 = vmul.f32 %v2372, 1.442695
      %v2451 = vpow.pop %v2450
      %v2452 = vmul.f32 %v2373, 1.442695
      %v2453 = vpow.pop %v2452
      %v2454 = vmul.f32 %v2374, 1.442695
      %v2455 = vpow.pop %v2454
      %v2456 = vmul.f32 %v2375, 1.442695
      %v2457 = vpow.pop %v2456
      %v2458 = vmul.f32 %v2376, 1.442695
      %v2459 = vpow.pop %v2458
      %v2460 = vmul.f32 %v2377, 1.442695
      %v2461 = vpow.pop %v2460
      %v2462 = vmul.f32 %v2378, 1.442695
      %v2463 = vpow.pop %v2462
      %v2464 = vmul.f32 %v2379, 1.442695
      %v2465 = vpow.pop %v2464
      %v2466 = vmul.f32 %v2380, 1.442695
      %v2467 = vpow.pop %v2466
      %v2468 = vmul.f32 %v2381, 1.442695
      %v2469 = vpow.pop %v2468
      %v2470 = vmul.f32 %v2382, 1.442695
      %v2471 = vpow.pop %v2470
      %v2472 = vmul.f32 %v2383, 1.442695
      %v2473 = vpow.pop %v2472
      %v2474 = vmul.f32 %v2384, 1.442695
      %v2475 = vpow.pop %v2474
      %v2476 = vmul.f32 %v2385, 1.442695
      %v2477 = vpow.pop %v2476
      %v2478 = vmul.f32 %v2386, 1.442695
      %v2479 = vpow.pop %v2478
      %v2480 = vmul.f32 %v2387, 1.442695
      %v2481 = vpow.pop %v2480
      %v2482 = vmul.f32 %v2388, 1.442695
      %v2483 = vpow.pop %v2482
      %v2484 = vmul.f32 %v2389, 1.442695
      %v2485 = vpow.pop %v2484
      %v2486 = vmul.f32 %v2390, 1.442695
      %v2487 = vpow.pop %v2486
      %v2488 = vmul.f32 %v2391, 1.442695
      %v2489 = vpow.pop %v2488
      %v2490 = vmul.f32 %v2392, 1.442695
      %v2491 = vpow.pop %v2490
      %v2492 = vmul.f32 %v2393, 1.442695
      %v2493 = vpow.pop %v2492
      %v2494 = vmul.f32 %v2394, 1.442695
      %v2495 = vpow.pop %v2494
      %v2496 = vmul.f32 %v2395, 1.442695
      %v2497 = vpow.pop %v2496
      %v2498 = vmul.f32 %v2396, 1.442695
      %v2499 = vpow.pop %v2498
      %v2500 = vmul.f32 %v2397, 1.442695
      %v2501 = vpow.pop %v2500
      %v2502 = vmul.f32 %v2398, 1.442695
      %v2503 = vpow.pop %v2502
      %v2504 = vmul.f32 %v2399, 1.442695
      %v2505 = vpow.pop %v2504
      %v2506 = vmul.f32 %v2400, 1.442695
      %v2507 = vpow.pop %v2506
      %v2508 = vmul.f32 %v2401, 1.442695
      %v2509 = vpow.pop %v2508
      %v2510 = vmul.f32 %v2402, 1.442695
      %v2511 = vpow.pop %v2510
      %v2512 = vmul.f32 %v2403, 1.442695
      %v2513 = vpow.pop %v2512
      %v2514 = vmul.f32 %v2404, 1.442695
      %v2515 = vpow.pop %v2514
      %v2516 = vmul.f32 %v2405, 1.442695
      %v2517 = vpow.pop %v2516
      %v2518 = vmul.f32 %v2406, 1.442695
      %v2519 = vpow.pop %v2518
      %v2520 = vmul.f32 %v2407, 1.442695
      %v2521 = vpow.pop %v2520
      %v2522 = vmul.f32 %v2408, 1.442695
      %v2523 = vpow.pop %v2522
      %v2524 = vmul.f32 %v2409, 1.442695
      %v2525 = vpow.pop %v2524
      %v2526 = vmul.f32 %v2410, 1.442695
      %v2527 = vpow.pop %v2526
      %v2528 = vmul.f32 %v2411, 1.442695
      %v2529 = vpow.pop %v2528
      %v2530 = vmul.f32 %v2412, 1.442695
      %v2531 = vpow.pop %v2530
      %v2532 = vmul.f32 %v2413, 1.442695
      %v2533 = vpow.pop %v2532
      %v2534 = vmul.f32 %v2414, 1.442695
      %v2535 = vpow.pop %v2534
      %v2536 = vmul.f32 %v2415, 1.442695
      %v2537 = vpow.pop %v2536
      %v2538 = vmul.f32 %v2416, 1.442695
      %v2539 = vpow.pop %v2538
      %v2540 = vmul.f32 %v2417, 1.442695
      %v2541 = vpow.pop %v2540
      %v2542 = vmul.f32 %v2418, 1.442695
      %v2543 = vpow.pop %v2542
      %v2544 = vmul.f32 %v2419, 1.442695
      %v2545 = vpow.pop %v2544
      %v2546 = vmul.f32 %v2420, 1.442695
      %v2547 = vpow.pop %v2546
      %v2548 = vmul.f32 %v2421, 1.442695
      %v2549 = vpow.pop %v2548
      %v2550 = vadd.f32 %v2423, 1.0
      %v2551 = vlog2.pop %v2550
      %v2552 = vmul.f32 %v2551, 0.6931472
      %v2553 = vmul.f32 -0.5, %v2423
      %v2554 = vadd.f32 %v2553, 1.0
      %v2555 = vmul.f32 %v2554, %v2423
      %v2556 = vand.u32 2147483647, %v2423
      %vm2557 = vcmp.lt.f32.partialorder %v2556, 0.0004427343
      %v2558 = vsel %vm2557, %v2555, %v2552
      %v2559 = vadd.f32 %v2425, 1.0
      %v2560 = vlog2.pop %v2559
      %v2561 = vmul.f32 %v2560, 0.6931472
      %v2562 = vmul.f32 -0.5, %v2425
      %v2563 = vadd.f32 %v2562, 1.0
      %v2564 = vmul.f32 %v2563, %v2425
      %v2565 = vand.u32 2147483647, %v2425
      %vm2566 = vcmp.lt.f32.partialorder %v2565, 0.0004427343
      %v2567 = vsel %vm2566, %v2564, %v2561
      %v2568 = vadd.f32 %v2427, 1.0
      %v2569 = vlog2.pop %v2568
      %v2570 = vmul.f32 %v2569, 0.6931472
      %v2571 = vmul.f32 -0.5, %v2427
      %v2572 = vadd.f32 %v2571, 1.0
      %v2573 = vmul.f32 %v2572, %v2427
      %v2574 = vand.u32 2147483647, %v2427
      %vm2575 = vcmp.lt.f32.partialorder %v2574, 0.0004427343
      %v2576 = vsel %vm2575, %v2573, %v2570
      %v2577 = vadd.f32 %v2429, 1.0
      %v2578 = vlog2.pop %v2577
      %v2579 = vmul.f32 %v2578, 0.6931472
      %v2580 = vmul.f32 -0.5, %v2429
      %v2581 = vadd.f32 %v2580, 1.0
      %v2582 = vmul.f32 %v2581, %v2429
      %v2583 = vand.u32 2147483647, %v2429
      %vm2584 = vcmp.lt.f32.partialorder %v2583, 0.0004427343
      %v2585 = vsel %vm2584, %v2582, %v2579
      %v2586 = vadd.f32 %v2431, 1.0
      %v2587 = vlog2.pop %v2586
      %v2588 = vmul.f32 %v2587, 0.6931472
      %v2589 = vmul.f32 -0.5, %v2431
      %v2590 = vadd.f32 %v2589, 1.0
      %v2591 = vmul.f32 %v2590, %v2431
      %v2592 = vand.u32 2147483647, %v2431
      %vm2593 = vcmp.lt.f32.partialorder %v2592, 0.0004427343
      %v2594 = vsel %vm2593, %v2591, %v2588
      %v2595 = vadd.f32 %v2433, 1.0
      %v2596 = vlog2.pop %v2595
      %v2597 = vmul.f32 %v2596, 0.6931472
      %v2598 = vmul.f32 -0.5, %v2433
      %v2599 = vadd.f32 %v2598, 1.0
      %v2600 = vmul.f32 %v2599, %v2433
      %v2601 = vand.u32 2147483647, %v2433
      %vm2602 = vcmp.lt.f32.partialorder %v2601, 0.0004427343
      %v2603 = vsel %vm2602, %v2600, %v2597
      %v2604 = vadd.f32 %v2435, 1.0
      %v2605 = vlog2.pop %v2604
      %v2606 = vmul.f32 %v2605, 0.6931472
      %v2607 = vmul.f32 -0.5, %v2435
      %v2608 = vadd.f32 %v2607, 1.0
      %v2609 = vmul.f32 %v2608, %v2435
      %v2610 = vand.u32 2147483647, %v2435
      %vm2611 = vcmp.lt.f32.partialorder %v2610, 0.0004427343
      %v2612 = vsel %vm2611, %v2609, %v2606
      %v2613 = vadd.f32 %v2437, 1.0
      %v2614 = vlog2.pop %v2613
      %v2615 = vmul.f32 %v2614, 0.6931472
      %v2616 = vmul.f32 -0.5, %v2437
      %v2617 = vadd.f32 %v2616, 1.0
      %v2618 = vmul.f32 %v2617, %v2437
      %v2619 = vand.u32 2147483647, %v2437
      %vm2620 = vcmp.lt.f32.partialorder %v2619, 0.0004427343
      %v2621 = vsel %vm2620, %v2618, %v2615
      %v2622 = vadd.f32 %v2439, 1.0
      %v2623 = vlog2.pop %v2622
      %v2624 = vmul.f32 %v2623, 0.6931472
      %v2625 = vmul.f32 -0.5, %v2439
      %v2626 = vadd.f32 %v2625, 1.0
      %v2627 = vmul.f32 %v2626, %v2439
      %v2628 = vand.u32 2147483647, %v2439
      %vm2629 = vcmp.lt.f32.partialorder %v2628, 0.0004427343
      %v2630 = vsel %vm2629, %v2627, %v2624
      %v2631 = vadd.f32 %v2441, 1.0
      %v2632 = vlog2.pop %v2631
      %v2633 = vmul.f32 %v2632, 0.6931472
      %v2634 = vmul.f32 -0.5, %v2441
      %v2635 = vadd.f32 %v2634, 1.0
      %v2636 = vmul.f32 %v2635, %v2441
      %v2637 = vand.u32 2147483647, %v2441
      %vm2638 = vcmp.lt.f32.partialorder %v2637, 0.0004427343
      %v2639 = vsel %vm2638, %v2636, %v2633
      %v2640 = vadd.f32 %v2443, 1.0
      %v2641 = vlog2.pop %v2640
      %v2642 = vmul.f32 %v2641, 0.6931472
      %v2643 = vmul.f32 -0.5, %v2443
      %v2644 = vadd.f32 %v2643, 1.0
      %v2645 = vmul.f32 %v2644, %v2443
      %v2646 = vand.u32 2147483647, %v2443
      %vm2647 = vcmp.lt.f32.partialorder %v2646, 0.0004427343
      %v2648 = vsel %vm2647, %v2645, %v2642
      %v2649 = vadd.f32 %v2445, 1.0
      %v2650 = vlog2.pop %v2649
      %v2651 = vmul.f32 %v2650, 0.6931472
      %v2652 = vmul.f32 -0.5, %v2445
      %v2653 = vadd.f32 %v2652, 1.0
      %v2654 = vmul.f32 %v2653, %v2445
      %v2655 = vand.u32 2147483647, %v2445
      %vm2656 = vcmp.lt.f32.partialorder %v2655, 0.0004427343
      %v2657 = vsel %vm2656, %v2654, %v2651
      %v2658 = vadd.f32 %v2447, 1.0
      %v2659 = vlog2.pop %v2658
      %v2660 = vmul.f32 %v2659, 0.6931472
      %v2661 = vmul.f32 -0.5, %v2447
      %v2662 = vadd.f32 %v2661, 1.0
      %v2663 = vmul.f32 %v2662, %v2447
      %v2664 = vand.u32 2147483647, %v2447
      %vm2665 = vcmp.lt.f32.partialorder %v2664, 0.0004427343
      %v2666 = vsel %vm2665, %v2663, %v2660
      %v2667 = vadd.f32 %v2449, 1.0
      %v2668 = vlog2.pop %v2667
      %v2669 = vmul.f32 %v2668, 0.6931472
      %v2670 = vmul.f32 -0.5, %v2449
      %v2671 = vadd.f32 %v2670, 1.0
      %v2672 = vmul.f32 %v2671, %v2449
      %v2673 = vand.u32 2147483647, %v2449
      %vm2674 = vcmp.lt.f32.partialorder %v2673, 0.0004427343
      %v2675 = vsel %vm2674, %v2672, %v2669
      %v2676 = vadd.f32 %v2451, 1.0
      %v2677 = vlog2.pop %v2676
      %v2678 = vmul.f32 %v2677, 0.6931472
      %v2679 = vmul.f32 -0.5, %v2451
      %v2680 = vadd.f32 %v2679, 1.0
      %v2681 = vmul.f32 %v2680, %v2451
      %v2682 = vand.u32 2147483647, %v2451
      %vm2683 = vcmp.lt.f32.partialorder %v2682, 0.0004427343
      %v2684 = vsel %vm2683, %v2681, %v2678
      %v2685 = vadd.f32 %v2453, 1.0
      %v2686 = vlog2.pop %v2685
      %v2687 = vmul.f32 %v2686, 0.6931472
      %v2688 = vmul.f32 -0.5, %v2453
      %v2689 = vadd.f32 %v2688, 1.0
      %v2690 = vmul.f32 %v2689, %v2453
      %v2691 = vand.u32 2147483647, %v2453
      %vm2692 = vcmp.lt.f32.partialorder %v2691, 0.0004427343
      %v2693 = vsel %vm2692, %v2690, %v2687
      %v2694 = vadd.f32 %v2455, 1.0
      %v2695 = vlog2.pop %v2694
      %v2696 = vmul.f32 %v2695, 0.6931472
      %v2697 = vmul.f32 -0.5, %v2455
      %v2698 = vadd.f32 %v2697, 1.0
      %v2699 = vmul.f32 %v2698, %v2455
      %v2700 = vand.u32 2147483647, %v2455
      %vm2701 = vcmp.lt.f32.partialorder %v2700, 0.0004427343
      %v2702 = vsel %vm2701, %v2699, %v2696
      %v2703 = vadd.f32 %v2457, 1.0
      %v2704 = vlog2.pop %v2703
      %v2705 = vmul.f32 %v2704, 0.6931472
      %v2706 = vmul.f32 -0.5, %v2457
      %v2707 = vadd.f32 %v2706, 1.0
      %v2708 = vmul.f32 %v2707, %v2457
      %v2709 = vand.u32 2147483647, %v2457
      %vm2710 = vcmp.lt.f32.partialorder %v2709, 0.0004427343
      %v2711 = vsel %vm2710, %v2708, %v2705
      %v2712 = vadd.f32 %v2459, 1.0
      %v2713 = vlog2.pop %v2712
      %v2714 = vmul.f32 %v2713, 0.6931472
      %v2715 = vmul.f32 -0.5, %v2459
      %v2716 = vadd.f32 %v2715, 1.0
      %v2717 = vmul.f32 %v2716, %v2459
      %v2718 = vand.u32 2147483647, %v2459
      %vm2719 = vcmp.lt.f32.partialorder %v2718, 0.0004427343
      %v2720 = vsel %vm2719, %v2717, %v2714
      %v2721 = vadd.f32 %v2461, 1.0
      %v2722 = vlog2.pop %v2721
      %v2723 = vmul.f32 %v2722, 0.6931472
      %v2724 = vmul.f32 -0.5, %v2461
      %v2725 = vadd.f32 %v2724, 1.0
      %v2726 = vmul.f32 %v2725, %v2461
      %v2727 = vand.u32 2147483647, %v2461
      %vm2728 = vcmp.lt.f32.partialorder %v2727, 0.0004427343
      %v2729 = vsel %vm2728, %v2726, %v2723
      %v2730 = vadd.f32 %v2463, 1.0
      %v2731 = vlog2.pop %v2730
      %v2732 = vmul.f32 %v2731, 0.6931472
      %v2733 = vmul.f32 -0.5, %v2463
      %v2734 = vadd.f32 %v2733, 1.0
      %v2735 = vmul.f32 %v2734, %v2463
      %v2736 = vand.u32 2147483647, %v2463
      %vm2737 = vcmp.lt.f32.partialorder %v2736, 0.0004427343
      %v2738 = vsel %vm2737, %v2735, %v2732
      %v2739 = vadd.f32 %v2465, 1.0
      %v2740 = vlog2.pop %v2739
      %v2741 = vmul.f32 %v2740, 0.6931472
      %v2742 = vmul.f32 -0.5, %v2465
      %v2743 = vadd.f32 %v2742, 1.0
      %v2744 = vmul.f32 %v2743, %v2465
      %v2745 = vand.u32 2147483647, %v2465
      %vm2746 = vcmp.lt.f32.partialorder %v2745, 0.0004427343
      %v2747 = vsel %vm2746, %v2744, %v2741
      %v2748 = vadd.f32 %v2467, 1.0
      %v2749 = vlog2.pop %v2748
      %v2750 = vmul.f32 %v2749, 0.6931472
      %v2751 = vmul.f32 -0.5, %v2467
      %v2752 = vadd.f32 %v2751, 1.0
      %v2753 = vmul.f32 %v2752, %v2467
      %v2754 = vand.u32 2147483647, %v2467
      %vm2755 = vcmp.lt.f32.partialorder %v2754, 0.0004427343
      %v2756 = vsel %vm2755, %v2753, %v2750
      %v2757 = vadd.f32 %v2469, 1.0
      %v2758 = vlog2.pop %v2757
      %v2759 = vmul.f32 %v2758, 0.6931472
      %v2760 = vmul.f32 -0.5, %v2469
      %v2761 = vadd.f32 %v2760, 1.0
      %v2762 = vmul.f32 %v2761, %v2469
      %v2763 = vand.u32 2147483647, %v2469
      %vm2764 = vcmp.lt.f32.partialorder %v2763, 0.0004427343
      %v2765 = vsel %vm2764, %v2762, %v2759
      %v2766 = vadd.f32 %v2471, 1.0
      %v2767 = vlog2.pop %v2766
      %v2768 = vmul.f32 %v2767, 0.6931472
      %v2769 = vmul.f32 -0.5, %v2471
      %v2770 = vadd.f32 %v2769, 1.0
      %v2771 = vmul.f32 %v2770, %v2471
      %v2772 = vand.u32 2147483647, %v2471
      %vm2773 = vcmp.lt.f32.partialorder %v2772, 0.0004427343
      %v2774 = vsel %vm2773, %v2771, %v2768
      %v2775 = vadd.f32 %v2473, 1.0
      %v2776 = vlog2.pop %v2775
      %v2777 = vmul.f32 %v2776, 0.6931472
      %v2778 = vmul.f32 -0.5, %v2473
      %v2779 = vadd.f32 %v2778, 1.0
      %v2780 = vmul.f32 %v2779, %v2473
      %v2781 = vand.u32 2147483647, %v2473
      %vm2782 = vcmp.lt.f32.partialorder %v2781, 0.0004427343
      %v2783 = vsel %vm2782, %v2780, %v2777
      %v2784 = vadd.f32 %v2475, 1.0
      %v2785 = vlog2.pop %v2784
      %v2786 = vmul.f32 %v2785, 0.6931472
      %v2787 = vmul.f32 -0.5, %v2475
      %v2788 = vadd.f32 %v2787, 1.0
      %v2789 = vmul.f32 %v2788, %v2475
      %v2790 = vand.u32 2147483647, %v2475
      %vm2791 = vcmp.lt.f32.partialorder %v2790, 0.0004427343
      %v2792 = vsel %vm2791, %v2789, %v2786
      %v2793 = vadd.f32 %v2477, 1.0
      %v2794 = vlog2.pop %v2793
      %v2795 = vmul.f32 %v2794, 0.6931472
      %v2796 = vmul.f32 -0.5, %v2477
      %v2797 = vadd.f32 %v2796, 1.0
      %v2798 = vmul.f32 %v2797, %v2477
      %v2799 = vand.u32 2147483647, %v2477
      %vm2800 = vcmp.lt.f32.partialorder %v2799, 0.0004427343
      %v2801 = vsel %vm2800, %v2798, %v2795
      %v2802 = vadd.f32 %v2479, 1.0
      %v2803 = vlog2.pop %v2802
      %v2804 = vmul.f32 %v2803, 0.6931472
      %v2805 = vmul.f32 -0.5, %v2479
      %v2806 = vadd.f32 %v2805, 1.0
      %v2807 = vmul.f32 %v2806, %v2479
      %v2808 = vand.u32 2147483647, %v2479
      %vm2809 = vcmp.lt.f32.partialorder %v2808, 0.0004427343
      %v2810 = vsel %vm2809, %v2807, %v2804
      %v2811 = vadd.f32 %v2481, 1.0
      %v2812 = vlog2.pop %v2811
      %v2813 = vmul.f32 %v2812, 0.6931472
      %v2814 = vmul.f32 -0.5, %v2481
      %v2815 = vadd.f32 %v2814, 1.0
      %v2816 = vmul.f32 %v2815, %v2481
      %v2817 = vand.u32 2147483647, %v2481
      %vm2818 = vcmp.lt.f32.partialorder %v2817, 0.0004427343
      %v2819 = vsel %vm2818, %v2816, %v2813
      %v2820 = vadd.f32 %v2483, 1.0
      %v2821 = vlog2.pop %v2820
      %v2822 = vmul.f32 %v2821, 0.6931472
      %v2823 = vmul.f32 -0.5, %v2483
      %v2824 = vadd.f32 %v2823, 1.0
      %v2825 = vmul.f32 %v2824, %v2483
      %v2826 = vand.u32 2147483647, %v2483
      %vm2827 = vcmp.lt.f32.partialorder %v2826, 0.0004427343
      %v2828 = vsel %vm2827, %v2825, %v2822
      %v2829 = vadd.f32 %v2485, 1.0
      %v2830 = vlog2.pop %v2829
      %v2831 = vmul.f32 %v2830, 0.6931472
      %v2832 = vmul.f32 -0.5, %v2485
      %v2833 = vadd.f32 %v2832, 1.0
      %v2834 = vmul.f32 %v2833, %v2485
      %v2835 = vand.u32 2147483647, %v2485
      %vm2836 = vcmp.lt.f32.partialorder %v2835, 0.0004427343
      %v2837 = vsel %vm2836, %v2834, %v2831
      %v2838 = vadd.f32 %v2487, 1.0
      %v2839 = vlog2.pop %v2838
      %v2840 = vmul.f32 %v2839, 0.6931472
      %v2841 = vmul.f32 -0.5, %v2487
      %v2842 = vadd.f32 %v2841, 1.0
      %v2843 = vmul.f32 %v2842, %v2487
      %v2844 = vand.u32 2147483647, %v2487
      %vm2845 = vcmp.lt.f32.partialorder %v2844, 0.0004427343
      %v2846 = vsel %vm2845, %v2843, %v2840
      %v2847 = vadd.f32 %v2489, 1.0
      %v2848 = vlog2.pop %v2847
      %v2849 = vmul.f32 %v2848, 0.6931472
      %v2850 = vmul.f32 -0.5, %v2489
      %v2851 = vadd.f32 %v2850, 1.0
      %v2852 = vmul.f32 %v2851, %v2489
      %v2853 = vand.u32 2147483647, %v2489
      %vm2854 = vcmp.lt.f32.partialorder %v2853, 0.0004427343
      %v2855 = vsel %vm2854, %v2852, %v2849
      %v2856 = vadd.f32 %v2491, 1.0
      %v2857 = vlog2.pop %v2856
      %v2858 = vmul.f32 %v2857, 0.6931472
      %v2859 = vmul.f32 -0.5, %v2491
      %v2860 = vadd.f32 %v2859, 1.0
      %v2861 = vmul.f32 %v2860, %v2491
      %v2862 = vand.u32 2147483647, %v2491
      %vm2863 = vcmp.lt.f32.partialorder %v2862, 0.0004427343
      %v2864 = vsel %vm2863, %v2861, %v2858
      %v2865 = vadd.f32 %v2493, 1.0
      %v2866 = vlog2.pop %v2865
      %v2867 = vmul.f32 %v2866, 0.6931472
      %v2868 = vmul.f32 -0.5, %v2493
      %v2869 = vadd.f32 %v2868, 1.0
      %v2870 = vmul.f32 %v2869, %v2493
      %v2871 = vand.u32 2147483647, %v2493
      %vm2872 = vcmp.lt.f32.partialorder %v2871, 0.0004427343
      %v2873 = vsel %vm2872, %v2870, %v2867
      %v2874 = vadd.f32 %v2495, 1.0
      %v2875 = vlog2.pop %v2874
      %v2876 = vmul.f32 %v2875, 0.6931472
      %v2877 = vmul.f32 -0.5, %v2495
      %v2878 = vadd.f32 %v2877, 1.0
      %v2879 = vmul.f32 %v2878, %v2495
      %v2880 = vand.u32 2147483647, %v2495
      %vm2881 = vcmp.lt.f32.partialorder %v2880, 0.0004427343
      %v2882 = vsel %vm2881, %v2879, %v2876
      %v2883 = vadd.f32 %v2497, 1.0
      %v2884 = vlog2.pop %v2883
      %v2885 = vmul.f32 %v2884, 0.6931472
      %v2886 = vmul.f32 -0.5, %v2497
      %v2887 = vadd.f32 %v2886, 1.0
      %v2888 = vmul.f32 %v2887, %v2497
      %v2889 = vand.u32 2147483647, %v2497
      %vm2890 = vcmp.lt.f32.partialorder %v2889, 0.0004427343
      %v2891 = vsel %vm2890, %v2888, %v2885
      %v2892 = vadd.f32 %v2499, 1.0
      %v2893 = vlog2.pop %v2892
      %v2894 = vmul.f32 %v2893, 0.6931472
      %v2895 = vmul.f32 -0.5, %v2499
      %v2896 = vadd.f32 %v2895, 1.0
      %v2897 = vmul.f32 %v2896, %v2499
      %v2898 = vand.u32 2147483647, %v2499
      %vm2899 = vcmp.lt.f32.partialorder %v2898, 0.0004427343
      %v2900 = vsel %vm2899, %v2897, %v2894
      %v2901 = vadd.f32 %v2501, 1.0
      %v2902 = vlog2.pop %v2901
      %v2903 = vmul.f32 %v2902, 0.6931472
      %v2904 = vmul.f32 -0.5, %v2501
      %v2905 = vadd.f32 %v2904, 1.0
      %v2906 = vmul.f32 %v2905, %v2501
      %v2907 = vand.u32 2147483647, %v2501
      %vm2908 = vcmp.lt.f32.partialorder %v2907, 0.0004427343
      %v2909 = vsel %vm2908, %v2906, %v2903
      %v2910 = vadd.f32 %v2503, 1.0
      %v2911 = vlog2.pop %v2910
      %v2912 = vmul.f32 %v2911, 0.6931472
      %v2913 = vmul.f32 -0.5, %v2503
      %v2914 = vadd.f32 %v2913, 1.0
      %v2915 = vmul.f32 %v2914, %v2503
      %v2916 = vand.u32 2147483647, %v2503
      %vm2917 = vcmp.lt.f32.partialorder %v2916, 0.0004427343
      %v2918 = vsel %vm2917, %v2915, %v2912
      %v2919 = vadd.f32 %v2505, 1.0
      %v2920 = vlog2.pop %v2919
      %v2921 = vmul.f32 %v2920, 0.6931472
      %v2922 = vmul.f32 -0.5, %v2505
      %v2923 = vadd.f32 %v2922, 1.0
      %v2924 = vmul.f32 %v2923, %v2505
      %v2925 = vand.u32 2147483647, %v2505
      %vm2926 = vcmp.lt.f32.partialorder %v2925, 0.0004427343
      %v2927 = vsel %vm2926, %v2924, %v2921
      %v2928 = vadd.f32 %v2507, 1.0
      %v2929 = vlog2.pop %v2928
      %v2930 = vmul.f32 %v2929, 0.6931472
      %v2931 = vmul.f32 -0.5, %v2507
      %v2932 = vadd.f32 %v2931, 1.0
      %v2933 = vmul.f32 %v2932, %v2507
      %v2934 = vand.u32 2147483647, %v2507
      %vm2935 = vcmp.lt.f32.partialorder %v2934, 0.0004427343
      %v2936 = vsel %vm2935, %v2933, %v2930
      %v2937 = vadd.f32 %v2509, 1.0
      %v2938 = vlog2.pop %v2937
      %v2939 = vmul.f32 %v2938, 0.6931472
      %v2940 = vmul.f32 -0.5, %v2509
      %v2941 = vadd.f32 %v2940, 1.0
      %v2942 = vmul.f32 %v2941, %v2509
      %v2943 = vand.u32 2147483647, %v2509
      %vm2944 = vcmp.lt.f32.partialorder %v2943, 0.0004427343
      %v2945 = vsel %vm2944, %v2942, %v2939
      %v2946 = vadd.f32 %v2511, 1.0
      %v2947 = vlog2.pop %v2946
      %v2948 = vmul.f32 %v2947, 0.6931472
      %v2949 = vmul.f32 -0.5, %v2511
      %v2950 = vadd.f32 %v2949, 1.0
      %v2951 = vmul.f32 %v2950, %v2511
      %v2952 = vand.u32 2147483647, %v2511
      %vm2953 = vcmp.lt.f32.partialorder %v2952, 0.0004427343
      %v2954 = vsel %vm2953, %v2951, %v2948
      %v2955 = vadd.f32 %v2513, 1.0
      %v2956 = vlog2.pop %v2955
      %v2957 = vmul.f32 %v2956, 0.6931472
      %v2958 = vmul.f32 -0.5, %v2513
      %v2959 = vadd.f32 %v2958, 1.0
      %v2960 = vmul.f32 %v2959, %v2513
      %v2961 = vand.u32 2147483647, %v2513
      %vm2962 = vcmp.lt.f32.partialorder %v2961, 0.0004427343
      %v2963 = vsel %vm2962, %v2960, %v2957
      %v2964 = vadd.f32 %v2515, 1.0
      %v2965 = vlog2.pop %v2964
      %v2966 = vmul.f32 %v2965, 0.6931472
      %v2967 = vmul.f32 -0.5, %v2515
      %v2968 = vadd.f32 %v2967, 1.0
      %v2969 = vmul.f32 %v2968, %v2515
      %v2970 = vand.u32 2147483647, %v2515
      %vm2971 = vcmp.lt.f32.partialorder %v2970, 0.0004427343
      %v2972 = vsel %vm2971, %v2969, %v2966
      %v2973 = vadd.f32 %v2517, 1.0
      %v2974 = vlog2.pop %v2973
      %v2975 = vmul.f32 %v2974, 0.6931472
      %v2976 = vmul.f32 -0.5, %v2517
      %v2977 = vadd.f32 %v2976, 1.0
      %v2978 = vmul.f32 %v2977, %v2517
      %v2979 = vand.u32 2147483647, %v2517
      %vm2980 = vcmp.lt.f32.partialorder %v2979, 0.0004427343
      %v2981 = vsel %vm2980, %v2978, %v2975
      %v2982 = vadd.f32 %v2519, 1.0
      %v2983 = vlog2.pop %v2982
      %v2984 = vmul.f32 %v2983, 0.6931472
      %v2985 = vmul.f32 -0.5, %v2519
      %v2986 = vadd.f32 %v2985, 1.0
      %v2987 = vmul.f32 %v2986, %v2519
      %v2988 = vand.u32 2147483647, %v2519
      %vm2989 = vcmp.lt.f32.partialorder %v2988, 0.0004427343
      %v2990 = vsel %vm2989, %v2987, %v2984
      %v2991 = vadd.f32 %v2521, 1.0
      %v2992 = vlog2.pop %v2991
      %v2993 = vmul.f32 %v2992, 0.6931472
      %v2994 = vmul.f32 -0.5, %v2521
      %v2995 = vadd.f32 %v2994, 1.0
      %v2996 = vmul.f32 %v2995, %v2521
      %v2997 = vand.u32 2147483647, %v2521
      %vm2998 = vcmp.lt.f32.partialorder %v2997, 0.0004427343
      %v2999 = vsel %vm2998, %v2996, %v2993
      %v3000 = vadd.f32 %v2523, 1.0
      %v3001 = vlog2.pop %v3000
      %v3002 = vmul.f32 %v3001, 0.6931472
      %v3003 = vmul.f32 -0.5, %v2523
      %v3004 = vadd.f32 %v3003, 1.0
      %v3005 = vmul.f32 %v3004, %v2523
      %v3006 = vand.u32 2147483647, %v2523
      %vm3007 = vcmp.lt.f32.partialorder %v3006, 0.0004427343
      %v3008 = vsel %vm3007, %v3005, %v3002
      %v3009 = vadd.f32 %v2525, 1.0
      %v3010 = vlog2.pop %v3009
      %v3011 = vmul.f32 %v3010, 0.6931472
      %v3012 = vmul.f32 -0.5, %v2525
      %v3013 = vadd.f32 %v3012, 1.0
      %v3014 = vmul.f32 %v3013, %v2525
      %v3015 = vand.u32 2147483647, %v2525
      %vm3016 = vcmp.lt.f32.partialorder %v3015, 0.0004427343
      %v3017 = vsel %vm3016, %v3014, %v3011
      %v3018 = vadd.f32 %v2527, 1.0
      %v3019 = vlog2.pop %v3018
      %v3020 = vmul.f32 %v3019, 0.6931472
      %v3021 = vmul.f32 -0.5, %v2527
      %v3022 = vadd.f32 %v3021, 1.0
      %v3023 = vmul.f32 %v3022, %v2527
      %v3024 = vand.u32 2147483647, %v2527
      %vm3025 = vcmp.lt.f32.partialorder %v3024, 0.0004427343
      %v3026 = vsel %vm3025, %v3023, %v3020
      %v3027 = vadd.f32 %v2529, 1.0
      %v3028 = vlog2.pop %v3027
      %v3029 = vmul.f32 %v3028, 0.6931472
      %v3030 = vmul.f32 -0.5, %v2529
      %v3031 = vadd.f32 %v3030, 1.0
      %v3032 = vmul.f32 %v3031, %v2529
      %v3033 = vand.u32 2147483647, %v2529
      %vm3034 = vcmp.lt.f32.partialorder %v3033, 0.0004427343
      %v3035 = vsel %vm3034, %v3032, %v3029
      %v3036 = vadd.f32 %v2531, 1.0
      %v3037 = vlog2.pop %v3036
      %v3038 = vmul.f32 %v3037, 0.6931472
      %v3039 = vmul.f32 -0.5, %v2531
      %v3040 = vadd.f32 %v3039, 1.0
      %v3041 = vmul.f32 %v3040, %v2531
      %v3042 = vand.u32 2147483647, %v2531
      %vm3043 = vcmp.lt.f32.partialorder %v3042, 0.0004427343
      %v3044 = vsel %vm3043, %v3041, %v3038
      %v3045 = vadd.f32 %v2533, 1.0
      %v3046 = vlog2.pop %v3045
      %v3047 = vmul.f32 %v3046, 0.6931472
      %v3048 = vmul.f32 -0.5, %v2533
      %v3049 = vadd.f32 %v3048, 1.0
      %v3050 = vmul.f32 %v3049, %v2533
      %v3051 = vand.u32 2147483647, %v2533
      %vm3052 = vcmp.lt.f32.partialorder %v3051, 0.0004427343
      %v3053 = vsel %vm3052, %v3050, %v3047
      %v3054 = vadd.f32 %v2535, 1.0
      %v3055 = vlog2.pop %v3054
      %v3056 = vmul.f32 %v3055, 0.6931472
      %v3057 = vmul.f32 -0.5, %v2535
      %v3058 = vadd.f32 %v3057, 1.0
      %v3059 = vmul.f32 %v3058, %v2535
      %v3060 = vand.u32 2147483647, %v2535
      %vm3061 = vcmp.lt.f32.partialorder %v3060, 0.0004427343
      %v3062 = vsel %vm3061, %v3059, %v3056
      %v3063 = vadd.f32 %v2537, 1.0
      %v3064 = vlog2.pop %v3063
      %v3065 = vmul.f32 %v3064, 0.6931472
      %v3066 = vmul.f32 -0.5, %v2537
      %v3067 = vadd.f32 %v3066, 1.0
      %v3068 = vmul.f32 %v3067, %v2537
      %v3069 = vand.u32 2147483647, %v2537
      %vm3070 = vcmp.lt.f32.partialorder %v3069, 0.0004427343
      %v3071 = vsel %vm3070, %v3068, %v3065
      %v3072 = vadd.f32 %v2539, 1.0
      %v3073 = vlog2.pop %v3072
      %v3074 = vmul.f32 %v3073, 0.6931472
      %v3075 = vmul.f32 -0.5, %v2539
      %v3076 = vadd.f32 %v3075, 1.0
      %v3077 = vmul.f32 %v3076, %v2539
      %v3078 = vand.u32 2147483647, %v2539
      %vm3079 = vcmp.lt.f32.partialorder %v3078, 0.0004427343
      %v3080 = vsel %vm3079, %v3077, %v3074
      %v3081 = vadd.f32 %v2541, 1.0
      %v3082 = vlog2.pop %v3081
      %v3083 = vmul.f32 %v3082, 0.6931472
      %v3084 = vmul.f32 -0.5, %v2541
      %v3085 = vadd.f32 %v3084, 1.0
      %v3086 = vmul.f32 %v3085, %v2541
      %v3087 = vand.u32 2147483647, %v2541
      %vm3088 = vcmp.lt.f32.partialorder %v3087, 0.0004427343
      %v3089 = vsel %vm3088, %v3086, %v3083
      %v3090 = vadd.f32 %v2543, 1.0
      %v3091 = vlog2.pop %v3090
      %v3092 = vmul.f32 %v3091, 0.6931472
      %v3093 = vmul.f32 -0.5, %v2543
      %v3094 = vadd.f32 %v3093, 1.0
      %v3095 = vmul.f32 %v3094, %v2543
      %v3096 = vand.u32 2147483647, %v2543
      %vm3097 = vcmp.lt.f32.partialorder %v3096, 0.0004427343
      %v3098 = vsel %vm3097, %v3095, %v3092
      %v3099 = vadd.f32 %v2545, 1.0
      %v3100 = vlog2.pop %v3099
      %v3101 = vmul.f32 %v3100, 0.6931472
      %v3102 = vmul.f32 -0.5, %v2545
      %v3103 = vadd.f32 %v3102, 1.0
      %v3104 = vmul.f32 %v3103, %v2545
      %v3105 = vand.u32 2147483647, %v2545
      %vm3106 = vcmp.lt.f32.partialorder %v3105, 0.0004427343
      %v3107 = vsel %vm3106, %v3104, %v3101
      %v3108 = vadd.f32 %v2547, 1.0
      %v3109 = vlog2.pop %v3108
      %v3110 = vmul.f32 %v3109, 0.6931472
      %v3111 = vmul.f32 -0.5, %v2547
      %v3112 = vadd.f32 %v3111, 1.0
      %v3113 = vmul.f32 %v3112, %v2547
      %v3114 = vand.u32 2147483647, %v2547
      %vm3115 = vcmp.lt.f32.partialorder %v3114, 0.0004427343
      %v3116 = vsel %vm3115, %v3113, %v3110
      %v3117 = vadd.f32 %v2549, 1.0
      %v3118 = vlog2.pop %v3117
      %v3119 = vmul.f32 %v3118, 0.6931472
      %v3120 = vmul.f32 -0.5, %v2549
      %v3121 = vadd.f32 %v3120, 1.0
      %v3122 = vmul.f32 %v3121, %v2549
      %v3123 = vand.u32 2147483647, %v2549
      %vm3124 = vcmp.lt.f32.partialorder %v3123, 0.0004427343
      %v3125 = vsel %vm3124, %v3122, %v3119
      %v3126 = vadd.f32 %v2230, %v2558
      %v3127 = vadd.f32 %v2231, %v2567
      %v3128 = vadd.f32 %v2232, %v2576
      %v3129 = vadd.f32 %v2233, %v2585
      %v3130 = vadd.f32 %v2234, %v2594
      %v3131 = vadd.f32 %v2235, %v2603
      %v3132 = vadd.f32 %v2236, %v2612
      %v3133 = vadd.f32 %v2237, %v2621
      %v3134 = vadd.f32 %v2238, %v2630
      %v3135 = vadd.f32 %v2239, %v2639
      %v3136 = vadd.f32 %v2240, %v2648
      %v3137 = vadd.f32 %v2241, %v2657
      %v3138 = vadd.f32 %v2242, %v2666
      %v3139 = vadd.f32 %v2243, %v2675
      %v3140 = vadd.f32 %v2244, %v2684
      %v3141 = vadd.f32 %v2245, %v2693
      %v3142 = vadd.f32 %v2246, %v2702
      %v3143 = vadd.f32 %v2247, %v2711
      %v3144 = vadd.f32 %v2248, %v2720
      %v3145 = vadd.f32 %v2249, %v2729
      %v3146 = vadd.f32 %v2250, %v2738
      %v3147 = vadd.f32 %v2251, %v2747
      %v3148 = vadd.f32 %v2252, %v2756
      %v3149 = vadd.f32 %v2253, %v2765
      %v3150 = vadd.f32 %v2254, %v2774
      %v3151 = vadd.f32 %v2255, %v2783
      %v3152 = vadd.f32 %v2256, %v2792
      %v3153 = vadd.f32 %v2257, %v2801
      %v3154 = vadd.f32 %v2258, %v2810
      %v3155 = vadd.f32 %v2259, %v2819
      %v3156 = vadd.f32 %v2260, %v2828
      %v3157 = vadd.f32 %v2261, %v2837
      %v3158 = vadd.f32 %v2262, %v2846
      %v3159 = vadd.f32 %v2263, %v2855
      %v3160 = vadd.f32 %v2264, %v2864
      %v3161 = vadd.f32 %v2265, %v2873
      %v3162 = vadd.f32 %v2266, %v2882
      %v3163 = vadd.f32 %v2267, %v2891
      %v3164 = vadd.f32 %v2268, %v2900
      %v3165 = vadd.f32 %v2269, %v2909
      %v3166 = vadd.f32 %v2270, %v2918
      %v3167 = vadd.f32 %v2271, %v2927
      %v3168 = vadd.f32 %v2272, %v2936
      %v3169 = vadd.f32 %v2273, %v2945
      %v3170 = vadd.f32 %v2274, %v2954
      %v3171 = vadd.f32 %v2275, %v2963
      %v3172 = vadd.f32 %v2276, %v2972
      %v3173 = vadd.f32 %v2277, %v2981
      %v3174 = vadd.f32 %v2278, %v2990
      %v3175 = vadd.f32 %v2279, %v2999
      %v3176 = vadd.f32 %v2280, %v3008
      %v3177 = vadd.f32 %v2281, %v3017
      %v3178 = vadd.f32 %v2282, %v3026
      %v3179 = vadd.f32 %v2283, %v3035
      %v3180 = vadd.f32 %v2284, %v3044
      %v3181 = vadd.f32 %v2285, %v3053
      %v3182 = vadd.f32 %v2286, %v3062
      %v3183 = vadd.f32 %v2287, %v3071
      %v3184 = vadd.f32 %v2288, %v3080
      %v3185 = vadd.f32 %v2289, %v3089
      %v3186 = vadd.f32 %v2290, %v3098
      %v3187 = vadd.f32 %v2291, %v3107
      %v3188 = vadd.f32 %v2292, %v3116
      %v3189 = vadd.f32 %v2293, %v3125
      %v3190 = vld [vmem:[%s16] sm:$0x3]
      %v3192 = vperm.slane %v3190, 0
      %v3193 = vperm.slane %v3190, 1
      %v3196 = vmul.f32 %v3126, %v3192
      %v3197 = vmul.f32 %v3127, %v3193
      %v3198 = vmul.f32 %v3128, %v3192
      %v3199 = vmul.f32 %v3129, %v3193
      %v3200 = vmul.f32 %v3130, %v3192
      %v3201 = vmul.f32 %v3131, %v3193
      %v3202 = vmul.f32 %v3132, %v3192
      %v3203 = vmul.f32 %v3133, %v3193
      %v3204 = vmul.f32 %v3134, %v3192
      %v3205 = vmul.f32 %v3135, %v3193
      %v3206 = vmul.f32 %v3136, %v3192
      %v3207 = vmul.f32 %v3137, %v3193
      %v3208 = vmul.f32 %v3138, %v3192
      %v3209 = vmul.f32 %v3139, %v3193
      %v3210 = vmul.f32 %v3140, %v3192
      %v3211 = vmul.f32 %v3141, %v3193
      %v3212 = vmul.f32 %v3142, %v3192
      %v3213 = vmul.f32 %v3143, %v3193
      %v3214 = vmul.f32 %v3144, %v3192
      %v3215 = vmul.f32 %v3145, %v3193
      %v3216 = vmul.f32 %v3146, %v3192
      %v3217 = vmul.f32 %v3147, %v3193
      %v3218 = vmul.f32 %v3148, %v3192
      %v3219 = vmul.f32 %v3149, %v3193
      %v3220 = vmul.f32 %v3150, %v3192
      %v3221 = vmul.f32 %v3151, %v3193
      %v3222 = vmul.f32 %v3152, %v3192
      %v3223 = vmul.f32 %v3153, %v3193
      %v3224 = vmul.f32 %v3154, %v3192
      %v3225 = vmul.f32 %v3155, %v3193
      %v3226 = vmul.f32 %v3156, %v3192
      %v3227 = vmul.f32 %v3157, %v3193
      %v3228 = vmul.f32 %v3158, %v3192
      %v3229 = vmul.f32 %v3159, %v3193
      %v3230 = vmul.f32 %v3160, %v3192
      %v3231 = vmul.f32 %v3161, %v3193
      %v3232 = vmul.f32 %v3162, %v3192
      %v3233 = vmul.f32 %v3163, %v3193
      %v3234 = vmul.f32 %v3164, %v3192
      %v3235 = vmul.f32 %v3165, %v3193
      %v3236 = vmul.f32 %v3166, %v3192
      %v3237 = vmul.f32 %v3167, %v3193
      %v3238 = vmul.f32 %v3168, %v3192
      %v3239 = vmul.f32 %v3169, %v3193
      %v3240 = vmul.f32 %v3170, %v3192
      %v3241 = vmul.f32 %v3171, %v3193
      %v3242 = vmul.f32 %v3172, %v3192
      %v3243 = vmul.f32 %v3173, %v3193
      %v3244 = vmul.f32 %v3174, %v3192
      %v3245 = vmul.f32 %v3175, %v3193
      %v3246 = vmul.f32 %v3176, %v3192
      %v3247 = vmul.f32 %v3177, %v3193
      %v3248 = vmul.f32 %v3178, %v3192
      %v3249 = vmul.f32 %v3179, %v3193
      %v3250 = vmul.f32 %v3180, %v3192
      %v3251 = vmul.f32 %v3181, %v3193
      %v3252 = vmul.f32 %v3182, %v3192
      %v3253 = vmul.f32 %v3183, %v3193
      %v3254 = vmul.f32 %v3184, %v3192
      %v3255 = vmul.f32 %v3185, %v3193
      %v3256 = vmul.f32 %v3186, %v3192
      %v3257 = vmul.f32 %v3187, %v3193
      %v3258 = vmul.f32 %v3188, %v3192
      %v3259 = vmul.f32 %v3189, %v3193
      %v3260 = vmul.f32 %v3196, 1.442695
      %v3261 = vpow.pop %v3260
      %v3262 = vmul.f32 %v3197, 1.442695
      %v3263 = vpow.pop %v3262
      %v3264 = vmul.f32 %v3198, 1.442695
      %v3265 = vpow.pop %v3264
      %v3266 = vmul.f32 %v3199, 1.442695
      %v3267 = vpow.pop %v3266
      %v3268 = vmul.f32 %v3200, 1.442695
      %v3269 = vpow.pop %v3268
      %v3270 = vmul.f32 %v3201, 1.442695
      %v3271 = vpow.pop %v3270
      %v3272 = vmul.f32 %v3202, 1.442695
      %v3273 = vpow.pop %v3272
      %v3274 = vmul.f32 %v3203, 1.442695
      %v3275 = vpow.pop %v3274
      %v3276 = vmul.f32 %v3204, 1.442695
      %v3277 = vpow.pop %v3276
      %v3278 = vmul.f32 %v3205, 1.442695
      %v3279 = vpow.pop %v3278
      %v3280 = vmul.f32 %v3206, 1.442695
      %v3281 = vpow.pop %v3280
      %v3282 = vmul.f32 %v3207, 1.442695
      %v3283 = vpow.pop %v3282
      %v3284 = vmul.f32 %v3208, 1.442695
      %v3285 = vpow.pop %v3284
      %v3286 = vmul.f32 %v3209, 1.442695
      %v3287 = vpow.pop %v3286
      %v3288 = vmul.f32 %v3210, 1.442695
      %v3289 = vpow.pop %v3288
      %v3290 = vmul.f32 %v3211, 1.442695
      %v3291 = vpow.pop %v3290
      %v3292 = vmul.f32 %v3212, 1.442695
      %v3293 = vpow.pop %v3292
      %v3294 = vmul.f32 %v3213, 1.442695
      %v3295 = vpow.pop %v3294
      %v3296 = vmul.f32 %v3214, 1.442695
      %v3297 = vpow.pop %v3296
      %v3298 = vmul.f32 %v3215, 1.442695
      %v3299 = vpow.pop %v3298
      %v3300 = vmul.f32 %v3216, 1.442695
      %v3301 = vpow.pop %v3300
      %v3302 = vmul.f32 %v3217, 1.442695
      %v3303 = vpow.pop %v3302
      %v3304 = vmul.f32 %v3218, 1.442695
      %v3305 = vpow.pop %v3304
      %v3306 = vmul.f32 %v3219, 1.442695
      %v3307 = vpow.pop %v3306
      %v3308 = vmul.f32 %v3220, 1.442695
      %v3309 = vpow.pop %v3308
      %v3310 = vmul.f32 %v3221, 1.442695
      %v3311 = vpow.pop %v3310
      %v3312 = vmul.f32 %v3222, 1.442695
      %v3313 = vpow.pop %v3312
      %v3314 = vmul.f32 %v3223, 1.442695
      %v3315 = vpow.pop %v3314
      %v3316 = vmul.f32 %v3224, 1.442695
      %v3317 = vpow.pop %v3316
      %v3318 = vmul.f32 %v3225, 1.442695
      %v3319 = vpow.pop %v3318
      %v3320 = vmul.f32 %v3226, 1.442695
      %v3321 = vpow.pop %v3320
      %v3322 = vmul.f32 %v3227, 1.442695
      %v3323 = vpow.pop %v3322
      %v3324 = vmul.f32 %v3228, 1.442695
      %v3325 = vpow.pop %v3324
      %v3326 = vmul.f32 %v3229, 1.442695
      %v3327 = vpow.pop %v3326
      %v3328 = vmul.f32 %v3230, 1.442695
      %v3329 = vpow.pop %v3328
      %v3330 = vmul.f32 %v3231, 1.442695
      %v3331 = vpow.pop %v3330
      %v3332 = vmul.f32 %v3232, 1.442695
      %v3333 = vpow.pop %v3332
      %v3334 = vmul.f32 %v3233, 1.442695
      %v3335 = vpow.pop %v3334
      %v3336 = vmul.f32 %v3234, 1.442695
      %v3337 = vpow.pop %v3336
      %v3338 = vmul.f32 %v3235, 1.442695
      %v3339 = vpow.pop %v3338
      %v3340 = vmul.f32 %v3236, 1.442695
      %v3341 = vpow.pop %v3340
      %v3342 = vmul.f32 %v3237, 1.442695
      %v3343 = vpow.pop %v3342
      %v3344 = vmul.f32 %v3238, 1.442695
      %v3345 = vpow.pop %v3344
      %v3346 = vmul.f32 %v3239, 1.442695
      %v3347 = vpow.pop %v3346
      %v3348 = vmul.f32 %v3240, 1.442695
      %v3349 = vpow.pop %v3348
      %v3350 = vmul.f32 %v3241, 1.442695
      %v3351 = vpow.pop %v3350
      %v3352 = vmul.f32 %v3242, 1.442695
      %v3353 = vpow.pop %v3352
      %v3354 = vmul.f32 %v3243, 1.442695
      %v3355 = vpow.pop %v3354
      %v3356 = vmul.f32 %v3244, 1.442695
      %v3357 = vpow.pop %v3356
      %v3358 = vmul.f32 %v3245, 1.442695
      %v3359 = vpow.pop %v3358
      %v3360 = vmul.f32 %v3246, 1.442695
      %v3361 = vpow.pop %v3360
      %v3362 = vmul.f32 %v3247, 1.442695
      %v3363 = vpow.pop %v3362
      %v3364 = vmul.f32 %v3248, 1.442695
      %v3365 = vpow.pop %v3364
      %v3366 = vmul.f32 %v3249, 1.442695
      %v3367 = vpow.pop %v3366
      %v3368 = vmul.f32 %v3250, 1.442695
      %v3369 = vpow.pop %v3368
      %v3370 = vmul.f32 %v3251, 1.442695
      %v3371 = vpow.pop %v3370
      %v3372 = vmul.f32 %v3252, 1.442695
      %v3373 = vpow.pop %v3372
      %v3374 = vmul.f32 %v3253, 1.442695
      %v3375 = vpow.pop %v3374
      %v3376 = vmul.f32 %v3254, 1.442695
      %v3377 = vpow.pop %v3376
      %v3378 = vmul.f32 %v3255, 1.442695
      %v3379 = vpow.pop %v3378
      %v3380 = vmul.f32 %v3256, 1.442695
      %v3381 = vpow.pop %v3380
      %v3382 = vmul.f32 %v3257, 1.442695
      %v3383 = vpow.pop %v3382
      %v3384 = vmul.f32 %v3258, 1.442695
      %v3385 = vpow.pop %v3384
      %v3386 = vmul.f32 %v3259, 1.442695
      %v3387 = vpow.pop %v3386
      %3388 = vst [vmem:[#allocation2] sm:$0xff] %v3261
      %3389 = vst [vmem:[#allocation2 + $0x8] sm:$0xff] %v3263
      %3390 = vst [vmem:[#allocation2 + $0x10] sm:$0xff] %v3265
      %3391 = vst [vmem:[#allocation2 + $0x18] sm:$0xff] %v3267
      %3392 = vst [vmem:[#allocation2 + $0x20] sm:$0xff] %v3269
      %3393 = vst [vmem:[#allocation2 + $0x28] sm:$0xff] %v3271
      %3394 = vst [vmem:[#allocation2 + $0x30] sm:$0xff] %v3273
      %3395 = vst [vmem:[#allocation2 + $0x38] sm:$0xff] %v3275
      %3396 = vst [vmem:[#allocation2 + $0x40] sm:$0xff] %v3277
      %3397 = vst [vmem:[#allocation2 + $0x48] sm:$0xff] %v3279
      %3398 = vst [vmem:[#allocation2 + $0x50] sm:$0xff] %v3281
      %3399 = vst [vmem:[#allocation2 + $0x58] sm:$0xff] %v3283
      %3400 = vst [vmem:[#allocation2 + $0x60] sm:$0xff] %v3285
      %3401 = vst [vmem:[#allocation2 + $0x68] sm:$0xff] %v3287
      %3402 = vst [vmem:[#allocation2 + $0x70] sm:$0xff] %v3289
      %3403 = vst [vmem:[#allocation2 + $0x78] sm:$0xff] %v3291
      %3404 = vst [vmem:[#allocation2 + $0x80] sm:$0xff] %v3293
      %3405 = vst [vmem:[#allocation2 + $0x88] sm:$0xff] %v3295
      %3406 = vst [vmem:[#allocation2 + $0x90] sm:$0xff] %v3297
      %3407 = vst [vmem:[#allocation2 + $0x98] sm:$0xff] %v3299
      %3408 = vst [vmem:[#allocation2 + $0xa0] sm:$0xff] %v3301
      %3409 = vst [vmem:[#allocation2 + $0xa8] sm:$0xff] %v3303
      %3410 = vst [vmem:[#allocation2 + $0xb0] sm:$0xff] %v3305
      %3411 = vst [vmem:[#allocation2 + $0xb8] sm:$0xff] %v3307
      %3412 = vst [vmem:[#allocation2 + $0xc0] sm:$0xff] %v3309
      %3413 = vst [vmem:[#allocation2 + $0xc8] sm:$0xff] %v3311
      %3414 = vst [vmem:[#allocation2 + $0xd0] sm:$0xff] %v3313
      %3415 = vst [vmem:[#allocation2 + $0xd8] sm:$0xff] %v3315
      %3416 = vst [vmem:[#allocation2 + $0xe0] sm:$0xff] %v3317
      %3417 = vst [vmem:[#allocation2 + $0xe8] sm:$0xff] %v3319
      %3418 = vst [vmem:[#allocation2 + $0xf0] sm:$0xff] %v3321
      %3419 = vst [vmem:[#allocation2 + $0xf8] sm:$0xff] %v3323
      %3420 = vst [vmem:[#allocation2 + $0x100] sm:$0xff] %v3325
      %3421 = vst [vmem:[#allocation2 + $0x108] sm:$0xff] %v3327
      %3422 = vst [vmem:[#allocation2 + $0x110] sm:$0xff] %v3329
      %3423 = vst [vmem:[#allocation2 + $0x118] sm:$0xff] %v3331
      %3424 = vst [vmem:[#allocation2 + $0x120] sm:$0xff] %v3333
      %3425 = vst [vmem:[#allocation2 + $0x128] sm:$0xff] %v3335
      %3426 = vst [vmem:[#allocation2 + $0x130] sm:$0xff] %v3337
      %3427 = vst [vmem:[#allocation2 + $0x138] sm:$0xff] %v3339
      %3428 = vst [vmem:[#allocation2 + $0x140] sm:$0xff] %v3341
      %3429 = vst [vmem:[#allocation2 + $0x148] sm:$0xff] %v3343
      %3430 = vst [vmem:[#allocation2 + $0x150] sm:$0xff] %v3345
      %3431 = vst [vmem:[#allocation2 + $0x158] sm:$0xff] %v3347
      %3432 = vst [vmem:[#allocation2 + $0x160] sm:$0xff] %v3349
      %3433 = vst [vmem:[#allocation2 + $0x168] sm:$0xff] %v3351
      %3434 = vst [vmem:[#allocation2 + $0x170] sm:$0xff] %v3353
      %3435 = vst [vmem:[#allocation2 + $0x178] sm:$0xff] %v3355
      %3436 = vst [vmem:[#allocation2 + $0x180] sm:$0xff] %v3357
      %3437 = vst [vmem:[#allocation2 + $0x188] sm:$0xff] %v3359
      %3438 = vst [vmem:[#allocation2 + $0x190] sm:$0xff] %v3361
      %3439 = vst [vmem:[#allocation2 + $0x198] sm:$0xff] %v3363
      %3440 = vst [vmem:[#allocation2 + $0x1a0] sm:$0xff] %v3365
      %3441 = vst [vmem:[#allocation2 + $0x1a8] sm:$0xff] %v3367
      %3442 = vst [vmem:[#allocation2 + $0x1b0] sm:$0xff] %v3369
      %3443 = vst [vmem:[#allocation2 + $0x1b8] sm:$0xff] %v3371
      %3444 = vst [vmem:[#allocation2 + $0x1c0] sm:$0xff] %v3373
      %3445 = vst [vmem:[#allocation2 + $0x1c8] sm:$0xff] %v3375
      %3446 = vst [vmem:[#allocation2 + $0x1d0] sm:$0xff] %v3377
      %3447 = vst [vmem:[#allocation2 + $0x1d8] sm:$0xff] %v3379
      %3448 = vst [vmem:[#allocation2 + $0x1e0] sm:$0xff] %v3381
      %3449 = vst [vmem:[#allocation2 + $0x1e8] sm:$0xff] %v3383
      %3450 = vst [vmem:[#allocation2 + $0x1f0] sm:$0xff] %v3385
      %3451 = vst [vmem:[#allocation2 + $0x1f8] sm:$0xff] %v3387
      %v3452 = vmul.f32 %v1930, %v3126
      %v3453 = vmul.f32 %v1931, %v3127
      %v3454 = vmul.f32 %v1932, %v3128
      %v3455 = vmul.f32 %v1933, %v3129
      %v3456 = vmul.f32 %v1934, %v3130
      %v3457 = vmul.f32 %v1935, %v3131
      %v3458 = vmul.f32 %v1936, %v3132
      %v3459 = vmul.f32 %v1937, %v3133
      %v3460 = vmul.f32 %v1938, %v3134
      %v3461 = vmul.f32 %v1939, %v3135
      %v3462 = vmul.f32 %v1940, %v3136
      %v3463 = vmul.f32 %v1941, %v3137
      %v3464 = vmul.f32 %v1942, %v3138
      %v3465 = vmul.f32 %v1943, %v3139
      %v3466 = vmul.f32 %v1944, %v3140
      %v3467 = vmul.f32 %v1945, %v3141
      %v3468 = vmul.f32 %v1946, %v3142
      %v3469 = vmul.f32 %v1947, %v3143
      %v3470 = vmul.f32 %v1948, %v3144
      %v3471 = vmul.f32 %v1949, %v3145
      %v3472 = vmul.f32 %v1950, %v3146
      %v3473 = vmul.f32 %v1951, %v3147
      %v3474 = vmul.f32 %v1952, %v3148
      %v3475 = vmul.f32 %v1953, %v3149
      %v3476 = vmul.f32 %v1954, %v3150
      %v3477 = vmul.f32 %v1955, %v3151
      %v3478 = vmul.f32 %v1956, %v3152
      %v3479 = vmul.f32 %v1957, %v3153
      %v3480 = vmul.f32 %v1958, %v3154
      %v3481 = vmul.f32 %v1959, %v3155
      %v3482 = vmul.f32 %v1960, %v3156
      %v3483 = vmul.f32 %v1961, %v3157
      %v3484 = vmul.f32 %v1962, %v3158
      %v3485 = vmul.f32 %v1963, %v3159
      %v3486 = vmul.f32 %v1964, %v3160
      %v3487 = vmul.f32 %v1965, %v3161
      %v3488 = vmul.f32 %v1966, %v3162
      %v3489 = vmul.f32 %v1967, %v3163
      %v3490 = vmul.f32 %v1968, %v3164
      %v3491 = vmul.f32 %v1969, %v3165
      %v3492 = vmul.f32 %v1970, %v3166
      %v3493 = vmul.f32 %v1971, %v3167
      %v3494 = vmul.f32 %v1972, %v3168
      %v3495 = vmul.f32 %v1973, %v3169
      %v3496 = vmul.f32 %v1974, %v3170
      %v3497 = vmul.f32 %v1975, %v3171
      %v3498 = vmul.f32 %v1976, %v3172
      %v3499 = vmul.f32 %v1977, %v3173
      %v3500 = vmul.f32 %v1978, %v3174
      %v3501 = vmul.f32 %v1979, %v3175
      %v3502 = vmul.f32 %v1980, %v3176
      %v3503 = vmul.f32 %v1981, %v3177
      %v3504 = vmul.f32 %v1982, %v3178
      %v3505 = vmul.f32 %v1983, %v3179
      %v3506 = vmul.f32 %v1984, %v3180
      %v3507 = vmul.f32 %v1985, %v3181
      %v3508 = vmul.f32 %v1986, %v3182
      %v3509 = vmul.f32 %v1987, %v3183
      %v3510 = vmul.f32 %v1988, %v3184
      %v3511 = vmul.f32 %v1989, %v3185
      %v3512 = vmul.f32 %v1990, %v3186
      %v3513 = vmul.f32 %v1991, %v3187
      %v3514 = vmul.f32 %v1992, %v3188
      %v3515 = vmul.f32 %v1993, %v3189
      %3516 = vst [vmem:[#allocation3] sm:$0xff] %v3452
      %3517 = vst [vmem:[#allocation3 + $0x8] sm:$0xff] %v3453
      %3518 = vst [vmem:[#allocation3 + $0x10] sm:$0xff] %v3454
      %3519 = vst [vmem:[#allocation3 + $0x18] sm:$0xff] %v3455
      %3520 = vst [vmem:[#allocation3 + $0x20] sm:$0xff] %v3456
      %3521 = vst [vmem:[#allocation3 + $0x28] sm:$0xff] %v3457
      %3522 = vst [vmem:[#allocation3 + $0x30] sm:$0xff] %v3458
      %3523 = vst [vmem:[#allocation3 + $0x38] sm:$0xff] %v3459
      %3524 = vst [vmem:[#allocation3 + $0x40] sm:$0xff] %v3460
      %3525 = vst [vmem:[#allocation3 + $0x48] sm:$0xff] %v3461
      %3526 = vst [vmem:[#allocation3 + $0x50] sm:$0xff] %v3462
      %3527 = vst [vmem:[#allocation3 + $0x58] sm:$0xff] %v3463
      %3528 = vst [vmem:[#allocation3 + $0x60] sm:$0xff] %v3464
      %3529 = vst [vmem:[#allocation3 + $0x68] sm:$0xff] %v3465
      %3530 = vst [vmem:[#allocation3 + $0x70] sm:$0xff] %v3466
      %3531 = vst [vmem:[#allocation3 + $0x78] sm:$0xff] %v3467
      %3532 = vst [vmem:[#allocation3 + $0x80] sm:$0xff] %v3468
      %3533 = vst [vmem:[#allocation3 + $0x88] sm:$0xff] %v3469
      %3534 = vst [vmem:[#allocation3 + $0x90] sm:$0xff] %v3470
      %3535 = vst [vmem:[#allocation3 + $0x98] sm:$0xff] %v3471
      %3536 = vst [vmem:[#allocation3 + $0xa0] sm:$0xff] %v3472
      %3537 = vst [vmem:[#allocation3 + $0xa8] sm:$0xff] %v3473
      %3538 = vst [vmem:[#allocation3 + $0xb0] sm:$0xff] %v3474
      %3539 = vst [vmem:[#allocation3 + $0xb8] sm:$0xff] %v3475
      %3540 = vst [vmem:[#allocation3 + $0xc0] sm:$0xff] %v3476
      %3541 = vst [vmem:[#allocation3 + $0xc8] sm:$0xff] %v3477
      %3542 = vst [vmem:[#allocation3 + $0xd0] sm:$0xff] %v3478
      %3543 = vst [vmem:[#allocation3 + $0xd8] sm:$0xff] %v3479
      %3544 = vst [vmem:[#allocation3 + $0xe0] sm:$0xff] %v3480
      %3545 = vst [vmem:[#allocation3 + $0xe8] sm:$0xff] %v3481
      %3546 = vst [vmem:[#allocation3 + $0xf0] sm:$0xff] %v3482
      %3547 = vst [vmem:[#allocation3 + $0xf8] sm:$0xff] %v3483
      %3548 = vst [vmem:[#allocation3 + $0x100] sm:$0xff] %v3484
      %3549 = vst [vmem:[#allocation3 + $0x108] sm:$0xff] %v3485
      %3550 = vst [vmem:[#allocation3 + $0x110] sm:$0xff] %v3486
      %3551 = vst [vmem:[#allocation3 + $0x118] sm:$0xff] %v3487
      %3552 = vst [vmem:[#allocation3 + $0x120] sm:$0xff] %v3488
      %3553 = vst [vmem:[#allocation3 + $0x128] sm:$0xff] %v3489
      %3554 = vst [vmem:[#allocation3 + $0x130] sm:$0xff] %v3490
      %3555 = vst [vmem:[#allocation3 + $0x138] sm:$0xff] %v3491
      %3556 = vst [vmem:[#allocation3 + $0x140] sm:$0xff] %v3492
      %3557 = vst [vmem:[#allocation3 + $0x148] sm:$0xff] %v3493
      %3558 = vst [vmem:[#allocation3 + $0x150] sm:$0xff] %v3494
      %3559 = vst [vmem:[#allocation3 + $0x158] sm:$0xff] %v3495
      %3560 = vst [vmem:[#allocation3 + $0x160] sm:$0xff] %v3496
      %3561 = vst [vmem:[#allocation3 + $0x168] sm:$0xff] %v3497
      %3562 = vst [vmem:[#allocation3 + $0x170] sm:$0xff] %v3498
      %3563 = vst [vmem:[#allocation3 + $0x178] sm:$0xff] %v3499
      %3564 = vst [vmem:[#allocation3 + $0x180] sm:$0xff] %v3500
      %3565 = vst [vmem:[#allocation3 + $0x188] sm:$0xff] %v3501
      %3566 = vst [vmem:[#allocation3 + $0x190] sm:$0xff] %v3502
      %3567 = vst [vmem:[#allocation3 + $0x198] sm:$0xff] %v3503
      %3568 = vst [vmem:[#allocation3 + $0x1a0] sm:$0xff] %v3504
      %3569 = vst [vmem:[#allocation3 + $0x1a8] sm:$0xff] %v3505
      %3570 = vst [vmem:[#allocation3 + $0x1b0] sm:$0xff] %v3506
      %3571 = vst [vmem:[#allocation3 + $0x1b8] sm:$0xff] %v3507
      %3572 = vst [vmem:[#allocation3 + $0x1c0] sm:$0xff] %v3508
      %3573 = vst [vmem:[#allocation3 + $0x1c8] sm:$0xff] %v3509
      %3574 = vst [vmem:[#allocation3 + $0x1d0] sm:$0xff] %v3510
      %3575 = vst [vmem:[#allocation3 + $0x1d8] sm:$0xff] %v3511
      %3576 = vst [vmem:[#allocation3 + $0x1e0] sm:$0xff] %v3512
      %3577 = vst [vmem:[#allocation3 + $0x1e8] sm:$0xff] %v3513
      %3578 = vst [vmem:[#allocation3 + $0x1f0] sm:$0xff] %v3514
      %3579 = vst [vmem:[#allocation3 + $0x1f8] sm:$0xff] %v3515
      loop: start=0, step=1, limit=32
      $region97: #{_lambda_.2} parent=95 // loop_pre_header
        _
      $region98: #{_lambda_.2} parent=95 // loop_header
        %s3581 = sphi 0, %s3585
        %p3582 = scmp.ge.s32.totalorder %s3581, 32
        %v3586 = vphi 0.0, %v3672
        %v3587 = vphi 0.0, %v3673
      $region99: #{_lambda_.2} parent=95 // loop_header_branch
        %3584 = sbr.rel (%p3582) target = $region103
      $region100: #{_lambda_.2} parent=95 // loop_body
        %s3588 = smul.u32 %s3581, 8
        %s3589 = sshra.s32 %s3588, 3
        %s3590 = sand.u32 %s3588, 7
        %s3591 = smul.u32 %s3589, 2
        %s3592 = smul.addr %s3591, 8
        %s3593 = scalar_lea.vmem [#allocation2], %s3592
        %v3594 = vld [vmem:[%s3593] sm:$0xff]
        %v3595 = vld [vmem:[%s3593 + $0x8] sm:$0xff]
        %s3596 = smul.addr %s3591, 8
        %s3597 = scalar_lea.vmem [#allocation3], %s3596
        %v3598 = vld [vmem:[%s3597] sm:$0xff]
        %v3599 = vld [vmem:[%s3597 + $0x8] sm:$0xff]
        %v3602 = vrot.slane %v3594, 7
        %v3603 = vrot.slane %v3595, 7
        %vm3606 = vcmask 1040384
        %v3607 = vsel %vm3606, 1.0, %v3602
        %v3608 = vsel %vm3606, 1.0, %v3603
        %v3611 = vrot.slane %v3598, 7
        %v3612 = vrot.slane %v3599, 7
        %v3615 = vsel %vm3606, 0.0, %v3611
        %v3616 = vsel %vm3606, 0.0, %v3612
        %v3617 = vmul.f32 %v3594, %v3615
        %v3618 = vmul.f32 %v3595, %v3616
        %v3619 = vadd.f32 %v3617, %v3598
        %v3620 = vadd.f32 %v3618, %v3599
        %v3621 = vmul.f32 %v3594, %v3607
        %v3622 = vmul.f32 %v3595, %v3608
        %v3625 = vrot.slane %v3621, 6
        %v3626 = vrot.slane %v3622, 6
        %vm3629 = vcmask 1041408
        %v3630 = vsel %vm3629, 1.0, %v3625
        %v3631 = vsel %vm3629, 1.0, %v3626
        %v3634 = vrot.slane %v3619, 6
        %v3635 = vrot.slane %v3620, 6
        %v3638 = vsel %vm3629, 0.0, %v3634
        %v3639 = vsel %vm3629, 0.0, %v3635
        %v3640 = vmul.f32 %v3621, %v3638
        %v3641 = vmul.f32 %v3622, %v3639
        %v3642 = vadd.f32 %v3640, %v3619
        %v3643 = vadd.f32 %v3641, %v3620
        %v3644 = vmul.f32 %v3621, %v3630
        %v3645 = vmul.f32 %v3622, %v3631
        %v3648 = vrot.slane %v3644, 4
        %v3649 = vrot.slane %v3645, 4
        %v3652 = vsel %vm826, 1.0, %v3648
        %v3653 = vsel %vm826, 1.0, %v3649
        %v3656 = vrot.slane %v3642, 4
        %v3657 = vrot.slane %v3643, 4
        %v3660 = vsel %vm826, 0.0, %v3656
        %v3661 = vsel %vm826, 0.0, %v3657
        %v3662 = vmul.f32 %v3644, %v3660
        %v3663 = vmul.f32 %v3645, %v3661
        %v3664 = vadd.f32 %v3662, %v3642
        %v3665 = vadd.f32 %v3663, %v3643
        %v3666 = vmul.f32 %v3644, %v3652
        %v3667 = vmul.f32 %v3645, %v3653
        %v3668 = vperm.slane %v3586, 7
        %v3669 = vperm.slane %v3587, 7
        %v3670 = vmul.f32 %v3666, %v3668
        %v3671 = vmul.f32 %v3667, %v3669
        %v3672 = vadd.f32 %v3670, %v3664
        %v3673 = vadd.f32 %v3671, %v3665
        %s3674 = smul.addr %s3591, 8
        %s3675 = scalar_lea.vmem [#allocation4], %s3674
        %3676 = vst [vmem:[%s3675] sm:$0xff] %v3672
        %3677 = vst [vmem:[%s3675 + $0x8] sm:$0xff] %v3673
      $region101: #{_lambda_.2} parent=95 // loop_footer
        %s3585 = sadd.s32 1, %s3581
      $region102: #{_lambda_.2} parent=95 // loop_footer_branch
        %3580 = sbr.rel target = $region98
      $region103: #{_lambda_.2} parent=95 // loop_exit
        _
      %v3678 = vld [vmem:[%s12] sm:$0xff]
      %v3679 = vld [vmem:[%s12 + $0x8] sm:$0xff]
      %v3680 = vld [vmem:[%s12 + $0x10] sm:$0xff]
      %v3681 = vld [vmem:[%s12 + $0x18] sm:$0xff]
      %3682 = vmatpush.msra.mxu0 0.0
      %3683 = vmatpush.msra.mxu0 0.0
      %3684 = vmatpush.msra.mxu0 0.0
      %3685 = vmatpush.msra.mxu0 0.0
      %3686 = vmatpush.msra.mxu0 0.0
      %3687 = vmatpush.msra.mxu0 0.0
      %3688 = vmatpush.msra.mxu0 0.0
      %3689 = vmatpush.msra.mxu0 0.0
      %3690 = vmatpush.msra.mxu0 0.0
      %3691 = vmatpush.msra.mxu0 0.0
      %3692 = vmatpush.msra.mxu0 0.0
      %3693 = vmatpush.msra.mxu0 0.0
      %3694 = vmatpush.msra.mxu0 0.0
      %3695 = vmatpush.msra.mxu0 0.0
      %3696 = vmatpush.msra.mxu0 %v3680
      %3697 = vmatpush.msra.mxu0 %v3678
      %3698 = vmatmul.f32.gmra.mxu0 %v1379
      %v3699 = vpop.f32.mrf.mxu0
      %v3700 = vadd.f32 0.0, %v3699
      %3701 = vmatmul.f32.gmra.mxu0 %v1382
      %v3702 = vpop.f32.mrf.mxu0
      %v3703 = vadd.f32 0.0, %v3702
      %3704 = vmatmul.f32.gmra.mxu0 %v1385
      %v3705 = vpop.f32.mrf.mxu0
      %v3706 = vadd.f32 0.0, %v3705
      %3707 = vmatmul.f32.gmra.mxu0 %v1388
      %v3708 = vpop.f32.mrf.mxu0
      %v3709 = vadd.f32 0.0, %v3708
      %3710 = vmatmul.f32.gmra.mxu0 %v1391
      %v3711 = vpop.f32.mrf.mxu0
      %v3712 = vadd.f32 0.0, %v3711
      %3713 = vmatmul.f32.gmra.mxu0 %v1394
      %v3714 = vpop.f32.mrf.mxu0
      %v3715 = vadd.f32 0.0, %v3714
      %3716 = vmatmul.f32.gmra.mxu0 %v1397
      %v3717 = vpop.f32.mrf.mxu0
      %v3718 = vadd.f32 0.0, %v3717
      %3719 = vmatmul.f32.gmra.mxu0 %v1400
      %v3720 = vpop.f32.mrf.mxu0
      %v3721 = vadd.f32 0.0, %v3720
      %3722 = vmatmul.f32.gmra.mxu0 %v1403
      %v3723 = vpop.f32.mrf.mxu0
      %v3724 = vadd.f32 0.0, %v3723
      %3725 = vmatmul.f32.gmra.mxu0 %v1406
      %v3726 = vpop.f32.mrf.mxu0
      %v3727 = vadd.f32 0.0, %v3726
      %3728 = vmatmul.f32.gmra.mxu0 %v1409
      %v3729 = vpop.f32.mrf.mxu0
      %v3730 = vadd.f32 0.0, %v3729
      %3731 = vmatmul.f32.gmra.mxu0 %v1412
      %v3732 = vpop.f32.mrf.mxu0
      %v3733 = vadd.f32 0.0, %v3732
      %3734 = vmatmul.f32.gmra.mxu0 %v1415
      %v3735 = vpop.f32.mrf.mxu0
      %v3736 = vadd.f32 0.0, %v3735
      %3737 = vmatmul.f32.gmra.mxu0 %v1418
      %v3738 = vpop.f32.mrf.mxu0
      %v3739 = vadd.f32 0.0, %v3738
      %3740 = vmatmul.f32.gmra.mxu0 %v1421
      %v3741 = vpop.f32.mrf.mxu0
      %v3742 = vadd.f32 0.0, %v3741
      %3743 = vmatmul.f32.gmra.mxu0 %v1424
      %v3744 = vpop.f32.mrf.mxu0
      %v3745 = vadd.f32 0.0, %v3744
      %3746 = vmatmul.f32.gmra.mxu0 %v1427
      %v3747 = vpop.f32.mrf.mxu0
      %v3748 = vadd.f32 0.0, %v3747
      %3749 = vmatmul.f32.gmra.mxu0 %v1430
      %v3750 = vpop.f32.mrf.mxu0
      %v3751 = vadd.f32 0.0, %v3750
      %3752 = vmatmul.f32.gmra.mxu0 %v1433
      %v3753 = vpop.f32.mrf.mxu0
      %v3754 = vadd.f32 0.0, %v3753
      %3755 = vmatmul.f32.gmra.mxu0 %v1436
      %v3756 = vpop.f32.mrf.mxu0
      %v3757 = vadd.f32 0.0, %v3756
      %3758 = vmatmul.f32.gmra.mxu0 %v1439
      %v3759 = vpop.f32.mrf.mxu0
      %v3760 = vadd.f32 0.0, %v3759
      %3761 = vmatmul.f32.gmra.mxu0 %v1442
      %v3762 = vpop.f32.mrf.mxu0
      %v3763 = vadd.f32 0.0, %v3762
      %3764 = vmatmul.f32.gmra.mxu0 %v1445
      %v3765 = vpop.f32.mrf.mxu0
      %v3766 = vadd.f32 0.0, %v3765
      %3767 = vmatmul.f32.gmra.mxu0 %v1448
      %v3768 = vpop.f32.mrf.mxu0
      %v3769 = vadd.f32 0.0, %v3768
      %3770 = vmatmul.f32.gmra.mxu0 %v1451
      %v3771 = vpop.f32.mrf.mxu0
      %v3772 = vadd.f32 0.0, %v3771
      %3773 = vmatmul.f32.gmra.mxu0 %v1454
      %v3774 = vpop.f32.mrf.mxu0
      %v3775 = vadd.f32 0.0, %v3774
      %3776 = vmatmul.f32.gmra.mxu0 %v1457
      %v3777 = vpop.f32.mrf.mxu0
      %v3778 = vadd.f32 0.0, %v3777
      %3779 = vmatmul.f32.gmra.mxu0 %v1460
      %v3780 = vpop.f32.mrf.mxu0
      %v3781 = vadd.f32 0.0, %v3780
      %3782 = vmatmul.f32.gmra.mxu0 %v1463
      %v3783 = vpop.f32.mrf.mxu0
      %v3784 = vadd.f32 0.0, %v3783
      %3785 = vmatmul.f32.gmra.mxu0 %v1466
      %v3786 = vpop.f32.mrf.mxu0
      %v3787 = vadd.f32 0.0, %v3786
      %3788 = vmatmul.f32.gmra.mxu0 %v1469
      %v3789 = vpop.f32.mrf.mxu0
      %v3790 = vadd.f32 0.0, %v3789
      %3791 = vmatmul.f32.gmra.mxu0 %v1472
      %v3792 = vpop.f32.mrf.mxu0
      %v3793 = vadd.f32 0.0, %v3792
      %3794 = vdwg.mxu0
      %3795 = vmatpush.msra.mxu0 0.0
      %3796 = vmatpush.msra.mxu0 0.0
      %3797 = vmatpush.msra.mxu0 0.0
      %3798 = vmatpush.msra.mxu0 0.0
      %3799 = vmatpush.msra.mxu0 0.0
      %3800 = vmatpush.msra.mxu0 0.0
      %3801 = vmatpush.msra.mxu0 0.0
      %3802 = vmatpush.msra.mxu0 0.0
      %3803 = vmatpush.msra.mxu0 0.0
      %3804 = vmatpush.msra.mxu0 0.0
      %3805 = vmatpush.msra.mxu0 0.0
      %3806 = vmatpush.msra.mxu0 0.0
      %3807 = vmatpush.msra.mxu0 0.0
      %3808 = vmatpush.msra.mxu0 0.0
      %3809 = vmatpush.msra.mxu0 %v3681
      %3810 = vmatpush.msra.mxu0 %v3679
      %3811 = vmatmul.f32.gmra.mxu0 %v1379
      %v3812 = vpop.f32.mrf.mxu0
      %v3813 = vadd.f32 0.0, %v3812
      %3814 = vmatmul.f32.gmra.mxu0 %v1382
      %v3815 = vpop.f32.mrf.mxu0
      %v3816 = vadd.f32 0.0, %v3815
      %3817 = vmatmul.f32.gmra.mxu0 %v1385
      %v3818 = vpop.f32.mrf.mxu0
      %v3819 = vadd.f32 0.0, %v3818
      %3820 = vmatmul.f32.gmra.mxu0 %v1388
      %v3821 = vpop.f32.mrf.mxu0
      %v3822 = vadd.f32 0.0, %v3821
      %3823 = vmatmul.f32.gmra.mxu0 %v1391
      %v3824 = vpop.f32.mrf.mxu0
      %v3825 = vadd.f32 0.0, %v3824
      %3826 = vmatmul.f32.gmra.mxu0 %v1394
      %v3827 = vpop.f32.mrf.mxu0
      %v3828 = vadd.f32 0.0, %v3827
      %3829 = vmatmul.f32.gmra.mxu0 %v1397
      %v3830 = vpop.f32.mrf.mxu0
      %v3831 = vadd.f32 0.0, %v3830
      %3832 = vmatmul.f32.gmra.mxu0 %v1400
      %v3833 = vpop.f32.mrf.mxu0
      %v3834 = vadd.f32 0.0, %v3833
      %3835 = vmatmul.f32.gmra.mxu0 %v1403
      %v3836 = vpop.f32.mrf.mxu0
      %v3837 = vadd.f32 0.0, %v3836
      %3838 = vmatmul.f32.gmra.mxu0 %v1406
      %v3839 = vpop.f32.mrf.mxu0
      %v3840 = vadd.f32 0.0, %v3839
      %3841 = vmatmul.f32.gmra.mxu0 %v1409
      %v3842 = vpop.f32.mrf.mxu0
      %v3843 = vadd.f32 0.0, %v3842
      %3844 = vmatmul.f32.gmra.mxu0 %v1412
      %v3845 = vpop.f32.mrf.mxu0
      %v3846 = vadd.f32 0.0, %v3845
      %3847 = vmatmul.f32.gmra.mxu0 %v1415
      %v3848 = vpop.f32.mrf.mxu0
      %v3849 = vadd.f32 0.0, %v3848
      %3850 = vmatmul.f32.gmra.mxu0 %v1418
      %v3851 = vpop.f32.mrf.mxu0
      %v3852 = vadd.f32 0.0, %v3851
      %3853 = vmatmul.f32.gmra.mxu0 %v1421
      %v3854 = vpop.f32.mrf.mxu0
      %v3855 = vadd.f32 0.0, %v3854
      %3856 = vmatmul.f32.gmra.mxu0 %v1424
      %v3857 = vpop.f32.mrf.mxu0
      %v3858 = vadd.f32 0.0, %v3857
      %3859 = vmatmul.f32.gmra.mxu0 %v1427
      %v3860 = vpop.f32.mrf.mxu0
      %v3861 = vadd.f32 0.0, %v3860
      %3862 = vmatmul.f32.gmra.mxu0 %v1430
      %v3863 = vpop.f32.mrf.mxu0
      %v3864 = vadd.f32 0.0, %v3863
      %3865 = vmatmul.f32.gmra.mxu0 %v1433
      %v3866 = vpop.f32.mrf.mxu0
      %v3867 = vadd.f32 0.0, %v3866
      %3868 = vmatmul.f32.gmra.mxu0 %v1436
      %v3869 = vpop.f32.mrf.mxu0
      %v3870 = vadd.f32 0.0, %v3869
      %3871 = vmatmul.f32.gmra.mxu0 %v1439
      %v3872 = vpop.f32.mrf.mxu0
      %v3873 = vadd.f32 0.0, %v3872
      %3874 = vmatmul.f32.gmra.mxu0 %v1442
      %v3875 = vpop.f32.mrf.mxu0
      %v3876 = vadd.f32 0.0, %v3875
      %3877 = vmatmul.f32.gmra.mxu0 %v1445
      %v3878 = vpop.f32.mrf.mxu0
      %v3879 = vadd.f32 0.0, %v3878
      %3880 = vmatmul.f32.gmra.mxu0 %v1448
      %v3881 = vpop.f32.mrf.mxu0
      %v3882 = vadd.f32 0.0, %v3881
      %3883 = vmatmul.f32.gmra.mxu0 %v1451
      %v3884 = vpop.f32.mrf.mxu0
      %v3885 = vadd.f32 0.0, %v3884
      %3886 = vmatmul.f32.gmra.mxu0 %v1454
      %v3887 = vpop.f32.mrf.mxu0
      %v3888 = vadd.f32 0.0, %v3887
      %3889 = vmatmul.f32.gmra.mxu0 %v1457
      %v3890 = vpop.f32.mrf.mxu0
      %v3891 = vadd.f32 0.0, %v3890
      %3892 = vmatmul.f32.gmra.mxu0 %v1460
      %v3893 = vpop.f32.mrf.mxu0
      %v3894 = vadd.f32 0.0, %v3893
      %3895 = vmatmul.f32.gmra.mxu0 %v1463
      %v3896 = vpop.f32.mrf.mxu0
      %v3897 = vadd.f32 0.0, %v3896
      %3898 = vmatmul.f32.gmra.mxu0 %v1466
      %v3899 = vpop.f32.mrf.mxu0
      %v3900 = vadd.f32 0.0, %v3899
      %3901 = vmatmul.f32.gmra.mxu0 %v1469
      %v3902 = vpop.f32.mrf.mxu0
      %v3903 = vadd.f32 0.0, %v3902
      %3904 = vmatmul.f32.gmra.mxu0 %v1472
      %v3905 = vpop.f32.mrf.mxu0
      %v3906 = vadd.f32 0.0, %v3905
      %3907 = vdwg.mxu0
      %v3908 = vld [vmem:[%s15] sm:$0xff]
      %v3909 = vld [vmem:[%s15 + $0x8] sm:$0xff]
      %v3910 = vld [vmem:[%s15 + $0x10] sm:$0xff]
      %v3911 = vld [vmem:[%s15 + $0x18] sm:$0xff]
      %v3912 = vld [vmem:[#allocation4] sm:$0xff]
      %v3913 = vld [vmem:[#allocation4 + $0x8] sm:$0xff]
      %v3914 = vld [vmem:[#allocation4 + $0x10] sm:$0xff]
      %v3915 = vld [vmem:[#allocation4 + $0x18] sm:$0xff]
      %v3916 = vld [vmem:[#allocation4 + $0x20] sm:$0xff]
      %v3917 = vld [vmem:[#allocation4 + $0x28] sm:$0xff]
      %v3918 = vld [vmem:[#allocation4 + $0x30] sm:$0xff]
      %v3919 = vld [vmem:[#allocation4 + $0x38] sm:$0xff]
      %v3920 = vld [vmem:[#allocation4 + $0x40] sm:$0xff]
      %v3921 = vld [vmem:[#allocation4 + $0x48] sm:$0xff]
      %v3922 = vld [vmem:[#allocation4 + $0x50] sm:$0xff]
      %v3923 = vld [vmem:[#allocation4 + $0x58] sm:$0xff]
      %v3924 = vld [vmem:[#allocation4 + $0x60] sm:$0xff]
      %v3925 = vld [vmem:[#allocation4 + $0x68] sm:$0xff]
      %v3926 = vld [vmem:[#allocation4 + $0x70] sm:$0xff]
      %v3927 = vld [vmem:[#allocation4 + $0x78] sm:$0xff]
      %v3928 = vld [vmem:[#allocation4 + $0x80] sm:$0xff]
      %v3929 = vld [vmem:[#allocation4 + $0x88] sm:$0xff]
      %v3930 = vld [vmem:[#allocation4 + $0x90] sm:$0xff]
      %v3931 = vld [vmem:[#allocation4 + $0x98] sm:$0xff]
      %v3932 = vld [vmem:[#allocation4 + $0xa0] sm:$0xff]
      %v3933 = vld [vmem:[#allocation4 + $0xa8] sm:$0xff]
      %v3934 = vld [vmem:[#allocation4 + $0xb0] sm:$0xff]
      %v3935 = vld [vmem:[#allocation4 + $0xb8] sm:$0xff]
      %v3936 = vld [vmem:[#allocation4 + $0xc0] sm:$0xff]
      %v3937 = vld [vmem:[#allocation4 + $0xc8] sm:$0xff]
      %v3938 = vld [vmem:[#allocation4 + $0xd0] sm:$0xff]
      %v3939 = vld [vmem:[#allocation4 + $0xd8] sm:$0xff]
      %v3940 = vld [vmem:[#allocation4 + $0xe0] sm:$0xff]
      %v3941 = vld [vmem:[#allocation4 + $0xe8] sm:$0xff]
      %v3942 = vld [vmem:[#allocation4 + $0xf0] sm:$0xff]
      %v3943 = vld [vmem:[#allocation4 + $0xf8] sm:$0xff]
      %v3944 = vld [vmem:[#allocation4 + $0x100] sm:$0xff]
      %v3945 = vld [vmem:[#allocation4 + $0x108] sm:$0xff]
      %v3946 = vld [vmem:[#allocation4 + $0x110] sm:$0xff]
      %v3947 = vld [vmem:[#allocation4 + $0x118] sm:$0xff]
      %v3948 = vld [vmem:[#allocation4 + $0x120] sm:$0xff]
      %v3949 = vld [vmem:[#allocation4 + $0x128] sm:$0xff]
      %v3950 = vld [vmem:[#allocation4 + $0x130] sm:$0xff]
      %v3951 = vld [vmem:[#allocation4 + $0x138] sm:$0xff]
      %v3952 = vld [vmem:[#allocation4 + $0x140] sm:$0xff]
      %v3953 = vld [vmem:[#allocation4 + $0x148] sm:$0xff]
      %v3954 = vld [vmem:[#allocation4 + $0x150] sm:$0xff]
      %v3955 = vld [vmem:[#allocation4 + $0x158] sm:$0xff]
      %v3956 = vld [vmem:[#allocation4 + $0x160] sm:$0xff]
      %v3957 = vld [vmem:[#allocation4 + $0x168] sm:$0xff]
      %v3958 = vld [vmem:[#allocation4 + $0x170] sm:$0xff]
      %v3959 = vld [vmem:[#allocation4 + $0x178] sm:$0xff]
      %v3960 = vld [vmem:[#allocation4 + $0x180] sm:$0xff]
      %v3961 = vld [vmem:[#allocation4 + $0x188] sm:$0xff]
      %v3962 = vld [vmem:[#allocation4 + $0x190] sm:$0xff]
      %v3963 = vld [vmem:[#allocation4 + $0x198] sm:$0xff]
      %v3964 = vld [vmem:[#allocation4 + $0x1a0] sm:$0xff]
      %v3965 = vld [vmem:[#allocation4 + $0x1a8] sm:$0xff]
      %v3966 = vld [vmem:[#allocation4 + $0x1b0] sm:$0xff]
      %v3967 = vld [vmem:[#allocation4 + $0x1b8] sm:$0xff]
      %v3968 = vld [vmem:[#allocation4 + $0x1c0] sm:$0xff]
      %v3969 = vld [vmem:[#allocation4 + $0x1c8] sm:$0xff]
      %v3970 = vld [vmem:[#allocation4 + $0x1d0] sm:$0xff]
      %v3971 = vld [vmem:[#allocation4 + $0x1d8] sm:$0xff]
      %v3972 = vld [vmem:[#allocation4 + $0x1e0] sm:$0xff]
      %v3973 = vld [vmem:[#allocation4 + $0x1e8] sm:$0xff]
      %v3974 = vld [vmem:[#allocation4 + $0x1f0] sm:$0xff]
      %v3975 = vld [vmem:[#allocation4 + $0x1f8] sm:$0xff]
      %v3976 = vmul.f32 %v3912, %v3700
      %v3977 = vmul.f32 %v3913, %v3813
      %v3978 = vmul.f32 %v3914, %v3703
      %v3979 = vmul.f32 %v3915, %v3816
      %v3980 = vmul.f32 %v3916, %v3706
      %v3981 = vmul.f32 %v3917, %v3819
      %v3982 = vmul.f32 %v3918, %v3709
      %v3983 = vmul.f32 %v3919, %v3822
      %v3984 = vmul.f32 %v3920, %v3712
      %v3985 = vmul.f32 %v3921, %v3825
      %v3986 = vmul.f32 %v3922, %v3715
      %v3987 = vmul.f32 %v3923, %v3828
      %v3988 = vmul.f32 %v3924, %v3718
      %v3989 = vmul.f32 %v3925, %v3831
      %v3990 = vmul.f32 %v3926, %v3721
      %v3991 = vmul.f32 %v3927, %v3834
      %v3992 = vmul.f32 %v3928, %v3724
      %v3993 = vmul.f32 %v3929, %v3837
      %v3994 = vmul.f32 %v3930, %v3727
      %v3995 = vmul.f32 %v3931, %v3840
      %v3996 = vmul.f32 %v3932, %v3730
      %v3997 = vmul.f32 %v3933, %v3843
      %v3998 = vmul.f32 %v3934, %v3733
      %v3999 = vmul.f32 %v3935, %v3846
      %v4000 = vmul.f32 %v3936, %v3736
      %v4001 = vmul.f32 %v3937, %v3849
      %v4002 = vmul.f32 %v3938, %v3739
      %v4003 = vmul.f32 %v3939, %v3852
      %v4004 = vmul.f32 %v3940, %v3742
      %v4005 = vmul.f32 %v3941, %v3855
      %v4006 = vmul.f32 %v3942, %v3745
      %v4007 = vmul.f32 %v3943, %v3858
      %v4008 = vmul.f32 %v3944, %v3748
      %v4009 = vmul.f32 %v3945, %v3861
      %v4010 = vmul.f32 %v3946, %v3751
      %v4011 = vmul.f32 %v3947, %v3864
      %v4012 = vmul.f32 %v3948, %v3754
      %v4013 = vmul.f32 %v3949, %v3867
      %v4014 = vmul.f32 %v3950, %v3757
      %v4015 = vmul.f32 %v3951, %v3870
      %v4016 = vmul.f32 %v3952, %v3760
      %v4017 = vmul.f32 %v3953, %v3873
      %v4018 = vmul.f32 %v3954, %v3763
      %v4019 = vmul.f32 %v3955, %v3876
      %v4020 = vmul.f32 %v3956, %v3766
      %v4021 = vmul.f32 %v3957, %v3879
      %v4022 = vmul.f32 %v3958, %v3769
      %v4023 = vmul.f32 %v3959, %v3882
      %v4024 = vmul.f32 %v3960, %v3772
      %v4025 = vmul.f32 %v3961, %v3885
      %v4026 = vmul.f32 %v3962, %v3775
      %v4027 = vmul.f32 %v3963, %v3888
      %v4028 = vmul.f32 %v3964, %v3778
      %v4029 = vmul.f32 %v3965, %v3891
      %v4030 = vmul.f32 %v3966, %v3781
      %v4031 = vmul.f32 %v3967, %v3894
      %v4032 = vmul.f32 %v3968, %v3784
      %v4033 = vmul.f32 %v3969, %v3897
      %v4034 = vmul.f32 %v3970, %v3787
      %v4035 = vmul.f32 %v3971, %v3900
      %v4036 = vmul.f32 %v3972, %v3790
      %v4037 = vmul.f32 %v3973, %v3903
      %v4038 = vmul.f32 %v3974, %v3793
      %v4039 = vmul.f32 %v3975, %v3906
      %v4040 = vld [vmem:[%s17] sm:$0xff]
      %v4041 = vld [vmem:[%s17 + $0x8] sm:$0xff]
      %4043 = vset.pattern.permute.xlu0 0
      %4044 = vperm.xlu0 %4043, %v4040
      %v4045 = vpop.permute.xlu0 %4044
      %4048 = vset.pattern.permute.xlu0 0
      %4049 = vperm.xlu0 %4048, %v4041
      %v4050 = vpop.permute.xlu0 %4049
      %v4052 = vmul.f32 %v4045, %v1306
      %v4053 = vmul.f32 %v4045, %v1307
      %v4054 = vmul.f32 %v4050, %v1308
      %v4055 = vmul.f32 %v4050, %v1309
      %4056 = vmatpush.xpose.msra.mxu0 %v4006
      %4057 = vmatpush.xpose.msra.mxu0 %v4004
      %4058 = vmatpush.xpose.msra.mxu0 %v4002
      %4059 = vmatpush.xpose.msra.mxu0 %v4000
      %4060 = vmatpush.xpose.msra.mxu0 %v3998
      %4061 = vmatpush.xpose.msra.mxu0 %v3996
      %4062 = vmatpush.xpose.msra.mxu0 %v3994
      %4063 = vmatpush.xpose.msra.mxu0 %v3992
      %4064 = vmatpush.xpose.msra.mxu0 %v3990
      %4065 = vmatpush.xpose.msra.mxu0 %v3988
      %4066 = vmatpush.xpose.msra.mxu0 %v3986
      %4067 = vmatpush.xpose.msra.mxu0 %v3984
      %4068 = vmatpush.xpose.msra.mxu0 %v3982
      %4069 = vmatpush.xpose.msra.mxu0 %v3980
      %4070 = vmatpush.xpose.msra.mxu0 %v3978
      %4071 = vmatpush.xpose.msra.mxu0 %v3976
      %4072 = vmatmul.f32.gmra.mxu0 %v3908
      %v4073 = vpop.f32.mrf.mxu0
      %v4074 = vadd.f32 %v4052, %v4073
      %4075 = vmatmul.f32.gmra.mxu0 %v3910
      %v4076 = vpop.f32.mrf.mxu0
      %v4077 = vadd.f32 %v4054, %v4076
      %4078 = vdwg.mxu0
      %4079 = vmatpush.xpose.msra.mxu0 %v4007
      %4080 = vmatpush.xpose.msra.mxu0 %v4005
      %4081 = vmatpush.xpose.msra.mxu0 %v4003
      %4082 = vmatpush.xpose.msra.mxu0 %v4001
      %4083 = vmatpush.xpose.msra.mxu0 %v3999
      %4084 = vmatpush.xpose.msra.mxu0 %v3997
      %4085 = vmatpush.xpose.msra.mxu0 %v3995
      %4086 = vmatpush.xpose.msra.mxu0 %v3993
      %4087 = vmatpush.xpose.msra.mxu0 %v3991
      %4088 = vmatpush.xpose.msra.mxu0 %v3989
      %4089 = vmatpush.xpose.msra.mxu0 %v3987
      %4090 = vmatpush.xpose.msra.mxu0 %v3985
      %4091 = vmatpush.xpose.msra.mxu0 %v3983
      %4092 = vmatpush.xpose.msra.mxu0 %v3981
      %4093 = vmatpush.xpose.msra.mxu0 %v3979
      %4094 = vmatpush.xpose.msra.mxu0 %v3977
      %4095 = vmatmul.f32.gmra.mxu0 %v3909
      %v4096 = vpop.f32.mrf.mxu0
      %v4097 = vadd.f32 %v4074, %v4096
      %4098 = vmatmul.f32.gmra.mxu0 %v3911
      %v4099 = vpop.f32.mrf.mxu0
      %v4100 = vadd.f32 %v4077, %v4099
      %4101 = vdwg.mxu0
      %4102 = vmatpush.xpose.msra.mxu0 %v4038
      %4103 = vmatpush.xpose.msra.mxu0 %v4036
      %4104 = vmatpush.xpose.msra.mxu0 %v4034
      %4105 = vmatpush.xpose.msra.mxu0 %v4032
      %4106 = vmatpush.xpose.msra.mxu0 %v4030
      %4107 = vmatpush.xpose.msra.mxu0 %v4028
      %4108 = vmatpush.xpose.msra.mxu0 %v4026
      %4109 = vmatpush.xpose.msra.mxu0 %v4024
      %4110 = vmatpush.xpose.msra.mxu0 %v4022
      %4111 = vmatpush.xpose.msra.mxu0 %v4020
      %4112 = vmatpush.xpose.msra.mxu0 %v4018
      %4113 = vmatpush.xpose.msra.mxu0 %v4016
      %4114 = vmatpush.xpose.msra.mxu0 %v4014
      %4115 = vmatpush.xpose.msra.mxu0 %v4012
      %4116 = vmatpush.xpose.msra.mxu0 %v4010
      %4117 = vmatpush.xpose.msra.mxu0 %v4008
      %4118 = vmatmul.f32.gmra.mxu0 %v3908
      %v4119 = vpop.f32.mrf.mxu0
      %v4120 = vadd.f32 %v4053, %v4119
      %4121 = vmatmul.f32.gmra.mxu0 %v3910
      %v4122 = vpop.f32.mrf.mxu0
      %v4123 = vadd.f32 %v4055, %v4122
      %4124 = vdwg.mxu0
      %4125 = vmatpush.xpose.msra.mxu0 %v4039
      %4126 = vmatpush.xpose.msra.mxu0 %v4037
      %4127 = vmatpush.xpose.msra.mxu0 %v4035
      %4128 = vmatpush.xpose.msra.mxu0 %v4033
      %4129 = vmatpush.xpose.msra.mxu0 %v4031
      %4130 = vmatpush.xpose.msra.mxu0 %v4029
      %4131 = vmatpush.xpose.msra.mxu0 %v4027
      %4132 = vmatpush.xpose.msra.mxu0 %v4025
      %4133 = vmatpush.xpose.msra.mxu0 %v4023
      %4134 = vmatpush.xpose.msra.mxu0 %v4021
      %4135 = vmatpush.xpose.msra.mxu0 %v4019
      %4136 = vmatpush.xpose.msra.mxu0 %v4017
      %4137 = vmatpush.xpose.msra.mxu0 %v4015
      %4138 = vmatpush.xpose.msra.mxu0 %v4013
      %4139 = vmatpush.xpose.msra.mxu0 %v4011
      %4140 = vmatpush.xpose.msra.mxu0 %v4009
      %4141 = vmatmul.f32.gmra.mxu0 %v3909
      %v4142 = vpop.f32.mrf.mxu0
      %v4143 = vadd.f32 %v4120, %v4142
      %4144 = vmatmul.f32.gmra.mxu0 %v3911
      %v4145 = vpop.f32.mrf.mxu0
      %v4146 = vadd.f32 %v4123, %v4145
      %4147 = vdwg.mxu0
      %v4148 = vxor.u32 %v1004, 2147483648
      %v4149 = vxor.u32 %v1033, 2147483648
      %v4150 = vxor.u32 %v1007, 2147483648
      %v4151 = vxor.u32 %v1036, 2147483648
      %v4152 = vmul.f32 %v4148, 1.442695
      %v4153 = vpow.pop %v4152
      %v4154 = vmul.f32 %v4149, 1.442695
      %v4155 = vpow.pop %v4154
      %v4156 = vmul.f32 %v4150, 1.442695
      %v4157 = vpow.pop %v4156
      %v4158 = vmul.f32 %v4151, 1.442695
      %v4159 = vpow.pop %v4158
      %v4160 = vadd.f32 %v4153, 1.0
      %v4161 = vadd.f32 %v4155, 1.0
      %v4162 = vadd.f32 %v4157, 1.0
      %v4163 = vadd.f32 %v4159, 1.0
      %v4164 = vrcp.pop %v4160
      %v4165 = vmul.f32 %v4160, %v4164
      %v4166 = vsub.f32 1.0, %v4165
      %v4167 = vmul.f32 %v4164, %v4166
      %v4168 = vadd.f32 %v4164, %v4167
      %vm4169 = vweird.f32 %v4160
      %vm4170 = vweird.f32 %v4164
      %vm4171 = vmor %vm4169, %vm4170
      %v4172 = vsel %vm4171, %v4164, %v4168
      %v4173 = vand.u32 2147483647, %v4160
      %vm4174 = vcmp.eq.f32.partialorder %v4173, 8.507059e+37
      %v4175 = vand.u32 %v4160, 2147483648
      %v4176 = vor.u32 1.1754944e-38, %v4175
      %v4177 = vsel %vm4174, %v4176, %v4172
      %v4178 = vmul.f32 1.0, %v4177
      %v4179 = vrcp.pop %v4161
      %v4180 = vmul.f32 %v4161, %v4179
      %v4181 = vsub.f32 1.0, %v4180
      %v4182 = vmul.f32 %v4179, %v4181
      %v4183 = vadd.f32 %v4179, %v4182
      %vm4184 = vweird.f32 %v4161
      %vm4185 = vweird.f32 %v4179
      %vm4186 = vmor %vm4184, %vm4185
      %v4187 = vsel %vm4186, %v4179, %v4183
      %v4188 = vand.u32 2147483647, %v4161
      %vm4189 = vcmp.eq.f32.partialorder %v4188, 8.507059e+37
      %v4190 = vand.u32 %v4161, 2147483648
      %v4191 = vor.u32 1.1754944e-38, %v4190
      %v4192 = vsel %vm4189, %v4191, %v4187
      %v4193 = vmul.f32 1.0, %v4192
      %v4194 = vrcp.pop %v4162
      %v4195 = vmul.f32 %v4162, %v4194
      %v4196 = vsub.f32 1.0, %v4195
      %v4197 = vmul.f32 %v4194, %v4196
      %v4198 = vadd.f32 %v4194, %v4197
      %vm4199 = vweird.f32 %v4162
      %vm4200 = vweird.f32 %v4194
      %vm4201 = vmor %vm4199, %vm4200
      %v4202 = vsel %vm4201, %v4194, %v4198
      %v4203 = vand.u32 2147483647, %v4162
      %vm4204 = vcmp.eq.f32.partialorder %v4203, 8.507059e+37
      %v4205 = vand.u32 %v4162, 2147483648
      %v4206 = vor.u32 1.1754944e-38, %v4205
      %v4207 = vsel %vm4204, %v4206, %v4202
      %v4208 = vmul.f32 1.0, %v4207
      %v4209 = vrcp.pop %v4163
      %v4210 = vmul.f32 %v4163, %v4209
      %v4211 = vsub.f32 1.0, %v4210
      %v4212 = vmul.f32 %v4209, %v4211
      %v4213 = vadd.f32 %v4209, %v4212
      %vm4214 = vweird.f32 %v4163
      %vm4215 = vweird.f32 %v4209
      %vm4216 = vmor %vm4214, %vm4215
      %v4217 = vsel %vm4216, %v4209, %v4213
      %v4218 = vand.u32 2147483647, %v4163
      %vm4219 = vcmp.eq.f32.partialorder %v4218, 8.507059e+37
      %v4220 = vand.u32 %v4163, 2147483648
      %v4221 = vor.u32 1.1754944e-38, %v4220
      %v4222 = vsel %vm4219, %v4221, %v4217
      %v4223 = vmul.f32 1.0, %v4222
      %v4224 = vmul.f32 %v1004, %v4178
      %v4225 = vmul.f32 %v1033, %v4193
      %v4226 = vmul.f32 %v1007, %v4208
      %v4227 = vmul.f32 %v1036, %v4223
      %v4228 = vmul.f32 %v4097, %v4224
      %v4229 = vmul.f32 %v4143, %v4225
      %v4230 = vmul.f32 %v4100, %v4226
      %v4231 = vmul.f32 %v4146, %v4227
      %v4232 = vld [vmem:[%s18] sm:$0xff]
      %v4234 = vsel %vm670, %v4232, 0
      %4236 = vmatpush.msra.mxu0 0.0
      %4237 = vmatpush.msra.mxu0 0.0
      %4238 = vmatpush.msra.mxu0 0.0
      %4239 = vmatpush.msra.mxu0 0.0
      %4240 = vmatpush.msra.mxu0 0.0
      %4241 = vmatpush.msra.mxu0 0.0
      %4242 = vmatpush.msra.mxu0 0.0
      %4243 = vmatpush.msra.mxu0 0.0
      %4244 = vmatpush.msra.mxu0 0.0
      %4245 = vmatpush.msra.mxu0 0.0
      %4246 = vmatpush.msra.mxu0 0.0
      %4247 = vmatpush.msra.mxu0 0.0
      %4248 = vmatpush.msra.mxu0 0.0
      %4249 = vmatpush.msra.mxu0 0.0
      %4250 = vmatpush.msra.mxu0 %v4230
      %4251 = vmatpush.msra.mxu0 %v4228
      %4252 = vmatmul.f32.gmra.mxu0 %v4234
      %v4253 = vpop.f32.mrf.mxu0
      %v4254 = vadd.f32 0.0, %v4253
      %4255 = vdwg.mxu0
      %4256 = vmatpush.msra.mxu0 0.0
      %4257 = vmatpush.msra.mxu0 0.0
      %4258 = vmatpush.msra.mxu0 0.0
      %4259 = vmatpush.msra.mxu0 0.0
      %4260 = vmatpush.msra.mxu0 0.0
      %4261 = vmatpush.msra.mxu0 0.0
      %4262 = vmatpush.msra.mxu0 0.0
      %4263 = vmatpush.msra.mxu0 0.0
      %4264 = vmatpush.msra.mxu0 0.0
      %4265 = vmatpush.msra.mxu0 0.0
      %4266 = vmatpush.msra.mxu0 0.0
      %4267 = vmatpush.msra.mxu0 0.0
      %4268 = vmatpush.msra.mxu0 0.0
      %4269 = vmatpush.msra.mxu0 0.0
      %4270 = vmatpush.msra.mxu0 %v4231
      %4271 = vmatpush.msra.mxu0 %v4229
      %4272 = vmatmul.f32.gmra.mxu0 %v4234
      %v4273 = vpop.f32.mrf.mxu0
      %v4274 = vadd.f32 0.0, %v4273
      %4275 = vdwg.mxu0
      %4276 = vst [vmem:[%s602] sm:$0xff] %v4254
      %4277 = vst [vmem:[%s602 + $0x8] sm:$0xff] %v4274
      %p4278 = scmp.lt.s32.totalorder %s30, 1
      %s4279 = scalar_select %p4278, %s30, 1
      %s4280 = smul.addr %s4279, 2
      %s4281 = smul.addr %s4280, 8
      %s4282 = scalar_lea.vmem %s19, %s4281
      // Predicated region
      $region104: #{_lambda_.2} parent=95 // pred_check
        %p4283 = pneg %p452
      $region105: #{_lambda_.2} parent=95 // pred_check_branch
        %4285 = sbr.rel (%p4283) target = $region107
      $region106: #{_lambda_.2} parent=95 // pred_region
        _
      $region107: #{_lambda_.2} parent=95 // pred_fallthru
        _
    $region96: #{_lambda_.2} parent=5 // pred_fallthru
      _
    %p4286 = scmp.le.s32.totalorder 2, %s25
    // Predicated region
    $region108: #{_lambda_.2} parent=5 // pred_check
      %p4287 = pneg %p4286
    $region109: #{_lambda_.2} parent=5 // pred_check_branch
      %4289 = sbr.rel (%p4287) target = $region111
    $region110: #{_lambda_.2} parent=5 // pred_region
      %s4290 = ssub.s32 %s25, 2
      // Predicated region
      $region112: #{_lambda_.2} parent=110 // pred_check
        %p4291 = pneg %p458
      $region113: #{_lambda_.2} parent=110 // pred_check_branch
        %4293 = sbr.rel (%p4291) target = $region115
      $region114: #{_lambda_.2} parent=110 // pred_region
        %p4294 = scmp.lt.s32.totalorder %s31, 1
        %s4295 = scalar_select %p4294, %s31, 1
        %s4296 = smul.addr %s4295, 2
        %s4297 = smul.addr %s4296, 8
        %s4298 = scalar_lea.vmem %s19, %s4297
      $region115: #{_lambda_.2} parent=110 // pred_fallthru
        _
    $region111: #{_lambda_.2} parent=5 // pred_fallthru
      _
  $region6: #{_lambda_.2} parent=0 // loop_footer
    %s29 = sadd.s32 1, %s25
  $region7: #{_lambda_.2} parent=0 // loop_footer_branch
    %24 = sbr.rel target = $region3
  $region8: #{_lambda_.2} parent=0 // loop_exit
    _

// kernel: _lambda_.3
$region0: #{_lambda_.3}
  #allocation0 [shape = 'u32[]', space=smem, size = 0x4, offset = 0x4, fixed_abs, tag = 'smem constant byte address 0x4 - core index']
  #allocation1 [shape = 'u32[72,128]{1,0:T(1,128)}', space=vmem, size = 0x9000, scoped, tag = 'internal scratch']
  #allocation2 [shape = 'f32[256,256]{1,0:T(8,128)}', space=vmem, size = 0x40000, scoped, tag = 'scratch operand']
  #allocation3 [shape = 'f32[256,256]{1,0:T(8,128)}', space=vmem, size = 0x40000, scoped, tag = 'scratch operand']
  #allocation4 [shape = 'f32[256,256]{1,0:T(8,128)}', space=vmem, size = 0x40000, scoped, tag = 'scratch operand']
  %s0 = inlined_call_operand.vmem [shape: f32[2,12,256], index: 0, kind: input, shape index: {}]
  %s1 = inlined_call_operand.vmem [shape: f32[12,1], index: 1, kind: input, shape index: {}]
  %s2 = inlined_call_operand.vmem [shape: f32[12,1], index: 2, kind: input, shape index: {}]
  %s3 = inlined_call_operand.vmem [shape: f32[1,256], index: 3, kind: input, shape index: {}]
  %s4 = inlined_call_operand.vmem [shape: f32[1,256], index: 4, kind: input, shape index: {}]
  %s5 = inlined_call_operand.vmem [shape: f32[8,108], index: 5, kind: input, shape index: {}]
  %s6 = inlined_call_operand.vmem [shape: f32[8,1], index: 6, kind: input, shape index: {}]
  %s7 = inlined_call_operand.vmem [shape: f32[8,1], index: 7, kind: input, shape index: {}]
  %s8 = inlined_call_operand.vmem [shape: f32[32,8], index: 8, kind: input, shape index: {}]
  %s9 = inlined_call_operand.vmem [shape: f32[16,4], index: 9, kind: input, shape index: {}]
  %s10 = inlined_call_operand.vmem [shape: f32[16,1], index: 10, kind: input, shape index: {}]
  %s11 = inlined_call_operand.vmem [shape: f32[16,256], index: 11, kind: input, shape index: {}]
  %s12 = inlined_call_operand.vmem [shape: f32[16,256], index: 12, kind: input, shape index: {}]
  %s13 = inlined_call_operand.vmem [shape: f32[16,256], index: 13, kind: input, shape index: {}]
  %s14 = inlined_call_operand.vmem [shape: f32[1,256], index: 14, kind: input, shape index: {}]
  %s15 = inlined_call_operand.vmem [shape: f32[16,256], index: 15, kind: input, shape index: {}]
  %s16 = inlined_call_operand.vmem [shape: f32[1,256], index: 16, kind: input, shape index: {}]
  %s17 = inlined_call_operand.vmem [shape: f32[16,1], index: 17, kind: input, shape index: {}]
  %s18 = inlined_call_operand.vmem [shape: f32[8,16], index: 18, kind: input, shape index: {}]
  %s19 = inlined_call_operand.vmem [shape: f32[2,8,256], index: 19, kind: output, shape index: {}]
  %s20 = sld [smem:[#allocation0]]
  $region116: #{_lambda_.3} parent=0
    _
  %s22 = ssub.s32 1, %s20
  %s23 = scalar_select 0, %s22, %s20
  loop: start=0, step=1, limit=4
  $region2: #{_lambda_.3} parent=0 // loop_pre_header
    _
  $region3: #{_lambda_.3} parent=0 // loop_header
    %s25 = sphi 0, %s29
    %p26 = scmp.ge.s32.totalorder %s25, 4
    %s35 = sphi 0, %s37
    %s38 = sphi 0, %s35
    %s39 = sphi 0, %s38
    %s55 = sphi 0, %s39
    %s59 = sphi 0, %s59
    %s61 = sphi 0, %s59
    %s62 = sphi 0, %s61
    %s76 = sphi 0, %s62
    %s80 = sphi 0, %s80
    %s82 = sphi 0, %s80
    %s83 = sphi 0, %s82
    %s97 = sphi 0, %s83
    %s101 = sphi 0, %s101
    %s103 = sphi 0, %s101
    %s104 = sphi 0, %s103
    %s118 = sphi 0, %s104
    %s122 = sphi 0, %s122
    %s124 = sphi 0, %s122
    %s125 = sphi 0, %s124
    %s139 = sphi 0, %s125
    %s143 = sphi 0, %s143
    %s145 = sphi 0, %s143
    %s146 = sphi 0, %s145
    %s160 = sphi 0, %s146
    %s164 = sphi 0, %s164
    %s166 = sphi 0, %s164
    %s167 = sphi 0, %s166
    %s181 = sphi 0, %s167
    %s185 = sphi 0, %s185
    %s187 = sphi 0, %s185
    %s188 = sphi 0, %s187
    %s202 = sphi 0, %s188
    %s206 = sphi 0, %s206
    %s208 = sphi 0, %s206
    %s209 = sphi 0, %s208
    %s223 = sphi 0, %s209
    %s227 = sphi 0, %s227
    %s229 = sphi 0, %s227
    %s230 = sphi 0, %s229
    %s244 = sphi 0, %s230
    %s248 = sphi 0, %s248
    %s250 = sphi 0, %s248
    %s251 = sphi 0, %s250
    %s265 = sphi 0, %s251
    %s269 = sphi 0, %s269
    %s271 = sphi 0, %s269
    %s272 = sphi 0, %s271
    %s286 = sphi 0, %s272
    %s290 = sphi 0, %s290
    %s292 = sphi 0, %s290
    %s293 = sphi 0, %s292
    %s307 = sphi 0, %s293
    %s311 = sphi 0, %s311
    %s313 = sphi 0, %s311
    %s314 = sphi 0, %s313
    %s328 = sphi 0, %s314
    %s332 = sphi 0, %s332
    %s334 = sphi 0, %s332
    %s335 = sphi 0, %s334
    %s349 = sphi 0, %s335
    %s353 = sphi 0, %s353
    %s355 = sphi 0, %s353
    %s356 = sphi 0, %s355
    %s370 = sphi 0, %s356
    %s374 = sphi 0, %s374
    %s376 = sphi 0, %s374
    %s377 = sphi 0, %s376
    %s391 = sphi 0, %s377
    %s395 = sphi 0, %s395
    %s397 = sphi 0, %s395
    %s398 = sphi 0, %s397
    %s412 = sphi 0, %s398
    %s416 = sphi 0, %s416
    %s418 = sphi 0, %s416
    %s419 = sphi 0, %s418
    %s433 = sphi 0, %s419
    %s439 = sphi 0, %s441
    %s442 = sphi 0, %s439
    %s443 = sphi 0, %s442
    %s459 = sphi 0, %s443
  $region4: #{_lambda_.3} parent=0 // loop_header_branch
    %28 = sbr.rel (%p26) target = $region8
  $region5: #{_lambda_.3} parent=0 // loop_body
    %s30 = ssub.s32 %s25, 1
    %s31 = ssub.s32 %s25, 2
    %s32 = sadd.s32 %s25, 1
    %s33 = ssub.s32 %s25, %s32
    %p34 = scmp.eq.s32.totalorder %s33, 0
    %s36 = sadd.s32 %s35, 1
    %s37 = scalar_select %p34, %s35, %s36
    %p40 = pneg %p34
    %p41 = scmp.eq.s32.totalorder %s25, 1
    %p42 = por %p40, %p41
    %p43 = scmp.ne.s32.totalorder %s35, %s38
    %p44 = scmp.eq.s32.totalorder %s25, 0
    %p45 = por %p43, %p44
    %p46 = scmp.ne.s32.totalorder %s35, %s38
    %p47 = scmp.eq.s32.totalorder %s30, 1
    %p48 = por %p46, %p47
    %p49 = scmp.ne.s32.totalorder %s38, %s39
    %p50 = scmp.eq.s32.totalorder %s30, 0
    %p51 = por %p49, %p50
    %p52 = scmp.ne.s32.totalorder %s38, %s39
    %p53 = scmp.eq.s32.totalorder %s31, 1
    %p54 = por %p52, %p53
    %p56 = scmp.ne.s32.totalorder %s39, %s55
    %p57 = scmp.eq.s32.totalorder %s31, 0
    %p58 = por %p56, %p57
    %s60 = sadd.s32 %s59, 1
    %p63 = scmp.eq.s32.totalorder %s25, 1
    %p64 = scmp.ne.s32.totalorder %s59, %s61
    %p65 = scmp.eq.s32.totalorder %s25, 0
    %p66 = por %p64, %p65
    %p67 = scmp.ne.s32.totalorder %s59, %s61
    %p68 = scmp.eq.s32.totalorder %s30, 1
    %p69 = por %p67, %p68
    %p70 = scmp.ne.s32.totalorder %s61, %s62
    %p71 = scmp.eq.s32.totalorder %s30, 0
    %p72 = por %p70, %p71
    %p73 = scmp.ne.s32.totalorder %s61, %s62
    %p74 = scmp.eq.s32.totalorder %s31, 1
    %p75 = por %p73, %p74
    %p77 = scmp.ne.s32.totalorder %s62, %s76
    %p78 = scmp.eq.s32.totalorder %s31, 0
    %p79 = por %p77, %p78
    %s81 = sadd.s32 %s80, 1
    %p84 = scmp.eq.s32.totalorder %s25, 1
    %p85 = scmp.ne.s32.totalorder %s80, %s82
    %p86 = scmp.eq.s32.totalorder %s25, 0
    %p87 = por %p85, %p86
    %p88 = scmp.ne.s32.totalorder %s80, %s82
    %p89 = scmp.eq.s32.totalorder %s30, 1
    %p90 = por %p88, %p89
    %p91 = scmp.ne.s32.totalorder %s82, %s83
    %p92 = scmp.eq.s32.totalorder %s30, 0
    %p93 = por %p91, %p92
    %p94 = scmp.ne.s32.totalorder %s82, %s83
    %p95 = scmp.eq.s32.totalorder %s31, 1
    %p96 = por %p94, %p95
    %p98 = scmp.ne.s32.totalorder %s83, %s97
    %p99 = scmp.eq.s32.totalorder %s31, 0
    %p100 = por %p98, %p99
    %s102 = sadd.s32 %s101, 1
    %p105 = scmp.eq.s32.totalorder %s25, 1
    %p106 = scmp.ne.s32.totalorder %s101, %s103
    %p107 = scmp.eq.s32.totalorder %s25, 0
    %p108 = por %p106, %p107
    %p109 = scmp.ne.s32.totalorder %s101, %s103
    %p110 = scmp.eq.s32.totalorder %s30, 1
    %p111 = por %p109, %p110
    %p112 = scmp.ne.s32.totalorder %s103, %s104
    %p113 = scmp.eq.s32.totalorder %s30, 0
    %p114 = por %p112, %p113
    %p115 = scmp.ne.s32.totalorder %s103, %s104
    %p116 = scmp.eq.s32.totalorder %s31, 1
    %p117 = por %p115, %p116
    %p119 = scmp.ne.s32.totalorder %s104, %s118
    %p120 = scmp.eq.s32.totalorder %s31, 0
    %p121 = por %p119, %p120
    %s123 = sadd.s32 %s122, 1
    %p126 = scmp.eq.s32.totalorder %s25, 1
    %p127 = scmp.ne.s32.totalorder %s122, %s124
    %p128 = scmp.eq.s32.totalorder %s25, 0
    %p129 = por %p127, %p128
    %p130 = scmp.ne.s32.totalorder %s122, %s124
    %p131 = scmp.eq.s32.totalorder %s30, 1
    %p132 = por %p130, %p131
    %p133 = scmp.ne.s32.totalorder %s124, %s125
    %p134 = scmp.eq.s32.totalorder %s30, 0
    %p135 = por %p133, %p134
    %p136 = scmp.ne.s32.totalorder %s124, %s125
    %p137 = scmp.eq.s32.totalorder %s31, 1
    %p138 = por %p136, %p137
    %p140 = scmp.ne.s32.totalorder %s125, %s139
    %p141 = scmp.eq.s32.totalorder %s31, 0
    %p142 = por %p140, %p141
    %s144 = sadd.s32 %s143, 1
    %p147 = scmp.eq.s32.totalorder %s25, 1
    %p148 = scmp.ne.s32.totalorder %s143, %s145
    %p149 = scmp.eq.s32.totalorder %s25, 0
    %p150 = por %p148, %p149
    %p151 = scmp.ne.s32.totalorder %s143, %s145
    %p152 = scmp.eq.s32.totalorder %s30, 1
    %p153 = por %p151, %p152
    %p154 = scmp.ne.s32.totalorder %s145, %s146
    %p155 = scmp.eq.s32.totalorder %s30, 0
    %p156 = por %p154, %p155
    %p157 = scmp.ne.s32.totalorder %s145, %s146
    %p158 = scmp.eq.s32.totalorder %s31, 1
    %p159 = por %p157, %p158
    %p161 = scmp.ne.s32.totalorder %s146, %s160
    %p162 = scmp.eq.s32.totalorder %s31, 0
    %p163 = por %p161, %p162
    %s165 = sadd.s32 %s164, 1
    %p168 = scmp.eq.s32.totalorder %s25, 1
    %p169 = scmp.ne.s32.totalorder %s164, %s166
    %p170 = scmp.eq.s32.totalorder %s25, 0
    %p171 = por %p169, %p170
    %p172 = scmp.ne.s32.totalorder %s164, %s166
    %p173 = scmp.eq.s32.totalorder %s30, 1
    %p174 = por %p172, %p173
    %p175 = scmp.ne.s32.totalorder %s166, %s167
    %p176 = scmp.eq.s32.totalorder %s30, 0
    %p177 = por %p175, %p176
    %p178 = scmp.ne.s32.totalorder %s166, %s167
    %p179 = scmp.eq.s32.totalorder %s31, 1
    %p180 = por %p178, %p179
    %p182 = scmp.ne.s32.totalorder %s167, %s181
    %p183 = scmp.eq.s32.totalorder %s31, 0
    %p184 = por %p182, %p183
    %s186 = sadd.s32 %s185, 1
    %p189 = scmp.eq.s32.totalorder %s25, 1
    %p190 = scmp.ne.s32.totalorder %s185, %s187
    %p191 = scmp.eq.s32.totalorder %s25, 0
    %p192 = por %p190, %p191
    %p193 = scmp.ne.s32.totalorder %s185, %s187
    %p194 = scmp.eq.s32.totalorder %s30, 1
    %p195 = por %p193, %p194
    %p196 = scmp.ne.s32.totalorder %s187, %s188
    %p197 = scmp.eq.s32.totalorder %s30, 0
    %p198 = por %p196, %p197
    %p199 = scmp.ne.s32.totalorder %s187, %s188
    %p200 = scmp.eq.s32.totalorder %s31, 1
    %p201 = por %p199, %p200
    %p203 = scmp.ne.s32.totalorder %s188, %s202
    %p204 = scmp.eq.s32.totalorder %s31, 0
    %p205 = por %p203, %p204
    %s207 = sadd.s32 %s206, 1
    %p210 = scmp.eq.s32.totalorder %s25, 1
    %p211 = scmp.ne.s32.totalorder %s206, %s208
    %p212 = scmp.eq.s32.totalorder %s25, 0
    %p213 = por %p211, %p212
    %p214 = scmp.ne.s32.totalorder %s206, %s208
    %p215 = scmp.eq.s32.totalorder %s30, 1
    %p216 = por %p214, %p215
    %p217 = scmp.ne.s32.totalorder %s208, %s209
    %p218 = scmp.eq.s32.totalorder %s30, 0
    %p219 = por %p217, %p218
    %p220 = scmp.ne.s32.totalorder %s208, %s209
    %p221 = scmp.eq.s32.totalorder %s31, 1
    %p222 = por %p220, %p221
    %p224 = scmp.ne.s32.totalorder %s209, %s223
    %p225 = scmp.eq.s32.totalorder %s31, 0
    %p226 = por %p224, %p225
    %s228 = sadd.s32 %s227, 1
    %p231 = scmp.eq.s32.totalorder %s25, 1
    %p232 = scmp.ne.s32.totalorder %s227, %s229
    %p233 = scmp.eq.s32.totalorder %s25, 0
    %p234 = por %p232, %p233
    %p235 = scmp.ne.s32.totalorder %s227, %s229
    %p236 = scmp.eq.s32.totalorder %s30, 1
    %p237 = por %p235, %p236
    %p238 = scmp.ne.s32.totalorder %s229, %s230
    %p239 = scmp.eq.s32.totalorder %s30, 0
    %p240 = por %p238, %p239
    %p241 = scmp.ne.s32.totalorder %s229, %s230
    %p242 = scmp.eq.s32.totalorder %s31, 1
    %p243 = por %p241, %p242
    %p245 = scmp.ne.s32.totalorder %s230, %s244
    %p246 = scmp.eq.s32.totalorder %s31, 0
    %p247 = por %p245, %p246
    %s249 = sadd.s32 %s248, 1
    %p252 = scmp.eq.s32.totalorder %s25, 1
    %p253 = scmp.ne.s32.totalorder %s248, %s250
    %p254 = scmp.eq.s32.totalorder %s25, 0
    %p255 = por %p253, %p254
    %p256 = scmp.ne.s32.totalorder %s248, %s250
    %p257 = scmp.eq.s32.totalorder %s30, 1
    %p258 = por %p256, %p257
    %p259 = scmp.ne.s32.totalorder %s250, %s251
    %p260 = scmp.eq.s32.totalorder %s30, 0
    %p261 = por %p259, %p260
    %p262 = scmp.ne.s32.totalorder %s250, %s251
    %p263 = scmp.eq.s32.totalorder %s31, 1
    %p264 = por %p262, %p263
    %p266 = scmp.ne.s32.totalorder %s251, %s265
    %p267 = scmp.eq.s32.totalorder %s31, 0
    %p268 = por %p266, %p267
    %s270 = sadd.s32 %s269, 1
    %p273 = scmp.eq.s32.totalorder %s25, 1
    %p274 = scmp.ne.s32.totalorder %s269, %s271
    %p275 = scmp.eq.s32.totalorder %s25, 0
    %p276 = por %p274, %p275
    %p277 = scmp.ne.s32.totalorder %s269, %s271
    %p278 = scmp.eq.s32.totalorder %s30, 1
    %p279 = por %p277, %p278
    %p280 = scmp.ne.s32.totalorder %s271, %s272
    %p281 = scmp.eq.s32.totalorder %s30, 0
    %p282 = por %p280, %p281
    %p283 = scmp.ne.s32.totalorder %s271, %s272
    %p284 = scmp.eq.s32.totalorder %s31, 1
    %p285 = por %p283, %p284
    %p287 = scmp.ne.s32.totalorder %s272, %s286
    %p288 = scmp.eq.s32.totalorder %s31, 0
    %p289 = por %p287, %p288
    %s291 = sadd.s32 %s290, 1
    %p294 = scmp.eq.s32.totalorder %s25, 1
    %p295 = scmp.ne.s32.totalorder %s290, %s292
    %p296 = scmp.eq.s32.totalorder %s25, 0
    %p297 = por %p295, %p296
    %p298 = scmp.ne.s32.totalorder %s290, %s292
    %p299 = scmp.eq.s32.totalorder %s30, 1
    %p300 = por %p298, %p299
    %p301 = scmp.ne.s32.totalorder %s292, %s293
    %p302 = scmp.eq.s32.totalorder %s30, 0
    %p303 = por %p301, %p302
    %p304 = scmp.ne.s32.totalorder %s292, %s293
    %p305 = scmp.eq.s32.totalorder %s31, 1
    %p306 = por %p304, %p305
    %p308 = scmp.ne.s32.totalorder %s293, %s307
    %p309 = scmp.eq.s32.totalorder %s31, 0
    %p310 = por %p308, %p309
    %s312 = sadd.s32 %s311, 1
    %p315 = scmp.eq.s32.totalorder %s25, 1
    %p316 = scmp.ne.s32.totalorder %s311, %s313
    %p317 = scmp.eq.s32.totalorder %s25, 0
    %p318 = por %p316, %p317
    %p319 = scmp.ne.s32.totalorder %s311, %s313
    %p320 = scmp.eq.s32.totalorder %s30, 1
    %p321 = por %p319, %p320
    %p322 = scmp.ne.s32.totalorder %s313, %s314
    %p323 = scmp.eq.s32.totalorder %s30, 0
    %p324 = por %p322, %p323
    %p325 = scmp.ne.s32.totalorder %s313, %s314
    %p326 = scmp.eq.s32.totalorder %s31, 1
    %p327 = por %p325, %p326
    %p329 = scmp.ne.s32.totalorder %s314, %s328
    %p330 = scmp.eq.s32.totalorder %s31, 0
    %p331 = por %p329, %p330
    %s333 = sadd.s32 %s332, 1
    %p336 = scmp.eq.s32.totalorder %s25, 1
    %p337 = scmp.ne.s32.totalorder %s332, %s334
    %p338 = scmp.eq.s32.totalorder %s25, 0
    %p339 = por %p337, %p338
    %p340 = scmp.ne.s32.totalorder %s332, %s334
    %p341 = scmp.eq.s32.totalorder %s30, 1
    %p342 = por %p340, %p341
    %p343 = scmp.ne.s32.totalorder %s334, %s335
    %p344 = scmp.eq.s32.totalorder %s30, 0
    %p345 = por %p343, %p344
    %p346 = scmp.ne.s32.totalorder %s334, %s335
    %p347 = scmp.eq.s32.totalorder %s31, 1
    %p348 = por %p346, %p347
    %p350 = scmp.ne.s32.totalorder %s335, %s349
    %p351 = scmp.eq.s32.totalorder %s31, 0
    %p352 = por %p350, %p351
    %s354 = sadd.s32 %s353, 1
    %p357 = scmp.eq.s32.totalorder %s25, 1
    %p358 = scmp.ne.s32.totalorder %s353, %s355
    %p359 = scmp.eq.s32.totalorder %s25, 0
    %p360 = por %p358, %p359
    %p361 = scmp.ne.s32.totalorder %s353, %s355
    %p362 = scmp.eq.s32.totalorder %s30, 1
    %p363 = por %p361, %p362
    %p364 = scmp.ne.s32.totalorder %s355, %s356
    %p365 = scmp.eq.s32.totalorder %s30, 0
    %p366 = por %p364, %p365
    %p367 = scmp.ne.s32.totalorder %s355, %s356
    %p368 = scmp.eq.s32.totalorder %s31, 1
    %p369 = por %p367, %p368
    %p371 = scmp.ne.s32.totalorder %s356, %s370
    %p372 = scmp.eq.s32.totalorder %s31, 0
    %p373 = por %p371, %p372
    %s375 = sadd.s32 %s374, 1
    %p378 = scmp.eq.s32.totalorder %s25, 1
    %p379 = scmp.ne.s32.totalorder %s374, %s376
    %p380 = scmp.eq.s32.totalorder %s25, 0
    %p381 = por %p379, %p380
    %p382 = scmp.ne.s32.totalorder %s374, %s376
    %p383 = scmp.eq.s32.totalorder %s30, 1
    %p384 = por %p382, %p383
    %p385 = scmp.ne.s32.totalorder %s376, %s377
    %p386 = scmp.eq.s32.totalorder %s30, 0
    %p387 = por %p385, %p386
    %p388 = scmp.ne.s32.totalorder %s376, %s377
    %p389 = scmp.eq.s32.totalorder %s31, 1
    %p390 = por %p388, %p389
    %p392 = scmp.ne.s32.totalorder %s377, %s391
    %p393 = scmp.eq.s32.totalorder %s31, 0
    %p394 = por %p392, %p393
    %s396 = sadd.s32 %s395, 1
    %p399 = scmp.eq.s32.totalorder %s25, 1
    %p400 = scmp.ne.s32.totalorder %s395, %s397
    %p401 = scmp.eq.s32.totalorder %s25, 0
    %p402 = por %p400, %p401
    %p403 = scmp.ne.s32.totalorder %s395, %s397
    %p404 = scmp.eq.s32.totalorder %s30, 1
    %p405 = por %p403, %p404
    %p406 = scmp.ne.s32.totalorder %s397, %s398
    %p407 = scmp.eq.s32.totalorder %s30, 0
    %p408 = por %p406, %p407
    %p409 = scmp.ne.s32.totalorder %s397, %s398
    %p410 = scmp.eq.s32.totalorder %s31, 1
    %p411 = por %p409, %p410
    %p413 = scmp.ne.s32.totalorder %s398, %s412
    %p414 = scmp.eq.s32.totalorder %s31, 0
    %p415 = por %p413, %p414
    %s417 = sadd.s32 %s416, 1
    %p420 = scmp.eq.s32.totalorder %s25, 1
    %p421 = scmp.ne.s32.totalorder %s416, %s418
    %p422 = scmp.eq.s32.totalorder %s25, 0
    %p423 = por %p421, %p422
    %p424 = scmp.ne.s32.totalorder %s416, %s418
    %p425 = scmp.eq.s32.totalorder %s30, 1
    %p426 = por %p424, %p425
    %p427 = scmp.ne.s32.totalorder %s418, %s419
    %p428 = scmp.eq.s32.totalorder %s30, 0
    %p429 = por %p427, %p428
    %p430 = scmp.ne.s32.totalorder %s418, %s419
    %p431 = scmp.eq.s32.totalorder %s31, 1
    %p432 = por %p430, %p431
    %p434 = scmp.ne.s32.totalorder %s419, %s433
    %p435 = scmp.eq.s32.totalorder %s31, 0
    %p436 = por %p434, %p435
    %s437 = ssub.s32 %s25, %s32
    %p438 = scmp.eq.s32.totalorder %s437, 0
    %s440 = sadd.s32 %s439, 1
    %s441 = scalar_select %p438, %s439, %s440
    %p444 = pneg %p438
    %p445 = scmp.eq.s32.totalorder %s25, 1
    %p446 = por %p444, %p445
    %p447 = scmp.ne.s32.totalorder %s439, %s442
    %p448 = scmp.eq.s32.totalorder %s25, 0
    %p449 = por %p447, %p448
    %p450 = scmp.ne.s32.totalorder %s439, %s442
    %p451 = scmp.eq.s32.totalorder %s30, 1
    %p452 = por %p450, %p451
    %p453 = scmp.ne.s32.totalorder %s442, %s443
    %p454 = scmp.eq.s32.totalorder %s30, 0
    %p455 = por %p453, %p454
    %p456 = scmp.ne.s32.totalorder %s442, %s443
    %p457 = scmp.eq.s32.totalorder %s31, 1
    %p458 = por %p456, %p457
    %p460 = scmp.ne.s32.totalorder %s443, %s459
    %p461 = scmp.eq.s32.totalorder %s31, 0
    %p462 = por %p460, %p461
    %p463 = scmp.le.s32.totalorder 1, %s25
    %p464 = scmp.lt.s32.totalorder %s25, 3
    %p465 = pnand %p463, %p464
    %p466 = pneg %p465
    // Predicated region
    $region9: #{_lambda_.3} parent=5 // pred_check
      _
    $region10: #{_lambda_.3} parent=5 // pred_check_branch
      %468 = sbr.rel (%p465) target = $region12
    $region11: #{_lambda_.3} parent=5 // pred_region
      %s469 = ssub.s32 %s25, 1
      // Predicated region
      $region13: #{_lambda_.3} parent=11 // pred_check
        %p470 = pneg %p72
      $region14: #{_lambda_.3} parent=11 // pred_check_branch
        %472 = sbr.rel (%p470) target = $region16
      $region15: #{_lambda_.3} parent=11 // pred_region
        _
      $region16: #{_lambda_.3} parent=11 // pred_fallthru
        _
      // Predicated region
      $region17: #{_lambda_.3} parent=11 // pred_check
        %p473 = pneg %p93
      $region18: #{_lambda_.3} parent=11 // pred_check_branch
        %475 = sbr.rel (%p473) target = $region20
      $region19: #{_lambda_.3} parent=11 // pred_region
        _
      $region20: #{_lambda_.3} parent=11 // pred_fallthru
        _
      // Predicated region
      $region21: #{_lambda_.3} parent=11 // pred_check
        %p476 = pneg %p114
      $region22: #{_lambda_.3} parent=11 // pred_check_branch
        %478 = sbr.rel (%p476) target = $region24
      $region23: #{_lambda_.3} parent=11 // pred_region
        _
      $region24: #{_lambda_.3} parent=11 // pred_fallthru
        _
      // Predicated region
      $region25: #{_lambda_.3} parent=11 // pred_check
        %p479 = pneg %p135
      $region26: #{_lambda_.3} parent=11 // pred_check_branch
        %481 = sbr.rel (%p479) target = $region28
      $region27: #{_lambda_.3} parent=11 // pred_region
        _
      $region28: #{_lambda_.3} parent=11 // pred_fallthru
        _
      // Predicated region
      $region29: #{_lambda_.3} parent=11 // pred_check
        %p482 = pneg %p156
      $region30: #{_lambda_.3} parent=11 // pred_check_branch
        %484 = sbr.rel (%p482) target = $region32
      $region31: #{_lambda_.3} parent=11 // pred_region
        _
      $region32: #{_lambda_.3} parent=11 // pred_fallthru
        _
      // Predicated region
      $region33: #{_lambda_.3} parent=11 // pred_check
        %p485 = pneg %p177
      $region34: #{_lambda_.3} parent=11 // pred_check_branch
        %487 = sbr.rel (%p485) target = $region36
      $region35: #{_lambda_.3} parent=11 // pred_region
        _
      $region36: #{_lambda_.3} parent=11 // pred_fallthru
        _
      // Predicated region
      $region37: #{_lambda_.3} parent=11 // pred_check
        %p488 = pneg %p198
      $region38: #{_lambda_.3} parent=11 // pred_check_branch
        %490 = sbr.rel (%p488) target = $region40
      $region39: #{_lambda_.3} parent=11 // pred_region
        _
      $region40: #{_lambda_.3} parent=11 // pred_fallthru
        _
      // Predicated region
      $region41: #{_lambda_.3} parent=11 // pred_check
        %p491 = pneg %p219
      $region42: #{_lambda_.3} parent=11 // pred_check_branch
        %493 = sbr.rel (%p491) target = $region44
      $region43: #{_lambda_.3} parent=11 // pred_region
        _
      $region44: #{_lambda_.3} parent=11 // pred_fallthru
        _
      // Predicated region
      $region45: #{_lambda_.3} parent=11 // pred_check
        %p494 = pneg %p240
      $region46: #{_lambda_.3} parent=11 // pred_check_branch
        %496 = sbr.rel (%p494) target = $region48
      $region47: #{_lambda_.3} parent=11 // pred_region
        _
      $region48: #{_lambda_.3} parent=11 // pred_fallthru
        _
      // Predicated region
      $region49: #{_lambda_.3} parent=11 // pred_check
        %p497 = pneg %p261
      $region50: #{_lambda_.3} parent=11 // pred_check_branch
        %499 = sbr.rel (%p497) target = $region52
      $region51: #{_lambda_.3} parent=11 // pred_region
        _
      $region52: #{_lambda_.3} parent=11 // pred_fallthru
        _
      // Predicated region
      $region53: #{_lambda_.3} parent=11 // pred_check
        %p500 = pneg %p282
      $region54: #{_lambda_.3} parent=11 // pred_check_branch
        %502 = sbr.rel (%p500) target = $region56
      $region55: #{_lambda_.3} parent=11 // pred_region
        _
      $region56: #{_lambda_.3} parent=11 // pred_fallthru
        _
      // Predicated region
      $region57: #{_lambda_.3} parent=11 // pred_check
        %p503 = pneg %p303
      $region58: #{_lambda_.3} parent=11 // pred_check_branch
        %505 = sbr.rel (%p503) target = $region60
      $region59: #{_lambda_.3} parent=11 // pred_region
        _
      $region60: #{_lambda_.3} parent=11 // pred_fallthru
        _
      // Predicated region
      $region61: #{_lambda_.3} parent=11 // pred_check
        %p506 = pneg %p324
      $region62: #{_lambda_.3} parent=11 // pred_check_branch
        %508 = sbr.rel (%p506) target = $region64
      $region63: #{_lambda_.3} parent=11 // pred_region
        _
      $region64: #{_lambda_.3} parent=11 // pred_fallthru
        _
      // Predicated region
      $region65: #{_lambda_.3} parent=11 // pred_check
        %p509 = pneg %p345
      $region66: #{_lambda_.3} parent=11 // pred_check_branch
        %511 = sbr.rel (%p509) target = $region68
      $region67: #{_lambda_.3} parent=11 // pred_region
        _
      $region68: #{_lambda_.3} parent=11 // pred_fallthru
        _
      // Predicated region
      $region69: #{_lambda_.3} parent=11 // pred_check
        %p512 = pneg %p366
      $region70: #{_lambda_.3} parent=11 // pred_check_branch
        %514 = sbr.rel (%p512) target = $region72
      $region71: #{_lambda_.3} parent=11 // pred_region
        _
      $region72: #{_lambda_.3} parent=11 // pred_fallthru
        _
      // Predicated region
      $region73: #{_lambda_.3} parent=11 // pred_check
        %p515 = pneg %p387
      $region74: #{_lambda_.3} parent=11 // pred_check_branch
        %517 = sbr.rel (%p515) target = $region76
      $region75: #{_lambda_.3} parent=11 // pred_region
        _
      $region76: #{_lambda_.3} parent=11 // pred_fallthru
        _
      // Predicated region
      $region77: #{_lambda_.3} parent=11 // pred_check
        %p518 = pneg %p408
      $region78: #{_lambda_.3} parent=11 // pred_check_branch
        %520 = sbr.rel (%p518) target = $region80
      $region79: #{_lambda_.3} parent=11 // pred_region
        _
      $region80: #{_lambda_.3} parent=11 // pred_fallthru
        _
      // Predicated region
      $region81: #{_lambda_.3} parent=11 // pred_check
        %p521 = pneg %p429
      $region82: #{_lambda_.3} parent=11 // pred_check_branch
        %523 = sbr.rel (%p521) target = $region84
      $region83: #{_lambda_.3} parent=11 // pred_region
        _
      $region84: #{_lambda_.3} parent=11 // pred_fallthru
        _
    $region12: #{_lambda_.3} parent=5 // pred_fallthru
      _
    %p524 = scmp.lt.s32.totalorder %s25, 2
    // Predicated region
    $region85: #{_lambda_.3} parent=5 // pred_check
      %p525 = pneg %p524
    $region86: #{_lambda_.3} parent=5 // pred_check_branch
      %527 = sbr.rel (%p525) target = $region88
    $region87: #{_lambda_.3} parent=5 // pred_region
      // Predicated region
      $region89: #{_lambda_.3} parent=87 // pred_check
        %p528 = pneg %p45
      $region90: #{_lambda_.3} parent=87 // pred_check_branch
        %530 = sbr.rel (%p528) target = $region92
      $region91: #{_lambda_.3} parent=87 // pred_region
        %p531 = scmp.lt.s32.totalorder %s25, 1
        %s532 = scalar_select %p531, %s25, 1
        %s533 = smul.addr %s532, 4
        %s534 = smul.addr %s533, 8
        %s535 = scalar_lea.vmem %s0, %s534
      $region92: #{_lambda_.3} parent=87 // pred_fallthru
        _
    $region88: #{_lambda_.3} parent=5 // pred_fallthru
      _
    %p536 = scmp.le.s32.totalorder 1, %s25
    %p537 = scmp.lt.s32.totalorder %s25, 3
    %p538 = pnand %p536, %p537
    %p539 = pneg %p538
    // Predicated region
    $region93: #{_lambda_.3} parent=5 // pred_check
      _
    $region94: #{_lambda_.3} parent=5 // pred_check_branch
      %541 = sbr.rel (%p538) target = $region96
    $region95: #{_lambda_.3} parent=5 // pred_region
      %s542 = ssub.s32 %s25, 1
      %p543 = scmp.lt.s32.totalorder %s30, 1
      %s544 = scalar_select %p543, %s30, 1
      %s545 = smul.addr %s544, 4
      %s546 = smul.addr %s545, 8
      %s547 = scalar_lea.vmem %s0, %s546
      %p548 = pneg %p51
      %p549 = pneg %p48
      %p550 = pneg %p72
      %p551 = pneg %p69
      %p552 = pneg %p93
      %p553 = pneg %p90
      %p554 = pneg %p114
      %p555 = pneg %p111
      %p556 = pneg %p135
      %p557 = pneg %p132
      %p558 = pneg %p156
      %p559 = pneg %p153
      %p560 = pneg %p177
      %p561 = pneg %p174
      %p562 = pneg %p198
      %p563 = pneg %p195
      %p564 = pneg %p219
      %p565 = pneg %p216
      %p566 = pneg %p240
      %p567 = pneg %p237
      %p568 = pneg %p261
      %p569 = pneg %p258
      %p570 = pneg %p282
      %p571 = pneg %p279
      %p572 = pneg %p303
      %p573 = pneg %p300
      %p574 = pneg %p324
      %p575 = pneg %p321
      %p576 = pneg %p345
      %p577 = pneg %p342
      %p578 = pneg %p366
      %p579 = pneg %p363
      %p580 = pneg %p387
      %p581 = pneg %p384
      %p582 = pneg %p408
      %p583 = pneg %p405
      %p584 = pneg %p429
      %p585 = pneg %p426
      %p586 = pneg %p455
      %p587 = pneg %p452
      %p588 = scmp.lt.s32.totalorder %s30, 1
      %s589 = scalar_select %p588, %s30, 1
      %s590 = smul.addr %s589, 2
      %s591 = smul.addr %s590, 8
      %s592 = scalar_lea.vmem %s19, %s591
      %p593 = scmp.lt.s32.totalorder %s30, 1
      %s594 = scalar_select %p593, %s30, 1
      %s595 = smul.addr %s594, 4
      %s596 = smul.addr %s595, 8
      %s597 = scalar_lea.vmem %s0, %s596
      %p598 = scmp.lt.s32.totalorder %s30, 1
      %s599 = scalar_select %p598, %s30, 1
      %s600 = smul.addr %s599, 2
      %s601 = smul.addr %s600, 8
      %s602 = scalar_lea.vmem %s19, %s601
      %v603 = vld [vmem:[%s597] sm:$0xff]
      %v604 = vld [vmem:[%s597 + $0x8] sm:$0xff]
      %v605 = vld [vmem:[%s597 + $0x10] sm:$0xf]
      %v606 = vld [vmem:[%s597 + $0x18] sm:$0xf]
      %v607 = vld [vmem:[%s1] sm:$0xff]
      %v608 = vld [vmem:[%s1 + $0x8] sm:$0xf]
      %610 = vset.pattern.permute.xlu0 0
      %611 = vperm.xlu0 %610, %v607
      %v612 = vpop.permute.xlu0 %611
      %615 = vset.pattern.permute.xlu0 0
      %616 = vperm.xlu0 %615, %v608
      %v617 = vpop.permute.xlu0 %616
      %v619 = vmul.f32 %v603, %v612
      %v620 = vmul.f32 %v604, %v612
      %v621 = vmul.f32 %v605, %v617
      %v622 = vmul.f32 %v606, %v617
      %v623 = vld [vmem:[%s2] sm:$0xff]
      %v624 = vld [vmem:[%s2 + $0x8] sm:$0xf]
      %626 = vset.pattern.permute.xlu0 0
      %627 = vperm.xlu0 %626, %v623
      %v628 = vpop.permute.xlu0 %627
      %631 = vset.pattern.permute.xlu0 0
      %632 = vperm.xlu0 %631, %v624
      %v633 = vpop.permute.xlu0 %632
      %v635 = vadd.f32 %v619, %v628
      %v636 = vadd.f32 %v620, %v628
      %v637 = vadd.f32 %v621, %v633
      %v638 = vadd.f32 %v622, %v633
      %v639 = vmax.f32 %v635, 0.0
      %v640 = vmax.f32 %v636, 0.0
      %v641 = vmax.f32 %v637, 0.0
      %v642 = vmax.f32 %v638, 0.0
      %647 = vrot.lane.b32.xlu0 %v639, 17
      %v648 = vpop.permute.xlu0 %647
      %649 = vrot.lane.b32.xlu0 %v640, 17
      %v650 = vpop.permute.xlu0 %649
      %651 = vrot.lane.b32.xlu0 %v641, 17
      %v652 = vpop.permute.xlu0 %651
      %653 = vrot.lane.b32.xlu0 %v642, 17
      %v654 = vpop.permute.xlu0 %653
      %vm655 = vcmask 138240
      %v656 = vsel %vm655, %v648, %v650
      %v657 = vsel %vm655, %v652, %v654
      %v664 = vsel %vm655, 0.0, %v648
      %v665 = vsel %vm655, 0.0, %v652
      %v666 = vsel %vm655, %v650, 0.0
      %v667 = vsel %vm655, %v654, 0.0
      %v668 = vld [vmem:[%s3] sm:$0x3]
      %v669 = vld [vmem:[%s4] sm:$0x3]
      %v671 = vperm.slane %v668, 0
      %v672 = vperm.slane %v668, 1
      %v675 = vmul.f32 %v664, %v671
      %v676 = vmul.f32 %v656, %v672
      %v677 = vmul.f32 %v665, %v671
      %v678 = vmul.f32 %v657, %v672
      %v680 = vperm.slane %v669, 0
      %v681 = vperm.slane %v669, 1
      %682 = vrot.lane.b32.xlu0 %v680, 2
      %v683 = vpop.permute.xlu0 %682
      %684 = vrot.lane.b32.xlu0 %v681, 2
      %v685 = vpop.permute.xlu0 %684
      %vm686 = vcmask 15360
      %v687 = vsel %vm686, %v683, %v685
      %v691 = vmul.f32 %v664, %v683
      %v692 = vmul.f32 %v656, %v687
      %v693 = vmul.f32 %v666, %v685
      %v694 = vmul.f32 %v665, %v683
      %v695 = vmul.f32 %v657, %v687
      %v696 = vmul.f32 %v667, %v685
      %697 = vrot.lane.b32.xlu0 %v671, 16
      %v698 = vpop.permute.xlu0 %697
      %699 = vrot.lane.b32.xlu0 %v672, 16
      %v700 = vpop.permute.xlu0 %699
      %vm701 = vcmask 130048
      %v702 = vsel %vm701, %v698, %v700
      %v706 = vmul.f32 %v664, %v698
      %v707 = vmul.f32 %v656, %v702
      %v708 = vmul.f32 %v666, %v700
      %v709 = vmul.f32 %v665, %v698
      %v710 = vmul.f32 %v657, %v702
      %v711 = vmul.f32 %v667, %v700
      %712 = vrot.lane.b32.xlu0 %v680, 18
      %v713 = vpop.permute.xlu0 %712
      %714 = vrot.lane.b32.xlu0 %v681, 18
      %v715 = vpop.permute.xlu0 %714
      %vm716 = vcmask 146432
      %v717 = vsel %vm716, %v713, %v715
      %v721 = vmul.f32 %v664, %v713
      %v722 = vmul.f32 %v656, %v717
      %v723 = vmul.f32 %v666, %v715
      %v724 = vmul.f32 %v665, %v713
      %v725 = vmul.f32 %v657, %v717
      %v726 = vmul.f32 %v667, %v715
      %727 = vrot.lane.b32.xlu0 %v671, 32
      %v728 = vpop.permute.xlu0 %727
      %729 = vrot.lane.b32.xlu0 %v672, 32
      %v730 = vpop.permute.xlu0 %729
      %vm731 = vcmask 261120
      %v732 = vsel %vm731, %v728, %v730
      %v736 = vmul.f32 %v664, %v728
      %v737 = vmul.f32 %v656, %v732
      %v738 = vmul.f32 %v666, %v730
      %v739 = vmul.f32 %v665, %v728
      %v740 = vmul.f32 %v657, %v732
      %v741 = vmul.f32 %v667, %v730
      %742 = vrot.lane.b32.xlu0 %v680, 34
      %v743 = vpop.permute.xlu0 %742
      %744 = vrot.lane.b32.xlu0 %v681, 34
      %v745 = vpop.permute.xlu0 %744
      %vm746 = vcmask 277504
      %v747 = vsel %vm746, %v743, %v745
      %v751 = vmul.f32 %v664, %v743
      %v752 = vmul.f32 %v656, %v747
      %v753 = vmul.f32 %v666, %v745
      %v754 = vmul.f32 %v665, %v743
      %v755 = vmul.f32 %v657, %v747
      %v756 = vmul.f32 %v667, %v745
      %vm761 = vcmask 1043456
      %v762 = vrot.slane %v664, 4
      %v763 = vrot.slane %v656, 4
      %v764 = vrot.slane %v666, 4
      %v765 = vrot.slane %v665, 4
      %v766 = vsel %vm761, %v762, %v765
      %v767 = vrot.slane %v657, 4
      %v768 = vsel %vm761, %v763, %v767
      %v769 = vrot.slane %v667, 4
      %v770 = vsel %vm761, %v764, %v769
      %771 = vrot.lane.b32.xlu0 %v762, 127
      %v772 = vpop.permute.xlu0 %771
      %773 = vrot.lane.b32.xlu0 %v763, 127
      %v774 = vpop.permute.xlu0 %773
      %775 = vrot.lane.b32.xlu0 %v764, 127
      %v776 = vpop.permute.xlu0 %775
      %777 = vrot.lane.b32.xlu0 %v766, 127
      %v778 = vpop.permute.xlu0 %777
      %779 = vrot.lane.b32.xlu0 %v768, 127
      %v780 = vpop.permute.xlu0 %779
      %781 = vrot.lane.b32.xlu0 %v770, 127
      %v782 = vpop.permute.xlu0 %781
      %vm783 = vcmask 1039360
      %v784 = vsel %vm783, %v772, %v774
      %v785 = vsel %vm783, %v774, %v776
      %v786 = vsel %vm783, %v778, %v780
      %v787 = vsel %vm783, %v780, %v782
      %798 = vrot.lane.b32.xlu0 %v691, 126
      %v799 = vpop.permute.xlu0 %798
      %800 = vrot.lane.b32.xlu0 %v692, 126
      %v801 = vpop.permute.xlu0 %800
      %802 = vrot.lane.b32.xlu0 %v693, 126
      %v803 = vpop.permute.xlu0 %802
      %804 = vrot.lane.b32.xlu0 %v694, 126
      %v805 = vpop.permute.xlu0 %804
      %806 = vrot.lane.b32.xlu0 %v695, 126
      %v807 = vpop.permute.xlu0 %806
      %808 = vrot.lane.b32.xlu0 %v696, 126
      %v809 = vpop.permute.xlu0 %808
      %vm810 = vcmask 1031168
      %v811 = vsel %vm810, %v799, %v801
      %v812 = vsel %vm810, %v801, %v803
      %v813 = vsel %vm810, %v805, %v807
      %v814 = vsel %vm810, %v807, %v809
      %v825 = vrot.slane %v706, 4
      %v826 = vrot.slane %v707, 4
      %v827 = vrot.slane %v708, 4
      %v828 = vrot.slane %v709, 4
      %v829 = vsel %vm761, %v825, %v828
      %v830 = vrot.slane %v710, 4
      %v831 = vsel %vm761, %v826, %v830
      %v832 = vrot.slane %v711, 4
      %v833 = vsel %vm761, %v827, %v832
      %834 = vrot.lane.b32.xlu0 %v825, 112
      %v835 = vpop.permute.xlu0 %834
      %836 = vrot.lane.b32.xlu0 %v826, 112
      %v837 = vpop.permute.xlu0 %836
      %838 = vrot.lane.b32.xlu0 %v827, 112
      %v839 = vpop.permute.xlu0 %838
      %840 = vrot.lane.b32.xlu0 %v829, 112
      %v841 = vpop.permute.xlu0 %840
      %842 = vrot.lane.b32.xlu0 %v831, 112
      %v843 = vpop.permute.xlu0 %842
      %844 = vrot.lane.b32.xlu0 %v833, 112
      %v845 = vpop.permute.xlu0 %844
      %vm846 = vcmask 916480
      %v847 = vsel %vm846, %v835, %v837
      %v848 = vsel %vm846, %v837, %v839
      %v849 = vsel %vm846, %v841, %v843
      %v850 = vsel %vm846, %v843, %v845
      %855 = vrot.lane.b32.xlu0 %v664, 111
      %v856 = vpop.permute.xlu0 %855
      %857 = vrot.lane.b32.xlu0 %v656, 111
      %v858 = vpop.permute.xlu0 %857
      %859 = vrot.lane.b32.xlu0 %v666, 111
      %v860 = vpop.permute.xlu0 %859
      %861 = vrot.lane.b32.xlu0 %v665, 111
      %v862 = vpop.permute.xlu0 %861
      %863 = vrot.lane.b32.xlu0 %v657, 111
      %v864 = vpop.permute.xlu0 %863
      %865 = vrot.lane.b32.xlu0 %v667, 111
      %v866 = vpop.permute.xlu0 %865
      %vm867 = vcmask 908288
      %v868 = vsel %vm867, %v856, %v858
      %v869 = vsel %vm867, %v858, %v860
      %v870 = vsel %vm867, %v862, %v864
      %v871 = vsel %vm867, %v864, %v866
      %v882 = vrot.slane %v721, 4
      %v883 = vrot.slane %v722, 4
      %v884 = vrot.slane %v723, 4
      %v885 = vrot.slane %v724, 4
      %v886 = vsel %vm761, %v882, %v885
      %v887 = vrot.slane %v725, 4
      %v888 = vsel %vm761, %v883, %v887
      %v889 = vrot.slane %v726, 4
      %v890 = vsel %vm761, %v884, %v889
      %891 = vrot.lane.b32.xlu0 %v882, 110
      %v892 = vpop.permute.xlu0 %891
      %893 = vrot.lane.b32.xlu0 %v883, 110
      %v894 = vpop.permute.xlu0 %893
      %895 = vrot.lane.b32.xlu0 %v884, 110
      %v896 = vpop.permute.xlu0 %895
      %897 = vrot.lane.b32.xlu0 %v886, 110
      %v898 = vpop.permute.xlu0 %897
      %899 = vrot.lane.b32.xlu0 %v888, 110
      %v900 = vpop.permute.xlu0 %899
      %901 = vrot.lane.b32.xlu0 %v890, 110
      %v902 = vpop.permute.xlu0 %901
      %vm903 = vcmask 900096
      %v904 = vsel %vm903, %v892, %v894
      %v905 = vsel %vm903, %v894, %v896
      %v906 = vsel %vm903, %v898, %v900
      %v907 = vsel %vm903, %v900, %v902
      %918 = vrot.lane.b32.xlu0 %v736, 96
      %v919 = vpop.permute.xlu0 %918
      %920 = vrot.lane.b32.xlu0 %v737, 96
      %v921 = vpop.permute.xlu0 %920
      %922 = vrot.lane.b32.xlu0 %v738, 96
      %v923 = vpop.permute.xlu0 %922
      %924 = vrot.lane.b32.xlu0 %v739, 96
      %v925 = vpop.permute.xlu0 %924
      %926 = vrot.lane.b32.xlu0 %v740, 96
      %v927 = vpop.permute.xlu0 %926
      %928 = vrot.lane.b32.xlu0 %v741, 96
      %v929 = vpop.permute.xlu0 %928
      %vm930 = vcmask 785408
      %v931 = vsel %vm930, %v919, %v921
      %v932 = vsel %vm930, %v921, %v923
      %v933 = vsel %vm930, %v925, %v927
      %v934 = vsel %vm930, %v927, %v929
      %939 = vrot.lane.b32.xlu0 %v762, 95
      %v940 = vpop.permute.xlu0 %939
      %941 = vrot.lane.b32.xlu0 %v763, 95
      %v942 = vpop.permute.xlu0 %941
      %943 = vrot.lane.b32.xlu0 %v764, 95
      %v944 = vpop.permute.xlu0 %943
      %945 = vrot.lane.b32.xlu0 %v766, 95
      %v946 = vpop.permute.xlu0 %945
      %947 = vrot.lane.b32.xlu0 %v768, 95
      %v948 = vpop.permute.xlu0 %947
      %949 = vrot.lane.b32.xlu0 %v770, 95
      %v950 = vpop.permute.xlu0 %949
      %vm951 = vcmask 777216
      %v952 = vsel %vm951, %v940, %v942
      %v953 = vsel %vm951, %v942, %v944
      %v954 = vsel %vm951, %v946, %v948
      %v955 = vsel %vm951, %v948, %v950
      %966 = vrot.lane.b32.xlu0 %v751, 94
      %v967 = vpop.permute.xlu0 %966
      %968 = vrot.lane.b32.xlu0 %v752, 94
      %v969 = vpop.permute.xlu0 %968
      %970 = vrot.lane.b32.xlu0 %v753, 94
      %v971 = vpop.permute.xlu0 %970
      %972 = vrot.lane.b32.xlu0 %v754, 94
      %v973 = vpop.permute.xlu0 %972
      %974 = vrot.lane.b32.xlu0 %v755, 94
      %v975 = vpop.permute.xlu0 %974
      %976 = vrot.lane.b32.xlu0 %v756, 94
      %v977 = vpop.permute.xlu0 %976
      %vm978 = vcmask 769024
      %v979 = vsel %vm978, %v967, %v969
      %v980 = vsel %vm978, %v969, %v971
      %v981 = vsel %vm978, %v973, %v975
      %v982 = vsel %vm978, %v975, %v977
      %v985 = vsel %vm761, %v677, %v784
      %v986 = vsel %vm761, %v678, %v785
      %v987 = vsel %vm761, %v813, %v847
      %v988 = vsel %vm761, %v814, %v848
      %v989 = vsel %vm761, %v870, %v904
      %v990 = vsel %vm761, %v871, %v905
      %v991 = vsel %vm761, %v933, %v952
      %v992 = vsel %vm761, %v934, %v953
      %v993 = vld [vmem:[%s5] sm:$0xff]
      %vm994 = vcmask 883712
      %v996 = vsel %vm994, %v993, 0
      %v998 = vsel %vm761, %v981, 0
      %v1000 = vsel %vm761, %v982, 0
      %1002 = vmatpush.msra.mxu0 0.0
      %1003 = vmatpush.msra.mxu0 0.0
      %1004 = vmatpush.msra.mxu0 %v998
      %1005 = vmatpush.msra.mxu0 %v979
      %1006 = vmatpush.msra.mxu0 %v954
      %1007 = vmatpush.msra.mxu0 %v991
      %1008 = vmatpush.msra.mxu0 %v931
      %1009 = vmatpush.msra.mxu0 %v906
      %1010 = vmatpush.msra.mxu0 %v989
      %1011 = vmatpush.msra.mxu0 %v868
      %1012 = vmatpush.msra.mxu0 %v849
      %1013 = vmatpush.msra.mxu0 %v987
      %1014 = vmatpush.msra.mxu0 %v811
      %1015 = vmatpush.msra.mxu0 %v786
      %1016 = vmatpush.msra.mxu0 %v985
      %1017 = vmatpush.msra.mxu0 %v675
      %1018 = vmatmul.f32.gmra.mxu0 %v996
      %v1019 = vpop.f32.mrf.mxu0
      %v1020 = vadd.f32 0.0, %v1019
      %1021 = vdwg.mxu0
      %1022 = vmatpush.msra.mxu0 0.0
      %1023 = vmatpush.msra.mxu0 0.0
      %1024 = vmatpush.msra.mxu0 %v1000
      %1025 = vmatpush.msra.mxu0 %v980
      %1026 = vmatpush.msra.mxu0 %v955
      %1027 = vmatpush.msra.mxu0 %v992
      %1028 = vmatpush.msra.mxu0 %v932
      %1029 = vmatpush.msra.mxu0 %v907
      %1030 = vmatpush.msra.mxu0 %v990
      %1031 = vmatpush.msra.mxu0 %v869
      %1032 = vmatpush.msra.mxu0 %v850
      %1033 = vmatpush.msra.mxu0 %v988
      %1034 = vmatpush.msra.mxu0 %v812
      %1035 = vmatpush.msra.mxu0 %v787
      %1036 = vmatpush.msra.mxu0 %v986
      %1037 = vmatpush.msra.mxu0 %v676
      %1038 = vmatmul.f32.gmra.mxu0 %v996
      %v1039 = vpop.f32.mrf.mxu0
      %v1040 = vadd.f32 0.0, %v1039
      %1041 = vdwg.mxu0
      %v1042 = vrot.slane %v1020, 4
      %v1043 = vadd.f32 %v1020, %v1042
      %v1044 = vrot.slane %v1043, 2
      %v1045 = vadd.f32 %v1043, %v1044
      %v1046 = vrot.slane %v1045, 1
      %v1047 = vadd.f32 %v1045, %v1046
      %v1048 = vrot.slane %v1040, 4
      %v1049 = vadd.f32 %v1040, %v1048
      %v1050 = vrot.slane %v1049, 2
      %v1051 = vadd.f32 %v1049, %v1050
      %v1052 = vrot.slane %v1051, 1
      %v1053 = vadd.f32 %v1051, %v1052
      %v1054 = vrcp.pop 8.0
      %v1055 = vmul.f32 8.0, %v1054
      %v1056 = vsub.f32 1.0, %v1055
      %v1057 = vmul.f32 %v1054, %v1056
      %v1058 = vadd.f32 %v1054, %v1057
      %vm1059 = vweird.f32 %v1054
      %v1060 = vsel %vm1059, %v1054, %v1058
      %v1061 = vmul.f32 %v1047, %v1060
      %v1062 = vmul.f32 %v1053, %v1060
      %v1063 = vsub.f32 %v1020, %v1061
      %v1064 = vsub.f32 %v1040, %v1062
      %v1065 = vmul.f32 %v1063, %v1063
      %v1066 = vmul.f32 %v1064, %v1064
      %v1067 = vrot.slane %v1065, 4
      %v1068 = vadd.f32 %v1065, %v1067
      %v1069 = vrot.slane %v1068, 2
      %v1070 = vadd.f32 %v1068, %v1069
      %v1071 = vrot.slane %v1070, 1
      %v1072 = vadd.f32 %v1070, %v1071
      %v1073 = vrot.slane %v1066, 4
      %v1074 = vadd.f32 %v1066, %v1073
      %v1075 = vrot.slane %v1074, 2
      %v1076 = vadd.f32 %v1074, %v1075
      %v1077 = vrot.slane %v1076, 1
      %v1078 = vadd.f32 %v1076, %v1077
      %v1079 = vmul.f32 %v1072, %v1060
      %v1080 = vmul.f32 %v1078, %v1060
      %v1081 = vadd.f32 %v1079, 1e-05
      %v1082 = vadd.f32 %v1080, 1e-05
      %v1083 = vrsqrt.pop %v1081
      %v1084 = vmul.f32 %v1083, %v1081
      %v1085 = vmul.f32 %v1084, %v1083
      %v1086 = vmul.f32 0.5, %v1085
      %v1087 = vsub.f32 1.5, %v1086
      %v1088 = vmul.f32 %v1083, %v1087
      %vm1089 = vweird.f32 %v1081
      %vm1090 = vweird.f32 %v1083
      %vm1091 = vmor %vm1089, %vm1090
      %v1092 = vsel %vm1091, %v1083, %v1088
      %v1093 = vrsqrt.pop %v1082
      %v1094 = vmul.f32 %v1093, %v1082
      %v1095 = vmul.f32 %v1094, %v1093
      %v1096 = vmul.f32 0.5, %v1095
      %v1097 = vsub.f32 1.5, %v1096
      %v1098 = vmul.f32 %v1093, %v1097
      %vm1099 = vweird.f32 %v1082
      %vm1100 = vweird.f32 %v1093
      %vm1101 = vmor %vm1099, %vm1100
      %v1102 = vsel %vm1101, %v1093, %v1098
      %v1103 = vmul.f32 %v1063, %v1092
      %v1104 = vmul.f32 %v1064, %v1102
      %v1105 = vld [vmem:[%s6] sm:$0xff]
      %1107 = vset.pattern.permute.xlu0 0
      %1108 = vperm.xlu0 %1107, %v1105
      %v1109 = vpop.permute.xlu0 %1108
      %v1111 = vmul.f32 %v1103, %v1109
      %v1112 = vmul.f32 %v1104, %v1109
      %v1113 = vld [vmem:[%s7] sm:$0xff]
      %1115 = vset.pattern.permute.xlu0 0
      %1116 = vperm.xlu0 %1115, %v1113
      %v1117 = vpop.permute.xlu0 %1116
      %v1119 = vadd.f32 %v1111, %v1117
      %v1120 = vadd.f32 %v1112, %v1117
      %v1121 = vld [vmem:[%s8] sm:$0xff]
      %v1122 = vld [vmem:[%s8 + $0x8] sm:$0xff]
      %v1123 = vld [vmem:[%s8 + $0x10] sm:$0xff]
      %v1124 = vld [vmem:[%s8 + $0x18] sm:$0xff]
      %vm1125 = vcmask 64512
      %v1127 = vsel %vm1125, %v1121, 0
      %v1130 = vsel %vm1125, %v1122, 0
      %v1133 = vsel %vm1125, %v1123, 0
      %v1136 = vsel %vm1125, %v1124, 0
      %1138 = vmatpush.msra.mxu0 0.0
      %1139 = vmatpush.msra.mxu0 0.0
      %1140 = vmatpush.msra.mxu0 0.0
      %1141 = vmatpush.msra.mxu0 0.0
      %1142 = vmatpush.msra.mxu0 0.0
      %1143 = vmatpush.msra.mxu0 0.0
      %1144 = vmatpush.msra.mxu0 0.0
      %1145 = vmatpush.msra.mxu0 0.0
      %1146 = vmatpush.msra.mxu0 0.0
      %1147 = vmatpush.msra.mxu0 0.0
      %1148 = vmatpush.msra.mxu0 0.0
      %1149 = vmatpush.msra.mxu0 0.0
      %1150 = vmatpush.msra.mxu0 0.0
      %1151 = vmatpush.msra.mxu0 0.0
      %1152 = vmatpush.msra.mxu0 0.0
      %1153 = vmatpush.msra.mxu0 %v1119
      %1154 = vmatmul.f32.gmra.mxu0 %v1127
      %v1155 = vpop.f32.mrf.mxu0
      %v1156 = vadd.f32 0.0, %v1155
      %1157 = vmatmul.f32.gmra.mxu0 %v1130
      %v1158 = vpop.f32.mrf.mxu0
      %v1159 = vadd.f32 0.0, %v1158
      %1160 = vmatmul.f32.gmra.mxu0 %v1133
      %v1161 = vpop.f32.mrf.mxu0
      %v1162 = vadd.f32 0.0, %v1161
      %1163 = vmatmul.f32.gmra.mxu0 %v1136
      %v1164 = vpop.f32.mrf.mxu0
      %v1165 = vadd.f32 0.0, %v1164
      %1166 = vdwg.mxu0
      %1167 = vmatpush.msra.mxu0 0.0
      %1168 = vmatpush.msra.mxu0 0.0
      %1169 = vmatpush.msra.mxu0 0.0
      %1170 = vmatpush.msra.mxu0 0.0
      %1171 = vmatpush.msra.mxu0 0.0
      %1172 = vmatpush.msra.mxu0 0.0
      %1173 = vmatpush.msra.mxu0 0.0
      %1174 = vmatpush.msra.mxu0 0.0
      %1175 = vmatpush.msra.mxu0 0.0
      %1176 = vmatpush.msra.mxu0 0.0
      %1177 = vmatpush.msra.mxu0 0.0
      %1178 = vmatpush.msra.mxu0 0.0
      %1179 = vmatpush.msra.mxu0 0.0
      %1180 = vmatpush.msra.mxu0 0.0
      %1181 = vmatpush.msra.mxu0 0.0
      %1182 = vmatpush.msra.mxu0 %v1120
      %1183 = vmatmul.f32.gmra.mxu0 %v1127
      %v1184 = vpop.f32.mrf.mxu0
      %v1185 = vadd.f32 0.0, %v1184
      %1186 = vmatmul.f32.gmra.mxu0 %v1130
      %v1187 = vpop.f32.mrf.mxu0
      %v1188 = vadd.f32 0.0, %v1187
      %1189 = vmatmul.f32.gmra.mxu0 %v1133
      %v1190 = vpop.f32.mrf.mxu0
      %v1191 = vadd.f32 0.0, %v1190
      %1192 = vmatmul.f32.gmra.mxu0 %v1136
      %v1193 = vpop.f32.mrf.mxu0
      %v1194 = vadd.f32 0.0, %v1193
      %1195 = vdwg.mxu0
      %1200 = vrot.lane.b32.xlu0 %v1156, 3
      %v1201 = vpop.permute.xlu0 %1200
      %1202 = vrot.lane.b32.xlu0 %v1185, 3
      %v1203 = vpop.permute.xlu0 %1202
      %1204 = vrot.lane.b32.xlu0 %v1159, 3
      %v1205 = vpop.permute.xlu0 %1204
      %1206 = vrot.lane.b32.xlu0 %v1188, 3
      %v1207 = vpop.permute.xlu0 %1206
      %vm1208 = vcmask 23552
      %v1209 = vsel %vm1208, %v1201, %v1203
      %v1210 = vsel %vm1208, %v1205, %v1207
      %v1217 = vsel %vm1208, 0.0, %v1201
      %v1218 = vsel %vm1208, 0.0, %v1205
      %v1219 = vld [vmem:[%s9] sm:$0xff]
      %v1220 = vld [vmem:[%s9 + $0x8] sm:$0xff]
      %1222 = vset.pattern.permute.xlu0 0
      %1223 = vperm.xlu0 %1222, %v1219
      %v1224 = vpop.permute.xlu0 %1223
      %1227 = vset.pattern.permute.xlu0 0
      %1228 = vperm.xlu0 %1227, %v1220
      %v1229 = vpop.permute.xlu0 %1228
      %v1231 = vmul.f32 %v1224, %v1217
      %v1232 = vmul.f32 %v1224, %v1209
      %v1233 = vmul.f32 %v1229, %v1218
      %v1234 = vmul.f32 %v1229, %v1210
      %v1235 = vadd.f32 %v1231, 0.0
      %v1236 = vadd.f32 %v1232, 0.0
      %v1237 = vadd.f32 %v1233, 0.0
      %v1238 = vadd.f32 %v1234, 0.0
      %1239 = vset.pattern.permute.xlu0 1
      %1240 = vperm.xlu0 %1239, %v1219
      %v1241 = vpop.permute.xlu0 %1240
      %1243 = vset.pattern.permute.xlu0 1
      %1244 = vperm.xlu0 %1243, %v1220
      %v1245 = vpop.permute.xlu0 %1244
      %v1247 = vmul.f32 %v1241, %v1217
      %v1248 = vmul.f32 %v1241, %v1209
      %v1249 = vmul.f32 %v1241, %v1203
      %v1250 = vmul.f32 %v1245, %v1218
      %v1251 = vmul.f32 %v1245, %v1210
      %v1252 = vmul.f32 %v1245, %v1207
      %1259 = vrot.lane.b32.xlu0 %v1247, 127
      %v1260 = vpop.permute.xlu0 %1259
      %1261 = vrot.lane.b32.xlu0 %v1248, 127
      %v1262 = vpop.permute.xlu0 %1261
      %1263 = vrot.lane.b32.xlu0 %v1249, 127
      %v1264 = vpop.permute.xlu0 %1263
      %1265 = vrot.lane.b32.xlu0 %v1250, 127
      %v1266 = vpop.permute.xlu0 %1265
      %1267 = vrot.lane.b32.xlu0 %v1251, 127
      %v1268 = vpop.permute.xlu0 %1267
      %1269 = vrot.lane.b32.xlu0 %v1252, 127
      %v1270 = vpop.permute.xlu0 %1269
      %v1271 = vsel %vm783, %v1260, %v1262
      %v1272 = vsel %vm783, %v1262, %v1264
      %v1273 = vsel %vm783, %v1266, %v1268
      %v1274 = vsel %vm783, %v1268, %v1270
      %v1279 = vadd.f32 %v1235, %v1271
      %v1280 = vadd.f32 %v1236, %v1272
      %v1281 = vadd.f32 %v1237, %v1273
      %v1282 = vadd.f32 %v1238, %v1274
      %1283 = vset.pattern.permute.xlu0 2
      %1284 = vperm.xlu0 %1283, %v1219
      %v1285 = vpop.permute.xlu0 %1284
      %1287 = vset.pattern.permute.xlu0 2
      %1288 = vperm.xlu0 %1287, %v1220
      %v1289 = vpop.permute.xlu0 %1288
      %v1291 = vmul.f32 %v1285, %v1217
      %v1292 = vmul.f32 %v1285, %v1209
      %v1293 = vmul.f32 %v1285, %v1203
      %v1294 = vmul.f32 %v1289, %v1218
      %v1295 = vmul.f32 %v1289, %v1210
      %v1296 = vmul.f32 %v1289, %v1207
      %1303 = vrot.lane.b32.xlu0 %v1291, 126
      %v1304 = vpop.permute.xlu0 %1303
      %1305 = vrot.lane.b32.xlu0 %v1292, 126
      %v1306 = vpop.permute.xlu0 %1305
      %1307 = vrot.lane.b32.xlu0 %v1293, 126
      %v1308 = vpop.permute.xlu0 %1307
      %1309 = vrot.lane.b32.xlu0 %v1294, 126
      %v1310 = vpop.permute.xlu0 %1309
      %1311 = vrot.lane.b32.xlu0 %v1295, 126
      %v1312 = vpop.permute.xlu0 %1311
      %1313 = vrot.lane.b32.xlu0 %v1296, 126
      %v1314 = vpop.permute.xlu0 %1313
      %v1315 = vsel %vm810, %v1304, %v1306
      %v1316 = vsel %vm810, %v1306, %v1308
      %v1317 = vsel %vm810, %v1310, %v1312
      %v1318 = vsel %vm810, %v1312, %v1314
      %v1323 = vadd.f32 %v1279, %v1315
      %v1324 = vadd.f32 %v1280, %v1316
      %v1325 = vadd.f32 %v1281, %v1317
      %v1326 = vadd.f32 %v1282, %v1318
      %1327 = vset.pattern.permute.xlu0 3
      %1328 = vperm.xlu0 %1327, %v1219
      %v1329 = vpop.permute.xlu0 %1328
      %1331 = vset.pattern.permute.xlu0 3
      %1332 = vperm.xlu0 %1331, %v1220
      %v1333 = vpop.permute.xlu0 %1332
      %v1335 = vmul.f32 %v1329, %v1217
      %v1336 = vmul.f32 %v1329, %v1209
      %v1337 = vmul.f32 %v1329, %v1203
      %v1338 = vmul.f32 %v1333, %v1218
      %v1339 = vmul.f32 %v1333, %v1210
      %v1340 = vmul.f32 %v1333, %v1207
      %1347 = vrot.lane.b32.xlu0 %v1335, 125
      %v1348 = vpop.permute.xlu0 %1347
      %1349 = vrot.lane.b32.xlu0 %v1336, 125
      %v1350 = vpop.permute.xlu0 %1349
      %1351 = vrot.lane.b32.xlu0 %v1337, 125
      %v1352 = vpop.permute.xlu0 %1351
      %1353 = vrot.lane.b32.xlu0 %v1338, 125
      %v1354 = vpop.permute.xlu0 %1353
      %1355 = vrot.lane.b32.xlu0 %v1339, 125
      %v1356 = vpop.permute.xlu0 %1355
      %1357 = vrot.lane.b32.xlu0 %v1340, 125
      %v1358 = vpop.permute.xlu0 %1357
      %vm1359 = vcmask 1022976
      %v1360 = vsel %vm1359, %v1348, %v1350
      %v1361 = vsel %vm1359, %v1350, %v1352
      %v1362 = vsel %vm1359, %v1354, %v1356
      %v1363 = vsel %vm1359, %v1356, %v1358
      %v1368 = vadd.f32 %v1323, %v1360
      %v1369 = vadd.f32 %v1324, %v1361
      %v1370 = vadd.f32 %v1325, %v1362
      %v1371 = vadd.f32 %v1326, %v1363
      %v1372 = vld [vmem:[%s10] sm:$0xff]
      %v1373 = vld [vmem:[%s10 + $0x8] sm:$0xff]
      %1375 = vset.pattern.permute.xlu0 0
      %1376 = vperm.xlu0 %1375, %v1372
      %v1377 = vpop.permute.xlu0 %1376
      %1380 = vset.pattern.permute.xlu0 0
      %1381 = vperm.xlu0 %1380, %v1373
      %v1382 = vpop.permute.xlu0 %1381
      %v1384 = vadd.f32 %v1368, %v1377
      %v1385 = vadd.f32 %v1369, %v1377
      %v1386 = vadd.f32 %v1370, %v1382
      %v1387 = vadd.f32 %v1371, %v1382
      %v1388 = vxor.u32 %v1384, 2147483648
      %v1389 = vxor.u32 %v1385, 2147483648
      %v1390 = vxor.u32 %v1386, 2147483648
      %v1391 = vxor.u32 %v1387, 2147483648
      %v1392 = vmul.f32 %v1388, 1.442695
      %v1393 = vpow.pop %v1392
      %v1394 = vmul.f32 %v1389, 1.442695
      %v1395 = vpow.pop %v1394
      %v1396 = vmul.f32 %v1390, 1.442695
      %v1397 = vpow.pop %v1396
      %v1398 = vmul.f32 %v1391, 1.442695
      %v1399 = vpow.pop %v1398
      %v1400 = vadd.f32 %v1393, 1.0
      %v1401 = vadd.f32 %v1395, 1.0
      %v1402 = vadd.f32 %v1397, 1.0
      %v1403 = vadd.f32 %v1399, 1.0
      %v1404 = vrcp.pop %v1400
      %v1405 = vmul.f32 %v1400, %v1404
      %v1406 = vsub.f32 1.0, %v1405
      %v1407 = vmul.f32 %v1404, %v1406
      %v1408 = vadd.f32 %v1404, %v1407
      %vm1409 = vweird.f32 %v1400
      %vm1410 = vweird.f32 %v1404
      %vm1411 = vmor %vm1409, %vm1410
      %v1412 = vsel %vm1411, %v1404, %v1408
      %v1413 = vand.u32 2147483647, %v1400
      %vm1414 = vcmp.eq.f32.partialorder %v1413, 8.507059e+37
      %v1415 = vand.u32 %v1400, 2147483648
      %v1416 = vor.u32 1.1754944e-38, %v1415
      %v1417 = vsel %vm1414, %v1416, %v1412
      %v1418 = vmul.f32 1.0, %v1417
      %v1419 = vrcp.pop %v1401
      %v1420 = vmul.f32 %v1401, %v1419
      %v1421 = vsub.f32 1.0, %v1420
      %v1422 = vmul.f32 %v1419, %v1421
      %v1423 = vadd.f32 %v1419, %v1422
      %vm1424 = vweird.f32 %v1401
      %vm1425 = vweird.f32 %v1419
      %vm1426 = vmor %vm1424, %vm1425
      %v1427 = vsel %vm1426, %v1419, %v1423
      %v1428 = vand.u32 2147483647, %v1401
      %vm1429 = vcmp.eq.f32.partialorder %v1428, 8.507059e+37
      %v1430 = vand.u32 %v1401, 2147483648
      %v1431 = vor.u32 1.1754944e-38, %v1430
      %v1432 = vsel %vm1429, %v1431, %v1427
      %v1433 = vmul.f32 1.0, %v1432
      %v1434 = vrcp.pop %v1402
      %v1435 = vmul.f32 %v1402, %v1434
      %v1436 = vsub.f32 1.0, %v1435
      %v1437 = vmul.f32 %v1434, %v1436
      %v1438 = vadd.f32 %v1434, %v1437
      %vm1439 = vweird.f32 %v1402
      %vm1440 = vweird.f32 %v1434
      %vm1441 = vmor %vm1439, %vm1440
      %v1442 = vsel %vm1441, %v1434, %v1438
      %v1443 = vand.u32 2147483647, %v1402
      %vm1444 = vcmp.eq.f32.partialorder %v1443, 8.507059e+37
      %v1445 = vand.u32 %v1402, 2147483648
      %v1446 = vor.u32 1.1754944e-38, %v1445
      %v1447 = vsel %vm1444, %v1446, %v1442
      %v1448 = vmul.f32 1.0, %v1447
      %v1449 = vrcp.pop %v1403
      %v1450 = vmul.f32 %v1403, %v1449
      %v1451 = vsub.f32 1.0, %v1450
      %v1452 = vmul.f32 %v1449, %v1451
      %v1453 = vadd.f32 %v1449, %v1452
      %vm1454 = vweird.f32 %v1403
      %vm1455 = vweird.f32 %v1449
      %vm1456 = vmor %vm1454, %vm1455
      %v1457 = vsel %vm1456, %v1449, %v1453
      %v1458 = vand.u32 2147483647, %v1403
      %vm1459 = vcmp.eq.f32.partialorder %v1458, 8.507059e+37
      %v1460 = vand.u32 %v1403, 2147483648
      %v1461 = vor.u32 1.1754944e-38, %v1460
      %v1462 = vsel %vm1459, %v1461, %v1457
      %v1463 = vmul.f32 1.0, %v1462
      %v1464 = vmul.f32 %v1384, %v1418
      %v1465 = vmul.f32 %v1385, %v1433
      %v1466 = vmul.f32 %v1386, %v1448
      %v1467 = vmul.f32 %v1387, %v1463
      %1468 = vxpose.xlu0.b32.start [1/16] %v1464, 128
      %1469 = vxpose.xlu0.b32.cont [2/16] %v1466, 128
      %1470 = vxpose.xlu0.b32.cont [3/16] 0.0, 128
      %1471 = vxpose.xlu0.b32.cont [4/16] 0.0, 128
      %1472 = vxpose.xlu0.b32.cont [5/16] 0.0, 128
      %1473 = vxpose.xlu0.b32.cont [6/16] 0.0, 128
      %1474 = vxpose.xlu0.b32.cont [7/16] 0.0, 128
      %1475 = vxpose.xlu0.b32.cont [8/16] 0.0, 128
      %1476 = vxpose.xlu0.b32.cont [9/16] 0.0, 128
      %1477 = vxpose.xlu0.b32.cont [10/16] 0.0, 128
      %1478 = vxpose.xlu0.b32.cont [11/16] 0.0, 128
      %1479 = vxpose.xlu0.b32.cont [12/16] 0.0, 128
      %1480 = vxpose.xlu0.b32.cont [13/16] 0.0, 128
      %1481 = vxpose.xlu0.b32.cont [14/16] 0.0, 128
      %1482 = vxpose.xlu0.b32.cont [15/16] 0.0, 128
      %1483 = vxpose.xlu0.b32.end [16/16] 0.0, 128
      %v1484 = vpop.trf.xlu0
      %v1485 = vpop.trf.xlu0
      %v1486 = vpop.trf.xlu0
      %v1487 = vpop.trf.xlu0
      %v1488 = vpop.trf.xlu0
      %v1489 = vpop.trf.xlu0
      %v1490 = vpop.trf.xlu0
      %v1491 = vpop.trf.xlu0
      %v1492 = vpop.trf.xlu0
      %v1493 = vpop.trf.xlu0
      %v1494 = vpop.trf.xlu0
      %v1495 = vpop.trf.xlu0
      %v1496 = vpop.trf.xlu0
      %v1497 = vpop.trf.xlu0
      %v1498 = vpop.trf.xlu0
      %v1499 = vpop.trf.xlu0
      %1500 = vxpose.xlu0.b32.start [1/16] %v1465, 128
      %1501 = vxpose.xlu0.b32.cont [2/16] %v1467, 128
      %1502 = vxpose.xlu0.b32.cont [3/16] 0.0, 128
      %1503 = vxpose.xlu0.b32.cont [4/16] 0.0, 128
      %1504 = vxpose.xlu0.b32.cont [5/16] 0.0, 128
      %1505 = vxpose.xlu0.b32.cont [6/16] 0.0, 128
      %1506 = vxpose.xlu0.b32.cont [7/16] 0.0, 128
      %1507 = vxpose.xlu0.b32.cont [8/16] 0.0, 128
      %1508 = vxpose.xlu0.b32.cont [9/16] 0.0, 128
      %1509 = vxpose.xlu0.b32.cont [10/16] 0.0, 128
      %1510 = vxpose.xlu0.b32.cont [11/16] 0.0, 128
      %1511 = vxpose.xlu0.b32.cont [12/16] 0.0, 128
      %1512 = vxpose.xlu0.b32.cont [13/16] 0.0, 128
      %1513 = vxpose.xlu0.b32.cont [14/16] 0.0, 128
      %1514 = vxpose.xlu0.b32.cont [15/16] 0.0, 128
      %1515 = vxpose.xlu0.b32.end [16/16] 0.0, 128
      %v1516 = vpop.trf.xlu0
      %v1517 = vpop.trf.xlu0
      %v1518 = vpop.trf.xlu0
      %v1519 = vpop.trf.xlu0
      %v1520 = vpop.trf.xlu0
      %v1521 = vpop.trf.xlu0
      %v1522 = vpop.trf.xlu0
      %v1523 = vpop.trf.xlu0
      %v1524 = vpop.trf.xlu0
      %v1525 = vpop.trf.xlu0
      %v1526 = vpop.trf.xlu0
      %v1527 = vpop.trf.xlu0
      %v1528 = vpop.trf.xlu0
      %v1529 = vpop.trf.xlu0
      %v1530 = vpop.trf.xlu0
      %v1531 = vpop.trf.xlu0
      %v1532 = vld [vmem:[%s11] sm:$0xff]
      %v1533 = vld [vmem:[%s11 + $0x8] sm:$0xff]
      %v1534 = vld [vmem:[%s11 + $0x10] sm:$0xff]
      %v1535 = vld [vmem:[%s11 + $0x18] sm:$0xff]
      %v1537 = vsel %vm701, %v1484, 0
      %v1540 = vsel %vm701, %v1485, 0
      %v1543 = vsel %vm701, %v1486, 0
      %v1546 = vsel %vm701, %v1487, 0
      %v1549 = vsel %vm701, %v1488, 0
      %v1552 = vsel %vm701, %v1489, 0
      %v1555 = vsel %vm701, %v1490, 0
      %v1558 = vsel %vm701, %v1491, 0
      %v1561 = vsel %vm701, %v1492, 0
      %v1564 = vsel %vm701, %v1493, 0
      %v1567 = vsel %vm701, %v1494, 0
      %v1570 = vsel %vm701, %v1495, 0
      %v1573 = vsel %vm701, %v1496, 0
      %v1576 = vsel %vm701, %v1497, 0
      %v1579 = vsel %vm701, %v1498, 0
      %v1582 = vsel %vm701, %v1499, 0
      %v1585 = vsel %vm701, %v1516, 0
      %v1588 = vsel %vm701, %v1517, 0
      %v1591 = vsel %vm701, %v1518, 0
      %v1594 = vsel %vm701, %v1519, 0
      %v1597 = vsel %vm701, %v1520, 0
      %v1600 = vsel %vm701, %v1521, 0
      %v1603 = vsel %vm701, %v1522, 0
      %v1606 = vsel %vm701, %v1523, 0
      %v1609 = vsel %vm701, %v1524, 0
      %v1612 = vsel %vm701, %v1525, 0
      %v1615 = vsel %vm701, %v1526, 0
      %v1618 = vsel %vm701, %v1527, 0
      %v1621 = vsel %vm701, %v1528, 0
      %v1624 = vsel %vm701, %v1529, 0
      %v1627 = vsel %vm701, %v1530, 0
      %v1630 = vsel %vm701, %v1531, 0
      %1632 = vmatpush.msra.mxu0 0.0
      %1633 = vmatpush.msra.mxu0 0.0
      %1634 = vmatpush.msra.mxu0 0.0
      %1635 = vmatpush.msra.mxu0 0.0
      %1636 = vmatpush.msra.mxu0 0.0
      %1637 = vmatpush.msra.mxu0 0.0
      %1638 = vmatpush.msra.mxu0 0.0
      %1639 = vmatpush.msra.mxu0 0.0
      %1640 = vmatpush.msra.mxu0 0.0
      %1641 = vmatpush.msra.mxu0 0.0
      %1642 = vmatpush.msra.mxu0 0.0
      %1643 = vmatpush.msra.mxu0 0.0
      %1644 = vmatpush.msra.mxu0 0.0
      %1645 = vmatpush.msra.mxu0 0.0
      %1646 = vmatpush.msra.mxu0 %v1534
      %1647 = vmatpush.msra.mxu0 %v1532
      %1648 = vmatmul.f32.gmra.mxu0 %v1537
      %v1649 = vpop.f32.mrf.mxu0
      %v1650 = vadd.f32 0.0, %v1649
      %1651 = vmatmul.f32.gmra.mxu0 %v1540
      %v1652 = vpop.f32.mrf.mxu0
      %v1653 = vadd.f32 0.0, %v1652
      %1654 = vmatmul.f32.gmra.mxu0 %v1543
      %v1655 = vpop.f32.mrf.mxu0
      %v1656 = vadd.f32 0.0, %v1655
      %1657 = vmatmul.f32.gmra.mxu0 %v1546
      %v1658 = vpop.f32.mrf.mxu0
      %v1659 = vadd.f32 0.0, %v1658
      %1660 = vmatmul.f32.gmra.mxu0 %v1549
      %v1661 = vpop.f32.mrf.mxu0
      %v1662 = vadd.f32 0.0, %v1661
      %1663 = vmatmul.f32.gmra.mxu0 %v1552
      %v1664 = vpop.f32.mrf.mxu0
      %v1665 = vadd.f32 0.0, %v1664
      %1666 = vmatmul.f32.gmra.mxu0 %v1555
      %v1667 = vpop.f32.mrf.mxu0
      %v1668 = vadd.f32 0.0, %v1667
      %1669 = vmatmul.f32.gmra.mxu0 %v1558
      %v1670 = vpop.f32.mrf.mxu0
      %v1671 = vadd.f32 0.0, %v1670
      %1672 = vmatmul.f32.gmra.mxu0 %v1561
      %v1673 = vpop.f32.mrf.mxu0
      %v1674 = vadd.f32 0.0, %v1673
      %1675 = vmatmul.f32.gmra.mxu0 %v1564
      %v1676 = vpop.f32.mrf.mxu0
      %v1677 = vadd.f32 0.0, %v1676
      %1678 = vmatmul.f32.gmra.mxu0 %v1567
      %v1679 = vpop.f32.mrf.mxu0
      %v1680 = vadd.f32 0.0, %v1679
      %1681 = vmatmul.f32.gmra.mxu0 %v1570
      %v1682 = vpop.f32.mrf.mxu0
      %v1683 = vadd.f32 0.0, %v1682
      %1684 = vmatmul.f32.gmra.mxu0 %v1573
      %v1685 = vpop.f32.mrf.mxu0
      %v1686 = vadd.f32 0.0, %v1685
      %1687 = vmatmul.f32.gmra.mxu0 %v1576
      %v1688 = vpop.f32.mrf.mxu0
      %v1689 = vadd.f32 0.0, %v1688
      %1690 = vmatmul.f32.gmra.mxu0 %v1579
      %v1691 = vpop.f32.mrf.mxu0
      %v1692 = vadd.f32 0.0, %v1691
      %1693 = vmatmul.f32.gmra.mxu0 %v1582
      %v1694 = vpop.f32.mrf.mxu0
      %v1695 = vadd.f32 0.0, %v1694
      %1696 = vmatmul.f32.gmra.mxu0 %v1585
      %v1697 = vpop.f32.mrf.mxu0
      %v1698 = vadd.f32 0.0, %v1697
      %1699 = vmatmul.f32.gmra.mxu0 %v1588
      %v1700 = vpop.f32.mrf.mxu0
      %v1701 = vadd.f32 0.0, %v1700
      %1702 = vmatmul.f32.gmra.mxu0 %v1591
      %v1703 = vpop.f32.mrf.mxu0
      %v1704 = vadd.f32 0.0, %v1703
      %1705 = vmatmul.f32.gmra.mxu0 %v1594
      %v1706 = vpop.f32.mrf.mxu0
      %v1707 = vadd.f32 0.0, %v1706
      %1708 = vmatmul.f32.gmra.mxu0 %v1597
      %v1709 = vpop.f32.mrf.mxu0
      %v1710 = vadd.f32 0.0, %v1709
      %1711 = vmatmul.f32.gmra.mxu0 %v1600
      %v1712 = vpop.f32.mrf.mxu0
      %v1713 = vadd.f32 0.0, %v1712
      %1714 = vmatmul.f32.gmra.mxu0 %v1603
      %v1715 = vpop.f32.mrf.mxu0
      %v1716 = vadd.f32 0.0, %v1715
      %1717 = vmatmul.f32.gmra.mxu0 %v1606
      %v1718 = vpop.f32.mrf.mxu0
      %v1719 = vadd.f32 0.0, %v1718
      %1720 = vmatmul.f32.gmra.mxu0 %v1609
      %v1721 = vpop.f32.mrf.mxu0
      %v1722 = vadd.f32 0.0, %v1721
      %1723 = vmatmul.f32.gmra.mxu0 %v1612
      %v1724 = vpop.f32.mrf.mxu0
      %v1725 = vadd.f32 0.0, %v1724
      %1726 = vmatmul.f32.gmra.mxu0 %v1615
      %v1727 = vpop.f32.mrf.mxu0
      %v1728 = vadd.f32 0.0, %v1727
      %1729 = vmatmul.f32.gmra.mxu0 %v1618
      %v1730 = vpop.f32.mrf.mxu0
      %v1731 = vadd.f32 0.0, %v1730
      %1732 = vmatmul.f32.gmra.mxu0 %v1621
      %v1733 = vpop.f32.mrf.mxu0
      %v1734 = vadd.f32 0.0, %v1733
      %1735 = vmatmul.f32.gmra.mxu0 %v1624
      %v1736 = vpop.f32.mrf.mxu0
      %v1737 = vadd.f32 0.0, %v1736
      %1738 = vmatmul.f32.gmra.mxu0 %v1627
      %v1739 = vpop.f32.mrf.mxu0
      %v1740 = vadd.f32 0.0, %v1739
      %1741 = vmatmul.f32.gmra.mxu0 %v1630
      %v1742 = vpop.f32.mrf.mxu0
      %v1743 = vadd.f32 0.0, %v1742
      %1744 = vdwg.mxu0
      %1745 = vmatpush.msra.mxu0 0.0
      %1746 = vmatpush.msra.mxu0 0.0
      %1747 = vmatpush.msra.mxu0 0.0
      %1748 = vmatpush.msra.mxu0 0.0
      %1749 = vmatpush.msra.mxu0 0.0
      %1750 = vmatpush.msra.mxu0 0.0
      %1751 = vmatpush.msra.mxu0 0.0
      %1752 = vmatpush.msra.mxu0 0.0
      %1753 = vmatpush.msra.mxu0 0.0
      %1754 = vmatpush.msra.mxu0 0.0
      %1755 = vmatpush.msra.mxu0 0.0
      %1756 = vmatpush.msra.mxu0 0.0
      %1757 = vmatpush.msra.mxu0 0.0
      %1758 = vmatpush.msra.mxu0 0.0
      %1759 = vmatpush.msra.mxu0 %v1535
      %1760 = vmatpush.msra.mxu0 %v1533
      %1761 = vmatmul.f32.gmra.mxu0 %v1537
      %v1762 = vpop.f32.mrf.mxu0
      %v1763 = vadd.f32 0.0, %v1762
      %1764 = vmatmul.f32.gmra.mxu0 %v1540
      %v1765 = vpop.f32.mrf.mxu0
      %v1766 = vadd.f32 0.0, %v1765
      %1767 = vmatmul.f32.gmra.mxu0 %v1543
      %v1768 = vpop.f32.mrf.mxu0
      %v1769 = vadd.f32 0.0, %v1768
      %1770 = vmatmul.f32.gmra.mxu0 %v1546
      %v1771 = vpop.f32.mrf.mxu0
      %v1772 = vadd.f32 0.0, %v1771
      %1773 = vmatmul.f32.gmra.mxu0 %v1549
      %v1774 = vpop.f32.mrf.mxu0
      %v1775 = vadd.f32 0.0, %v1774
      %1776 = vmatmul.f32.gmra.mxu0 %v1552
      %v1777 = vpop.f32.mrf.mxu0
      %v1778 = vadd.f32 0.0, %v1777
      %1779 = vmatmul.f32.gmra.mxu0 %v1555
      %v1780 = vpop.f32.mrf.mxu0
      %v1781 = vadd.f32 0.0, %v1780
      %1782 = vmatmul.f32.gmra.mxu0 %v1558
      %v1783 = vpop.f32.mrf.mxu0
      %v1784 = vadd.f32 0.0, %v1783
      %1785 = vmatmul.f32.gmra.mxu0 %v1561
      %v1786 = vpop.f32.mrf.mxu0
      %v1787 = vadd.f32 0.0, %v1786
      %1788 = vmatmul.f32.gmra.mxu0 %v1564
      %v1789 = vpop.f32.mrf.mxu0
      %v1790 = vadd.f32 0.0, %v1789
      %1791 = vmatmul.f32.gmra.mxu0 %v1567
      %v1792 = vpop.f32.mrf.mxu0
      %v1793 = vadd.f32 0.0, %v1792
      %1794 = vmatmul.f32.gmra.mxu0 %v1570
      %v1795 = vpop.f32.mrf.mxu0
      %v1796 = vadd.f32 0.0, %v1795
      %1797 = vmatmul.f32.gmra.mxu0 %v1573
      %v1798 = vpop.f32.mrf.mxu0
      %v1799 = vadd.f32 0.0, %v1798
      %1800 = vmatmul.f32.gmra.mxu0 %v1576
      %v1801 = vpop.f32.mrf.mxu0
      %v1802 = vadd.f32 0.0, %v1801
      %1803 = vmatmul.f32.gmra.mxu0 %v1579
      %v1804 = vpop.f32.mrf.mxu0
      %v1805 = vadd.f32 0.0, %v1804
      %1806 = vmatmul.f32.gmra.mxu0 %v1582
      %v1807 = vpop.f32.mrf.mxu0
      %v1808 = vadd.f32 0.0, %v1807
      %1809 = vmatmul.f32.gmra.mxu0 %v1585
      %v1810 = vpop.f32.mrf.mxu0
      %v1811 = vadd.f32 0.0, %v1810
      %1812 = vmatmul.f32.gmra.mxu0 %v1588
      %v1813 = vpop.f32.mrf.mxu0
      %v1814 = vadd.f32 0.0, %v1813
      %1815 = vmatmul.f32.gmra.mxu0 %v1591
      %v1816 = vpop.f32.mrf.mxu0
      %v1817 = vadd.f32 0.0, %v1816
      %1818 = vmatmul.f32.gmra.mxu0 %v1594
      %v1819 = vpop.f32.mrf.mxu0
      %v1820 = vadd.f32 0.0, %v1819
      %1821 = vmatmul.f32.gmra.mxu0 %v1597
      %v1822 = vpop.f32.mrf.mxu0
      %v1823 = vadd.f32 0.0, %v1822
      %1824 = vmatmul.f32.gmra.mxu0 %v1600
      %v1825 = vpop.f32.mrf.mxu0
      %v1826 = vadd.f32 0.0, %v1825
      %1827 = vmatmul.f32.gmra.mxu0 %v1603
      %v1828 = vpop.f32.mrf.mxu0
      %v1829 = vadd.f32 0.0, %v1828
      %1830 = vmatmul.f32.gmra.mxu0 %v1606
      %v1831 = vpop.f32.mrf.mxu0
      %v1832 = vadd.f32 0.0, %v1831
      %1833 = vmatmul.f32.gmra.mxu0 %v1609
      %v1834 = vpop.f32.mrf.mxu0
      %v1835 = vadd.f32 0.0, %v1834
      %1836 = vmatmul.f32.gmra.mxu0 %v1612
      %v1837 = vpop.f32.mrf.mxu0
      %v1838 = vadd.f32 0.0, %v1837
      %1839 = vmatmul.f32.gmra.mxu0 %v1615
      %v1840 = vpop.f32.mrf.mxu0
      %v1841 = vadd.f32 0.0, %v1840
      %1842 = vmatmul.f32.gmra.mxu0 %v1618
      %v1843 = vpop.f32.mrf.mxu0
      %v1844 = vadd.f32 0.0, %v1843
      %1845 = vmatmul.f32.gmra.mxu0 %v1621
      %v1846 = vpop.f32.mrf.mxu0
      %v1847 = vadd.f32 0.0, %v1846
      %1848 = vmatmul.f32.gmra.mxu0 %v1624
      %v1849 = vpop.f32.mrf.mxu0
      %v1850 = vadd.f32 0.0, %v1849
      %1851 = vmatmul.f32.gmra.mxu0 %v1627
      %v1852 = vpop.f32.mrf.mxu0
      %v1853 = vadd.f32 0.0, %v1852
      %1854 = vmatmul.f32.gmra.mxu0 %v1630
      %v1855 = vpop.f32.mrf.mxu0
      %v1856 = vadd.f32 0.0, %v1855
      %1857 = vdwg.mxu0
      %v1858 = vld [vmem:[%s15] sm:$0xff]
      %v1859 = vld [vmem:[%s15 + $0x8] sm:$0xff]
      %v1860 = vld [vmem:[%s15 + $0x10] sm:$0xff]
      %v1861 = vld [vmem:[%s15 + $0x18] sm:$0xff]
      %1862 = vmatpush.msra.mxu0 0.0
      %1863 = vmatpush.msra.mxu0 0.0
      %1864 = vmatpush.msra.mxu0 0.0
      %1865 = vmatpush.msra.mxu0 0.0
      %1866 = vmatpush.msra.mxu0 0.0
      %1867 = vmatpush.msra.mxu0 0.0
      %1868 = vmatpush.msra.mxu0 0.0
      %1869 = vmatpush.msra.mxu0 0.0
      %1870 = vmatpush.msra.mxu0 0.0
      %1871 = vmatpush.msra.mxu0 0.0
      %1872 = vmatpush.msra.mxu0 0.0
      %1873 = vmatpush.msra.mxu0 0.0
      %1874 = vmatpush.msra.mxu0 0.0
      %1875 = vmatpush.msra.mxu0 0.0
      %1876 = vmatpush.msra.mxu0 %v1860
      %1877 = vmatpush.msra.mxu0 %v1858
      %1878 = vmatmul.f32.gmra.mxu0 %v1537
      %v1879 = vpop.f32.mrf.mxu0
      %v1880 = vadd.f32 0.0, %v1879
      %1881 = vmatmul.f32.gmra.mxu0 %v1540
      %v1882 = vpop.f32.mrf.mxu0
      %v1883 = vadd.f32 0.0, %v1882
      %1884 = vmatmul.f32.gmra.mxu0 %v1543
      %v1885 = vpop.f32.mrf.mxu0
      %v1886 = vadd.f32 0.0, %v1885
      %1887 = vmatmul.f32.gmra.mxu0 %v1546
      %v1888 = vpop.f32.mrf.mxu0
      %v1889 = vadd.f32 0.0, %v1888
      %1890 = vmatmul.f32.gmra.mxu0 %v1549
      %v1891 = vpop.f32.mrf.mxu0
      %v1892 = vadd.f32 0.0, %v1891
      %1893 = vmatmul.f32.gmra.mxu0 %v1552
      %v1894 = vpop.f32.mrf.mxu0
      %v1895 = vadd.f32 0.0, %v1894
      %1896 = vmatmul.f32.gmra.mxu0 %v1555
      %v1897 = vpop.f32.mrf.mxu0
      %v1898 = vadd.f32 0.0, %v1897
      %1899 = vmatmul.f32.gmra.mxu0 %v1558
      %v1900 = vpop.f32.mrf.mxu0
      %v1901 = vadd.f32 0.0, %v1900
      %1902 = vmatmul.f32.gmra.mxu0 %v1561
      %v1903 = vpop.f32.mrf.mxu0
      %v1904 = vadd.f32 0.0, %v1903
      %1905 = vmatmul.f32.gmra.mxu0 %v1564
      %v1906 = vpop.f32.mrf.mxu0
      %v1907 = vadd.f32 0.0, %v1906
      %1908 = vmatmul.f32.gmra.mxu0 %v1567
      %v1909 = vpop.f32.mrf.mxu0
      %v1910 = vadd.f32 0.0, %v1909
      %1911 = vmatmul.f32.gmra.mxu0 %v1570
      %v1912 = vpop.f32.mrf.mxu0
      %v1913 = vadd.f32 0.0, %v1912
      %1914 = vmatmul.f32.gmra.mxu0 %v1573
      %v1915 = vpop.f32.mrf.mxu0
      %v1916 = vadd.f32 0.0, %v1915
      %1917 = vmatmul.f32.gmra.mxu0 %v1576
      %v1918 = vpop.f32.mrf.mxu0
      %v1919 = vadd.f32 0.0, %v1918
      %1920 = vmatmul.f32.gmra.mxu0 %v1579
      %v1921 = vpop.f32.mrf.mxu0
      %v1922 = vadd.f32 0.0, %v1921
      %1923 = vmatmul.f32.gmra.mxu0 %v1582
      %v1924 = vpop.f32.mrf.mxu0
      %v1925 = vadd.f32 0.0, %v1924
      %1926 = vmatmul.f32.gmra.mxu0 %v1585
      %v1927 = vpop.f32.mrf.mxu0
      %v1928 = vadd.f32 0.0, %v1927
      %1929 = vmatmul.f32.gmra.mxu0 %v1588
      %v1930 = vpop.f32.mrf.mxu0
      %v1931 = vadd.f32 0.0, %v1930
      %1932 = vmatmul.f32.gmra.mxu0 %v1591
      %v1933 = vpop.f32.mrf.mxu0
      %v1934 = vadd.f32 0.0, %v1933
      %1935 = vmatmul.f32.gmra.mxu0 %v1594
      %v1936 = vpop.f32.mrf.mxu0
      %v1937 = vadd.f32 0.0, %v1936
      %1938 = vmatmul.f32.gmra.mxu0 %v1597
      %v1939 = vpop.f32.mrf.mxu0
      %v1940 = vadd.f32 0.0, %v1939
      %1941 = vmatmul.f32.gmra.mxu0 %v1600
      %v1942 = vpop.f32.mrf.mxu0
      %v1943 = vadd.f32 0.0, %v1942
      %1944 = vmatmul.f32.gmra.mxu0 %v1603
      %v1945 = vpop.f32.mrf.mxu0
      %v1946 = vadd.f32 0.0, %v1945
      %1947 = vmatmul.f32.gmra.mxu0 %v1606
      %v1948 = vpop.f32.mrf.mxu0
      %v1949 = vadd.f32 0.0, %v1948
      %1950 = vmatmul.f32.gmra.mxu0 %v1609
      %v1951 = vpop.f32.mrf.mxu0
      %v1952 = vadd.f32 0.0, %v1951
      %1953 = vmatmul.f32.gmra.mxu0 %v1612
      %v1954 = vpop.f32.mrf.mxu0
      %v1955 = vadd.f32 0.0, %v1954
      %1956 = vmatmul.f32.gmra.mxu0 %v1615
      %v1957 = vpop.f32.mrf.mxu0
      %v1958 = vadd.f32 0.0, %v1957
      %1959 = vmatmul.f32.gmra.mxu0 %v1618
      %v1960 = vpop.f32.mrf.mxu0
      %v1961 = vadd.f32 0.0, %v1960
      %1962 = vmatmul.f32.gmra.mxu0 %v1621
      %v1963 = vpop.f32.mrf.mxu0
      %v1964 = vadd.f32 0.0, %v1963
      %1965 = vmatmul.f32.gmra.mxu0 %v1624
      %v1966 = vpop.f32.mrf.mxu0
      %v1967 = vadd.f32 0.0, %v1966
      %1968 = vmatmul.f32.gmra.mxu0 %v1627
      %v1969 = vpop.f32.mrf.mxu0
      %v1970 = vadd.f32 0.0, %v1969
      %1971 = vmatmul.f32.gmra.mxu0 %v1630
      %v1972 = vpop.f32.mrf.mxu0
      %v1973 = vadd.f32 0.0, %v1972
      %1974 = vdwg.mxu0
      %1975 = vmatpush.msra.mxu0 0.0
      %1976 = vmatpush.msra.mxu0 0.0
      %1977 = vmatpush.msra.mxu0 0.0
      %1978 = vmatpush.msra.mxu0 0.0
      %1979 = vmatpush.msra.mxu0 0.0
      %1980 = vmatpush.msra.mxu0 0.0
      %1981 = vmatpush.msra.mxu0 0.0
      %1982 = vmatpush.msra.mxu0 0.0
      %1983 = vmatpush.msra.mxu0 0.0
      %1984 = vmatpush.msra.mxu0 0.0
      %1985 = vmatpush.msra.mxu0 0.0
      %1986 = vmatpush.msra.mxu0 0.0
      %1987 = vmatpush.msra.mxu0 0.0
      %1988 = vmatpush.msra.mxu0 0.0
      %1989 = vmatpush.msra.mxu0 %v1861
      %1990 = vmatpush.msra.mxu0 %v1859
      %1991 = vmatmul.f32.gmra.mxu0 %v1537
      %v1992 = vpop.f32.mrf.mxu0
      %v1993 = vadd.f32 0.0, %v1992
      %1994 = vmatmul.f32.gmra.mxu0 %v1540
      %v1995 = vpop.f32.mrf.mxu0
      %v1996 = vadd.f32 0.0, %v1995
      %1997 = vmatmul.f32.gmra.mxu0 %v1543
      %v1998 = vpop.f32.mrf.mxu0
      %v1999 = vadd.f32 0.0, %v1998
      %2000 = vmatmul.f32.gmra.mxu0 %v1546
      %v2001 = vpop.f32.mrf.mxu0
      %v2002 = vadd.f32 0.0, %v2001
      %2003 = vmatmul.f32.gmra.mxu0 %v1549
      %v2004 = vpop.f32.mrf.mxu0
      %v2005 = vadd.f32 0.0, %v2004
      %2006 = vmatmul.f32.gmra.mxu0 %v1552
      %v2007 = vpop.f32.mrf.mxu0
      %v2008 = vadd.f32 0.0, %v2007
      %2009 = vmatmul.f32.gmra.mxu0 %v1555
      %v2010 = vpop.f32.mrf.mxu0
      %v2011 = vadd.f32 0.0, %v2010
      %2012 = vmatmul.f32.gmra.mxu0 %v1558
      %v2013 = vpop.f32.mrf.mxu0
      %v2014 = vadd.f32 0.0, %v2013
      %2015 = vmatmul.f32.gmra.mxu0 %v1561
      %v2016 = vpop.f32.mrf.mxu0
      %v2017 = vadd.f32 0.0, %v2016
      %2018 = vmatmul.f32.gmra.mxu0 %v1564
      %v2019 = vpop.f32.mrf.mxu0
      %v2020 = vadd.f32 0.0, %v2019
      %2021 = vmatmul.f32.gmra.mxu0 %v1567
      %v2022 = vpop.f32.mrf.mxu0
      %v2023 = vadd.f32 0.0, %v2022
      %2024 = vmatmul.f32.gmra.mxu0 %v1570
      %v2025 = vpop.f32.mrf.mxu0
      %v2026 = vadd.f32 0.0, %v2025
      %2027 = vmatmul.f32.gmra.mxu0 %v1573
      %v2028 = vpop.f32.mrf.mxu0
      %v2029 = vadd.f32 0.0, %v2028
      %2030 = vmatmul.f32.gmra.mxu0 %v1576
      %v2031 = vpop.f32.mrf.mxu0
      %v2032 = vadd.f32 0.0, %v2031
      %2033 = vmatmul.f32.gmra.mxu0 %v1579
      %v2034 = vpop.f32.mrf.mxu0
      %v2035 = vadd.f32 0.0, %v2034
      %2036 = vmatmul.f32.gmra.mxu0 %v1582
      %v2037 = vpop.f32.mrf.mxu0
      %v2038 = vadd.f32 0.0, %v2037
      %2039 = vmatmul.f32.gmra.mxu0 %v1585
      %v2040 = vpop.f32.mrf.mxu0
      %v2041 = vadd.f32 0.0, %v2040
      %2042 = vmatmul.f32.gmra.mxu0 %v1588
      %v2043 = vpop.f32.mrf.mxu0
      %v2044 = vadd.f32 0.0, %v2043
      %2045 = vmatmul.f32.gmra.mxu0 %v1591
      %v2046 = vpop.f32.mrf.mxu0
      %v2047 = vadd.f32 0.0, %v2046
      %2048 = vmatmul.f32.gmra.mxu0 %v1594
      %v2049 = vpop.f32.mrf.mxu0
      %v2050 = vadd.f32 0.0, %v2049
      %2051 = vmatmul.f32.gmra.mxu0 %v1597
      %v2052 = vpop.f32.mrf.mxu0
      %v2053 = vadd.f32 0.0, %v2052
      %2054 = vmatmul.f32.gmra.mxu0 %v1600
      %v2055 = vpop.f32.mrf.mxu0
      %v2056 = vadd.f32 0.0, %v2055
      %2057 = vmatmul.f32.gmra.mxu0 %v1603
      %v2058 = vpop.f32.mrf.mxu0
      %v2059 = vadd.f32 0.0, %v2058
      %2060 = vmatmul.f32.gmra.mxu0 %v1606
      %v2061 = vpop.f32.mrf.mxu0
      %v2062 = vadd.f32 0.0, %v2061
      %2063 = vmatmul.f32.gmra.mxu0 %v1609
      %v2064 = vpop.f32.mrf.mxu0
      %v2065 = vadd.f32 0.0, %v2064
      %2066 = vmatmul.f32.gmra.mxu0 %v1612
      %v2067 = vpop.f32.mrf.mxu0
      %v2068 = vadd.f32 0.0, %v2067
      %2069 = vmatmul.f32.gmra.mxu0 %v1615
      %v2070 = vpop.f32.mrf.mxu0
      %v2071 = vadd.f32 0.0, %v2070
      %2072 = vmatmul.f32.gmra.mxu0 %v1618
      %v2073 = vpop.f32.mrf.mxu0
      %v2074 = vadd.f32 0.0, %v2073
      %2075 = vmatmul.f32.gmra.mxu0 %v1621
      %v2076 = vpop.f32.mrf.mxu0
      %v2077 = vadd.f32 0.0, %v2076
      %2078 = vmatmul.f32.gmra.mxu0 %v1624
      %v2079 = vpop.f32.mrf.mxu0
      %v2080 = vadd.f32 0.0, %v2079
      %2081 = vmatmul.f32.gmra.mxu0 %v1627
      %v2082 = vpop.f32.mrf.mxu0
      %v2083 = vadd.f32 0.0, %v2082
      %2084 = vmatmul.f32.gmra.mxu0 %v1630
      %v2085 = vpop.f32.mrf.mxu0
      %v2086 = vadd.f32 0.0, %v2085
      %2087 = vdwg.mxu0
      %v2088 = vmul.f32 %v1650, %v1880
      %v2089 = vmul.f32 %v1763, %v1993
      %v2090 = vmul.f32 %v1653, %v1883
      %v2091 = vmul.f32 %v1766, %v1996
      %v2092 = vmul.f32 %v1656, %v1886
      %v2093 = vmul.f32 %v1769, %v1999
      %v2094 = vmul.f32 %v1659, %v1889
      %v2095 = vmul.f32 %v1772, %v2002
      %v2096 = vmul.f32 %v1662, %v1892
      %v2097 = vmul.f32 %v1775, %v2005
      %v2098 = vmul.f32 %v1665, %v1895
      %v2099 = vmul.f32 %v1778, %v2008
      %v2100 = vmul.f32 %v1668, %v1898
      %v2101 = vmul.f32 %v1781, %v2011
      %v2102 = vmul.f32 %v1671, %v1901
      %v2103 = vmul.f32 %v1784, %v2014
      %v2104 = vmul.f32 %v1674, %v1904
      %v2105 = vmul.f32 %v1787, %v2017
      %v2106 = vmul.f32 %v1677, %v1907
      %v2107 = vmul.f32 %v1790, %v2020
      %v2108 = vmul.f32 %v1680, %v1910
      %v2109 = vmul.f32 %v1793, %v2023
      %v2110 = vmul.f32 %v1683, %v1913
      %v2111 = vmul.f32 %v1796, %v2026
      %v2112 = vmul.f32 %v1686, %v1916
      %v2113 = vmul.f32 %v1799, %v2029
      %v2114 = vmul.f32 %v1689, %v1919
      %v2115 = vmul.f32 %v1802, %v2032
      %v2116 = vmul.f32 %v1692, %v1922
      %v2117 = vmul.f32 %v1805, %v2035
      %v2118 = vmul.f32 %v1695, %v1925
      %v2119 = vmul.f32 %v1808, %v2038
      %v2120 = vmul.f32 %v1698, %v1928
      %v2121 = vmul.f32 %v1811, %v2041
      %v2122 = vmul.f32 %v1701, %v1931
      %v2123 = vmul.f32 %v1814, %v2044
      %v2124 = vmul.f32 %v1704, %v1934
      %v2125 = vmul.f32 %v1817, %v2047
      %v2126 = vmul.f32 %v1707, %v1937
      %v2127 = vmul.f32 %v1820, %v2050
      %v2128 = vmul.f32 %v1710, %v1940
      %v2129 = vmul.f32 %v1823, %v2053
      %v2130 = vmul.f32 %v1713, %v1943
      %v2131 = vmul.f32 %v1826, %v2056
      %v2132 = vmul.f32 %v1716, %v1946
      %v2133 = vmul.f32 %v1829, %v2059
      %v2134 = vmul.f32 %v1719, %v1949
      %v2135 = vmul.f32 %v1832, %v2062
      %v2136 = vmul.f32 %v1722, %v1952
      %v2137 = vmul.f32 %v1835, %v2065
      %v2138 = vmul.f32 %v1725, %v1955
      %v2139 = vmul.f32 %v1838, %v2068
      %v2140 = vmul.f32 %v1728, %v1958
      %v2141 = vmul.f32 %v1841, %v2071
      %v2142 = vmul.f32 %v1731, %v1961
      %v2143 = vmul.f32 %v1844, %v2074
      %v2144 = vmul.f32 %v1734, %v1964
      %v2145 = vmul.f32 %v1847, %v2077
      %v2146 = vmul.f32 %v1737, %v1967
      %v2147 = vmul.f32 %v1850, %v2080
      %v2148 = vmul.f32 %v1740, %v1970
      %v2149 = vmul.f32 %v1853, %v2083
      %v2150 = vmul.f32 %v1743, %v1973
      %v2151 = vmul.f32 %v1856, %v2086
      %v2152 = vld [vmem:[%s13] sm:$0xff]
      %v2153 = vld [vmem:[%s13 + $0x8] sm:$0xff]
      %v2154 = vld [vmem:[%s13 + $0x10] sm:$0xff]
      %v2155 = vld [vmem:[%s13 + $0x18] sm:$0xff]
      %v2156 = vld [vmem:[%s14] sm:$0x3]
      %v2158 = vperm.slane %v2156, 0
      %v2159 = vperm.slane %v2156, 1
      %2162 = vmatpush.msra.mxu0 0.0
      %2163 = vmatpush.msra.mxu0 0.0
      %2164 = vmatpush.msra.mxu0 0.0
      %2165 = vmatpush.msra.mxu0 0.0
      %2166 = vmatpush.msra.mxu0 0.0
      %2167 = vmatpush.msra.mxu0 0.0
      %2168 = vmatpush.msra.mxu0 0.0
      %2169 = vmatpush.msra.mxu0 0.0
      %2170 = vmatpush.msra.mxu0 0.0
      %2171 = vmatpush.msra.mxu0 0.0
      %2172 = vmatpush.msra.mxu0 0.0
      %2173 = vmatpush.msra.mxu0 0.0
      %2174 = vmatpush.msra.mxu0 0.0
      %2175 = vmatpush.msra.mxu0 0.0
      %2176 = vmatpush.msra.mxu0 %v2154
      %2177 = vmatpush.msra.mxu0 %v2152
      %2178 = vmatmul.f32.gmra.mxu0 %v1537
      %v2179 = vpop.f32.mrf.mxu0
      %v2180 = vadd.f32 %v2158, %v2179
      %2181 = vmatmul.f32.gmra.mxu0 %v1540
      %v2182 = vpop.f32.mrf.mxu0
      %v2183 = vadd.f32 %v2158, %v2182
      %2184 = vmatmul.f32.gmra.mxu0 %v1543
      %v2185 = vpop.f32.mrf.mxu0
      %v2186 = vadd.f32 %v2158, %v2185
      %2187 = vmatmul.f32.gmra.mxu0 %v1546
      %v2188 = vpop.f32.mrf.mxu0
      %v2189 = vadd.f32 %v2158, %v2188
      %2190 = vmatmul.f32.gmra.mxu0 %v1549
      %v2191 = vpop.f32.mrf.mxu0
      %v2192 = vadd.f32 %v2158, %v2191
      %2193 = vmatmul.f32.gmra.mxu0 %v1552
      %v2194 = vpop.f32.mrf.mxu0
      %v2195 = vadd.f32 %v2158, %v2194
      %2196 = vmatmul.f32.gmra.mxu0 %v1555
      %v2197 = vpop.f32.mrf.mxu0
      %v2198 = vadd.f32 %v2158, %v2197
      %2199 = vmatmul.f32.gmra.mxu0 %v1558
      %v2200 = vpop.f32.mrf.mxu0
      %v2201 = vadd.f32 %v2158, %v2200
      %2202 = vmatmul.f32.gmra.mxu0 %v1561
      %v2203 = vpop.f32.mrf.mxu0
      %v2204 = vadd.f32 %v2158, %v2203
      %2205 = vmatmul.f32.gmra.mxu0 %v1564
      %v2206 = vpop.f32.mrf.mxu0
      %v2207 = vadd.f32 %v2158, %v2206
      %2208 = vmatmul.f32.gmra.mxu0 %v1567
      %v2209 = vpop.f32.mrf.mxu0
      %v2210 = vadd.f32 %v2158, %v2209
      %2211 = vmatmul.f32.gmra.mxu0 %v1570
      %v2212 = vpop.f32.mrf.mxu0
      %v2213 = vadd.f32 %v2158, %v2212
      %2214 = vmatmul.f32.gmra.mxu0 %v1573
      %v2215 = vpop.f32.mrf.mxu0
      %v2216 = vadd.f32 %v2158, %v2215
      %2217 = vmatmul.f32.gmra.mxu0 %v1576
      %v2218 = vpop.f32.mrf.mxu0
      %v2219 = vadd.f32 %v2158, %v2218
      %2220 = vmatmul.f32.gmra.mxu0 %v1579
      %v2221 = vpop.f32.mrf.mxu0
      %v2222 = vadd.f32 %v2158, %v2221
      %2223 = vmatmul.f32.gmra.mxu0 %v1582
      %v2224 = vpop.f32.mrf.mxu0
      %v2225 = vadd.f32 %v2158, %v2224
      %2226 = vmatmul.f32.gmra.mxu0 %v1585
      %v2227 = vpop.f32.mrf.mxu0
      %v2228 = vadd.f32 %v2158, %v2227
      %2229 = vmatmul.f32.gmra.mxu0 %v1588
      %v2230 = vpop.f32.mrf.mxu0
      %v2231 = vadd.f32 %v2158, %v2230
      %2232 = vmatmul.f32.gmra.mxu0 %v1591
      %v2233 = vpop.f32.mrf.mxu0
      %v2234 = vadd.f32 %v2158, %v2233
      %2235 = vmatmul.f32.gmra.mxu0 %v1594
      %v2236 = vpop.f32.mrf.mxu0
      %v2237 = vadd.f32 %v2158, %v2236
      %2238 = vmatmul.f32.gmra.mxu0 %v1597
      %v2239 = vpop.f32.mrf.mxu0
      %v2240 = vadd.f32 %v2158, %v2239
      %2241 = vmatmul.f32.gmra.mxu0 %v1600
      %v2242 = vpop.f32.mrf.mxu0
      %v2243 = vadd.f32 %v2158, %v2242
      %2244 = vmatmul.f32.gmra.mxu0 %v1603
      %v2245 = vpop.f32.mrf.mxu0
      %v2246 = vadd.f32 %v2158, %v2245
      %2247 = vmatmul.f32.gmra.mxu0 %v1606
      %v2248 = vpop.f32.mrf.mxu0
      %v2249 = vadd.f32 %v2158, %v2248
      %2250 = vmatmul.f32.gmra.mxu0 %v1609
      %v2251 = vpop.f32.mrf.mxu0
      %v2252 = vadd.f32 %v2158, %v2251
      %2253 = vmatmul.f32.gmra.mxu0 %v1612
      %v2254 = vpop.f32.mrf.mxu0
      %v2255 = vadd.f32 %v2158, %v2254
      %2256 = vmatmul.f32.gmra.mxu0 %v1615
      %v2257 = vpop.f32.mrf.mxu0
      %v2258 = vadd.f32 %v2158, %v2257
      %2259 = vmatmul.f32.gmra.mxu0 %v1618
      %v2260 = vpop.f32.mrf.mxu0
      %v2261 = vadd.f32 %v2158, %v2260
      %2262 = vmatmul.f32.gmra.mxu0 %v1621
      %v2263 = vpop.f32.mrf.mxu0
      %v2264 = vadd.f32 %v2158, %v2263
      %2265 = vmatmul.f32.gmra.mxu0 %v1624
      %v2266 = vpop.f32.mrf.mxu0
      %v2267 = vadd.f32 %v2158, %v2266
      %2268 = vmatmul.f32.gmra.mxu0 %v1627
      %v2269 = vpop.f32.mrf.mxu0
      %v2270 = vadd.f32 %v2158, %v2269
      %2271 = vmatmul.f32.gmra.mxu0 %v1630
      %v2272 = vpop.f32.mrf.mxu0
      %v2273 = vadd.f32 %v2158, %v2272
      %2274 = vdwg.mxu0
      %2275 = vmatpush.msra.mxu0 0.0
      %2276 = vmatpush.msra.mxu0 0.0
      %2277 = vmatpush.msra.mxu0 0.0
      %2278 = vmatpush.msra.mxu0 0.0
      %2279 = vmatpush.msra.mxu0 0.0
      %2280 = vmatpush.msra.mxu0 0.0
      %2281 = vmatpush.msra.mxu0 0.0
      %2282 = vmatpush.msra.mxu0 0.0
      %2283 = vmatpush.msra.mxu0 0.0
      %2284 = vmatpush.msra.mxu0 0.0
      %2285 = vmatpush.msra.mxu0 0.0
      %2286 = vmatpush.msra.mxu0 0.0
      %2287 = vmatpush.msra.mxu0 0.0
      %2288 = vmatpush.msra.mxu0 0.0
      %2289 = vmatpush.msra.mxu0 %v2155
      %2290 = vmatpush.msra.mxu0 %v2153
      %2291 = vmatmul.f32.gmra.mxu0 %v1537
      %v2292 = vpop.f32.mrf.mxu0
      %v2293 = vadd.f32 %v2159, %v2292
      %2294 = vmatmul.f32.gmra.mxu0 %v1540
      %v2295 = vpop.f32.mrf.mxu0
      %v2296 = vadd.f32 %v2159, %v2295
      %2297 = vmatmul.f32.gmra.mxu0 %v1543
      %v2298 = vpop.f32.mrf.mxu0
      %v2299 = vadd.f32 %v2159, %v2298
      %2300 = vmatmul.f32.gmra.mxu0 %v1546
      %v2301 = vpop.f32.mrf.mxu0
      %v2302 = vadd.f32 %v2159, %v2301
      %2303 = vmatmul.f32.gmra.mxu0 %v1549
      %v2304 = vpop.f32.mrf.mxu0
      %v2305 = vadd.f32 %v2159, %v2304
      %2306 = vmatmul.f32.gmra.mxu0 %v1552
      %v2307 = vpop.f32.mrf.mxu0
      %v2308 = vadd.f32 %v2159, %v2307
      %2309 = vmatmul.f32.gmra.mxu0 %v1555
      %v2310 = vpop.f32.mrf.mxu0
      %v2311 = vadd.f32 %v2159, %v2310
      %2312 = vmatmul.f32.gmra.mxu0 %v1558
      %v2313 = vpop.f32.mrf.mxu0
      %v2314 = vadd.f32 %v2159, %v2313
      %2315 = vmatmul.f32.gmra.mxu0 %v1561
      %v2316 = vpop.f32.mrf.mxu0
      %v2317 = vadd.f32 %v2159, %v2316
      %2318 = vmatmul.f32.gmra.mxu0 %v1564
      %v2319 = vpop.f32.mrf.mxu0
      %v2320 = vadd.f32 %v2159, %v2319
      %2321 = vmatmul.f32.gmra.mxu0 %v1567
      %v2322 = vpop.f32.mrf.mxu0
      %v2323 = vadd.f32 %v2159, %v2322
      %2324 = vmatmul.f32.gmra.mxu0 %v1570
      %v2325 = vpop.f32.mrf.mxu0
      %v2326 = vadd.f32 %v2159, %v2325
      %2327 = vmatmul.f32.gmra.mxu0 %v1573
      %v2328 = vpop.f32.mrf.mxu0
      %v2329 = vadd.f32 %v2159, %v2328
      %2330 = vmatmul.f32.gmra.mxu0 %v1576
      %v2331 = vpop.f32.mrf.mxu0
      %v2332 = vadd.f32 %v2159, %v2331
      %2333 = vmatmul.f32.gmra.mxu0 %v1579
      %v2334 = vpop.f32.mrf.mxu0
      %v2335 = vadd.f32 %v2159, %v2334
      %2336 = vmatmul.f32.gmra.mxu0 %v1582
      %v2337 = vpop.f32.mrf.mxu0
      %v2338 = vadd.f32 %v2159, %v2337
      %2339 = vmatmul.f32.gmra.mxu0 %v1585
      %v2340 = vpop.f32.mrf.mxu0
      %v2341 = vadd.f32 %v2159, %v2340
      %2342 = vmatmul.f32.gmra.mxu0 %v1588
      %v2343 = vpop.f32.mrf.mxu0
      %v2344 = vadd.f32 %v2159, %v2343
      %2345 = vmatmul.f32.gmra.mxu0 %v1591
      %v2346 = vpop.f32.mrf.mxu0
      %v2347 = vadd.f32 %v2159, %v2346
      %2348 = vmatmul.f32.gmra.mxu0 %v1594
      %v2349 = vpop.f32.mrf.mxu0
      %v2350 = vadd.f32 %v2159, %v2349
      %2351 = vmatmul.f32.gmra.mxu0 %v1597
      %v2352 = vpop.f32.mrf.mxu0
      %v2353 = vadd.f32 %v2159, %v2352
      %2354 = vmatmul.f32.gmra.mxu0 %v1600
      %v2355 = vpop.f32.mrf.mxu0
      %v2356 = vadd.f32 %v2159, %v2355
      %2357 = vmatmul.f32.gmra.mxu0 %v1603
      %v2358 = vpop.f32.mrf.mxu0
      %v2359 = vadd.f32 %v2159, %v2358
      %2360 = vmatmul.f32.gmra.mxu0 %v1606
      %v2361 = vpop.f32.mrf.mxu0
      %v2362 = vadd.f32 %v2159, %v2361
      %2363 = vmatmul.f32.gmra.mxu0 %v1609
      %v2364 = vpop.f32.mrf.mxu0
      %v2365 = vadd.f32 %v2159, %v2364
      %2366 = vmatmul.f32.gmra.mxu0 %v1612
      %v2367 = vpop.f32.mrf.mxu0
      %v2368 = vadd.f32 %v2159, %v2367
      %2369 = vmatmul.f32.gmra.mxu0 %v1615
      %v2370 = vpop.f32.mrf.mxu0
      %v2371 = vadd.f32 %v2159, %v2370
      %2372 = vmatmul.f32.gmra.mxu0 %v1618
      %v2373 = vpop.f32.mrf.mxu0
      %v2374 = vadd.f32 %v2159, %v2373
      %2375 = vmatmul.f32.gmra.mxu0 %v1621
      %v2376 = vpop.f32.mrf.mxu0
      %v2377 = vadd.f32 %v2159, %v2376
      %2378 = vmatmul.f32.gmra.mxu0 %v1624
      %v2379 = vpop.f32.mrf.mxu0
      %v2380 = vadd.f32 %v2159, %v2379
      %2381 = vmatmul.f32.gmra.mxu0 %v1627
      %v2382 = vpop.f32.mrf.mxu0
      %v2383 = vadd.f32 %v2159, %v2382
      %2384 = vmatmul.f32.gmra.mxu0 %v1630
      %v2385 = vpop.f32.mrf.mxu0
      %v2386 = vadd.f32 %v2159, %v2385
      %2387 = vdwg.mxu0
      %v2388 = vmax.f32 %v2180, 0.0
      %v2389 = vmax.f32 %v2293, 0.0
      %v2390 = vmax.f32 %v2183, 0.0
      %v2391 = vmax.f32 %v2296, 0.0
      %v2392 = vmax.f32 %v2186, 0.0
      %v2393 = vmax.f32 %v2299, 0.0
      %v2394 = vmax.f32 %v2189, 0.0
      %v2395 = vmax.f32 %v2302, 0.0
      %v2396 = vmax.f32 %v2192, 0.0
      %v2397 = vmax.f32 %v2305, 0.0
      %v2398 = vmax.f32 %v2195, 0.0
      %v2399 = vmax.f32 %v2308, 0.0
      %v2400 = vmax.f32 %v2198, 0.0
      %v2401 = vmax.f32 %v2311, 0.0
      %v2402 = vmax.f32 %v2201, 0.0
      %v2403 = vmax.f32 %v2314, 0.0
      %v2404 = vmax.f32 %v2204, 0.0
      %v2405 = vmax.f32 %v2317, 0.0
      %v2406 = vmax.f32 %v2207, 0.0
      %v2407 = vmax.f32 %v2320, 0.0
      %v2408 = vmax.f32 %v2210, 0.0
      %v2409 = vmax.f32 %v2323, 0.0
      %v2410 = vmax.f32 %v2213, 0.0
      %v2411 = vmax.f32 %v2326, 0.0
      %v2412 = vmax.f32 %v2216, 0.0
      %v2413 = vmax.f32 %v2329, 0.0
      %v2414 = vmax.f32 %v2219, 0.0
      %v2415 = vmax.f32 %v2332, 0.0
      %v2416 = vmax.f32 %v2222, 0.0
      %v2417 = vmax.f32 %v2335, 0.0
      %v2418 = vmax.f32 %v2225, 0.0
      %v2419 = vmax.f32 %v2338, 0.0
      %v2420 = vmax.f32 %v2228, 0.0
      %v2421 = vmax.f32 %v2341, 0.0
      %v2422 = vmax.f32 %v2231, 0.0
      %v2423 = vmax.f32 %v2344, 0.0
      %v2424 = vmax.f32 %v2234, 0.0
      %v2425 = vmax.f32 %v2347, 0.0
      %v2426 = vmax.f32 %v2237, 0.0
      %v2427 = vmax.f32 %v2350, 0.0
      %v2428 = vmax.f32 %v2240, 0.0
      %v2429 = vmax.f32 %v2353, 0.0
      %v2430 = vmax.f32 %v2243, 0.0
      %v2431 = vmax.f32 %v2356, 0.0
      %v2432 = vmax.f32 %v2246, 0.0
      %v2433 = vmax.f32 %v2359, 0.0
      %v2434 = vmax.f32 %v2249, 0.0
      %v2435 = vmax.f32 %v2362, 0.0
      %v2436 = vmax.f32 %v2252, 0.0
      %v2437 = vmax.f32 %v2365, 0.0
      %v2438 = vmax.f32 %v2255, 0.0
      %v2439 = vmax.f32 %v2368, 0.0
      %v2440 = vmax.f32 %v2258, 0.0
      %v2441 = vmax.f32 %v2371, 0.0
      %v2442 = vmax.f32 %v2261, 0.0
      %v2443 = vmax.f32 %v2374, 0.0
      %v2444 = vmax.f32 %v2264, 0.0
      %v2445 = vmax.f32 %v2377, 0.0
      %v2446 = vmax.f32 %v2267, 0.0
      %v2447 = vmax.f32 %v2380, 0.0
      %v2448 = vmax.f32 %v2270, 0.0
      %v2449 = vmax.f32 %v2383, 0.0
      %v2450 = vmax.f32 %v2273, 0.0
      %v2451 = vmax.f32 %v2386, 0.0
      %v2452 = vand.u32 2147483647, %v2180
      %v2453 = vand.u32 2147483647, %v2293
      %v2454 = vand.u32 2147483647, %v2183
      %v2455 = vand.u32 2147483647, %v2296
      %v2456 = vand.u32 2147483647, %v2186
      %v2457 = vand.u32 2147483647, %v2299
      %v2458 = vand.u32 2147483647, %v2189
      %v2459 = vand.u32 2147483647, %v2302
      %v2460 = vand.u32 2147483647, %v2192
      %v2461 = vand.u32 2147483647, %v2305
      %v2462 = vand.u32 2147483647, %v2195
      %v2463 = vand.u32 2147483647, %v2308
      %v2464 = vand.u32 2147483647, %v2198
      %v2465 = vand.u32 2147483647, %v2311
      %v2466 = vand.u32 2147483647, %v2201
      %v2467 = vand.u32 2147483647, %v2314
      %v2468 = vand.u32 2147483647, %v2204
      %v2469 = vand.u32 2147483647, %v2317
      %v2470 = vand.u32 2147483647, %v2207
      %v2471 = vand.u32 2147483647, %v2320
      %v2472 = vand.u32 2147483647, %v2210
      %v2473 = vand.u32 2147483647, %v2323
      %v2474 = vand.u32 2147483647, %v2213
      %v2475 = vand.u32 2147483647, %v2326
      %v2476 = vand.u32 2147483647, %v2216
      %v2477 = vand.u32 2147483647, %v2329
      %v2478 = vand.u32 2147483647, %v2219
      %v2479 = vand.u32 2147483647, %v2332
      %v2480 = vand.u32 2147483647, %v2222
      %v2481 = vand.u32 2147483647, %v2335
      %v2482 = vand.u32 2147483647, %v2225
      %v2483 = vand.u32 2147483647, %v2338
      %v2484 = vand.u32 2147483647, %v2228
      %v2485 = vand.u32 2147483647, %v2341
      %v2486 = vand.u32 2147483647, %v2231
      %v2487 = vand.u32 2147483647, %v2344
      %v2488 = vand.u32 2147483647, %v2234
      %v2489 = vand.u32 2147483647, %v2347
      %v2490 = vand.u32 2147483647, %v2237
      %v2491 = vand.u32 2147483647, %v2350
      %v2492 = vand.u32 2147483647, %v2240
      %v2493 = vand.u32 2147483647, %v2353
      %v2494 = vand.u32 2147483647, %v2243
      %v2495 = vand.u32 2147483647, %v2356
      %v2496 = vand.u32 2147483647, %v2246
      %v2497 = vand.u32 2147483647, %v2359
      %v2498 = vand.u32 2147483647, %v2249
      %v2499 = vand.u32 2147483647, %v2362
      %v2500 = vand.u32 2147483647, %v2252
      %v2501 = vand.u32 2147483647, %v2365
      %v2502 = vand.u32 2147483647, %v2255
      %v2503 = vand.u32 2147483647, %v2368
      %v2504 = vand.u32 2147483647, %v2258
      %v2505 = vand.u32 2147483647, %v2371
      %v2506 = vand.u32 2147483647, %v2261
      %v2507 = vand.u32 2147483647, %v2374
      %v2508 = vand.u32 2147483647, %v2264
      %v2509 = vand.u32 2147483647, %v2377
      %v2510 = vand.u32 2147483647, %v2267
      %v2511 = vand.u32 2147483647, %v2380
      %v2512 = vand.u32 2147483647, %v2270
      %v2513 = vand.u32 2147483647, %v2383
      %v2514 = vand.u32 2147483647, %v2273
      %v2515 = vand.u32 2147483647, %v2386
      %v2516 = vsub.f32 0.0, %v2452
      %v2517 = vsub.f32 0.0, %v2453
      %v2518 = vsub.f32 0.0, %v2454
      %v2519 = vsub.f32 0.0, %v2455
      %v2520 = vsub.f32 0.0, %v2456
      %v2521 = vsub.f32 0.0, %v2457
      %v2522 = vsub.f32 0.0, %v2458
      %v2523 = vsub.f32 0.0, %v2459
      %v2524 = vsub.f32 0.0, %v2460
      %v2525 = vsub.f32 0.0, %v2461
      %v2526 = vsub.f32 0.0, %v2462
      %v2527 = vsub.f32 0.0, %v2463
      %v2528 = vsub.f32 0.0, %v2464
      %v2529 = vsub.f32 0.0, %v2465
      %v2530 = vsub.f32 0.0, %v2466
      %v2531 = vsub.f32 0.0, %v2467
      %v2532 = vsub.f32 0.0, %v2468
      %v2533 = vsub.f32 0.0, %v2469
      %v2534 = vsub.f32 0.0, %v2470
      %v2535 = vsub.f32 0.0, %v2471
      %v2536 = vsub.f32 0.0, %v2472
      %v2537 = vsub.f32 0.0, %v2473
      %v2538 = vsub.f32 0.0, %v2474
      %v2539 = vsub.f32 0.0, %v2475
      %v2540 = vsub.f32 0.0, %v2476
      %v2541 = vsub.f32 0.0, %v2477
      %v2542 = vsub.f32 0.0, %v2478
      %v2543 = vsub.f32 0.0, %v2479
      %v2544 = vsub.f32 0.0, %v2480
      %v2545 = vsub.f32 0.0, %v2481
      %v2546 = vsub.f32 0.0, %v2482
      %v2547 = vsub.f32 0.0, %v2483
      %v2548 = vsub.f32 0.0, %v2484
      %v2549 = vsub.f32 0.0, %v2485
      %v2550 = vsub.f32 0.0, %v2486
      %v2551 = vsub.f32 0.0, %v2487
      %v2552 = vsub.f32 0.0, %v2488
      %v2553 = vsub.f32 0.0, %v2489
      %v2554 = vsub.f32 0.0, %v2490
      %v2555 = vsub.f32 0.0, %v2491
      %v2556 = vsub.f32 0.0, %v2492
      %v2557 = vsub.f32 0.0, %v2493
      %v2558 = vsub.f32 0.0, %v2494
      %v2559 = vsub.f32 0.0, %v2495
      %v2560 = vsub.f32 0.0, %v2496
      %v2561 = vsub.f32 0.0, %v2497
      %v2562 = vsub.f32 0.0, %v2498
      %v2563 = vsub.f32 0.0, %v2499
      %v2564 = vsub.f32 0.0, %v2500
      %v2565 = vsub.f32 0.0, %v2501
      %v2566 = vsub.f32 0.0, %v2502
      %v2567 = vsub.f32 0.0, %v2503
      %v2568 = vsub.f32 0.0, %v2504
      %v2569 = vsub.f32 0.0, %v2505
      %v2570 = vsub.f32 0.0, %v2506
      %v2571 = vsub.f32 0.0, %v2507
      %v2572 = vsub.f32 0.0, %v2508
      %v2573 = vsub.f32 0.0, %v2509
      %v2574 = vsub.f32 0.0, %v2510
      %v2575 = vsub.f32 0.0, %v2511
      %v2576 = vsub.f32 0.0, %v2512
      %v2577 = vsub.f32 0.0, %v2513
      %v2578 = vsub.f32 0.0, %v2514
      %v2579 = vsub.f32 0.0, %v2515
      %v2580 = vmul.f32 %v2516, 1.442695
      %v2581 = vpow.pop %v2580
      %v2582 = vmul.f32 %v2517, 1.442695
      %v2583 = vpow.pop %v2582
      %v2584 = vmul.f32 %v2518, 1.442695
      %v2585 = vpow.pop %v2584
      %v2586 = vmul.f32 %v2519, 1.442695
      %v2587 = vpow.pop %v2586
      %v2588 = vmul.f32 %v2520, 1.442695
      %v2589 = vpow.pop %v2588
      %v2590 = vmul.f32 %v2521, 1.442695
      %v2591 = vpow.pop %v2590
      %v2592 = vmul.f32 %v2522, 1.442695
      %v2593 = vpow.pop %v2592
      %v2594 = vmul.f32 %v2523, 1.442695
      %v2595 = vpow.pop %v2594
      %v2596 = vmul.f32 %v2524, 1.442695
      %v2597 = vpow.pop %v2596
      %v2598 = vmul.f32 %v2525, 1.442695
      %v2599 = vpow.pop %v2598
      %v2600 = vmul.f32 %v2526, 1.442695
      %v2601 = vpow.pop %v2600
      %v2602 = vmul.f32 %v2527, 1.442695
      %v2603 = vpow.pop %v2602
      %v2604 = vmul.f32 %v2528, 1.442695
      %v2605 = vpow.pop %v2604
      %v2606 = vmul.f32 %v2529, 1.442695
      %v2607 = vpow.pop %v2606
      %v2608 = vmul.f32 %v2530, 1.442695
      %v2609 = vpow.pop %v2608
      %v2610 = vmul.f32 %v2531, 1.442695
      %v2611 = vpow.pop %v2610
      %v2612 = vmul.f32 %v2532, 1.442695
      %v2613 = vpow.pop %v2612
      %v2614 = vmul.f32 %v2533, 1.442695
      %v2615 = vpow.pop %v2614
      %v2616 = vmul.f32 %v2534, 1.442695
      %v2617 = vpow.pop %v2616
      %v2618 = vmul.f32 %v2535, 1.442695
      %v2619 = vpow.pop %v2618
      %v2620 = vmul.f32 %v2536, 1.442695
      %v2621 = vpow.pop %v2620
      %v2622 = vmul.f32 %v2537, 1.442695
      %v2623 = vpow.pop %v2622
      %v2624 = vmul.f32 %v2538, 1.442695
      %v2625 = vpow.pop %v2624
      %v2626 = vmul.f32 %v2539, 1.442695
      %v2627 = vpow.pop %v2626
      %v2628 = vmul.f32 %v2540, 1.442695
      %v2629 = vpow.pop %v2628
      %v2630 = vmul.f32 %v2541, 1.442695
      %v2631 = vpow.pop %v2630
      %v2632 = vmul.f32 %v2542, 1.442695
      %v2633 = vpow.pop %v2632
      %v2634 = vmul.f32 %v2543, 1.442695
      %v2635 = vpow.pop %v2634
      %v2636 = vmul.f32 %v2544, 1.442695
      %v2637 = vpow.pop %v2636
      %v2638 = vmul.f32 %v2545, 1.442695
      %v2639 = vpow.pop %v2638
      %v2640 = vmul.f32 %v2546, 1.442695
      %v2641 = vpow.pop %v2640
      %v2642 = vmul.f32 %v2547, 1.442695
      %v2643 = vpow.pop %v2642
      %v2644 = vmul.f32 %v2548, 1.442695
      %v2645 = vpow.pop %v2644
      %v2646 = vmul.f32 %v2549, 1.442695
      %v2647 = vpow.pop %v2646
      %v2648 = vmul.f32 %v2550, 1.442695
      %v2649 = vpow.pop %v2648
      %v2650 = vmul.f32 %v2551, 1.442695
      %v2651 = vpow.pop %v2650
      %v2652 = vmul.f32 %v2552, 1.442695
      %v2653 = vpow.pop %v2652
      %v2654 = vmul.f32 %v2553, 1.442695
      %v2655 = vpow.pop %v2654
      %v2656 = vmul.f32 %v2554, 1.442695
      %v2657 = vpow.pop %v2656
      %v2658 = vmul.f32 %v2555, 1.442695
      %v2659 = vpow.pop %v2658
      %v2660 = vmul.f32 %v2556, 1.442695
      %v2661 = vpow.pop %v2660
      %v2662 = vmul.f32 %v2557, 1.442695
      %v2663 = vpow.pop %v2662
      %v2664 = vmul.f32 %v2558, 1.442695
      %v2665 = vpow.pop %v2664
      %v2666 = vmul.f32 %v2559, 1.442695
      %v2667 = vpow.pop %v2666
      %v2668 = vmul.f32 %v2560, 1.442695
      %v2669 = vpow.pop %v2668
      %v2670 = vmul.f32 %v2561, 1.442695
      %v2671 = vpow.pop %v2670
      %v2672 = vmul.f32 %v2562, 1.442695
      %v2673 = vpow.pop %v2672
      %v2674 = vmul.f32 %v2563, 1.442695
      %v2675 = vpow.pop %v2674
      %v2676 = vmul.f32 %v2564, 1.442695
      %v2677 = vpow.pop %v2676
      %v2678 = vmul.f32 %v2565, 1.442695
      %v2679 = vpow.pop %v2678
      %v2680 = vmul.f32 %v2566, 1.442695
      %v2681 = vpow.pop %v2680
      %v2682 = vmul.f32 %v2567, 1.442695
      %v2683 = vpow.pop %v2682
      %v2684 = vmul.f32 %v2568, 1.442695
      %v2685 = vpow.pop %v2684
      %v2686 = vmul.f32 %v2569, 1.442695
      %v2687 = vpow.pop %v2686
      %v2688 = vmul.f32 %v2570, 1.442695
      %v2689 = vpow.pop %v2688
      %v2690 = vmul.f32 %v2571, 1.442695
      %v2691 = vpow.pop %v2690
      %v2692 = vmul.f32 %v2572, 1.442695
      %v2693 = vpow.pop %v2692
      %v2694 = vmul.f32 %v2573, 1.442695
      %v2695 = vpow.pop %v2694
      %v2696 = vmul.f32 %v2574, 1.442695
      %v2697 = vpow.pop %v2696
      %v2698 = vmul.f32 %v2575, 1.442695
      %v2699 = vpow.pop %v2698
      %v2700 = vmul.f32 %v2576, 1.442695
      %v2701 = vpow.pop %v2700
      %v2702 = vmul.f32 %v2577, 1.442695
      %v2703 = vpow.pop %v2702
      %v2704 = vmul.f32 %v2578, 1.442695
      %v2705 = vpow.pop %v2704
      %v2706 = vmul.f32 %v2579, 1.442695
      %v2707 = vpow.pop %v2706
      %v2708 = vadd.f32 %v2581, 1.0
      %v2709 = vlog2.pop %v2708
      %v2710 = vmul.f32 %v2709, 0.6931472
      %v2711 = vmul.f32 -0.5, %v2581
      %v2712 = vadd.f32 %v2711, 1.0
      %v2713 = vmul.f32 %v2712, %v2581
      %v2714 = vand.u32 2147483647, %v2581
      %vm2715 = vcmp.lt.f32.partialorder %v2714, 0.0004427343
      %v2716 = vsel %vm2715, %v2713, %v2710
      %v2717 = vadd.f32 %v2583, 1.0
      %v2718 = vlog2.pop %v2717
      %v2719 = vmul.f32 %v2718, 0.6931472
      %v2720 = vmul.f32 -0.5, %v2583
      %v2721 = vadd.f32 %v2720, 1.0
      %v2722 = vmul.f32 %v2721, %v2583
      %v2723 = vand.u32 2147483647, %v2583
      %vm2724 = vcmp.lt.f32.partialorder %v2723, 0.0004427343
      %v2725 = vsel %vm2724, %v2722, %v2719
      %v2726 = vadd.f32 %v2585, 1.0
      %v2727 = vlog2.pop %v2726
      %v2728 = vmul.f32 %v2727, 0.6931472
      %v2729 = vmul.f32 -0.5, %v2585
      %v2730 = vadd.f32 %v2729, 1.0
      %v2731 = vmul.f32 %v2730, %v2585
      %v2732 = vand.u32 2147483647, %v2585
      %vm2733 = vcmp.lt.f32.partialorder %v2732, 0.0004427343
      %v2734 = vsel %vm2733, %v2731, %v2728
      %v2735 = vadd.f32 %v2587, 1.0
      %v2736 = vlog2.pop %v2735
      %v2737 = vmul.f32 %v2736, 0.6931472
      %v2738 = vmul.f32 -0.5, %v2587
      %v2739 = vadd.f32 %v2738, 1.0
      %v2740 = vmul.f32 %v2739, %v2587
      %v2741 = vand.u32 2147483647, %v2587
      %vm2742 = vcmp.lt.f32.partialorder %v2741, 0.0004427343
      %v2743 = vsel %vm2742, %v2740, %v2737
      %v2744 = vadd.f32 %v2589, 1.0
      %v2745 = vlog2.pop %v2744
      %v2746 = vmul.f32 %v2745, 0.6931472
      %v2747 = vmul.f32 -0.5, %v2589
      %v2748 = vadd.f32 %v2747, 1.0
      %v2749 = vmul.f32 %v2748, %v2589
      %v2750 = vand.u32 2147483647, %v2589
      %vm2751 = vcmp.lt.f32.partialorder %v2750, 0.0004427343
      %v2752 = vsel %vm2751, %v2749, %v2746
      %v2753 = vadd.f32 %v2591, 1.0
      %v2754 = vlog2.pop %v2753
      %v2755 = vmul.f32 %v2754, 0.6931472
      %v2756 = vmul.f32 -0.5, %v2591
      %v2757 = vadd.f32 %v2756, 1.0
      %v2758 = vmul.f32 %v2757, %v2591
      %v2759 = vand.u32 2147483647, %v2591
      %vm2760 = vcmp.lt.f32.partialorder %v2759, 0.0004427343
      %v2761 = vsel %vm2760, %v2758, %v2755
      %v2762 = vadd.f32 %v2593, 1.0
      %v2763 = vlog2.pop %v2762
      %v2764 = vmul.f32 %v2763, 0.6931472
      %v2765 = vmul.f32 -0.5, %v2593
      %v2766 = vadd.f32 %v2765, 1.0
      %v2767 = vmul.f32 %v2766, %v2593
      %v2768 = vand.u32 2147483647, %v2593
      %vm2769 = vcmp.lt.f32.partialorder %v2768, 0.0004427343
      %v2770 = vsel %vm2769, %v2767, %v2764
      %v2771 = vadd.f32 %v2595, 1.0
      %v2772 = vlog2.pop %v2771
      %v2773 = vmul.f32 %v2772, 0.6931472
      %v2774 = vmul.f32 -0.5, %v2595
      %v2775 = vadd.f32 %v2774, 1.0
      %v2776 = vmul.f32 %v2775, %v2595
      %v2777 = vand.u32 2147483647, %v2595
      %vm2778 = vcmp.lt.f32.partialorder %v2777, 0.0004427343
      %v2779 = vsel %vm2778, %v2776, %v2773
      %v2780 = vadd.f32 %v2597, 1.0
      %v2781 = vlog2.pop %v2780
      %v2782 = vmul.f32 %v2781, 0.6931472
      %v2783 = vmul.f32 -0.5, %v2597
      %v2784 = vadd.f32 %v2783, 1.0
      %v2785 = vmul.f32 %v2784, %v2597
      %v2786 = vand.u32 2147483647, %v2597
      %vm2787 = vcmp.lt.f32.partialorder %v2786, 0.0004427343
      %v2788 = vsel %vm2787, %v2785, %v2782
      %v2789 = vadd.f32 %v2599, 1.0
      %v2790 = vlog2.pop %v2789
      %v2791 = vmul.f32 %v2790, 0.6931472
      %v2792 = vmul.f32 -0.5, %v2599
      %v2793 = vadd.f32 %v2792, 1.0
      %v2794 = vmul.f32 %v2793, %v2599
      %v2795 = vand.u32 2147483647, %v2599
      %vm2796 = vcmp.lt.f32.partialorder %v2795, 0.0004427343
      %v2797 = vsel %vm2796, %v2794, %v2791
      %v2798 = vadd.f32 %v2601, 1.0
      %v2799 = vlog2.pop %v2798
      %v2800 = vmul.f32 %v2799, 0.6931472
      %v2801 = vmul.f32 -0.5, %v2601
      %v2802 = vadd.f32 %v2801, 1.0
      %v2803 = vmul.f32 %v2802, %v2601
      %v2804 = vand.u32 2147483647, %v2601
      %vm2805 = vcmp.lt.f32.partialorder %v2804, 0.0004427343
      %v2806 = vsel %vm2805, %v2803, %v2800
      %v2807 = vadd.f32 %v2603, 1.0
      %v2808 = vlog2.pop %v2807
      %v2809 = vmul.f32 %v2808, 0.6931472
      %v2810 = vmul.f32 -0.5, %v2603
      %v2811 = vadd.f32 %v2810, 1.0
      %v2812 = vmul.f32 %v2811, %v2603
      %v2813 = vand.u32 2147483647, %v2603
      %vm2814 = vcmp.lt.f32.partialorder %v2813, 0.0004427343
      %v2815 = vsel %vm2814, %v2812, %v2809
      %v2816 = vadd.f32 %v2605, 1.0
      %v2817 = vlog2.pop %v2816
      %v2818 = vmul.f32 %v2817, 0.6931472
      %v2819 = vmul.f32 -0.5, %v2605
      %v2820 = vadd.f32 %v2819, 1.0
      %v2821 = vmul.f32 %v2820, %v2605
      %v2822 = vand.u32 2147483647, %v2605
      %vm2823 = vcmp.lt.f32.partialorder %v2822, 0.0004427343
      %v2824 = vsel %vm2823, %v2821, %v2818
      %v2825 = vadd.f32 %v2607, 1.0
      %v2826 = vlog2.pop %v2825
      %v2827 = vmul.f32 %v2826, 0.6931472
      %v2828 = vmul.f32 -0.5, %v2607
      %v2829 = vadd.f32 %v2828, 1.0
      %v2830 = vmul.f32 %v2829, %v2607
      %v2831 = vand.u32 2147483647, %v2607
      %vm2832 = vcmp.lt.f32.partialorder %v2831, 0.0004427343
      %v2833 = vsel %vm2832, %v2830, %v2827
      %v2834 = vadd.f32 %v2609, 1.0
      %v2835 = vlog2.pop %v2834
      %v2836 = vmul.f32 %v2835, 0.6931472
      %v2837 = vmul.f32 -0.5, %v2609
      %v2838 = vadd.f32 %v2837, 1.0
      %v2839 = vmul.f32 %v2838, %v2609
      %v2840 = vand.u32 2147483647, %v2609
      %vm2841 = vcmp.lt.f32.partialorder %v2840, 0.0004427343
      %v2842 = vsel %vm2841, %v2839, %v2836
      %v2843 = vadd.f32 %v2611, 1.0
      %v2844 = vlog2.pop %v2843
      %v2845 = vmul.f32 %v2844, 0.6931472
      %v2846 = vmul.f32 -0.5, %v2611
      %v2847 = vadd.f32 %v2846, 1.0
      %v2848 = vmul.f32 %v2847, %v2611
      %v2849 = vand.u32 2147483647, %v2611
      %vm2850 = vcmp.lt.f32.partialorder %v2849, 0.0004427343
      %v2851 = vsel %vm2850, %v2848, %v2845
      %v2852 = vadd.f32 %v2613, 1.0
      %v2853 = vlog2.pop %v2852
      %v2854 = vmul.f32 %v2853, 0.6931472
      %v2855 = vmul.f32 -0.5, %v2613
      %v2856 = vadd.f32 %v2855, 1.0
      %v2857 = vmul.f32 %v2856, %v2613
      %v2858 = vand.u32 2147483647, %v2613
      %vm2859 = vcmp.lt.f32.partialorder %v2858, 0.0004427343
      %v2860 = vsel %vm2859, %v2857, %v2854
      %v2861 = vadd.f32 %v2615, 1.0
      %v2862 = vlog2.pop %v2861
      %v2863 = vmul.f32 %v2862, 0.6931472
      %v2864 = vmul.f32 -0.5, %v2615
      %v2865 = vadd.f32 %v2864, 1.0
      %v2866 = vmul.f32 %v2865, %v2615
      %v2867 = vand.u32 2147483647, %v2615
      %vm2868 = vcmp.lt.f32.partialorder %v2867, 0.0004427343
      %v2869 = vsel %vm2868, %v2866, %v2863
      %v2870 = vadd.f32 %v2617, 1.0
      %v2871 = vlog2.pop %v2870
      %v2872 = vmul.f32 %v2871, 0.6931472
      %v2873 = vmul.f32 -0.5, %v2617
      %v2874 = vadd.f32 %v2873, 1.0
      %v2875 = vmul.f32 %v2874, %v2617
      %v2876 = vand.u32 2147483647, %v2617
      %vm2877 = vcmp.lt.f32.partialorder %v2876, 0.0004427343
      %v2878 = vsel %vm2877, %v2875, %v2872
      %v2879 = vadd.f32 %v2619, 1.0
      %v2880 = vlog2.pop %v2879
      %v2881 = vmul.f32 %v2880, 0.6931472
      %v2882 = vmul.f32 -0.5, %v2619
      %v2883 = vadd.f32 %v2882, 1.0
      %v2884 = vmul.f32 %v2883, %v2619
      %v2885 = vand.u32 2147483647, %v2619
      %vm2886 = vcmp.lt.f32.partialorder %v2885, 0.0004427343
      %v2887 = vsel %vm2886, %v2884, %v2881
      %v2888 = vadd.f32 %v2621, 1.0
      %v2889 = vlog2.pop %v2888
      %v2890 = vmul.f32 %v2889, 0.6931472
      %v2891 = vmul.f32 -0.5, %v2621
      %v2892 = vadd.f32 %v2891, 1.0
      %v2893 = vmul.f32 %v2892, %v2621
      %v2894 = vand.u32 2147483647, %v2621
      %vm2895 = vcmp.lt.f32.partialorder %v2894, 0.0004427343
      %v2896 = vsel %vm2895, %v2893, %v2890
      %v2897 = vadd.f32 %v2623, 1.0
      %v2898 = vlog2.pop %v2897
      %v2899 = vmul.f32 %v2898, 0.6931472
      %v2900 = vmul.f32 -0.5, %v2623
      %v2901 = vadd.f32 %v2900, 1.0
      %v2902 = vmul.f32 %v2901, %v2623
      %v2903 = vand.u32 2147483647, %v2623
      %vm2904 = vcmp.lt.f32.partialorder %v2903, 0.0004427343
      %v2905 = vsel %vm2904, %v2902, %v2899
      %v2906 = vadd.f32 %v2625, 1.0
      %v2907 = vlog2.pop %v2906
      %v2908 = vmul.f32 %v2907, 0.6931472
      %v2909 = vmul.f32 -0.5, %v2625
      %v2910 = vadd.f32 %v2909, 1.0
      %v2911 = vmul.f32 %v2910, %v2625
      %v2912 = vand.u32 2147483647, %v2625
      %vm2913 = vcmp.lt.f32.partialorder %v2912, 0.0004427343
      %v2914 = vsel %vm2913, %v2911, %v2908
      %v2915 = vadd.f32 %v2627, 1.0
      %v2916 = vlog2.pop %v2915
      %v2917 = vmul.f32 %v2916, 0.6931472
      %v2918 = vmul.f32 -0.5, %v2627
      %v2919 = vadd.f32 %v2918, 1.0
      %v2920 = vmul.f32 %v2919, %v2627
      %v2921 = vand.u32 2147483647, %v2627
      %vm2922 = vcmp.lt.f32.partialorder %v2921, 0.0004427343
      %v2923 = vsel %vm2922, %v2920, %v2917
      %v2924 = vadd.f32 %v2629, 1.0
      %v2925 = vlog2.pop %v2924
      %v2926 = vmul.f32 %v2925, 0.6931472
      %v2927 = vmul.f32 -0.5, %v2629
      %v2928 = vadd.f32 %v2927, 1.0
      %v2929 = vmul.f32 %v2928, %v2629
      %v2930 = vand.u32 2147483647, %v2629
      %vm2931 = vcmp.lt.f32.partialorder %v2930, 0.0004427343
      %v2932 = vsel %vm2931, %v2929, %v2926
      %v2933 = vadd.f32 %v2631, 1.0
      %v2934 = vlog2.pop %v2933
      %v2935 = vmul.f32 %v2934, 0.6931472
      %v2936 = vmul.f32 -0.5, %v2631
      %v2937 = vadd.f32 %v2936, 1.0
      %v2938 = vmul.f32 %v2937, %v2631
      %v2939 = vand.u32 2147483647, %v2631
      %vm2940 = vcmp.lt.f32.partialorder %v2939, 0.0004427343
      %v2941 = vsel %vm2940, %v2938, %v2935
      %v2942 = vadd.f32 %v2633, 1.0
      %v2943 = vlog2.pop %v2942
      %v2944 = vmul.f32 %v2943, 0.6931472
      %v2945 = vmul.f32 -0.5, %v2633
      %v2946 = vadd.f32 %v2945, 1.0
      %v2947 = vmul.f32 %v2946, %v2633
      %v2948 = vand.u32 2147483647, %v2633
      %vm2949 = vcmp.lt.f32.partialorder %v2948, 0.0004427343
      %v2950 = vsel %vm2949, %v2947, %v2944
      %v2951 = vadd.f32 %v2635, 1.0
      %v2952 = vlog2.pop %v2951
      %v2953 = vmul.f32 %v2952, 0.6931472
      %v2954 = vmul.f32 -0.5, %v2635
      %v2955 = vadd.f32 %v2954, 1.0
      %v2956 = vmul.f32 %v2955, %v2635
      %v2957 = vand.u32 2147483647, %v2635
      %vm2958 = vcmp.lt.f32.partialorder %v2957, 0.0004427343
      %v2959 = vsel %vm2958, %v2956, %v2953
      %v2960 = vadd.f32 %v2637, 1.0
      %v2961 = vlog2.pop %v2960
      %v2962 = vmul.f32 %v2961, 0.6931472
      %v2963 = vmul.f32 -0.5, %v2637
      %v2964 = vadd.f32 %v2963, 1.0
      %v2965 = vmul.f32 %v2964, %v2637
      %v2966 = vand.u32 2147483647, %v2637
      %vm2967 = vcmp.lt.f32.partialorder %v2966, 0.0004427343
      %v2968 = vsel %vm2967, %v2965, %v2962
      %v2969 = vadd.f32 %v2639, 1.0
      %v2970 = vlog2.pop %v2969
      %v2971 = vmul.f32 %v2970, 0.6931472
      %v2972 = vmul.f32 -0.5, %v2639
      %v2973 = vadd.f32 %v2972, 1.0
      %v2974 = vmul.f32 %v2973, %v2639
      %v2975 = vand.u32 2147483647, %v2639
      %vm2976 = vcmp.lt.f32.partialorder %v2975, 0.0004427343
      %v2977 = vsel %vm2976, %v2974, %v2971
      %v2978 = vadd.f32 %v2641, 1.0
      %v2979 = vlog2.pop %v2978
      %v2980 = vmul.f32 %v2979, 0.6931472
      %v2981 = vmul.f32 -0.5, %v2641
      %v2982 = vadd.f32 %v2981, 1.0
      %v2983 = vmul.f32 %v2982, %v2641
      %v2984 = vand.u32 2147483647, %v2641
      %vm2985 = vcmp.lt.f32.partialorder %v2984, 0.0004427343
      %v2986 = vsel %vm2985, %v2983, %v2980
      %v2987 = vadd.f32 %v2643, 1.0
      %v2988 = vlog2.pop %v2987
      %v2989 = vmul.f32 %v2988, 0.6931472
      %v2990 = vmul.f32 -0.5, %v2643
      %v2991 = vadd.f32 %v2990, 1.0
      %v2992 = vmul.f32 %v2991, %v2643
      %v2993 = vand.u32 2147483647, %v2643
      %vm2994 = vcmp.lt.f32.partialorder %v2993, 0.0004427343
      %v2995 = vsel %vm2994, %v2992, %v2989
      %v2996 = vadd.f32 %v2645, 1.0
      %v2997 = vlog2.pop %v2996
      %v2998 = vmul.f32 %v2997, 0.6931472
      %v2999 = vmul.f32 -0.5, %v2645
      %v3000 = vadd.f32 %v2999, 1.0
      %v3001 = vmul.f32 %v3000, %v2645
      %v3002 = vand.u32 2147483647, %v2645
      %vm3003 = vcmp.lt.f32.partialorder %v3002, 0.0004427343
      %v3004 = vsel %vm3003, %v3001, %v2998
      %v3005 = vadd.f32 %v2647, 1.0
      %v3006 = vlog2.pop %v3005
      %v3007 = vmul.f32 %v3006, 0.6931472
      %v3008 = vmul.f32 -0.5, %v2647
      %v3009 = vadd.f32 %v3008, 1.0
      %v3010 = vmul.f32 %v3009, %v2647
      %v3011 = vand.u32 2147483647, %v2647
      %vm3012 = vcmp.lt.f32.partialorder %v3011, 0.0004427343
      %v3013 = vsel %vm3012, %v3010, %v3007
      %v3014 = vadd.f32 %v2649, 1.0
      %v3015 = vlog2.pop %v3014
      %v3016 = vmul.f32 %v3015, 0.6931472
      %v3017 = vmul.f32 -0.5, %v2649
      %v3018 = vadd.f32 %v3017, 1.0
      %v3019 = vmul.f32 %v3018, %v2649
      %v3020 = vand.u32 2147483647, %v2649
      %vm3021 = vcmp.lt.f32.partialorder %v3020, 0.0004427343
      %v3022 = vsel %vm3021, %v3019, %v3016
      %v3023 = vadd.f32 %v2651, 1.0
      %v3024 = vlog2.pop %v3023
      %v3025 = vmul.f32 %v3024, 0.6931472
      %v3026 = vmul.f32 -0.5, %v2651
      %v3027 = vadd.f32 %v3026, 1.0
      %v3028 = vmul.f32 %v3027, %v2651
      %v3029 = vand.u32 2147483647, %v2651
      %vm3030 = vcmp.lt.f32.partialorder %v3029, 0.0004427343
      %v3031 = vsel %vm3030, %v3028, %v3025
      %v3032 = vadd.f32 %v2653, 1.0
      %v3033 = vlog2.pop %v3032
      %v3034 = vmul.f32 %v3033, 0.6931472
      %v3035 = vmul.f32 -0.5, %v2653
      %v3036 = vadd.f32 %v3035, 1.0
      %v3037 = vmul.f32 %v3036, %v2653
      %v3038 = vand.u32 2147483647, %v2653
      %vm3039 = vcmp.lt.f32.partialorder %v3038, 0.0004427343
      %v3040 = vsel %vm3039, %v3037, %v3034
      %v3041 = vadd.f32 %v2655, 1.0
      %v3042 = vlog2.pop %v3041
      %v3043 = vmul.f32 %v3042, 0.6931472
      %v3044 = vmul.f32 -0.5, %v2655
      %v3045 = vadd.f32 %v3044, 1.0
      %v3046 = vmul.f32 %v3045, %v2655
      %v3047 = vand.u32 2147483647, %v2655
      %vm3048 = vcmp.lt.f32.partialorder %v3047, 0.0004427343
      %v3049 = vsel %vm3048, %v3046, %v3043
      %v3050 = vadd.f32 %v2657, 1.0
      %v3051 = vlog2.pop %v3050
      %v3052 = vmul.f32 %v3051, 0.6931472
      %v3053 = vmul.f32 -0.5, %v2657
      %v3054 = vadd.f32 %v3053, 1.0
      %v3055 = vmul.f32 %v3054, %v2657
      %v3056 = vand.u32 2147483647, %v2657
      %vm3057 = vcmp.lt.f32.partialorder %v3056, 0.0004427343
      %v3058 = vsel %vm3057, %v3055, %v3052
      %v3059 = vadd.f32 %v2659, 1.0
      %v3060 = vlog2.pop %v3059
      %v3061 = vmul.f32 %v3060, 0.6931472
      %v3062 = vmul.f32 -0.5, %v2659
      %v3063 = vadd.f32 %v3062, 1.0
      %v3064 = vmul.f32 %v3063, %v2659
      %v3065 = vand.u32 2147483647, %v2659
      %vm3066 = vcmp.lt.f32.partialorder %v3065, 0.0004427343
      %v3067 = vsel %vm3066, %v3064, %v3061
      %v3068 = vadd.f32 %v2661, 1.0
      %v3069 = vlog2.pop %v3068
      %v3070 = vmul.f32 %v3069, 0.6931472
      %v3071 = vmul.f32 -0.5, %v2661
      %v3072 = vadd.f32 %v3071, 1.0
      %v3073 = vmul.f32 %v3072, %v2661
      %v3074 = vand.u32 2147483647, %v2661
      %vm3075 = vcmp.lt.f32.partialorder %v3074, 0.0004427343
      %v3076 = vsel %vm3075, %v3073, %v3070
      %v3077 = vadd.f32 %v2663, 1.0
      %v3078 = vlog2.pop %v3077
      %v3079 = vmul.f32 %v3078, 0.6931472
      %v3080 = vmul.f32 -0.5, %v2663
      %v3081 = vadd.f32 %v3080, 1.0
      %v3082 = vmul.f32 %v3081, %v2663
      %v3083 = vand.u32 2147483647, %v2663
      %vm3084 = vcmp.lt.f32.partialorder %v3083, 0.0004427343
      %v3085 = vsel %vm3084, %v3082, %v3079
      %v3086 = vadd.f32 %v2665, 1.0
      %v3087 = vlog2.pop %v3086
      %v3088 = vmul.f32 %v3087, 0.6931472
      %v3089 = vmul.f32 -0.5, %v2665
      %v3090 = vadd.f32 %v3089, 1.0
      %v3091 = vmul.f32 %v3090, %v2665
      %v3092 = vand.u32 2147483647, %v2665
      %vm3093 = vcmp.lt.f32.partialorder %v3092, 0.0004427343
      %v3094 = vsel %vm3093, %v3091, %v3088
      %v3095 = vadd.f32 %v2667, 1.0
      %v3096 = vlog2.pop %v3095
      %v3097 = vmul.f32 %v3096, 0.6931472
      %v3098 = vmul.f32 -0.5, %v2667
      %v3099 = vadd.f32 %v3098, 1.0
      %v3100 = vmul.f32 %v3099, %v2667
      %v3101 = vand.u32 2147483647, %v2667
      %vm3102 = vcmp.lt.f32.partialorder %v3101, 0.0004427343
      %v3103 = vsel %vm3102, %v3100, %v3097
      %v3104 = vadd.f32 %v2669, 1.0
      %v3105 = vlog2.pop %v3104
      %v3106 = vmul.f32 %v3105, 0.6931472
      %v3107 = vmul.f32 -0.5, %v2669
      %v3108 = vadd.f32 %v3107, 1.0
      %v3109 = vmul.f32 %v3108, %v2669
      %v3110 = vand.u32 2147483647, %v2669
      %vm3111 = vcmp.lt.f32.partialorder %v3110, 0.0004427343
      %v3112 = vsel %vm3111, %v3109, %v3106
      %v3113 = vadd.f32 %v2671, 1.0
      %v3114 = vlog2.pop %v3113
      %v3115 = vmul.f32 %v3114, 0.6931472
      %v3116 = vmul.f32 -0.5, %v2671
      %v3117 = vadd.f32 %v3116, 1.0
      %v3118 = vmul.f32 %v3117, %v2671
      %v3119 = vand.u32 2147483647, %v2671
      %vm3120 = vcmp.lt.f32.partialorder %v3119, 0.0004427343
      %v3121 = vsel %vm3120, %v3118, %v3115
      %v3122 = vadd.f32 %v2673, 1.0
      %v3123 = vlog2.pop %v3122
      %v3124 = vmul.f32 %v3123, 0.6931472
      %v3125 = vmul.f32 -0.5, %v2673
      %v3126 = vadd.f32 %v3125, 1.0
      %v3127 = vmul.f32 %v3126, %v2673
      %v3128 = vand.u32 2147483647, %v2673
      %vm3129 = vcmp.lt.f32.partialorder %v3128, 0.0004427343
      %v3130 = vsel %vm3129, %v3127, %v3124
      %v3131 = vadd.f32 %v2675, 1.0
      %v3132 = vlog2.pop %v3131
      %v3133 = vmul.f32 %v3132, 0.6931472
      %v3134 = vmul.f32 -0.5, %v2675
      %v3135 = vadd.f32 %v3134, 1.0
      %v3136 = vmul.f32 %v3135, %v2675
      %v3137 = vand.u32 2147483647, %v2675
      %vm3138 = vcmp.lt.f32.partialorder %v3137, 0.0004427343
      %v3139 = vsel %vm3138, %v3136, %v3133
      %v3140 = vadd.f32 %v2677, 1.0
      %v3141 = vlog2.pop %v3140
      %v3142 = vmul.f32 %v3141, 0.6931472
      %v3143 = vmul.f32 -0.5, %v2677
      %v3144 = vadd.f32 %v3143, 1.0
      %v3145 = vmul.f32 %v3144, %v2677
      %v3146 = vand.u32 2147483647, %v2677
      %vm3147 = vcmp.lt.f32.partialorder %v3146, 0.0004427343
      %v3148 = vsel %vm3147, %v3145, %v3142
      %v3149 = vadd.f32 %v2679, 1.0
      %v3150 = vlog2.pop %v3149
      %v3151 = vmul.f32 %v3150, 0.6931472
      %v3152 = vmul.f32 -0.5, %v2679
      %v3153 = vadd.f32 %v3152, 1.0
      %v3154 = vmul.f32 %v3153, %v2679
      %v3155 = vand.u32 2147483647, %v2679
      %vm3156 = vcmp.lt.f32.partialorder %v3155, 0.0004427343
      %v3157 = vsel %vm3156, %v3154, %v3151
      %v3158 = vadd.f32 %v2681, 1.0
      %v3159 = vlog2.pop %v3158
      %v3160 = vmul.f32 %v3159, 0.6931472
      %v3161 = vmul.f32 -0.5, %v2681
      %v3162 = vadd.f32 %v3161, 1.0
      %v3163 = vmul.f32 %v3162, %v2681
      %v3164 = vand.u32 2147483647, %v2681
      %vm3165 = vcmp.lt.f32.partialorder %v3164, 0.0004427343
      %v3166 = vsel %vm3165, %v3163, %v3160
      %v3167 = vadd.f32 %v2683, 1.0
      %v3168 = vlog2.pop %v3167
      %v3169 = vmul.f32 %v3168, 0.6931472
      %v3170 = vmul.f32 -0.5, %v2683
      %v3171 = vadd.f32 %v3170, 1.0
      %v3172 = vmul.f32 %v3171, %v2683
      %v3173 = vand.u32 2147483647, %v2683
      %vm3174 = vcmp.lt.f32.partialorder %v3173, 0.0004427343
      %v3175 = vsel %vm3174, %v3172, %v3169
      %v3176 = vadd.f32 %v2685, 1.0
      %v3177 = vlog2.pop %v3176
      %v3178 = vmul.f32 %v3177, 0.6931472
      %v3179 = vmul.f32 -0.5, %v2685
      %v3180 = vadd.f32 %v3179, 1.0
      %v3181 = vmul.f32 %v3180, %v2685
      %v3182 = vand.u32 2147483647, %v2685
      %vm3183 = vcmp.lt.f32.partialorder %v3182, 0.0004427343
      %v3184 = vsel %vm3183, %v3181, %v3178
      %v3185 = vadd.f32 %v2687, 1.0
      %v3186 = vlog2.pop %v3185
      %v3187 = vmul.f32 %v3186, 0.6931472
      %v3188 = vmul.f32 -0.5, %v2687
      %v3189 = vadd.f32 %v3188, 1.0
      %v3190 = vmul.f32 %v3189, %v2687
      %v3191 = vand.u32 2147483647, %v2687
      %vm3192 = vcmp.lt.f32.partialorder %v3191, 0.0004427343
      %v3193 = vsel %vm3192, %v3190, %v3187
      %v3194 = vadd.f32 %v2689, 1.0
      %v3195 = vlog2.pop %v3194
      %v3196 = vmul.f32 %v3195, 0.6931472
      %v3197 = vmul.f32 -0.5, %v2689
      %v3198 = vadd.f32 %v3197, 1.0
      %v3199 = vmul.f32 %v3198, %v2689
      %v3200 = vand.u32 2147483647, %v2689
      %vm3201 = vcmp.lt.f32.partialorder %v3200, 0.0004427343
      %v3202 = vsel %vm3201, %v3199, %v3196
      %v3203 = vadd.f32 %v2691, 1.0
      %v3204 = vlog2.pop %v3203
      %v3205 = vmul.f32 %v3204, 0.6931472
      %v3206 = vmul.f32 -0.5, %v2691
      %v3207 = vadd.f32 %v3206, 1.0
      %v3208 = vmul.f32 %v3207, %v2691
      %v3209 = vand.u32 2147483647, %v2691
      %vm3210 = vcmp.lt.f32.partialorder %v3209, 0.0004427343
      %v3211 = vsel %vm3210, %v3208, %v3205
      %v3212 = vadd.f32 %v2693, 1.0
      %v3213 = vlog2.pop %v3212
      %v3214 = vmul.f32 %v3213, 0.6931472
      %v3215 = vmul.f32 -0.5, %v2693
      %v3216 = vadd.f32 %v3215, 1.0
      %v3217 = vmul.f32 %v3216, %v2693
      %v3218 = vand.u32 2147483647, %v2693
      %vm3219 = vcmp.lt.f32.partialorder %v3218, 0.0004427343
      %v3220 = vsel %vm3219, %v3217, %v3214
      %v3221 = vadd.f32 %v2695, 1.0
      %v3222 = vlog2.pop %v3221
      %v3223 = vmul.f32 %v3222, 0.6931472
      %v3224 = vmul.f32 -0.5, %v2695
      %v3225 = vadd.f32 %v3224, 1.0
      %v3226 = vmul.f32 %v3225, %v2695
      %v3227 = vand.u32 2147483647, %v2695
      %vm3228 = vcmp.lt.f32.partialorder %v3227, 0.0004427343
      %v3229 = vsel %vm3228, %v3226, %v3223
      %v3230 = vadd.f32 %v2697, 1.0
      %v3231 = vlog2.pop %v3230
      %v3232 = vmul.f32 %v3231, 0.6931472
      %v3233 = vmul.f32 -0.5, %v2697
      %v3234 = vadd.f32 %v3233, 1.0
      %v3235 = vmul.f32 %v3234, %v2697
      %v3236 = vand.u32 2147483647, %v2697
      %vm3237 = vcmp.lt.f32.partialorder %v3236, 0.0004427343
      %v3238 = vsel %vm3237, %v3235, %v3232
      %v3239 = vadd.f32 %v2699, 1.0
      %v3240 = vlog2.pop %v3239
      %v3241 = vmul.f32 %v3240, 0.6931472
      %v3242 = vmul.f32 -0.5, %v2699
      %v3243 = vadd.f32 %v3242, 1.0
      %v3244 = vmul.f32 %v3243, %v2699
      %v3245 = vand.u32 2147483647, %v2699
      %vm3246 = vcmp.lt.f32.partialorder %v3245, 0.0004427343
      %v3247 = vsel %vm3246, %v3244, %v3241
      %v3248 = vadd.f32 %v2701, 1.0
      %v3249 = vlog2.pop %v3248
      %v3250 = vmul.f32 %v3249, 0.6931472
      %v3251 = vmul.f32 -0.5, %v2701
      %v3252 = vadd.f32 %v3251, 1.0
      %v3253 = vmul.f32 %v3252, %v2701
      %v3254 = vand.u32 2147483647, %v2701
      %vm3255 = vcmp.lt.f32.partialorder %v3254, 0.0004427343
      %v3256 = vsel %vm3255, %v3253, %v3250
      %v3257 = vadd.f32 %v2703, 1.0
      %v3258 = vlog2.pop %v3257
      %v3259 = vmul.f32 %v3258, 0.6931472
      %v3260 = vmul.f32 -0.5, %v2703
      %v3261 = vadd.f32 %v3260, 1.0
      %v3262 = vmul.f32 %v3261, %v2703
      %v3263 = vand.u32 2147483647, %v2703
      %vm3264 = vcmp.lt.f32.partialorder %v3263, 0.0004427343
      %v3265 = vsel %vm3264, %v3262, %v3259
      %v3266 = vadd.f32 %v2705, 1.0
      %v3267 = vlog2.pop %v3266
      %v3268 = vmul.f32 %v3267, 0.6931472
      %v3269 = vmul.f32 -0.5, %v2705
      %v3270 = vadd.f32 %v3269, 1.0
      %v3271 = vmul.f32 %v3270, %v2705
      %v3272 = vand.u32 2147483647, %v2705
      %vm3273 = vcmp.lt.f32.partialorder %v3272, 0.0004427343
      %v3274 = vsel %vm3273, %v3271, %v3268
      %v3275 = vadd.f32 %v2707, 1.0
      %v3276 = vlog2.pop %v3275
      %v3277 = vmul.f32 %v3276, 0.6931472
      %v3278 = vmul.f32 -0.5, %v2707
      %v3279 = vadd.f32 %v3278, 1.0
      %v3280 = vmul.f32 %v3279, %v2707
      %v3281 = vand.u32 2147483647, %v2707
      %vm3282 = vcmp.lt.f32.partialorder %v3281, 0.0004427343
      %v3283 = vsel %vm3282, %v3280, %v3277
      %v3284 = vadd.f32 %v2388, %v2716
      %v3285 = vadd.f32 %v2389, %v2725
      %v3286 = vadd.f32 %v2390, %v2734
      %v3287 = vadd.f32 %v2391, %v2743
      %v3288 = vadd.f32 %v2392, %v2752
      %v3289 = vadd.f32 %v2393, %v2761
      %v3290 = vadd.f32 %v2394, %v2770
      %v3291 = vadd.f32 %v2395, %v2779
      %v3292 = vadd.f32 %v2396, %v2788
      %v3293 = vadd.f32 %v2397, %v2797
      %v3294 = vadd.f32 %v2398, %v2806
      %v3295 = vadd.f32 %v2399, %v2815
      %v3296 = vadd.f32 %v2400, %v2824
      %v3297 = vadd.f32 %v2401, %v2833
      %v3298 = vadd.f32 %v2402, %v2842
      %v3299 = vadd.f32 %v2403, %v2851
      %v3300 = vadd.f32 %v2404, %v2860
      %v3301 = vadd.f32 %v2405, %v2869
      %v3302 = vadd.f32 %v2406, %v2878
      %v3303 = vadd.f32 %v2407, %v2887
      %v3304 = vadd.f32 %v2408, %v2896
      %v3305 = vadd.f32 %v2409, %v2905
      %v3306 = vadd.f32 %v2410, %v2914
      %v3307 = vadd.f32 %v2411, %v2923
      %v3308 = vadd.f32 %v2412, %v2932
      %v3309 = vadd.f32 %v2413, %v2941
      %v3310 = vadd.f32 %v2414, %v2950
      %v3311 = vadd.f32 %v2415, %v2959
      %v3312 = vadd.f32 %v2416, %v2968
      %v3313 = vadd.f32 %v2417, %v2977
      %v3314 = vadd.f32 %v2418, %v2986
      %v3315 = vadd.f32 %v2419, %v2995
      %v3316 = vadd.f32 %v2420, %v3004
      %v3317 = vadd.f32 %v2421, %v3013
      %v3318 = vadd.f32 %v2422, %v3022
      %v3319 = vadd.f32 %v2423, %v3031
      %v3320 = vadd.f32 %v2424, %v3040
      %v3321 = vadd.f32 %v2425, %v3049
      %v3322 = vadd.f32 %v2426, %v3058
      %v3323 = vadd.f32 %v2427, %v3067
      %v3324 = vadd.f32 %v2428, %v3076
      %v3325 = vadd.f32 %v2429, %v3085
      %v3326 = vadd.f32 %v2430, %v3094
      %v3327 = vadd.f32 %v2431, %v3103
      %v3328 = vadd.f32 %v2432, %v3112
      %v3329 = vadd.f32 %v2433, %v3121
      %v3330 = vadd.f32 %v2434, %v3130
      %v3331 = vadd.f32 %v2435, %v3139
      %v3332 = vadd.f32 %v2436, %v3148
      %v3333 = vadd.f32 %v2437, %v3157
      %v3334 = vadd.f32 %v2438, %v3166
      %v3335 = vadd.f32 %v2439, %v3175
      %v3336 = vadd.f32 %v2440, %v3184
      %v3337 = vadd.f32 %v2441, %v3193
      %v3338 = vadd.f32 %v2442, %v3202
      %v3339 = vadd.f32 %v2443, %v3211
      %v3340 = vadd.f32 %v2444, %v3220
      %v3341 = vadd.f32 %v2445, %v3229
      %v3342 = vadd.f32 %v2446, %v3238
      %v3343 = vadd.f32 %v2447, %v3247
      %v3344 = vadd.f32 %v2448, %v3256
      %v3345 = vadd.f32 %v2449, %v3265
      %v3346 = vadd.f32 %v2450, %v3274
      %v3347 = vadd.f32 %v2451, %v3283
      %v3348 = vld [vmem:[%s16] sm:$0x3]
      %v3350 = vperm.slane %v3348, 0
      %v3351 = vperm.slane %v3348, 1
      %v3354 = vmul.f32 %v3284, %v3350
      %v3355 = vmul.f32 %v3285, %v3351
      %v3356 = vmul.f32 %v3286, %v3350
      %v3357 = vmul.f32 %v3287, %v3351
      %v3358 = vmul.f32 %v3288, %v3350
      %v3359 = vmul.f32 %v3289, %v3351
      %v3360 = vmul.f32 %v3290, %v3350
      %v3361 = vmul.f32 %v3291, %v3351
      %v3362 = vmul.f32 %v3292, %v3350
      %v3363 = vmul.f32 %v3293, %v3351
      %v3364 = vmul.f32 %v3294, %v3350
      %v3365 = vmul.f32 %v3295, %v3351
      %v3366 = vmul.f32 %v3296, %v3350
      %v3367 = vmul.f32 %v3297, %v3351
      %v3368 = vmul.f32 %v3298, %v3350
      %v3369 = vmul.f32 %v3299, %v3351
      %v3370 = vmul.f32 %v3300, %v3350
      %v3371 = vmul.f32 %v3301, %v3351
      %v3372 = vmul.f32 %v3302, %v3350
      %v3373 = vmul.f32 %v3303, %v3351
      %v3374 = vmul.f32 %v3304, %v3350
      %v3375 = vmul.f32 %v3305, %v3351
      %v3376 = vmul.f32 %v3306, %v3350
      %v3377 = vmul.f32 %v3307, %v3351
      %v3378 = vmul.f32 %v3308, %v3350
      %v3379 = vmul.f32 %v3309, %v3351
      %v3380 = vmul.f32 %v3310, %v3350
      %v3381 = vmul.f32 %v3311, %v3351
      %v3382 = vmul.f32 %v3312, %v3350
      %v3383 = vmul.f32 %v3313, %v3351
      %v3384 = vmul.f32 %v3314, %v3350
      %v3385 = vmul.f32 %v3315, %v3351
      %v3386 = vmul.f32 %v3316, %v3350
      %v3387 = vmul.f32 %v3317, %v3351
      %v3388 = vmul.f32 %v3318, %v3350
      %v3389 = vmul.f32 %v3319, %v3351
      %v3390 = vmul.f32 %v3320, %v3350
      %v3391 = vmul.f32 %v3321, %v3351
      %v3392 = vmul.f32 %v3322, %v3350
      %v3393 = vmul.f32 %v3323, %v3351
      %v3394 = vmul.f32 %v3324, %v3350
      %v3395 = vmul.f32 %v3325, %v3351
      %v3396 = vmul.f32 %v3326, %v3350
      %v3397 = vmul.f32 %v3327, %v3351
      %v3398 = vmul.f32 %v3328, %v3350
      %v3399 = vmul.f32 %v3329, %v3351
      %v3400 = vmul.f32 %v3330, %v3350
      %v3401 = vmul.f32 %v3331, %v3351
      %v3402 = vmul.f32 %v3332, %v3350
      %v3403 = vmul.f32 %v3333, %v3351
      %v3404 = vmul.f32 %v3334, %v3350
      %v3405 = vmul.f32 %v3335, %v3351
      %v3406 = vmul.f32 %v3336, %v3350
      %v3407 = vmul.f32 %v3337, %v3351
      %v3408 = vmul.f32 %v3338, %v3350
      %v3409 = vmul.f32 %v3339, %v3351
      %v3410 = vmul.f32 %v3340, %v3350
      %v3411 = vmul.f32 %v3341, %v3351
      %v3412 = vmul.f32 %v3342, %v3350
      %v3413 = vmul.f32 %v3343, %v3351
      %v3414 = vmul.f32 %v3344, %v3350
      %v3415 = vmul.f32 %v3345, %v3351
      %v3416 = vmul.f32 %v3346, %v3350
      %v3417 = vmul.f32 %v3347, %v3351
      %v3418 = vmul.f32 %v3354, 1.442695
      %v3419 = vpow.pop %v3418
      %v3420 = vmul.f32 %v3355, 1.442695
      %v3421 = vpow.pop %v3420
      %v3422 = vmul.f32 %v3356, 1.442695
      %v3423 = vpow.pop %v3422
      %v3424 = vmul.f32 %v3357, 1.442695
      %v3425 = vpow.pop %v3424
      %v3426 = vmul.f32 %v3358, 1.442695
      %v3427 = vpow.pop %v3426
      %v3428 = vmul.f32 %v3359, 1.442695
      %v3429 = vpow.pop %v3428
      %v3430 = vmul.f32 %v3360, 1.442695
      %v3431 = vpow.pop %v3430
      %v3432 = vmul.f32 %v3361, 1.442695
      %v3433 = vpow.pop %v3432
      %v3434 = vmul.f32 %v3362, 1.442695
      %v3435 = vpow.pop %v3434
      %v3436 = vmul.f32 %v3363, 1.442695
      %v3437 = vpow.pop %v3436
      %v3438 = vmul.f32 %v3364, 1.442695
      %v3439 = vpow.pop %v3438
      %v3440 = vmul.f32 %v3365, 1.442695
      %v3441 = vpow.pop %v3440
      %v3442 = vmul.f32 %v3366, 1.442695
      %v3443 = vpow.pop %v3442
      %v3444 = vmul.f32 %v3367, 1.442695
      %v3445 = vpow.pop %v3444
      %v3446 = vmul.f32 %v3368, 1.442695
      %v3447 = vpow.pop %v3446
      %v3448 = vmul.f32 %v3369, 1.442695
      %v3449 = vpow.pop %v3448
      %v3450 = vmul.f32 %v3370, 1.442695
      %v3451 = vpow.pop %v3450
      %v3452 = vmul.f32 %v3371, 1.442695
      %v3453 = vpow.pop %v3452
      %v3454 = vmul.f32 %v3372, 1.442695
      %v3455 = vpow.pop %v3454
      %v3456 = vmul.f32 %v3373, 1.442695
      %v3457 = vpow.pop %v3456
      %v3458 = vmul.f32 %v3374, 1.442695
      %v3459 = vpow.pop %v3458
      %v3460 = vmul.f32 %v3375, 1.442695
      %v3461 = vpow.pop %v3460
      %v3462 = vmul.f32 %v3376, 1.442695
      %v3463 = vpow.pop %v3462
      %v3464 = vmul.f32 %v3377, 1.442695
      %v3465 = vpow.pop %v3464
      %v3466 = vmul.f32 %v3378, 1.442695
      %v3467 = vpow.pop %v3466
      %v3468 = vmul.f32 %v3379, 1.442695
      %v3469 = vpow.pop %v3468
      %v3470 = vmul.f32 %v3380, 1.442695
      %v3471 = vpow.pop %v3470
      %v3472 = vmul.f32 %v3381, 1.442695
      %v3473 = vpow.pop %v3472
      %v3474 = vmul.f32 %v3382, 1.442695
      %v3475 = vpow.pop %v3474
      %v3476 = vmul.f32 %v3383, 1.442695
      %v3477 = vpow.pop %v3476
      %v3478 = vmul.f32 %v3384, 1.442695
      %v3479 = vpow.pop %v3478
      %v3480 = vmul.f32 %v3385, 1.442695
      %v3481 = vpow.pop %v3480
      %v3482 = vmul.f32 %v3386, 1.442695
      %v3483 = vpow.pop %v3482
      %v3484 = vmul.f32 %v3387, 1.442695
      %v3485 = vpow.pop %v3484
      %v3486 = vmul.f32 %v3388, 1.442695
      %v3487 = vpow.pop %v3486
      %v3488 = vmul.f32 %v3389, 1.442695
      %v3489 = vpow.pop %v3488
      %v3490 = vmul.f32 %v3390, 1.442695
      %v3491 = vpow.pop %v3490
      %v3492 = vmul.f32 %v3391, 1.442695
      %v3493 = vpow.pop %v3492
      %v3494 = vmul.f32 %v3392, 1.442695
      %v3495 = vpow.pop %v3494
      %v3496 = vmul.f32 %v3393, 1.442695
      %v3497 = vpow.pop %v3496
      %v3498 = vmul.f32 %v3394, 1.442695
      %v3499 = vpow.pop %v3498
      %v3500 = vmul.f32 %v3395, 1.442695
      %v3501 = vpow.pop %v3500
      %v3502 = vmul.f32 %v3396, 1.442695
      %v3503 = vpow.pop %v3502
      %v3504 = vmul.f32 %v3397, 1.442695
      %v3505 = vpow.pop %v3504
      %v3506 = vmul.f32 %v3398, 1.442695
      %v3507 = vpow.pop %v3506
      %v3508 = vmul.f32 %v3399, 1.442695
      %v3509 = vpow.pop %v3508
      %v3510 = vmul.f32 %v3400, 1.442695
      %v3511 = vpow.pop %v3510
      %v3512 = vmul.f32 %v3401, 1.442695
      %v3513 = vpow.pop %v3512
      %v3514 = vmul.f32 %v3402, 1.442695
      %v3515 = vpow.pop %v3514
      %v3516 = vmul.f32 %v3403, 1.442695
      %v3517 = vpow.pop %v3516
      %v3518 = vmul.f32 %v3404, 1.442695
      %v3519 = vpow.pop %v3518
      %v3520 = vmul.f32 %v3405, 1.442695
      %v3521 = vpow.pop %v3520
      %v3522 = vmul.f32 %v3406, 1.442695
      %v3523 = vpow.pop %v3522
      %v3524 = vmul.f32 %v3407, 1.442695
      %v3525 = vpow.pop %v3524
      %v3526 = vmul.f32 %v3408, 1.442695
      %v3527 = vpow.pop %v3526
      %v3528 = vmul.f32 %v3409, 1.442695
      %v3529 = vpow.pop %v3528
      %v3530 = vmul.f32 %v3410, 1.442695
      %v3531 = vpow.pop %v3530
      %v3532 = vmul.f32 %v3411, 1.442695
      %v3533 = vpow.pop %v3532
      %v3534 = vmul.f32 %v3412, 1.442695
      %v3535 = vpow.pop %v3534
      %v3536 = vmul.f32 %v3413, 1.442695
      %v3537 = vpow.pop %v3536
      %v3538 = vmul.f32 %v3414, 1.442695
      %v3539 = vpow.pop %v3538
      %v3540 = vmul.f32 %v3415, 1.442695
      %v3541 = vpow.pop %v3540
      %v3542 = vmul.f32 %v3416, 1.442695
      %v3543 = vpow.pop %v3542
      %v3544 = vmul.f32 %v3417, 1.442695
      %v3545 = vpow.pop %v3544
      %3546 = vst [vmem:[#allocation2] sm:$0xff] %v3419
      %3547 = vst [vmem:[#allocation2 + $0x8] sm:$0xff] %v3421
      %3548 = vst [vmem:[#allocation2 + $0x10] sm:$0xff] %v3423
      %3549 = vst [vmem:[#allocation2 + $0x18] sm:$0xff] %v3425
      %3550 = vst [vmem:[#allocation2 + $0x20] sm:$0xff] %v3427
      %3551 = vst [vmem:[#allocation2 + $0x28] sm:$0xff] %v3429
      %3552 = vst [vmem:[#allocation2 + $0x30] sm:$0xff] %v3431
      %3553 = vst [vmem:[#allocation2 + $0x38] sm:$0xff] %v3433
      %3554 = vst [vmem:[#allocation2 + $0x40] sm:$0xff] %v3435
      %3555 = vst [vmem:[#allocation2 + $0x48] sm:$0xff] %v3437
      %3556 = vst [vmem:[#allocation2 + $0x50] sm:$0xff] %v3439
      %3557 = vst [vmem:[#allocation2 + $0x58] sm:$0xff] %v3441
      %3558 = vst [vmem:[#allocation2 + $0x60] sm:$0xff] %v3443
      %3559 = vst [vmem:[#allocation2 + $0x68] sm:$0xff] %v3445
      %3560 = vst [vmem:[#allocation2 + $0x70] sm:$0xff] %v3447
      %3561 = vst [vmem:[#allocation2 + $0x78] sm:$0xff] %v3449
      %3562 = vst [vmem:[#allocation2 + $0x80] sm:$0xff] %v3451
      %3563 = vst [vmem:[#allocation2 + $0x88] sm:$0xff] %v3453
      %3564 = vst [vmem:[#allocation2 + $0x90] sm:$0xff] %v3455
      %3565 = vst [vmem:[#allocation2 + $0x98] sm:$0xff] %v3457
      %3566 = vst [vmem:[#allocation2 + $0xa0] sm:$0xff] %v3459
      %3567 = vst [vmem:[#allocation2 + $0xa8] sm:$0xff] %v3461
      %3568 = vst [vmem:[#allocation2 + $0xb0] sm:$0xff] %v3463
      %3569 = vst [vmem:[#allocation2 + $0xb8] sm:$0xff] %v3465
      %3570 = vst [vmem:[#allocation2 + $0xc0] sm:$0xff] %v3467
      %3571 = vst [vmem:[#allocation2 + $0xc8] sm:$0xff] %v3469
      %3572 = vst [vmem:[#allocation2 + $0xd0] sm:$0xff] %v3471
      %3573 = vst [vmem:[#allocation2 + $0xd8] sm:$0xff] %v3473
      %3574 = vst [vmem:[#allocation2 + $0xe0] sm:$0xff] %v3475
      %3575 = vst [vmem:[#allocation2 + $0xe8] sm:$0xff] %v3477
      %3576 = vst [vmem:[#allocation2 + $0xf0] sm:$0xff] %v3479
      %3577 = vst [vmem:[#allocation2 + $0xf8] sm:$0xff] %v3481
      %3578 = vst [vmem:[#allocation2 + $0x100] sm:$0xff] %v3483
      %3579 = vst [vmem:[#allocation2 + $0x108] sm:$0xff] %v3485
      %3580 = vst [vmem:[#allocation2 + $0x110] sm:$0xff] %v3487
      %3581 = vst [vmem:[#allocation2 + $0x118] sm:$0xff] %v3489
      %3582 = vst [vmem:[#allocation2 + $0x120] sm:$0xff] %v3491
      %3583 = vst [vmem:[#allocation2 + $0x128] sm:$0xff] %v3493
      %3584 = vst [vmem:[#allocation2 + $0x130] sm:$0xff] %v3495
      %3585 = vst [vmem:[#allocation2 + $0x138] sm:$0xff] %v3497
      %3586 = vst [vmem:[#allocation2 + $0x140] sm:$0xff] %v3499
      %3587 = vst [vmem:[#allocation2 + $0x148] sm:$0xff] %v3501
      %3588 = vst [vmem:[#allocation2 + $0x150] sm:$0xff] %v3503
      %3589 = vst [vmem:[#allocation2 + $0x158] sm:$0xff] %v3505
      %3590 = vst [vmem:[#allocation2 + $0x160] sm:$0xff] %v3507
      %3591 = vst [vmem:[#allocation2 + $0x168] sm:$0xff] %v3509
      %3592 = vst [vmem:[#allocation2 + $0x170] sm:$0xff] %v3511
      %3593 = vst [vmem:[#allocation2 + $0x178] sm:$0xff] %v3513
      %3594 = vst [vmem:[#allocation2 + $0x180] sm:$0xff] %v3515
      %3595 = vst [vmem:[#allocation2 + $0x188] sm:$0xff] %v3517
      %3596 = vst [vmem:[#allocation2 + $0x190] sm:$0xff] %v3519
      %3597 = vst [vmem:[#allocation2 + $0x198] sm:$0xff] %v3521
      %3598 = vst [vmem:[#allocation2 + $0x1a0] sm:$0xff] %v3523
      %3599 = vst [vmem:[#allocation2 + $0x1a8] sm:$0xff] %v3525
      %3600 = vst [vmem:[#allocation2 + $0x1b0] sm:$0xff] %v3527
      %3601 = vst [vmem:[#allocation2 + $0x1b8] sm:$0xff] %v3529
      %3602 = vst [vmem:[#allocation2 + $0x1c0] sm:$0xff] %v3531
      %3603 = vst [vmem:[#allocation2 + $0x1c8] sm:$0xff] %v3533
      %3604 = vst [vmem:[#allocation2 + $0x1d0] sm:$0xff] %v3535
      %3605 = vst [vmem:[#allocation2 + $0x1d8] sm:$0xff] %v3537
      %3606 = vst [vmem:[#allocation2 + $0x1e0] sm:$0xff] %v3539
      %3607 = vst [vmem:[#allocation2 + $0x1e8] sm:$0xff] %v3541
      %3608 = vst [vmem:[#allocation2 + $0x1f0] sm:$0xff] %v3543
      %3609 = vst [vmem:[#allocation2 + $0x1f8] sm:$0xff] %v3545
      %v3610 = vmul.f32 %v2088, %v3284
      %v3611 = vmul.f32 %v2089, %v3285
      %v3612 = vmul.f32 %v2090, %v3286
      %v3613 = vmul.f32 %v2091, %v3287
      %v3614 = vmul.f32 %v2092, %v3288
      %v3615 = vmul.f32 %v2093, %v3289
      %v3616 = vmul.f32 %v2094, %v3290
      %v3617 = vmul.f32 %v2095, %v3291
      %v3618 = vmul.f32 %v2096, %v3292
      %v3619 = vmul.f32 %v2097, %v3293
      %v3620 = vmul.f32 %v2098, %v3294
      %v3621 = vmul.f32 %v2099, %v3295
      %v3622 = vmul.f32 %v2100, %v3296
      %v3623 = vmul.f32 %v2101, %v3297
      %v3624 = vmul.f32 %v2102, %v3298
      %v3625 = vmul.f32 %v2103, %v3299
      %v3626 = vmul.f32 %v2104, %v3300
      %v3627 = vmul.f32 %v2105, %v3301
      %v3628 = vmul.f32 %v2106, %v3302
      %v3629 = vmul.f32 %v2107, %v3303
      %v3630 = vmul.f32 %v2108, %v3304
      %v3631 = vmul.f32 %v2109, %v3305
      %v3632 = vmul.f32 %v2110, %v3306
      %v3633 = vmul.f32 %v2111, %v3307
      %v3634 = vmul.f32 %v2112, %v3308
      %v3635 = vmul.f32 %v2113, %v3309
      %v3636 = vmul.f32 %v2114, %v3310
      %v3637 = vmul.f32 %v2115, %v3311
      %v3638 = vmul.f32 %v2116, %v3312
      %v3639 = vmul.f32 %v2117, %v3313
      %v3640 = vmul.f32 %v2118, %v3314
      %v3641 = vmul.f32 %v2119, %v3315
      %v3642 = vmul.f32 %v2120, %v3316
      %v3643 = vmul.f32 %v2121, %v3317
      %v3644 = vmul.f32 %v2122, %v3318
      %v3645 = vmul.f32 %v2123, %v3319
      %v3646 = vmul.f32 %v2124, %v3320
      %v3647 = vmul.f32 %v2125, %v3321
      %v3648 = vmul.f32 %v2126, %v3322
      %v3649 = vmul.f32 %v2127, %v3323
      %v3650 = vmul.f32 %v2128, %v3324
      %v3651 = vmul.f32 %v2129, %v3325
      %v3652 = vmul.f32 %v2130, %v3326
      %v3653 = vmul.f32 %v2131, %v3327
      %v3654 = vmul.f32 %v2132, %v3328
      %v3655 = vmul.f32 %v2133, %v3329
      %v3656 = vmul.f32 %v2134, %v3330
      %v3657 = vmul.f32 %v2135, %v3331
      %v3658 = vmul.f32 %v2136, %v3332
      %v3659 = vmul.f32 %v2137, %v3333
      %v3660 = vmul.f32 %v2138, %v3334
      %v3661 = vmul.f32 %v2139, %v3335
      %v3662 = vmul.f32 %v2140, %v3336
      %v3663 = vmul.f32 %v2141, %v3337
      %v3664 = vmul.f32 %v2142, %v3338
      %v3665 = vmul.f32 %v2143, %v3339
      %v3666 = vmul.f32 %v2144, %v3340
      %v3667 = vmul.f32 %v2145, %v3341
      %v3668 = vmul.f32 %v2146, %v3342
      %v3669 = vmul.f32 %v2147, %v3343
      %v3670 = vmul.f32 %v2148, %v3344
      %v3671 = vmul.f32 %v2149, %v3345
      %v3672 = vmul.f32 %v2150, %v3346
      %v3673 = vmul.f32 %v2151, %v3347
      %3674 = vst [vmem:[#allocation3] sm:$0xff] %v3610
      %3675 = vst [vmem:[#allocation3 + $0x8] sm:$0xff] %v3611
      %3676 = vst [vmem:[#allocation3 + $0x10] sm:$0xff] %v3612
      %3677 = vst [vmem:[#allocation3 + $0x18] sm:$0xff] %v3613
      %3678 = vst [vmem:[#allocation3 + $0x20] sm:$0xff] %v3614
      %3679 = vst [vmem:[#allocation3 + $0x28] sm:$0xff] %v3615
      %3680 = vst [vmem:[#allocation3 + $0x30] sm:$0xff] %v3616
      %3681 = vst [vmem:[#allocation3 + $0x38] sm:$0xff] %v3617
      %3682 = vst [vmem:[#allocation3 + $0x40] sm:$0xff] %v3618
      %3683 = vst [vmem:[#allocation3 + $0x48] sm:$0xff] %v3619
      %3684 = vst [vmem:[#allocation3 + $0x50] sm:$0xff] %v3620
      %3685 = vst [vmem:[#allocation3 + $0x58] sm:$0xff] %v3621
      %3686 = vst [vmem:[#allocation3 + $0x60] sm:$0xff] %v3622
      %3687 = vst [vmem:[#allocation3 + $0x68] sm:$0xff] %v3623
      %3688 = vst [vmem:[#allocation3 + $0x70] sm:$0xff] %v3624
      %3689 = vst [vmem:[#allocation3 + $0x78] sm:$0xff] %v3625
      %3690 = vst [vmem:[#allocation3 + $0x80] sm:$0xff] %v3626
      %3691 = vst [vmem:[#allocation3 + $0x88] sm:$0xff] %v3627
      %3692 = vst [vmem:[#allocation3 + $0x90] sm:$0xff] %v3628
      %3693 = vst [vmem:[#allocation3 + $0x98] sm:$0xff] %v3629
      %3694 = vst [vmem:[#allocation3 + $0xa0] sm:$0xff] %v3630
      %3695 = vst [vmem:[#allocation3 + $0xa8] sm:$0xff] %v3631
      %3696 = vst [vmem:[#allocation3 + $0xb0] sm:$0xff] %v3632
      %3697 = vst [vmem:[#allocation3 + $0xb8] sm:$0xff] %v3633
      %3698 = vst [vmem:[#allocation3 + $0xc0] sm:$0xff] %v3634
      %3699 = vst [vmem:[#allocation3 + $0xc8] sm:$0xff] %v3635
      %3700 = vst [vmem:[#allocation3 + $0xd0] sm:$0xff] %v3636
      %3701 = vst [vmem:[#allocation3 + $0xd8] sm:$0xff] %v3637
      %3702 = vst [vmem:[#allocation3 + $0xe0] sm:$0xff] %v3638
      %3703 = vst [vmem:[#allocation3 + $0xe8] sm:$0xff] %v3639
      %3704 = vst [vmem:[#allocation3 + $0xf0] sm:$0xff] %v3640
      %3705 = vst [vmem:[#allocation3 + $0xf8] sm:$0xff] %v3641
      %3706 = vst [vmem:[#allocation3 + $0x100] sm:$0xff] %v3642
      %3707 = vst [vmem:[#allocation3 + $0x108] sm:$0xff] %v3643
      %3708 = vst [vmem:[#allocation3 + $0x110] sm:$0xff] %v3644
      %3709 = vst [vmem:[#allocation3 + $0x118] sm:$0xff] %v3645
      %3710 = vst [vmem:[#allocation3 + $0x120] sm:$0xff] %v3646
      %3711 = vst [vmem:[#allocation3 + $0x128] sm:$0xff] %v3647
      %3712 = vst [vmem:[#allocation3 + $0x130] sm:$0xff] %v3648
      %3713 = vst [vmem:[#allocation3 + $0x138] sm:$0xff] %v3649
      %3714 = vst [vmem:[#allocation3 + $0x140] sm:$0xff] %v3650
      %3715 = vst [vmem:[#allocation3 + $0x148] sm:$0xff] %v3651
      %3716 = vst [vmem:[#allocation3 + $0x150] sm:$0xff] %v3652
      %3717 = vst [vmem:[#allocation3 + $0x158] sm:$0xff] %v3653
      %3718 = vst [vmem:[#allocation3 + $0x160] sm:$0xff] %v3654
      %3719 = vst [vmem:[#allocation3 + $0x168] sm:$0xff] %v3655
      %3720 = vst [vmem:[#allocation3 + $0x170] sm:$0xff] %v3656
      %3721 = vst [vmem:[#allocation3 + $0x178] sm:$0xff] %v3657
      %3722 = vst [vmem:[#allocation3 + $0x180] sm:$0xff] %v3658
      %3723 = vst [vmem:[#allocation3 + $0x188] sm:$0xff] %v3659
      %3724 = vst [vmem:[#allocation3 + $0x190] sm:$0xff] %v3660
      %3725 = vst [vmem:[#allocation3 + $0x198] sm:$0xff] %v3661
      %3726 = vst [vmem:[#allocation3 + $0x1a0] sm:$0xff] %v3662
      %3727 = vst [vmem:[#allocation3 + $0x1a8] sm:$0xff] %v3663
      %3728 = vst [vmem:[#allocation3 + $0x1b0] sm:$0xff] %v3664
      %3729 = vst [vmem:[#allocation3 + $0x1b8] sm:$0xff] %v3665
      %3730 = vst [vmem:[#allocation3 + $0x1c0] sm:$0xff] %v3666
      %3731 = vst [vmem:[#allocation3 + $0x1c8] sm:$0xff] %v3667
      %3732 = vst [vmem:[#allocation3 + $0x1d0] sm:$0xff] %v3668
      %3733 = vst [vmem:[#allocation3 + $0x1d8] sm:$0xff] %v3669
      %3734 = vst [vmem:[#allocation3 + $0x1e0] sm:$0xff] %v3670
      %3735 = vst [vmem:[#allocation3 + $0x1e8] sm:$0xff] %v3671
      %3736 = vst [vmem:[#allocation3 + $0x1f0] sm:$0xff] %v3672
      %3737 = vst [vmem:[#allocation3 + $0x1f8] sm:$0xff] %v3673
      loop: start=0, step=1, limit=32
      $region97: #{_lambda_.3} parent=95 // loop_pre_header
        _
      $region98: #{_lambda_.3} parent=95 // loop_header
        %s3739 = sphi 0, %s3743
        %p3740 = scmp.ge.s32.totalorder %s3739, 32
        %v3744 = vphi 0.0, %v3830
        %v3745 = vphi 0.0, %v3831
      $region99: #{_lambda_.3} parent=95 // loop_header_branch
        %3742 = sbr.rel (%p3740) target = $region103
      $region100: #{_lambda_.3} parent=95 // loop_body
        %s3746 = smul.u32 %s3739, 8
        %s3747 = sshra.s32 %s3746, 3
        %s3748 = sand.u32 %s3746, 7
        %s3749 = smul.u32 %s3747, 2
        %s3750 = smul.addr %s3749, 8
        %s3751 = scalar_lea.vmem [#allocation2], %s3750
        %v3752 = vld [vmem:[%s3751] sm:$0xff]
        %v3753 = vld [vmem:[%s3751 + $0x8] sm:$0xff]
        %s3754 = smul.addr %s3749, 8
        %s3755 = scalar_lea.vmem [#allocation3], %s3754
        %v3756 = vld [vmem:[%s3755] sm:$0xff]
        %v3757 = vld [vmem:[%s3755 + $0x8] sm:$0xff]
        %v3760 = vrot.slane %v3752, 7
        %v3761 = vrot.slane %v3753, 7
        %vm3764 = vcmask 1040384
        %v3765 = vsel %vm3764, 1.0, %v3760
        %v3766 = vsel %vm3764, 1.0, %v3761
        %v3769 = vrot.slane %v3756, 7
        %v3770 = vrot.slane %v3757, 7
        %v3773 = vsel %vm3764, 0.0, %v3769
        %v3774 = vsel %vm3764, 0.0, %v3770
        %v3775 = vmul.f32 %v3752, %v3773
        %v3776 = vmul.f32 %v3753, %v3774
        %v3777 = vadd.f32 %v3775, %v3756
        %v3778 = vadd.f32 %v3776, %v3757
        %v3779 = vmul.f32 %v3752, %v3765
        %v3780 = vmul.f32 %v3753, %v3766
        %v3783 = vrot.slane %v3779, 6
        %v3784 = vrot.slane %v3780, 6
        %vm3787 = vcmask 1041408
        %v3788 = vsel %vm3787, 1.0, %v3783
        %v3789 = vsel %vm3787, 1.0, %v3784
        %v3792 = vrot.slane %v3777, 6
        %v3793 = vrot.slane %v3778, 6
        %v3796 = vsel %vm3787, 0.0, %v3792
        %v3797 = vsel %vm3787, 0.0, %v3793
        %v3798 = vmul.f32 %v3779, %v3796
        %v3799 = vmul.f32 %v3780, %v3797
        %v3800 = vadd.f32 %v3798, %v3777
        %v3801 = vadd.f32 %v3799, %v3778
        %v3802 = vmul.f32 %v3779, %v3788
        %v3803 = vmul.f32 %v3780, %v3789
        %v3806 = vrot.slane %v3802, 4
        %v3807 = vrot.slane %v3803, 4
        %v3810 = vsel %vm761, 1.0, %v3806
        %v3811 = vsel %vm761, 1.0, %v3807
        %v3814 = vrot.slane %v3800, 4
        %v3815 = vrot.slane %v3801, 4
        %v3818 = vsel %vm761, 0.0, %v3814
        %v3819 = vsel %vm761, 0.0, %v3815
        %v3820 = vmul.f32 %v3802, %v3818
        %v3821 = vmul.f32 %v3803, %v3819
        %v3822 = vadd.f32 %v3820, %v3800
        %v3823 = vadd.f32 %v3821, %v3801
        %v3824 = vmul.f32 %v3802, %v3810
        %v3825 = vmul.f32 %v3803, %v3811
        %v3826 = vperm.slane %v3744, 7
        %v3827 = vperm.slane %v3745, 7
        %v3828 = vmul.f32 %v3824, %v3826
        %v3829 = vmul.f32 %v3825, %v3827
        %v3830 = vadd.f32 %v3828, %v3822
        %v3831 = vadd.f32 %v3829, %v3823
        %s3832 = smul.addr %s3749, 8
        %s3833 = scalar_lea.vmem [#allocation4], %s3832
        %3834 = vst [vmem:[%s3833] sm:$0xff] %v3830
        %3835 = vst [vmem:[%s3833 + $0x8] sm:$0xff] %v3831
      $region101: #{_lambda_.3} parent=95 // loop_footer
        %s3743 = sadd.s32 1, %s3739
      $region102: #{_lambda_.3} parent=95 // loop_footer_branch
        %3738 = sbr.rel target = $region98
      $region103: #{_lambda_.3} parent=95 // loop_exit
        _
      %v3836 = vld [vmem:[%s12] sm:$0xff]
      %v3837 = vld [vmem:[%s12 + $0x8] sm:$0xff]
      %v3838 = vld [vmem:[%s12 + $0x10] sm:$0xff]
      %v3839 = vld [vmem:[%s12 + $0x18] sm:$0xff]
      %3840 = vmatpush.msra.mxu0 0.0
      %3841 = vmatpush.msra.mxu0 0.0
      %3842 = vmatpush.msra.mxu0 0.0
      %3843 = vmatpush.msra.mxu0 0.0
      %3844 = vmatpush.msra.mxu0 0.0
      %3845 = vmatpush.msra.mxu0 0.0
      %3846 = vmatpush.msra.mxu0 0.0
      %3847 = vmatpush.msra.mxu0 0.0
      %3848 = vmatpush.msra.mxu0 0.0
      %3849 = vmatpush.msra.mxu0 0.0
      %3850 = vmatpush.msra.mxu0 0.0
      %3851 = vmatpush.msra.mxu0 0.0
      %3852 = vmatpush.msra.mxu0 0.0
      %3853 = vmatpush.msra.mxu0 0.0
      %3854 = vmatpush.msra.mxu0 %v3838
      %3855 = vmatpush.msra.mxu0 %v3836
      %3856 = vmatmul.f32.gmra.mxu0 %v1537
      %v3857 = vpop.f32.mrf.mxu0
      %v3858 = vadd.f32 0.0, %v3857
      %3859 = vmatmul.f32.gmra.mxu0 %v1540
      %v3860 = vpop.f32.mrf.mxu0
      %v3861 = vadd.f32 0.0, %v3860
      %3862 = vmatmul.f32.gmra.mxu0 %v1543
      %v3863 = vpop.f32.mrf.mxu0
      %v3864 = vadd.f32 0.0, %v3863
      %3865 = vmatmul.f32.gmra.mxu0 %v1546
      %v3866 = vpop.f32.mrf.mxu0
      %v3867 = vadd.f32 0.0, %v3866
      %3868 = vmatmul.f32.gmra.mxu0 %v1549
      %v3869 = vpop.f32.mrf.mxu0
      %v3870 = vadd.f32 0.0, %v3869
      %3871 = vmatmul.f32.gmra.mxu0 %v1552
      %v3872 = vpop.f32.mrf.mxu0
      %v3873 = vadd.f32 0.0, %v3872
      %3874 = vmatmul.f32.gmra.mxu0 %v1555
      %v3875 = vpop.f32.mrf.mxu0
      %v3876 = vadd.f32 0.0, %v3875
      %3877 = vmatmul.f32.gmra.mxu0 %v1558
      %v3878 = vpop.f32.mrf.mxu0
      %v3879 = vadd.f32 0.0, %v3878
      %3880 = vmatmul.f32.gmra.mxu0 %v1561
      %v3881 = vpop.f32.mrf.mxu0
      %v3882 = vadd.f32 0.0, %v3881
      %3883 = vmatmul.f32.gmra.mxu0 %v1564
      %v3884 = vpop.f32.mrf.mxu0
      %v3885 = vadd.f32 0.0, %v3884
      %3886 = vmatmul.f32.gmra.mxu0 %v1567
      %v3887 = vpop.f32.mrf.mxu0
      %v3888 = vadd.f32 0.0, %v3887
      %3889 = vmatmul.f32.gmra.mxu0 %v1570
      %v3890 = vpop.f32.mrf.mxu0
      %v3891 = vadd.f32 0.0, %v3890
      %3892 = vmatmul.f32.gmra.mxu0 %v1573
      %v3893 = vpop.f32.mrf.mxu0
      %v3894 = vadd.f32 0.0, %v3893
      %3895 = vmatmul.f32.gmra.mxu0 %v1576
      %v3896 = vpop.f32.mrf.mxu0
      %v3897 = vadd.f32 0.0, %v3896
      %3898 = vmatmul.f32.gmra.mxu0 %v1579
      %v3899 = vpop.f32.mrf.mxu0
      %v3900 = vadd.f32 0.0, %v3899
      %3901 = vmatmul.f32.gmra.mxu0 %v1582
      %v3902 = vpop.f32.mrf.mxu0
      %v3903 = vadd.f32 0.0, %v3902
      %3904 = vmatmul.f32.gmra.mxu0 %v1585
      %v3905 = vpop.f32.mrf.mxu0
      %v3906 = vadd.f32 0.0, %v3905
      %3907 = vmatmul.f32.gmra.mxu0 %v1588
      %v3908 = vpop.f32.mrf.mxu0
      %v3909 = vadd.f32 0.0, %v3908
      %3910 = vmatmul.f32.gmra.mxu0 %v1591
      %v3911 = vpop.f32.mrf.mxu0
      %v3912 = vadd.f32 0.0, %v3911
      %3913 = vmatmul.f32.gmra.mxu0 %v1594
      %v3914 = vpop.f32.mrf.mxu0
      %v3915 = vadd.f32 0.0, %v3914
      %3916 = vmatmul.f32.gmra.mxu0 %v1597
      %v3917 = vpop.f32.mrf.mxu0
      %v3918 = vadd.f32 0.0, %v3917
      %3919 = vmatmul.f32.gmra.mxu0 %v1600
      %v3920 = vpop.f32.mrf.mxu0
      %v3921 = vadd.f32 0.0, %v3920
      %3922 = vmatmul.f32.gmra.mxu0 %v1603
      %v3923 = vpop.f32.mrf.mxu0
      %v3924 = vadd.f32 0.0, %v3923
      %3925 = vmatmul.f32.gmra.mxu0 %v1606
      %v3926 = vpop.f32.mrf.mxu0
      %v3927 = vadd.f32 0.0, %v3926
      %3928 = vmatmul.f32.gmra.mxu0 %v1609
      %v3929 = vpop.f32.mrf.mxu0
      %v3930 = vadd.f32 0.0, %v3929
      %3931 = vmatmul.f32.gmra.mxu0 %v1612
      %v3932 = vpop.f32.mrf.mxu0
      %v3933 = vadd.f32 0.0, %v3932
      %3934 = vmatmul.f32.gmra.mxu0 %v1615
      %v3935 = vpop.f32.mrf.mxu0
      %v3936 = vadd.f32 0.0, %v3935
      %3937 = vmatmul.f32.gmra.mxu0 %v1618
      %v3938 = vpop.f32.mrf.mxu0
      %v3939 = vadd.f32 0.0, %v3938
      %3940 = vmatmul.f32.gmra.mxu0 %v1621
      %v3941 = vpop.f32.mrf.mxu0
      %v3942 = vadd.f32 0.0, %v3941
      %3943 = vmatmul.f32.gmra.mxu0 %v1624
      %v3944 = vpop.f32.mrf.mxu0
      %v3945 = vadd.f32 0.0, %v3944
      %3946 = vmatmul.f32.gmra.mxu0 %v1627
      %v3947 = vpop.f32.mrf.mxu0
      %v3948 = vadd.f32 0.0, %v3947
      %3949 = vmatmul.f32.gmra.mxu0 %v1630
      %v3950 = vpop.f32.mrf.mxu0
      %v3951 = vadd.f32 0.0, %v3950
      %3952 = vdwg.mxu0
      %3953 = vmatpush.msra.mxu0 0.0
      %3954 = vmatpush.msra.mxu0 0.0
      %3955 = vmatpush.msra.mxu0 0.0
      %3956 = vmatpush.msra.mxu0 0.0
      %3957 = vmatpush.msra.mxu0 0.0
      %3958 = vmatpush.msra.mxu0 0.0
      %3959 = vmatpush.msra.mxu0 0.0
      %3960 = vmatpush.msra.mxu0 0.0
      %3961 = vmatpush.msra.mxu0 0.0
      %3962 = vmatpush.msra.mxu0 0.0
      %3963 = vmatpush.msra.mxu0 0.0
      %3964 = vmatpush.msra.mxu0 0.0
      %3965 = vmatpush.msra.mxu0 0.0
      %3966 = vmatpush.msra.mxu0 0.0
      %3967 = vmatpush.msra.mxu0 %v3839
      %3968 = vmatpush.msra.mxu0 %v3837
      %3969 = vmatmul.f32.gmra.mxu0 %v1537
      %v3970 = vpop.f32.mrf.mxu0
      %v3971 = vadd.f32 0.0, %v3970
      %3972 = vmatmul.f32.gmra.mxu0 %v1540
      %v3973 = vpop.f32.mrf.mxu0
      %v3974 = vadd.f32 0.0, %v3973
      %3975 = vmatmul.f32.gmra.mxu0 %v1543
      %v3976 = vpop.f32.mrf.mxu0
      %v3977 = vadd.f32 0.0, %v3976
      %3978 = vmatmul.f32.gmra.mxu0 %v1546
      %v3979 = vpop.f32.mrf.mxu0
      %v3980 = vadd.f32 0.0, %v3979
      %3981 = vmatmul.f32.gmra.mxu0 %v1549
      %v3982 = vpop.f32.mrf.mxu0
      %v3983 = vadd.f32 0.0, %v3982
      %3984 = vmatmul.f32.gmra.mxu0 %v1552
      %v3985 = vpop.f32.mrf.mxu0
      %v3986 = vadd.f32 0.0, %v3985
      %3987 = vmatmul.f32.gmra.mxu0 %v1555
      %v3988 = vpop.f32.mrf.mxu0
      %v3989 = vadd.f32 0.0, %v3988
      %3990 = vmatmul.f32.gmra.mxu0 %v1558
      %v3991 = vpop.f32.mrf.mxu0
      %v3992 = vadd.f32 0.0, %v3991
      %3993 = vmatmul.f32.gmra.mxu0 %v1561
      %v3994 = vpop.f32.mrf.mxu0
      %v3995 = vadd.f32 0.0, %v3994
      %3996 = vmatmul.f32.gmra.mxu0 %v1564
      %v3997 = vpop.f32.mrf.mxu0
      %v3998 = vadd.f32 0.0, %v3997
      %3999 = vmatmul.f32.gmra.mxu0 %v1567
      %v4000 = vpop.f32.mrf.mxu0
      %v4001 = vadd.f32 0.0, %v4000
      %4002 = vmatmul.f32.gmra.mxu0 %v1570
      %v4003 = vpop.f32.mrf.mxu0
      %v4004 = vadd.f32 0.0, %v4003
      %4005 = vmatmul.f32.gmra.mxu0 %v1573
      %v4006 = vpop.f32.mrf.mxu0
      %v4007 = vadd.f32 0.0, %v4006
      %4008 = vmatmul.f32.gmra.mxu0 %v1576
      %v4009 = vpop.f32.mrf.mxu0
      %v4010 = vadd.f32 0.0, %v4009
      %4011 = vmatmul.f32.gmra.mxu0 %v1579
      %v4012 = vpop.f32.mrf.mxu0
      %v4013 = vadd.f32 0.0, %v4012
      %4014 = vmatmul.f32.gmra.mxu0 %v1582
      %v4015 = vpop.f32.mrf.mxu0
      %v4016 = vadd.f32 0.0, %v4015
      %4017 = vmatmul.f32.gmra.mxu0 %v1585
      %v4018 = vpop.f32.mrf.mxu0
      %v4019 = vadd.f32 0.0, %v4018
      %4020 = vmatmul.f32.gmra.mxu0 %v1588
      %v4021 = vpop.f32.mrf.mxu0
      %v4022 = vadd.f32 0.0, %v4021
      %4023 = vmatmul.f32.gmra.mxu0 %v1591
      %v4024 = vpop.f32.mrf.mxu0
      %v4025 = vadd.f32 0.0, %v4024
      %4026 = vmatmul.f32.gmra.mxu0 %v1594
      %v4027 = vpop.f32.mrf.mxu0
      %v4028 = vadd.f32 0.0, %v4027
      %4029 = vmatmul.f32.gmra.mxu0 %v1597
      %v4030 = vpop.f32.mrf.mxu0
      %v4031 = vadd.f32 0.0, %v4030
      %4032 = vmatmul.f32.gmra.mxu0 %v1600
      %v4033 = vpop.f32.mrf.mxu0
      %v4034 = vadd.f32 0.0, %v4033
      %4035 = vmatmul.f32.gmra.mxu0 %v1603
      %v4036 = vpop.f32.mrf.mxu0
      %v4037 = vadd.f32 0.0, %v4036
      %4038 = vmatmul.f32.gmra.mxu0 %v1606
      %v4039 = vpop.f32.mrf.mxu0
      %v4040 = vadd.f32 0.0, %v4039
      %4041 = vmatmul.f32.gmra.mxu0 %v1609
      %v4042 = vpop.f32.mrf.mxu0
      %v4043 = vadd.f32 0.0, %v4042
      %4044 = vmatmul.f32.gmra.mxu0 %v1612
      %v4045 = vpop.f32.mrf.mxu0
      %v4046 = vadd.f32 0.0, %v4045
      %4047 = vmatmul.f32.gmra.mxu0 %v1615
      %v4048 = vpop.f32.mrf.mxu0
      %v4049 = vadd.f32 0.0, %v4048
      %4050 = vmatmul.f32.gmra.mxu0 %v1618
      %v4051 = vpop.f32.mrf.mxu0
      %v4052 = vadd.f32 0.0, %v4051
      %4053 = vmatmul.f32.gmra.mxu0 %v1621
      %v4054 = vpop.f32.mrf.mxu0
      %v4055 = vadd.f32 0.0, %v4054
      %4056 = vmatmul.f32.gmra.mxu0 %v1624
      %v4057 = vpop.f32.mrf.mxu0
      %v4058 = vadd.f32 0.0, %v4057
      %4059 = vmatmul.f32.gmra.mxu0 %v1627
      %v4060 = vpop.f32.mrf.mxu0
      %v4061 = vadd.f32 0.0, %v4060
      %4062 = vmatmul.f32.gmra.mxu0 %v1630
      %v4063 = vpop.f32.mrf.mxu0
      %v4064 = vadd.f32 0.0, %v4063
      %4065 = vdwg.mxu0
      %v4066 = vld [vmem:[%s15] sm:$0xff]
      %v4067 = vld [vmem:[%s15 + $0x8] sm:$0xff]
      %v4068 = vld [vmem:[%s15 + $0x10] sm:$0xff]
      %v4069 = vld [vmem:[%s15 + $0x18] sm:$0xff]
      %v4070 = vld [vmem:[#allocation4] sm:$0xff]
      %v4071 = vld [vmem:[#allocation4 + $0x8] sm:$0xff]
      %v4072 = vld [vmem:[#allocation4 + $0x10] sm:$0xff]
      %v4073 = vld [vmem:[#allocation4 + $0x18] sm:$0xff]
      %v4074 = vld [vmem:[#allocation4 + $0x20] sm:$0xff]
      %v4075 = vld [vmem:[#allocation4 + $0x28] sm:$0xff]
      %v4076 = vld [vmem:[#allocation4 + $0x30] sm:$0xff]
      %v4077 = vld [vmem:[#allocation4 + $0x38] sm:$0xff]
      %v4078 = vld [vmem:[#allocation4 + $0x40] sm:$0xff]
      %v4079 = vld [vmem:[#allocation4 + $0x48] sm:$0xff]
      %v4080 = vld [vmem:[#allocation4 + $0x50] sm:$0xff]
      %v4081 = vld [vmem:[#allocation4 + $0x58] sm:$0xff]
      %v4082 = vld [vmem:[#allocation4 + $0x60] sm:$0xff]
      %v4083 = vld [vmem:[#allocation4 + $0x68] sm:$0xff]
      %v4084 = vld [vmem:[#allocation4 + $0x70] sm:$0xff]
      %v4085 = vld [vmem:[#allocation4 + $0x78] sm:$0xff]
      %v4086 = vld [vmem:[#allocation4 + $0x80] sm:$0xff]
      %v4087 = vld [vmem:[#allocation4 + $0x88] sm:$0xff]
      %v4088 = vld [vmem:[#allocation4 + $0x90] sm:$0xff]
      %v4089 = vld [vmem:[#allocation4 + $0x98] sm:$0xff]
      %v4090 = vld [vmem:[#allocation4 + $0xa0] sm:$0xff]
      %v4091 = vld [vmem:[#allocation4 + $0xa8] sm:$0xff]
      %v4092 = vld [vmem:[#allocation4 + $0xb0] sm:$0xff]
      %v4093 = vld [vmem:[#allocation4 + $0xb8] sm:$0xff]
      %v4094 = vld [vmem:[#allocation4 + $0xc0] sm:$0xff]
      %v4095 = vld [vmem:[#allocation4 + $0xc8] sm:$0xff]
      %v4096 = vld [vmem:[#allocation4 + $0xd0] sm:$0xff]
      %v4097 = vld [vmem:[#allocation4 + $0xd8] sm:$0xff]
      %v4098 = vld [vmem:[#allocation4 + $0xe0] sm:$0xff]
      %v4099 = vld [vmem:[#allocation4 + $0xe8] sm:$0xff]
      %v4100 = vld [vmem:[#allocation4 + $0xf0] sm:$0xff]
      %v4101 = vld [vmem:[#allocation4 + $0xf8] sm:$0xff]
      %v4102 = vld [vmem:[#allocation4 + $0x100] sm:$0xff]
      %v4103 = vld [vmem:[#allocation4 + $0x108] sm:$0xff]
      %v4104 = vld [vmem:[#allocation4 + $0x110] sm:$0xff]
      %v4105 = vld [vmem:[#allocation4 + $0x118] sm:$0xff]
      %v4106 = vld [vmem:[#allocation4 + $0x120] sm:$0xff]
      %v4107 = vld [vmem:[#allocation4 + $0x128] sm:$0xff]
      %v4108 = vld [vmem:[#allocation4 + $0x130] sm:$0xff]
      %v4109 = vld [vmem:[#allocation4 + $0x138] sm:$0xff]
      %v4110 = vld [vmem:[#allocation4 + $0x140] sm:$0xff]
      %v4111 = vld [vmem:[#allocation4 + $0x148] sm:$0xff]
      %v4112 = vld [vmem:[#allocation4 + $0x150] sm:$0xff]
      %v4113 = vld [vmem:[#allocation4 + $0x158] sm:$0xff]
      %v4114 = vld [vmem:[#allocation4 + $0x160] sm:$0xff]
      %v4115 = vld [vmem:[#allocation4 + $0x168] sm:$0xff]
      %v4116 = vld [vmem:[#allocation4 + $0x170] sm:$0xff]
      %v4117 = vld [vmem:[#allocation4 + $0x178] sm:$0xff]
      %v4118 = vld [vmem:[#allocation4 + $0x180] sm:$0xff]
      %v4119 = vld [vmem:[#allocation4 + $0x188] sm:$0xff]
      %v4120 = vld [vmem:[#allocation4 + $0x190] sm:$0xff]
      %v4121 = vld [vmem:[#allocation4 + $0x198] sm:$0xff]
      %v4122 = vld [vmem:[#allocation4 + $0x1a0] sm:$0xff]
      %v4123 = vld [vmem:[#allocation4 + $0x1a8] sm:$0xff]
      %v4124 = vld [vmem:[#allocation4 + $0x1b0] sm:$0xff]
      %v4125 = vld [vmem:[#allocation4 + $0x1b8] sm:$0xff]
      %v4126 = vld [vmem:[#allocation4 + $0x1c0] sm:$0xff]
      %v4127 = vld [vmem:[#allocation4 + $0x1c8] sm:$0xff]
      %v4128 = vld [vmem:[#allocation4 + $0x1d0] sm:$0xff]
      %v4129 = vld [vmem:[#allocation4 + $0x1d8] sm:$0xff]
      %v4130 = vld [vmem:[#allocation4 + $0x1e0] sm:$0xff]
      %v4131 = vld [vmem:[#allocation4 + $0x1e8] sm:$0xff]
      %v4132 = vld [vmem:[#allocation4 + $0x1f0] sm:$0xff]
      %v4133 = vld [vmem:[#allocation4 + $0x1f8] sm:$0xff]
      %v4134 = vmul.f32 %v4070, %v3858
      %v4135 = vmul.f32 %v4071, %v3971
      %v4136 = vmul.f32 %v4072, %v3861
      %v4137 = vmul.f32 %v4073, %v3974
      %v4138 = vmul.f32 %v4074, %v3864
      %v4139 = vmul.f32 %v4075, %v3977
      %v4140 = vmul.f32 %v4076, %v3867
      %v4141 = vmul.f32 %v4077, %v3980
      %v4142 = vmul.f32 %v4078, %v3870
      %v4143 = vmul.f32 %v4079, %v3983
      %v4144 = vmul.f32 %v4080, %v3873
      %v4145 = vmul.f32 %v4081, %v3986
      %v4146 = vmul.f32 %v4082, %v3876
      %v4147 = vmul.f32 %v4083, %v3989
      %v4148 = vmul.f32 %v4084, %v3879
      %v4149 = vmul.f32 %v4085, %v3992
      %v4150 = vmul.f32 %v4086, %v3882
      %v4151 = vmul.f32 %v4087, %v3995
      %v4152 = vmul.f32 %v4088, %v3885
      %v4153 = vmul.f32 %v4089, %v3998
      %v4154 = vmul.f32 %v4090, %v3888
      %v4155 = vmul.f32 %v4091, %v4001
      %v4156 = vmul.f32 %v4092, %v3891
      %v4157 = vmul.f32 %v4093, %v4004
      %v4158 = vmul.f32 %v4094, %v3894
      %v4159 = vmul.f32 %v4095, %v4007
      %v4160 = vmul.f32 %v4096, %v3897
      %v4161 = vmul.f32 %v4097, %v4010
      %v4162 = vmul.f32 %v4098, %v3900
      %v4163 = vmul.f32 %v4099, %v4013
      %v4164 = vmul.f32 %v4100, %v3903
      %v4165 = vmul.f32 %v4101, %v4016
      %v4166 = vmul.f32 %v4102, %v3906
      %v4167 = vmul.f32 %v4103, %v4019
      %v4168 = vmul.f32 %v4104, %v3909
      %v4169 = vmul.f32 %v4105, %v4022
      %v4170 = vmul.f32 %v4106, %v3912
      %v4171 = vmul.f32 %v4107, %v4025
      %v4172 = vmul.f32 %v4108, %v3915
      %v4173 = vmul.f32 %v4109, %v4028
      %v4174 = vmul.f32 %v4110, %v3918
      %v4175 = vmul.f32 %v4111, %v4031
      %v4176 = vmul.f32 %v4112, %v3921
      %v4177 = vmul.f32 %v4113, %v4034
      %v4178 = vmul.f32 %v4114, %v3924
      %v4179 = vmul.f32 %v4115, %v4037
      %v4180 = vmul.f32 %v4116, %v3927
      %v4181 = vmul.f32 %v4117, %v4040
      %v4182 = vmul.f32 %v4118, %v3930
      %v4183 = vmul.f32 %v4119, %v4043
      %v4184 = vmul.f32 %v4120, %v3933
      %v4185 = vmul.f32 %v4121, %v4046
      %v4186 = vmul.f32 %v4122, %v3936
      %v4187 = vmul.f32 %v4123, %v4049
      %v4188 = vmul.f32 %v4124, %v3939
      %v4189 = vmul.f32 %v4125, %v4052
      %v4190 = vmul.f32 %v4126, %v3942
      %v4191 = vmul.f32 %v4127, %v4055
      %v4192 = vmul.f32 %v4128, %v3945
      %v4193 = vmul.f32 %v4129, %v4058
      %v4194 = vmul.f32 %v4130, %v3948
      %v4195 = vmul.f32 %v4131, %v4061
      %v4196 = vmul.f32 %v4132, %v3951
      %v4197 = vmul.f32 %v4133, %v4064
      %v4198 = vld [vmem:[%s17] sm:$0xff]
      %v4199 = vld [vmem:[%s17 + $0x8] sm:$0xff]
      %4201 = vset.pattern.permute.xlu0 0
      %4202 = vperm.xlu0 %4201, %v4198
      %v4203 = vpop.permute.xlu0 %4202
      %4206 = vset.pattern.permute.xlu0 0
      %4207 = vperm.xlu0 %4206, %v4199
      %v4208 = vpop.permute.xlu0 %4207
      %v4210 = vmul.f32 %v4203, %v1464
      %v4211 = vmul.f32 %v4203, %v1465
      %v4212 = vmul.f32 %v4208, %v1466
      %v4213 = vmul.f32 %v4208, %v1467
      %4214 = vmatpush.xpose.msra.mxu0 %v4164
      %4215 = vmatpush.xpose.msra.mxu0 %v4162
      %4216 = vmatpush.xpose.msra.mxu0 %v4160
      %4217 = vmatpush.xpose.msra.mxu0 %v4158
      %4218 = vmatpush.xpose.msra.mxu0 %v4156
      %4219 = vmatpush.xpose.msra.mxu0 %v4154
      %4220 = vmatpush.xpose.msra.mxu0 %v4152
      %4221 = vmatpush.xpose.msra.mxu0 %v4150
      %4222 = vmatpush.xpose.msra.mxu0 %v4148
      %4223 = vmatpush.xpose.msra.mxu0 %v4146
      %4224 = vmatpush.xpose.msra.mxu0 %v4144
      %4225 = vmatpush.xpose.msra.mxu0 %v4142
      %4226 = vmatpush.xpose.msra.mxu0 %v4140
      %4227 = vmatpush.xpose.msra.mxu0 %v4138
      %4228 = vmatpush.xpose.msra.mxu0 %v4136
      %4229 = vmatpush.xpose.msra.mxu0 %v4134
      %4230 = vmatmul.f32.gmra.mxu0 %v4066
      %v4231 = vpop.f32.mrf.mxu0
      %v4232 = vadd.f32 %v4210, %v4231
      %4233 = vmatmul.f32.gmra.mxu0 %v4068
      %v4234 = vpop.f32.mrf.mxu0
      %v4235 = vadd.f32 %v4212, %v4234
      %4236 = vdwg.mxu0
      %4237 = vmatpush.xpose.msra.mxu0 %v4165
      %4238 = vmatpush.xpose.msra.mxu0 %v4163
      %4239 = vmatpush.xpose.msra.mxu0 %v4161
      %4240 = vmatpush.xpose.msra.mxu0 %v4159
      %4241 = vmatpush.xpose.msra.mxu0 %v4157
      %4242 = vmatpush.xpose.msra.mxu0 %v4155
      %4243 = vmatpush.xpose.msra.mxu0 %v4153
      %4244 = vmatpush.xpose.msra.mxu0 %v4151
      %4245 = vmatpush.xpose.msra.mxu0 %v4149
      %4246 = vmatpush.xpose.msra.mxu0 %v4147
      %4247 = vmatpush.xpose.msra.mxu0 %v4145
      %4248 = vmatpush.xpose.msra.mxu0 %v4143
      %4249 = vmatpush.xpose.msra.mxu0 %v4141
      %4250 = vmatpush.xpose.msra.mxu0 %v4139
      %4251 = vmatpush.xpose.msra.mxu0 %v4137
      %4252 = vmatpush.xpose.msra.mxu0 %v4135
      %4253 = vmatmul.f32.gmra.mxu0 %v4067
      %v4254 = vpop.f32.mrf.mxu0
      %v4255 = vadd.f32 %v4232, %v4254
      %4256 = vmatmul.f32.gmra.mxu0 %v4069
      %v4257 = vpop.f32.mrf.mxu0
      %v4258 = vadd.f32 %v4235, %v4257
      %4259 = vdwg.mxu0
      %4260 = vmatpush.xpose.msra.mxu0 %v4196
      %4261 = vmatpush.xpose.msra.mxu0 %v4194
      %4262 = vmatpush.xpose.msra.mxu0 %v4192
      %4263 = vmatpush.xpose.msra.mxu0 %v4190
      %4264 = vmatpush.xpose.msra.mxu0 %v4188
      %4265 = vmatpush.xpose.msra.mxu0 %v4186
      %4266 = vmatpush.xpose.msra.mxu0 %v4184
      %4267 = vmatpush.xpose.msra.mxu0 %v4182
      %4268 = vmatpush.xpose.msra.mxu0 %v4180
      %4269 = vmatpush.xpose.msra.mxu0 %v4178
      %4270 = vmatpush.xpose.msra.mxu0 %v4176
      %4271 = vmatpush.xpose.msra.mxu0 %v4174
      %4272 = vmatpush.xpose.msra.mxu0 %v4172
      %4273 = vmatpush.xpose.msra.mxu0 %v4170
      %4274 = vmatpush.xpose.msra.mxu0 %v4168
      %4275 = vmatpush.xpose.msra.mxu0 %v4166
      %4276 = vmatmul.f32.gmra.mxu0 %v4066
      %v4277 = vpop.f32.mrf.mxu0
      %v4278 = vadd.f32 %v4211, %v4277
      %4279 = vmatmul.f32.gmra.mxu0 %v4068
      %v4280 = vpop.f32.mrf.mxu0
      %v4281 = vadd.f32 %v4213, %v4280
      %4282 = vdwg.mxu0
      %4283 = vmatpush.xpose.msra.mxu0 %v4197
      %4284 = vmatpush.xpose.msra.mxu0 %v4195
      %4285 = vmatpush.xpose.msra.mxu0 %v4193
      %4286 = vmatpush.xpose.msra.mxu0 %v4191
      %4287 = vmatpush.xpose.msra.mxu0 %v4189
      %4288 = vmatpush.xpose.msra.mxu0 %v4187
      %4289 = vmatpush.xpose.msra.mxu0 %v4185
      %4290 = vmatpush.xpose.msra.mxu0 %v4183
      %4291 = vmatpush.xpose.msra.mxu0 %v4181
      %4292 = vmatpush.xpose.msra.mxu0 %v4179
      %4293 = vmatpush.xpose.msra.mxu0 %v4177
      %4294 = vmatpush.xpose.msra.mxu0 %v4175
      %4295 = vmatpush.xpose.msra.mxu0 %v4173
      %4296 = vmatpush.xpose.msra.mxu0 %v4171
      %4297 = vmatpush.xpose.msra.mxu0 %v4169
      %4298 = vmatpush.xpose.msra.mxu0 %v4167
      %4299 = vmatmul.f32.gmra.mxu0 %v4067
      %v4300 = vpop.f32.mrf.mxu0
      %v4301 = vadd.f32 %v4278, %v4300
      %4302 = vmatmul.f32.gmra.mxu0 %v4069
      %v4303 = vpop.f32.mrf.mxu0
      %v4304 = vadd.f32 %v4281, %v4303
      %4305 = vdwg.mxu0
      %v4306 = vxor.u32 %v1162, 2147483648
      %v4307 = vxor.u32 %v1191, 2147483648
      %v4308 = vxor.u32 %v1165, 2147483648
      %v4309 = vxor.u32 %v1194, 2147483648
      %v4310 = vmul.f32 %v4306, 1.442695
      %v4311 = vpow.pop %v4310
      %v4312 = vmul.f32 %v4307, 1.442695
      %v4313 = vpow.pop %v4312
      %v4314 = vmul.f32 %v4308, 1.442695
      %v4315 = vpow.pop %v4314
      %v4316 = vmul.f32 %v4309, 1.442695
      %v4317 = vpow.pop %v4316
      %v4318 = vadd.f32 %v4311, 1.0
      %v4319 = vadd.f32 %v4313, 1.0
      %v4320 = vadd.f32 %v4315, 1.0
      %v4321 = vadd.f32 %v4317, 1.0
      %v4322 = vrcp.pop %v4318
      %v4323 = vmul.f32 %v4318, %v4322
      %v4324 = vsub.f32 1.0, %v4323
      %v4325 = vmul.f32 %v4322, %v4324
      %v4326 = vadd.f32 %v4322, %v4325
      %vm4327 = vweird.f32 %v4318
      %vm4328 = vweird.f32 %v4322
      %vm4329 = vmor %vm4327, %vm4328
      %v4330 = vsel %vm4329, %v4322, %v4326
      %v4331 = vand.u32 2147483647, %v4318
      %vm4332 = vcmp.eq.f32.partialorder %v4331, 8.507059e+37
      %v4333 = vand.u32 %v4318, 2147483648
      %v4334 = vor.u32 1.1754944e-38, %v4333
      %v4335 = vsel %vm4332, %v4334, %v4330
      %v4336 = vmul.f32 1.0, %v4335
      %v4337 = vrcp.pop %v4319
      %v4338 = vmul.f32 %v4319, %v4337
      %v4339 = vsub.f32 1.0, %v4338
      %v4340 = vmul.f32 %v4337, %v4339
      %v4341 = vadd.f32 %v4337, %v4340
      %vm4342 = vweird.f32 %v4319
      %vm4343 = vweird.f32 %v4337
      %vm4344 = vmor %vm4342, %vm4343
      %v4345 = vsel %vm4344, %v4337, %v4341
      %v4346 = vand.u32 2147483647, %v4319
      %vm4347 = vcmp.eq.f32.partialorder %v4346, 8.507059e+37
      %v4348 = vand.u32 %v4319, 2147483648
      %v4349 = vor.u32 1.1754944e-38, %v4348
      %v4350 = vsel %vm4347, %v4349, %v4345
      %v4351 = vmul.f32 1.0, %v4350
      %v4352 = vrcp.pop %v4320
      %v4353 = vmul.f32 %v4320, %v4352
      %v4354 = vsub.f32 1.0, %v4353
      %v4355 = vmul.f32 %v4352, %v4354
      %v4356 = vadd.f32 %v4352, %v4355
      %vm4357 = vweird.f32 %v4320
      %vm4358 = vweird.f32 %v4352
      %vm4359 = vmor %vm4357, %vm4358
      %v4360 = vsel %vm4359, %v4352, %v4356
      %v4361 = vand.u32 2147483647, %v4320
      %vm4362 = vcmp.eq.f32.partialorder %v4361, 8.507059e+37
      %v4363 = vand.u32 %v4320, 2147483648
      %v4364 = vor.u32 1.1754944e-38, %v4363
      %v4365 = vsel %vm4362, %v4364, %v4360
      %v4366 = vmul.f32 1.0, %v4365
      %v4367 = vrcp.pop %v4321
      %v4368 = vmul.f32 %v4321, %v4367
      %v4369 = vsub.f32 1.0, %v4368
      %v4370 = vmul.f32 %v4367, %v4369
      %v4371 = vadd.f32 %v4367, %v4370
      %vm4372 = vweird.f32 %v4321
      %vm4373 = vweird.f32 %v4367
      %vm4374 = vmor %vm4372, %vm4373
      %v4375 = vsel %vm4374, %v4367, %v4371
      %v4376 = vand.u32 2147483647, %v4321
      %vm4377 = vcmp.eq.f32.partialorder %v4376, 8.507059e+37
      %v4378 = vand.u32 %v4321, 2147483648
      %v4379 = vor.u32 1.1754944e-38, %v4378
      %v4380 = vsel %vm4377, %v4379, %v4375
      %v4381 = vmul.f32 1.0, %v4380
      %v4382 = vmul.f32 %v1162, %v4336
      %v4383 = vmul.f32 %v1191, %v4351
      %v4384 = vmul.f32 %v1165, %v4366
      %v4385 = vmul.f32 %v1194, %v4381
      %v4386 = vmul.f32 %v4255, %v4382
      %v4387 = vmul.f32 %v4301, %v4383
      %v4388 = vmul.f32 %v4258, %v4384
      %v4389 = vmul.f32 %v4304, %v4385
      %v4390 = vld [vmem:[%s18] sm:$0xff]
      %v4392 = vsel %vm701, %v4390, 0
      %4394 = vmatpush.msra.mxu0 0.0
      %4395 = vmatpush.msra.mxu0 0.0
      %4396 = vmatpush.msra.mxu0 0.0
      %4397 = vmatpush.msra.mxu0 0.0
      %4398 = vmatpush.msra.mxu0 0.0
      %4399 = vmatpush.msra.mxu0 0.0
      %4400 = vmatpush.msra.mxu0 0.0
      %4401 = vmatpush.msra.mxu0 0.0
      %4402 = vmatpush.msra.mxu0 0.0
      %4403 = vmatpush.msra.mxu0 0.0
      %4404 = vmatpush.msra.mxu0 0.0
      %4405 = vmatpush.msra.mxu0 0.0
      %4406 = vmatpush.msra.mxu0 0.0
      %4407 = vmatpush.msra.mxu0 0.0
      %4408 = vmatpush.msra.mxu0 %v4388
      %4409 = vmatpush.msra.mxu0 %v4386
      %4410 = vmatmul.f32.gmra.mxu0 %v4392
      %v4411 = vpop.f32.mrf.mxu0
      %v4412 = vadd.f32 0.0, %v4411
      %4413 = vdwg.mxu0
      %4414 = vmatpush.msra.mxu0 0.0
      %4415 = vmatpush.msra.mxu0 0.0
      %4416 = vmatpush.msra.mxu0 0.0
      %4417 = vmatpush.msra.mxu0 0.0
      %4418 = vmatpush.msra.mxu0 0.0
      %4419 = vmatpush.msra.mxu0 0.0
      %4420 = vmatpush.msra.mxu0 0.0
      %4421 = vmatpush.msra.mxu0 0.0
      %4422 = vmatpush.msra.mxu0 0.0
      %4423 = vmatpush.msra.mxu0 0.0
      %4424 = vmatpush.msra.mxu0 0.0
      %4425 = vmatpush.msra.mxu0 0.0
      %4426 = vmatpush.msra.mxu0 0.0
      %4427 = vmatpush.msra.mxu0 0.0
      %4428 = vmatpush.msra.mxu0 %v4389
      %4429 = vmatpush.msra.mxu0 %v4387
      %4430 = vmatmul.f32.gmra.mxu0 %v4392
      %v4431 = vpop.f32.mrf.mxu0
      %v4432 = vadd.f32 0.0, %v4431
      %4433 = vdwg.mxu0
      %4434 = vst [vmem:[%s602] sm:$0xff] %v4412
      %4435 = vst [vmem:[%s602 + $0x8] sm:$0xff] %v4432
      %p4436 = scmp.lt.s32.totalorder %s30, 1
      %s4437 = scalar_select %p4436, %s30, 1
      %s4438 = smul.addr %s4437, 2
      %s4439 = smul.addr %s4438, 8
      %s4440 = scalar_lea.vmem %s19, %s4439
      // Predicated region
      $region104: #{_lambda_.3} parent=95 // pred_check
        %p4441 = pneg %p452
      $region105: #{_lambda_.3} parent=95 // pred_check_branch
        %4443 = sbr.rel (%p4441) target = $region107
      $region106: #{_lambda_.3} parent=95 // pred_region
        _
      $region107: #{_lambda_.3} parent=95 // pred_fallthru
        _
    $region96: #{_lambda_.3} parent=5 // pred_fallthru
      _
    %p4444 = scmp.le.s32.totalorder 2, %s25
    // Predicated region
    $region108: #{_lambda_.3} parent=5 // pred_check
      %p4445 = pneg %p4444
    $region109: #{_lambda_.3} parent=5 // pred_check_branch
      %4447 = sbr.rel (%p4445) target = $region111
    $region110: #{_lambda_.3} parent=5 // pred_region
      %s4448 = ssub.s32 %s25, 2
      // Predicated region
      $region112: #{_lambda_.3} parent=110 // pred_check
        %p4449 = pneg %p458
      $region113: #{_lambda_.3} parent=110 // pred_check_branch
        %4451 = sbr.rel (%p4449) target = $region115
      $region114: #{_lambda_.3} parent=110 // pred_region
        %p4452 = scmp.lt.s32.totalorder %s31, 1
        %s4453 = scalar_select %p4452, %s31, 1
        %s4454 = smul.addr %s4453, 2
        %s4455 = smul.addr %s4454, 8
        %s4456 = scalar_lea.vmem %s19, %s4455
      $region115: #{_lambda_.3} parent=110 // pred_fallthru
        _
    $region111: #{_lambda_.3} parent=5 // pred_fallthru
      _
  $region6: #{_lambda_.3} parent=0 // loop_footer
    %s29 = sadd.s32 1, %s25
  $region7: #{_lambda_.3} parent=0 // loop_footer_branch
    %24 = sbr.rel target = $region3
  $region8: #{_lambda_.3} parent=0 // loop_exit
    _

</llo_original>
